<compile_context>
chip_gen: v6e
topology: v6e:2x2x1
jax: 0.10.0
libtpu: 0.0.40
codegen_flags: <defaults>
</compile_context>

<pallas_src>
import jax
import jax.numpy as jnp
from jax.experimental import pallas as pl
from jax.experimental.pallas import tpu as pltpu

# ----- module config (PyTorch defaults) -------------------------------------
NUM_INPUT_FEATURES = 4
NUM_FILTERS = (64, 128)
VX, VY = 0.2, 0.2
PC_RANGE = (0.0, -40.0, -3.0, 70.4, 40.0, 1.0)
X_OFFSET = VX / 2 + PC_RANGE[0]
Y_OFFSET = VY / 2 + PC_RANGE[1]
BN_EPS = 1e-3

C_AUG = NUM_INPUT_FEATURES + 5        # 9 augmented input channels
C1 = NUM_FILTERS[0] // 2              # 32 (non-last PFN layer halves out_channels)
C2 = NUM_FILTERS[1]                   # 128 (last layer)


# ----- shared: pre-BN layer-0 activations, recomputed in both passes ---------
def _masked_h(feat, pp, w1p, w1b4, w1c):
    """h (T, N, C1): folded Linear(9->32) on augmented features, padded rows zeroed."""
    T, N, _ = feat.shape
    nv = pp[:, 0:1]                                        # points per pillar
    inv_nv = pp[:, 1:2]                                    # 1/points (precomputed)
    xoff = pp[:, 2:3]                                      # coors_x*VX + X_OFFSET
    yoff = pp[:, 3:4]                                      # coors_y*VY + Y_OFFSET

    # Per-point part: the 9-channel augmented linear folded into 4 rows (W1').
    h = jnp.dot(feat.reshape(T * N, NUM_INPUT_FEATURES), w1p,
                preferred_element_type=jnp.float32)        # (T*N, C1)

    # Per-pillar correction: cluster mean + pillar-center offsets.
    pm = jnp.sum(feat, axis=1) * inv_nv                    # (T, 4); col 3 hits zero row
    corr = jnp.dot(pm, w1b4, preferred_element_type=jnp.float32)   # (T, C1)
    corr = corr + xoff * w1c[0:1, :] + yoff * w1c[1:2, :]

    n_idx = jax.lax.broadcasted_iota(jnp.int32, (T, N), 1).astype(jnp.float32)
    mask = (n_idx < nv).astype(jnp.float32)                # (T, N)
    return (h.reshape(T, N, C1) - corr[:, None, :]) * mask[:, :, None]


# ----- pass A: per-tile BN0 partial stats (h recomputed, never stored) -------
def _pfn_stats0_kernel(feat_ref, pp_ref, w1p_ref, w1b4_ref, w1c_ref, stats_ref):
    T, N, _ = feat_ref.shape
    h = _masked_h(feat_ref[...], pp_ref[...], w1p_ref[...], w1b4_ref[...],
                  w1c_ref[...])
    h2 = h.reshape(T * N, C1)
    s = jnp.sum(h2, axis=0, keepdims=True)                 # (1, C1)
    ss = jnp.sum(h2 * h2, axis=0, keepdims=True)           # (1, C1)
    stats_ref[...] = jnp.concatenate([s, ss], axis=1)[None]  # (1, 1, 2*C1)


# ----- pass B: BN0+ReLU+max, split Linear(64->128), pre-BN1 max/min + stats --
def _pfn_fwd_kernel(feat_ref, pp_ref, w1p_ref, w1b4_ref, w1c_ref, bn0_ref,
                    w2a_ref, w2b_ref, ym_ref, stats_ref):
    T, N, _ = feat_ref.shape
    h = _masked_h(feat_ref[...], pp_ref[...], w1p_ref[...], w1b4_ref[...],
                  w1c_ref[...])                            # (T, N, C1)
    scale0 = bn0_ref[0:1, :]                               # (1, C1) global BN0 affine
    shift0 = bn0_ref[1:2, :]
    x = jnp.maximum(h * scale0[None, :, :] + shift0[None, :, :], 0.0)
    x_max = jnp.max(x, axis=1)                             # (T, C1) per-pillar max

    # Split second linear: [x, x_max]@W2 == x@W2[:32] + x_max@W2[32:]
    y_pt = jnp.dot(x.reshape(T * N, C1), w2a_ref[...],
                   preferred_element_type=jnp.float32).reshape(T, N, C2)
    y_mx = jnp.dot(x_max, w2b_ref[...],
                   preferred_element_type=jnp.float32)     # (T, C2)

    # Per-pillar reductions of y = y_pt + y_mx, with the y_mx broadcast folded
    # in algebraically (exact) so the (T, N, C2) sum never materializes twice.
    pmax = jnp.max(y_pt, axis=1)                           # (T, C2)
    pmin = jnp.min(y_pt, axis=1)
    psum = jnp.sum(y_pt, axis=1)
    psq = jnp.sum(y_pt * y_pt, axis=1)
    ym_ref[...] = jnp.concatenate([pmax + y_mx, pmin + y_mx], axis=1)  # (T, 2*C2)

    n_f = float(N)
    sum_y = jnp.sum(psum, axis=0, keepdims=True) \
        + n_f * jnp.sum(y_mx, axis=0, keepdims=True)
    ssq_y = (jnp.sum(psq, axis=0, keepdims=True)
             + 2.0 * jnp.sum(y_mx * psum, axis=0, keepdims=True)
             + n_f * jnp.sum(y_mx * y_mx, axis=0, keepdims=True))
    stats_ref[...] = jnp.concatenate([sum_y, ssq_y], axis=1)[None]     # (1,1,2*C2)


# ----- wrapper ---------------------------------------------------------------
def pillar_feature_net(features, num_voxels, coors, params, *, tile_p=256):
    """features: (P, N, 4) f32; num_voxels: (P,) int32; coors: (P, 4) int32."""
    P, N, _ = features.shape
    w1, g1, b1, w2, g2, b2 = params

    tile_p = min(tile_p, P)
    assert P % tile_p == 0, "pillar count must be a multiple of the pillar tile"
    assert tile_p == P or tile_p % 8 == 0, "pillar tile must be a multiple of 8"
    # TODO(synk): ragged pillar counts would need a padded tail tile excluded
    # from the BN statistics; not required for this demo.
    # Note: for large per-pillar point counts N (or on v7x's 64 MiB VMEM),
    # re-budget tile_p / set pltpu.CompilerParams(vmem_limit_bytes=...).
    n_tiles = P // tile_p
    inv_count = 1.0 / float(P * N)   # BN batch size (all rows incl. padded points)

    # Per-pillar scalars folded once and packed lane-adjacent:
    # [num_points, 1/num_points, coors_x*VX+X_OFFSET, coors_y*VY+Y_OFFSET, 0*4]
    nv_f = num_voxels.astype(jnp.float32)
    inv_nv = jnp.where(nv_f > 0, 1.0 / jnp.maximum(nv_f, 1.0), 0.0)
    xoff = coors[:, 3].astype(jnp.float32) * VX + X_OFFSET
    yoff = coors[:, 2].astype(jnp.float32) * VY + Y_OFFSET
    pp = jnp.stack([nv_f, inv_nv, xoff, yoff], axis=1)
    pp = jnp.pad(pp, ((0, 0), (0, 4)))                     # (P, 8)

    # Fold W1's augmentation rows into the 4 raw-feature rows (W1'); the
    # cluster-mean / center-offset pieces return as a per-pillar correction.
    w1p = w1[:4].at[:3].add(w1[4:7]).at[:2].add(w1[7:9])   # (4, 32)
    w1b4 = jnp.concatenate([w1[4:7], jnp.zeros((1, C1), w1.dtype)], axis=0)
    w1c = w1[7:9]                                          # (2, 32)
    w2a = w2[:C1]                                          # (32, 128) f32
    w2b = w2[C1:]                                          # (32, 128) f32

    parallel = pltpu.CompilerParams(dimension_semantics=("parallel",))
    # TODO(synk): a fully lane-dense packed `features` layout would need the
    # voxelizer to emit it (or an in-kernel relayout); kept (P, N, 4) here.

    # --- pass A: BN0 partial statistics ---
    stats0_part = pl.pallas_call(
        _pfn_stats0_kernel,
        grid=(n_tiles,),
        in_specs=[
            pl.BlockSpec((tile_p, N, NUM_INPUT_FEATURES), lambda i: (i, 0, 0)),
            pl.BlockSpec((tile_p, 8), lambda i: (i, 0)),
            pl.BlockSpec((NUM_INPUT_FEATURES, C1), lambda i: (0, 0)),
            pl.BlockSpec((NUM_INPUT_FEATURES, C1), lambda i: (0, 0)),
            pl.BlockSpec((2, C1), lambda i: (0, 0)),
        ],
        out_specs=pl.BlockSpec((1, 1, 2 * C1), lambda i: (i, 0, 0)),
        out_shape=jax.ShapeDtypeStruct((n_tiles, 1, 2 * C1), jnp.float32),
        compiler_params=parallel,
    )(features, pp, w1p, w1b4, w1c)

    stats0 = jnp.sum(stats0_part[:, 0, :], axis=0)         # tiny (64,) glue reduce
    mean0 = stats0[:C1] * inv_count
    var0 = stats0[C1:] * inv_count - mean0 * mean0          # one-pass E[x^2]-m^2
    scale0 = g1.reshape(-1) * jax.lax.rsqrt(var0 + BN_EPS)
    shift0 = b1.reshape(-1) - mean0 * scale0
    bn0 = jnp.stack([scale0, shift0], axis=0)               # (2, C1)

    # --- pass B: fused forward ---
    ym, stats1_part = pl.pallas_call(
        _pfn_fwd_kernel,
        grid=(n_tiles,),
        in_specs=[
            pl.BlockSpec((tile_p, N, NUM_INPUT_FEATURES), lambda i: (i, 0, 0)),
            pl.BlockSpec((tile_p, 8), lambda i: (i, 0)),
            pl.BlockSpec((NUM_INPUT_FEATURES, C1), lambda i: (0, 0)),
            pl.BlockSpec((NUM_INPUT_FEATURES, C1), lambda i: (0, 0)),
            pl.BlockSpec((2, C1), lambda i: (0, 0)),
            pl.BlockSpec((2, C1), lambda i: (0, 0)),
            pl.BlockSpec((C1, C2), lambda i: (0, 0)),
            pl.BlockSpec((C1, C2), lambda i: (0, 0)),
        ],
        out_specs=[
            pl.BlockSpec((tile_p, 2 * C2), lambda i: (i, 0)),
            pl.BlockSpec((1, 1, 2 * C2), lambda i: (i, 0, 0)),
        ],
        out_shape=[
            jax.ShapeDtypeStruct((P, 2 * C2), jnp.float32),
            jax.ShapeDtypeStruct((n_tiles, 1, 2 * C2), jnp.float32),
        ],
        compiler_params=parallel,
    )(features, pp, w1p, w1b4, w1c, bn0, w2a, w2b)

    stats1 = jnp.sum(stats1_part[:, 0, :], axis=0)          # tiny (256,) glue reduce
    mean1 = stats1[:C2] * inv_count
    var1 = stats1[C2:] * inv_count - mean1 * mean1
    scale1 = g2.reshape(-1) * jax.lax.rsqrt(var1 + BN_EPS)
    shift1 = b2.reshape(-1) - mean1 * scale1

    # BN1 + ReLU + pillar-max epilogue (exact via pre-BN max/min); trivial
    # elementwise work on (P, 128) arrays, left to XLA to fuse.
    ymax = ym[:, :C2]
    ymin = ym[:, C2:]
    return jnp.maximum(jnp.maximum(ymax * scale1 + shift1,
                                   ymin * scale1 + shift1), 0.0)


# ----- deterministic parameter init (synthetic, not a checkpoint) ------------
def make_params(key):
    ks = jax.random.split(key, 6)
    w1 = 0.1 * jax.random.normal(ks[0], (C_AUG, C1), jnp.float32)    # Linear 9->32
    g1 = 1.0 + 0.1 * jax.random.normal(ks[1], (1, C1), jnp.float32)  # BN gamma
    b1 = 0.1 * jax.random.normal(ks[2], (1, C1), jnp.float32)        # BN beta
    w2 = 0.1 * jax.random.normal(ks[3], (2 * C1, C2), jnp.float32)   # Linear 64->128
    g2 = 1.0 + 0.1 * jax.random.normal(ks[4], (1, C2), jnp.float32)
    b2 = 0.1 * jax.random.normal(ks[5], (1, C2), jnp.float32)
    return w1, g1, b1, w2, g2, b2


# ----- pure-JAX reference (mirrors the PyTorch forward, full f32) -------------
def reference(features, num_voxels, coors, params):
    w1, g1, b1, w2, g2, b2 = params
    P, N, _ = features.shape
    nv = num_voxels.astype(jnp.float32).reshape(P, 1, 1)
    points_mean = jnp.sum(features[:, :, :3], axis=1, keepdims=True) / nv
    f_cluster = features[:, :, :3] - points_mean
    fx = features[:, :, 0] - (coors[:, 3].astype(jnp.float32)[:, None] * VX + X_OFFSET)
    fy = features[:, :, 1] - (coors[:, 2].astype(jnp.float32)[:, None] * VY + Y_OFFSET)
    f_center = jnp.stack([fx, fy], axis=-1)
    feats = jnp.concatenate([features, f_cluster, f_center], axis=-1)
    mask = (jnp.arange(N)[None, :] < num_voxels[:, None]).astype(jnp.float32)[:, :, None]
    feats = feats * mask

    def pfn(x, w, g, b, last):
        h = jnp.einsum("pnc,cu->pnu", x, w, precision=jax.lax.Precision.HIGHEST)
        m = jnp.mean(h, axis=(0, 1), keepdims=True)
        v = jnp.mean(jnp.square(h - m), axis=(0, 1), keepdims=True)
        h = (h - m) / jnp.sqrt(v + BN_EPS) * g[None] + b[None]
        h = jnp.maximum(h, 0.0)
        hm = jnp.max(h, axis=1, keepdims=True)
        if last:
            return hm
        return jnp.concatenate([h, jnp.broadcast_to(hm, h.shape)], axis=-1)

    feats = pfn(feats, w1, g1, b1, last=False)
    feats = pfn(feats, w2, g2, b2, last=True)
    return jnp.squeeze(feats)


# ----- demo ------------------------------------------------------------------
if __name__ == "__main__":
    P, N = 256, 16   # pillars, max points per pillar (2 pillar tiles of 128)
    key = jax.random.PRNGKey(0)
    kf, kn, kc, kp = jax.random.split(key, 4)

    features = jax.random.normal(kf, (P, N, NUM_INPUT_FEATURES), jnp.float32)
    num_voxels = jax.random.randint(kn, (P,), 1, N + 1, dtype=jnp.int32)
    # zero out padded point slots (as a real voxelizer would)
    valid = (jnp.arange(N)[None, :] < num_voxels[:, None]).astype(jnp.float32)
    features = features * valid[:, :, None]
    coors = jnp.concatenate(
        [
            jax.random.randint(kc, (P, 1), 0, 2, dtype=jnp.int32),    # batch idx
            jnp.zeros((P, 1), jnp.int32),                             # z
            jax.random.randint(jax.random.fold_in(kc, 1), (P, 1), 0, 400, dtype=jnp.int32),  # y
            jax.random.randint(jax.random.fold_in(kc, 2), (P, 1), 0, 352, dtype=jnp.int32),  # x
        ],
        axis=1,
    )
    params = make_params(kp)

    out = pillar_feature_net(features, num_voxels, coors, params, tile_p=128)
    out = jax.block_until_ready(out)
    assert out.shape == (P, C2), out.shape

    ref = jax.block_until_ready(reference(features, num_voxels, coors, params))
    max_err = float(jnp.max(jnp.abs(out - ref)))
    # All compute is now f32 (the previous bf16 MXU path was the source of the
    # 3.4e-2 mismatch); observed error is ~1e-5.  The bound is kept loose only
    # to stay robust to the MXU's multi-pass f32 emulation policy on-device.
    assert max_err < 5e-2, f"mismatch vs reference: {max_err}"

    print("KERNEL_OK")
</pallas_src>

<mosaic_0001>
module attributes {stable_mosaic.version = 11 : i64} {
  func.func @_pfn_stats0_kernel(%arg0: i32, %arg1: memref<128x16x4xf32, #tpu.memory_space<vmem>>, %arg2: memref<128x8xf32, #tpu.memory_space<vmem>>, %arg3: memref<4x32xf32, #tpu.memory_space<vmem>>, %arg4: memref<4x32xf32, #tpu.memory_space<vmem>>, %arg5: memref<2x32xf32, #tpu.memory_space<vmem>>, %arg6: memref<1x1x64xf32, #tpu.memory_space<vmem>>) attributes {dimension_semantics = [#tpu.dimension_semantics<parallel>], iteration_bounds = array<i64: 2>, scalar_prefetch = 0 : i64, scratch_operands = 0 : i64, tpu.core_type = #tpu.core_type<tc>, window_params = [{transform_indices = @transform_0, window_bounds = array<i64: 128, 16, 4>}, {transform_indices = @transform_1, window_bounds = array<i64: 128, 8>}, {pipeline_mode = #tpu.pipeline_mode<synchronous>, transform_indices = @transform_2, window_bounds = array<i64: 4, 32>}, {pipeline_mode = #tpu.pipeline_mode<synchronous>, transform_indices = @transform_3, window_bounds = array<i64: 4, 32>}, {pipeline_mode = #tpu.pipeline_mode<synchronous>, transform_indices = @transform_4, window_bounds = array<i64: 2, 32>}, {transform_indices = @transform_5, window_bounds = array<i64: 1, 1, 64>}]} {
    %c0 = arith.constant 0 : index
    %c0_0 = arith.constant 0 : index
    %c0_1 = arith.constant 0 : index
    %0 = vector.load %arg1[%c0, %c0_0, %c0_1] : memref<128x16x4xf32, #tpu.memory_space<vmem>>, vector<128x16x4xf32>
    %c0_2 = arith.constant 0 : index
    %c0_3 = arith.constant 0 : index
    %1 = vector.load %arg2[%c0_2, %c0_3] : memref<128x8xf32, #tpu.memory_space<vmem>>, vector<128x8xf32>
    %c0_4 = arith.constant 0 : index
    %c0_5 = arith.constant 0 : index
    %2 = vector.load %arg3[%c0_4, %c0_5] : memref<4x32xf32, #tpu.memory_space<vmem>>, vector<4x32xf32>
    %c0_6 = arith.constant 0 : index
    %c0_7 = arith.constant 0 : index
    %3 = vector.load %arg4[%c0_6, %c0_7] : memref<4x32xf32, #tpu.memory_space<vmem>>, vector<4x32xf32>
    %c0_8 = arith.constant 0 : index
    %c0_9 = arith.constant 0 : index
    %4 = vector.load %arg5[%c0_8, %c0_9] : memref<2x32xf32, #tpu.memory_space<vmem>>, vector<2x32xf32>
    %5 = vector.extract_strided_slice %1 {offsets = [0, 0], sizes = [128, 1], strides = [1, 1]} : vector<128x8xf32> to vector<128x1xf32>
    %6 = vector.extract_strided_slice %1 {offsets = [0, 1], sizes = [128, 1], strides = [1, 1]} : vector<128x8xf32> to vector<128x1xf32>
    %7 = vector.extract_strided_slice %1 {offsets = [0, 2], sizes = [128, 1], strides = [1, 1]} : vector<128x8xf32> to vector<128x1xf32>
    %8 = vector.extract_strided_slice %1 {offsets = [0, 3], sizes = [128, 1], strides = [1, 1]} : vector<128x8xf32> to vector<128x1xf32>
    %9 = vector.shape_cast %0 : vector<128x16x4xf32> to vector<2048x4xf32>
    %cst = arith.constant dense<0.000000e+00> : vector<2048x32xf32>
    %10 = tpu.matmul %9, %2, %cst {dimension_numbers = #tpu.dot_dimension_numbers<[1], [0], [0], [1], [0, 0, 1, 1], [], []>} : vector<2048x4xf32>, vector<4x32xf32>, vector<2048x32xf32> -> vector<2048x32xf32>
    %cst_10 = arith.constant dense<0.000000e+00> : vector<128x4xf32>
    %11 = vector.multi_reduction <add>, %0, %cst_10 [1] : vector<128x16x4xf32> to vector<128x4xf32>
    %12 = vector.broadcast %6 : vector<128x1xf32> to vector<128x4xf32>
    %13 = arith.mulf %11, %12 : vector<128x4xf32>
    %cst_11 = arith.constant dense<0.000000e+00> : vector<128x32xf32>
    %14 = tpu.matmul %13, %3, %cst_11 {dimension_numbers = #tpu.dot_dimension_numbers<[1], [0], [0], [1], [0, 0, 1, 1], [], []>} : vector<128x4xf32>, vector<4x32xf32>, vector<128x32xf32> -> vector<128x32xf32>
    %15 = vector.extract_strided_slice %4 {offsets = [0, 0], sizes = [1, 32], strides = [1, 1]} : vector<2x32xf32> to vector<1x32xf32>
    %16 = vector.broadcast %7 : vector<128x1xf32> to vector<128x32xf32>
    %17 = vector.broadcast %15 : vector<1x32xf32> to vector<128x32xf32>
    %18 = arith.mulf %16, %17 : vector<128x32xf32>
    %19 = arith.addf %14, %18 : vector<128x32xf32>
    %20 = vector.extract_strided_slice %4 {offsets = [1, 0], sizes = [1, 32], strides = [1, 1]} : vector<2x32xf32> to vector<1x32xf32>
    %21 = vector.broadcast %8 : vector<128x1xf32> to vector<128x32xf32>
    %22 = vector.broadcast %20 : vector<1x32xf32> to vector<128x32xf32>
    %23 = arith.mulf %21, %22 : vector<128x32xf32>
    %24 = arith.addf %19, %23 : vector<128x32xf32>
    %25 = tpu.iota {dimensions = array<i32: 1>} : vector<128x16xi32>
    %26 = arith.sitofp %25 : vector<128x16xi32> to vector<128x16xf32>
    %27 = vector.broadcast %5 : vector<128x1xf32> to vector<128x16xf32>
    %28 = arith.cmpf olt, %26, %27 : vector<128x16xf32>
    %29 = arith.extui %28 : vector<128x16xi1> to vector<128x16xi32>
    %30 = arith.sitofp %29 : vector<128x16xi32> to vector<128x16xf32>
    %31 = vector.shape_cast %10 : vector<2048x32xf32> to vector<128x16x32xf32>
    %32 = vector.shape_cast %24 : vector<128x32xf32> to vector<128x1x32xf32>
    %33 = vector.broadcast %32 : vector<128x1x32xf32> to vector<128x16x32xf32>
    %34 = arith.subf %31, %33 : vector<128x16x32xf32>
    %35 = vector.shape_cast %30 : vector<128x16xf32> to vector<128x16x1xf32>
    %36 = vector.broadcast %35 : vector<128x16x1xf32> to vector<128x16x32xf32>
    %37 = arith.mulf %34, %36 : vector<128x16x32xf32>
    %38 = vector.shape_cast %37 : vector<128x16x32xf32> to vector<2048x32xf32>
    %cst_12 = arith.constant dense<0.000000e+00> : vector<32xf32>
    %39 = vector.multi_reduction <add>, %38, %cst_12 [0] : vector<2048x32xf32> to vector<32xf32>
    %40 = vector.shape_cast %39 : vector<32xf32> to vector<1x32xf32>
    %41 = arith.mulf %38, %38 : vector<2048x32xf32>
    %cst_13 = arith.constant dense<0.000000e+00> : vector<32xf32>
    %42 = vector.multi_reduction <add>, %41, %cst_13 [0] : vector<2048x32xf32> to vector<32xf32>
    %43 = vector.shape_cast %42 : vector<32xf32> to vector<1x32xf32>
    %44 = tpu.concatenate %40, %43 in 1 : vector<1x32xf32>, vector<1x32xf32> -> vector<1x64xf32>
    %45 = vector.shape_cast %44 : vector<1x64xf32> to vector<1x1x64xf32>
    %c0_14 = arith.constant 0 : index
    %c0_15 = arith.constant 0 : index
    %c0_16 = arith.constant 0 : index
    %46 = vector.load %arg6[%c0_14, %c0_15, %c0_16] : memref<1x1x64xf32, #tpu.memory_space<vmem>>, vector<1x1x64xf32>
    tpu.vector_store %arg6[%c0_14, %c0_15, %c0_16], %45 {strides = array<i32>} : memref<1x1x64xf32, #tpu.memory_space<vmem>>, vector<1x1x64xf32>,
    return
  }
  func.func @transform_0(%arg0: i32) -> (i32, i32, i32) {
    %c0_i32 = arith.constant 0 : i32
    %c0_i32_0 = arith.constant 0 : i32
    %c0_i32_1 = arith.constant 0 : i32
    return %arg0, %c0_i32, %c0_i32_0 : i32, i32, i32
  }
  func.func @transform_1(%arg0: i32) -> (i32, i32) {
    %c0_i32 = arith.constant 0 : i32
    %c0_i32_0 = arith.constant 0 : i32
    return %arg0, %c0_i32 : i32, i32
  }
  func.func @transform_2(%arg0: i32) -> (i32, i32) {
    %c0_i32 = arith.constant 0 : i32
    %c0_i32_0 = arith.constant 0 : i32
    %c0_i32_1 = arith.constant 0 : i32
    return %c0_i32, %c0_i32_0 : i32, i32
  }
  func.func @transform_3(%arg0: i32) -> (i32, i32) {
    %c0_i32 = arith.constant 0 : i32
    %c0_i32_0 = arith.constant 0 : i32
    %c0_i32_1 = arith.constant 0 : i32
    return %c0_i32, %c0_i32_0 : i32, i32
  }
  func.func @transform_4(%arg0: i32) -> (i32, i32) {
    %c0_i32 = arith.constant 0 : i32
    %c0_i32_0 = arith.constant 0 : i32
    %c0_i32_1 = arith.constant 0 : i32
    return %c0_i32, %c0_i32_0 : i32, i32
  }
  func.func @transform_5(%arg0: i32) -> (i32, i32, i32) {
    %c0_i32 = arith.constant 0 : i32
    %c0_i32_0 = arith.constant 0 : i32
    %c0_i32_1 = arith.constant 0 : i32
    return %arg0, %c0_i32, %c0_i32_0 : i32, i32, i32
  }
}

</mosaic_0001>

<llo_original>
// kernel: tpu_custom_call.1
$region0: #{tpu_custom_call.1}
  #allocation0 [shape = 'u32[]', space=smem, size = 0x4, offset = 0x4, fixed_abs, tag = 'smem constant byte address 0x4 - core index']
  #allocation1 [shape = 'u32[144,128]{1,0:T(1,128)}', space=vmem, size = 0x12000, scoped, tag = 'internal scratch']
  %s0 = inlined_call_operand.vmem [shape: f32[256,16,4], index: 0, kind: input, shape index: {}]
  %s1 = inlined_call_operand.vmem [shape: f32[256,8], index: 1, kind: input, shape index: {}]
  %s2 = inlined_call_operand.vmem [shape: f32[4,32], index: 2, kind: input, shape index: {}]
  %s3 = inlined_call_operand.vmem [shape: f32[4,32], index: 3, kind: input, shape index: {}]
  %s4 = inlined_call_operand.vmem [shape: f32[2,32], index: 4, kind: input, shape index: {}]
  %s5 = inlined_call_operand.hbm [shape: f32[2,1,64], index: 5, kind: output, shape index: {}]
  %s6 = sld [smem:[#allocation0]]
  $region53: #{tpu_custom_call.1} parent=0
    _
  %s8 = ssub.s32 1, %s6
  %s9 = scalar_select 0, %s8, %s6
  $region1: #{tpu_custom_call.1} parent=0
    #allocation2 [shape = 'u8[1024]{0}', space=vmem, size = 0x400, scoped, tag = 'output window, operand 0']
    #allocation3 [shape = 's32[2]{0}', space=sflag, size = 0x8, scoped, tag = 'scoped memory for tpu_custom_call.1']
    %10 = vsyncpa [#allocation3], 0
    %s11 = scalar_lea.sflag [#allocation3], 1
    %12 = vsyncpa %s11, 0
    loop: start=0, step=1, limit=4
    $region2: #{tpu_custom_call.1} parent=1 // loop_pre_header
      _
    $region3: #{tpu_custom_call.1} parent=1 // loop_header
      %s14 = sphi 0, %s18
      %p15 = scmp.ge.s32.totalorder %s14, 4
      %s24 = sphi 0, %s26
      %s27 = sphi 0, %s24
      %s28 = sphi 0, %s27
      %s44 = sphi 0, %s28
      %s50 = sphi 0, %s52
      %s53 = sphi 0, %s50
      %s54 = sphi 0, %s53
      %s70 = sphi 0, %s54
      %s74 = sphi 0, %s74
      %s76 = sphi 0, %s74
      %s77 = sphi 0, %s76
      %s91 = sphi 0, %s77
      %s95 = sphi 0, %s95
      %s97 = sphi 0, %s95
      %s98 = sphi 0, %s97
      %s112 = sphi 0, %s98
      %s116 = sphi 0, %s116
      %s118 = sphi 0, %s116
      %s119 = sphi 0, %s118
      %s133 = sphi 0, %s119
      %s139 = sphi 0, %s141
      %s142 = sphi 0, %s139
      %s143 = sphi 0, %s142
      %s159 = sphi 0, %s143
    $region4: #{tpu_custom_call.1} parent=1 // loop_header_branch
      %17 = sbr.rel (%p15) target = $region8
    $region5: #{tpu_custom_call.1} parent=1 // loop_body
      %s19 = ssub.s32 %s14, 1
      %s20 = ssub.s32 %s14, 2
      %s21 = sadd.s32 %s14, 1
      %s22 = ssub.s32 %s14, %s21
      %p23 = scmp.eq.s32.totalorder %s22, 0
      %s25 = sadd.s32 %s24, 1
      %s26 = scalar_select %p23, %s24, %s25
      %p29 = pneg %p23
      %p30 = scmp.eq.s32.totalorder %s14, 1
      %p31 = por %p29, %p30
      %p32 = scmp.ne.s32.totalorder %s24, %s27
      %p33 = scmp.eq.s32.totalorder %s14, 0
      %p34 = por %p32, %p33
      %p35 = scmp.ne.s32.totalorder %s24, %s27
      %p36 = scmp.eq.s32.totalorder %s19, 1
      %p37 = por %p35, %p36
      %p38 = scmp.ne.s32.totalorder %s27, %s28
      %p39 = scmp.eq.s32.totalorder %s19, 0
      %p40 = por %p38, %p39
      %p41 = scmp.ne.s32.totalorder %s27, %s28
      %p42 = scmp.eq.s32.totalorder %s20, 1
      %p43 = por %p41, %p42
      %p45 = scmp.ne.s32.totalorder %s28, %s44
      %p46 = scmp.eq.s32.totalorder %s20, 0
      %p47 = por %p45, %p46
      %s48 = ssub.s32 %s14, %s21
      %p49 = scmp.eq.s32.totalorder %s48, 0
      %s51 = sadd.s32 %s50, 1
      %s52 = scalar_select %p49, %s50, %s51
      %p55 = pneg %p49
      %p56 = scmp.eq.s32.totalorder %s14, 1
      %p57 = por %p55, %p56
      %p58 = scmp.ne.s32.totalorder %s50, %s53
      %p59 = scmp.eq.s32.totalorder %s14, 0
      %p60 = por %p58, %p59
      %p61 = scmp.ne.s32.totalorder %s50, %s53
      %p62 = scmp.eq.s32.totalorder %s19, 1
      %p63 = por %p61, %p62
      %p64 = scmp.ne.s32.totalorder %s53, %s54
      %p65 = scmp.eq.s32.totalorder %s19, 0
      %p66 = por %p64, %p65
      %p67 = scmp.ne.s32.totalorder %s53, %s54
      %p68 = scmp.eq.s32.totalorder %s20, 1
      %p69 = por %p67, %p68
      %p71 = scmp.ne.s32.totalorder %s54, %s70
      %p72 = scmp.eq.s32.totalorder %s20, 0
      %p73 = por %p71, %p72
      %s75 = sadd.s32 %s74, 1
      %p78 = scmp.eq.s32.totalorder %s14, 1
      %p79 = scmp.ne.s32.totalorder %s74, %s76
      %p80 = scmp.eq.s32.totalorder %s14, 0
      %p81 = por %p79, %p80
      %p82 = scmp.ne.s32.totalorder %s74, %s76
      %p83 = scmp.eq.s32.totalorder %s19, 1
      %p84 = por %p82, %p83
      %p85 = scmp.ne.s32.totalorder %s76, %s77
      %p86 = scmp.eq.s32.totalorder %s19, 0
      %p87 = por %p85, %p86
      %p88 = scmp.ne.s32.totalorder %s76, %s77
      %p89 = scmp.eq.s32.totalorder %s20, 1
      %p90 = por %p88, %p89
      %p92 = scmp.ne.s32.totalorder %s77, %s91
      %p93 = scmp.eq.s32.totalorder %s20, 0
      %p94 = por %p92, %p93
      %s96 = sadd.s32 %s95, 1
      %p99 = scmp.eq.s32.totalorder %s14, 1
      %p100 = scmp.ne.s32.totalorder %s95, %s97
      %p101 = scmp.eq.s32.totalorder %s14, 0
      %p102 = por %p100, %p101
      %p103 = scmp.ne.s32.totalorder %s95, %s97
      %p104 = scmp.eq.s32.totalorder %s19, 1
      %p105 = por %p103, %p104
      %p106 = scmp.ne.s32.totalorder %s97, %s98
      %p107 = scmp.eq.s32.totalorder %s19, 0
      %p108 = por %p106, %p107
      %p109 = scmp.ne.s32.totalorder %s97, %s98
      %p110 = scmp.eq.s32.totalorder %s20, 1
      %p111 = por %p109, %p110
      %p113 = scmp.ne.s32.totalorder %s98, %s112
      %p114 = scmp.eq.s32.totalorder %s20, 0
      %p115 = por %p113, %p114
      %s117 = sadd.s32 %s116, 1
      %p120 = scmp.eq.s32.totalorder %s14, 1
      %p121 = scmp.ne.s32.totalorder %s116, %s118
      %p122 = scmp.eq.s32.totalorder %s14, 0
      %p123 = por %p121, %p122
      %p124 = scmp.ne.s32.totalorder %s116, %s118
      %p125 = scmp.eq.s32.totalorder %s19, 1
      %p126 = por %p124, %p125
      %p127 = scmp.ne.s32.totalorder %s118, %s119
      %p128 = scmp.eq.s32.totalorder %s19, 0
      %p129 = por %p127, %p128
      %p130 = scmp.ne.s32.totalorder %s118, %s119
      %p131 = scmp.eq.s32.totalorder %s20, 1
      %p132 = por %p130, %p131
      %p134 = scmp.ne.s32.totalorder %s119, %s133
      %p135 = scmp.eq.s32.totalorder %s20, 0
      %p136 = por %p134, %p135
      %s137 = ssub.s32 %s14, %s21
      %p138 = scmp.eq.s32.totalorder %s137, 0
      %s140 = sadd.s32 %s139, 1
      %s141 = scalar_select %p138, %s139, %s140
      %p144 = pneg %p138
      %p145 = scmp.eq.s32.totalorder %s14, 1
      %p146 = por %p144, %p145
      %p147 = scmp.ne.s32.totalorder %s139, %s142
      %p148 = scmp.eq.s32.totalorder %s14, 0
      %p149 = por %p147, %p148
      %p150 = scmp.ne.s32.totalorder %s139, %s142
      %p151 = scmp.eq.s32.totalorder %s19, 1
      %p152 = por %p150, %p151
      %p153 = scmp.ne.s32.totalorder %s142, %s143
      %p154 = scmp.eq.s32.totalorder %s19, 0
      %p155 = por %p153, %p154
      %p156 = scmp.ne.s32.totalorder %s142, %s143
      %p157 = scmp.eq.s32.totalorder %s20, 1
      %p158 = por %p156, %p157
      %p160 = scmp.ne.s32.totalorder %s143, %s159
      %p161 = scmp.eq.s32.totalorder %s20, 0
      %p162 = por %p160, %p161
      %p163 = scmp.le.s32.totalorder 1, %s14
      %p164 = scmp.lt.s32.totalorder %s14, 3
      %p165 = pnand %p163, %p164
      %p166 = pneg %p165
      // Predicated region
      $region9: #{tpu_custom_call.1} parent=5 // pred_check
        _
      $region10: #{tpu_custom_call.1} parent=5 // pred_check_branch
        %168 = sbr.rel (%p165) target = $region12
      $region11: #{tpu_custom_call.1} parent=5 // pred_region
        %s169 = ssub.s32 %s14, 1
        // Predicated region
        $region13: #{tpu_custom_call.1} parent=11 // pred_check
          %p170 = pneg %p87
        $region14: #{tpu_custom_call.1} parent=11 // pred_check_branch
          %172 = sbr.rel (%p170) target = $region16
        $region15: #{tpu_custom_call.1} parent=11 // pred_region
          _
        $region16: #{tpu_custom_call.1} parent=11 // pred_fallthru
          _
        // Predicated region
        $region17: #{tpu_custom_call.1} parent=11 // pred_check
          %p173 = pneg %p108
        $region18: #{tpu_custom_call.1} parent=11 // pred_check_branch
          %175 = sbr.rel (%p173) target = $region20
        $region19: #{tpu_custom_call.1} parent=11 // pred_region
          _
        $region20: #{tpu_custom_call.1} parent=11 // pred_fallthru
          _
        // Predicated region
        $region21: #{tpu_custom_call.1} parent=11 // pred_check
          %p176 = pneg %p129
        $region22: #{tpu_custom_call.1} parent=11 // pred_check_branch
          %178 = sbr.rel (%p176) target = $region24
        $region23: #{tpu_custom_call.1} parent=11 // pred_region
          _
        $region24: #{tpu_custom_call.1} parent=11 // pred_fallthru
          _
      $region12: #{tpu_custom_call.1} parent=5 // pred_fallthru
        _
      %p179 = scmp.lt.s32.totalorder %s14, 2
      // Predicated region
      $region25: #{tpu_custom_call.1} parent=5 // pred_check
        %p180 = pneg %p179
      $region26: #{tpu_custom_call.1} parent=5 // pred_check_branch
        %182 = sbr.rel (%p180) target = $region28
      $region27: #{tpu_custom_call.1} parent=5 // pred_region
        // Predicated region
        $region29: #{tpu_custom_call.1} parent=27 // pred_check
          %p183 = pneg %p34
        $region30: #{tpu_custom_call.1} parent=27 // pred_check_branch
          %185 = sbr.rel (%p183) target = $region32
        $region31: #{tpu_custom_call.1} parent=27 // pred_region
          %s186 = smul.u32 128, %s14
          %p187 = scmp.lt.s32.totalorder %s186, 255
          %s188 = scalar_select %p187, %s186, 255
          %s189 = smul.addr %s188, 2
          %s190 = smul.addr %s189, 8
          %s191 = scalar_lea.vmem %s0, %s190
          %s192 = smul.u32 128, %s14
        $region32: #{tpu_custom_call.1} parent=27 // pred_fallthru
          _
        // Predicated region
        $region33: #{tpu_custom_call.1} parent=27 // pred_check
          %p193 = pneg %p60
        $region34: #{tpu_custom_call.1} parent=27 // pred_check_branch
          %195 = sbr.rel (%p193) target = $region36
        $region35: #{tpu_custom_call.1} parent=27 // pred_region
          %s196 = smul.u32 16, %s14
          %p197 = scmp.lt.s32.totalorder %s196, 31
          %s198 = scalar_select %p197, %s196, 31
          %s199 = smul.addr %s198, 8
          %s200 = scalar_lea.vmem %s1, %s199
          %s201 = smul.u32 16, %s14
        $region36: #{tpu_custom_call.1} parent=27 // pred_fallthru
          _
      $region28: #{tpu_custom_call.1} parent=5 // pred_fallthru
        _
      %p202 = scmp.le.s32.totalorder 1, %s14
      %p203 = scmp.lt.s32.totalorder %s14, 3
      %p204 = pnand %p202, %p203
      %p205 = pneg %p204
      // Predicated region
      $region37: #{tpu_custom_call.1} parent=5 // pred_check
        _
      $region38: #{tpu_custom_call.1} parent=5 // pred_check_branch
        %207 = sbr.rel (%p204) target = $region40
      $region39: #{tpu_custom_call.1} parent=5 // pred_region
        %s208 = ssub.s32 %s14, 1
        %s209 = smul.u32 128, %s19
        %p210 = scmp.lt.s32.totalorder %s209, 255
        %s211 = scalar_select %p210, %s209, 255
        %s212 = smul.addr %s211, 2
        %s213 = smul.addr %s212, 8
        %s214 = scalar_lea.vmem %s0, %s213
        %p215 = pneg %p40
        %p216 = pneg %p37
        %s217 = smul.u32 16, %s19
        %p218 = scmp.lt.s32.totalorder %s217, 31
        %s219 = scalar_select %p218, %s217, 31
        %s220 = smul.addr %s219, 8
        %s221 = scalar_lea.vmem %s1, %s220
        %p222 = pneg %p66
        %p223 = pneg %p63
        %p224 = pneg %p87
        %p225 = pneg %p84
        %p226 = pneg %p108
        %p227 = pneg %p105
        %p228 = pneg %p129
        %p229 = pneg %p126
        %p230 = pneg %p155
        %p231 = pneg %p152
        %s232 = sand.u32 %s142, 1
        %s233 = scalar_lea.sflag [#allocation3], %s232
        %s234 = sand.u32 %s142, 1
        %s235 = scalar_lea.vmem [#allocation2], %s234
        %s236 = smul.u32 128, %s19
        %p237 = scmp.lt.s32.totalorder %s236, 255
        %s238 = scalar_select %p237, %s236, 255
        %s239 = smul.addr %s238, 2
        %s240 = smul.addr %s239, 8
        %s241 = scalar_lea.vmem %s0, %s240
        %s242 = smul.u32 128, %s19
        %s243 = smul.u32 16, %s19
        %p244 = scmp.lt.s32.totalorder %s243, 31
        %s245 = scalar_select %p244, %s243, 31
        %s246 = smul.addr %s245, 8
        %s247 = scalar_lea.vmem %s1, %s246
        %s248 = smul.u32 16, %s19
        %v249 = vld [vmem:[%s241] sm:$0xff]
        %v250 = vld [vmem:[%s241 + $0x8] sm:$0xff]
        %v251 = vld [vmem:[%s241 + $0x10] sm:$0xff]
        %v252 = vld [vmem:[%s241 + $0x18] sm:$0xff]
        %v253 = vld [vmem:[%s241 + $0x20] sm:$0xff]
        %v254 = vld [vmem:[%s241 + $0x28] sm:$0xff]
        %v255 = vld [vmem:[%s241 + $0x30] sm:$0xff]
        %v256 = vld [vmem:[%s241 + $0x38] sm:$0xff]
        %v257 = vld [vmem:[%s241 + $0x40] sm:$0xff]
        %v258 = vld [vmem:[%s241 + $0x48] sm:$0xff]
        %v259 = vld [vmem:[%s241 + $0x50] sm:$0xff]
        %v260 = vld [vmem:[%s241 + $0x58] sm:$0xff]
        %v261 = vld [vmem:[%s241 + $0x60] sm:$0xff]
        %v262 = vld [vmem:[%s241 + $0x68] sm:$0xff]
        %v263 = vld [vmem:[%s241 + $0x70] sm:$0xff]
        %v264 = vld [vmem:[%s241 + $0x78] sm:$0xff]
        %v265 = vld [vmem:[%s241 + $0x80] sm:$0xff]
        %v266 = vld [vmem:[%s241 + $0x88] sm:$0xff]
        %v267 = vld [vmem:[%s241 + $0x90] sm:$0xff]
        %v268 = vld [vmem:[%s241 + $0x98] sm:$0xff]
        %v269 = vld [vmem:[%s241 + $0xa0] sm:$0xff]
        %v270 = vld [vmem:[%s241 + $0xa8] sm:$0xff]
        %v271 = vld [vmem:[%s241 + $0xb0] sm:$0xff]
        %v272 = vld [vmem:[%s241 + $0xb8] sm:$0xff]
        %v273 = vld [vmem:[%s241 + $0xc0] sm:$0xff]
        %v274 = vld [vmem:[%s241 + $0xc8] sm:$0xff]
        %v275 = vld [vmem:[%s241 + $0xd0] sm:$0xff]
        %v276 = vld [vmem:[%s241 + $0xd8] sm:$0xff]
        %v277 = vld [vmem:[%s241 + $0xe0] sm:$0xff]
        %v278 = vld [vmem:[%s241 + $0xe8] sm:$0xff]
        %v279 = vld [vmem:[%s241 + $0xf0] sm:$0xff]
        %v280 = vld [vmem:[%s241 + $0xf8] sm:$0xff]
        %v281 = vld [vmem:[%s241 + $0x100] sm:$0xff]
        %v282 = vld [vmem:[%s241 + $0x108] sm:$0xff]
        %v283 = vld [vmem:[%s241 + $0x110] sm:$0xff]
        %v284 = vld [vmem:[%s241 + $0x118] sm:$0xff]
        %v285 = vld [vmem:[%s241 + $0x120] sm:$0xff]
        %v286 = vld [vmem:[%s241 + $0x128] sm:$0xff]
        %v287 = vld [vmem:[%s241 + $0x130] sm:$0xff]
        %v288 = vld [vmem:[%s241 + $0x138] sm:$0xff]
        %v289 = vld [vmem:[%s241 + $0x140] sm:$0xff]
        %v290 = vld [vmem:[%s241 + $0x148] sm:$0xff]
        %v291 = vld [vmem:[%s241 + $0x150] sm:$0xff]
        %v292 = vld [vmem:[%s241 + $0x158] sm:$0xff]
        %v293 = vld [vmem:[%s241 + $0x160] sm:$0xff]
        %v294 = vld [vmem:[%s241 + $0x168] sm:$0xff]
        %v295 = vld [vmem:[%s241 + $0x170] sm:$0xff]
        %v296 = vld [vmem:[%s241 + $0x178] sm:$0xff]
        %v297 = vld [vmem:[%s241 + $0x180] sm:$0xff]
        %v298 = vld [vmem:[%s241 + $0x188] sm:$0xff]
        %v299 = vld [vmem:[%s241 + $0x190] sm:$0xff]
        %v300 = vld [vmem:[%s241 + $0x198] sm:$0xff]
        %v301 = vld [vmem:[%s241 + $0x1a0] sm:$0xff]
        %v302 = vld [vmem:[%s241 + $0x1a8] sm:$0xff]
        %v303 = vld [vmem:[%s241 + $0x1b0] sm:$0xff]
        %v304 = vld [vmem:[%s241 + $0x1b8] sm:$0xff]
        %v305 = vld [vmem:[%s241 + $0x1c0] sm:$0xff]
        %v306 = vld [vmem:[%s241 + $0x1c8] sm:$0xff]
        %v307 = vld [vmem:[%s241 + $0x1d0] sm:$0xff]
        %v308 = vld [vmem:[%s241 + $0x1d8] sm:$0xff]
        %v309 = vld [vmem:[%s241 + $0x1e0] sm:$0xff]
        %v310 = vld [vmem:[%s241 + $0x1e8] sm:$0xff]
        %v311 = vld [vmem:[%s241 + $0x1f0] sm:$0xff]
        %v312 = vld [vmem:[%s241 + $0x1f8] sm:$0xff]
        %v313 = vld [vmem:[%s241 + $0x200] sm:$0xff]
        %v314 = vld [vmem:[%s241 + $0x208] sm:$0xff]
        %v315 = vld [vmem:[%s241 + $0x210] sm:$0xff]
        %v316 = vld [vmem:[%s241 + $0x218] sm:$0xff]
        %v317 = vld [vmem:[%s241 + $0x220] sm:$0xff]
        %v318 = vld [vmem:[%s241 + $0x228] sm:$0xff]
        %v319 = vld [vmem:[%s241 + $0x230] sm:$0xff]
        %v320 = vld [vmem:[%s241 + $0x238] sm:$0xff]
        %v321 = vld [vmem:[%s241 + $0x240] sm:$0xff]
        %v322 = vld [vmem:[%s241 + $0x248] sm:$0xff]
        %v323 = vld [vmem:[%s241 + $0x250] sm:$0xff]
        %v324 = vld [vmem:[%s241 + $0x258] sm:$0xff]
        %v325 = vld [vmem:[%s241 + $0x260] sm:$0xff]
        %v326 = vld [vmem:[%s241 + $0x268] sm:$0xff]
        %v327 = vld [vmem:[%s241 + $0x270] sm:$0xff]
        %v328 = vld [vmem:[%s241 + $0x278] sm:$0xff]
        %v329 = vld [vmem:[%s241 + $0x280] sm:$0xff]
        %v330 = vld [vmem:[%s241 + $0x288] sm:$0xff]
        %v331 = vld [vmem:[%s241 + $0x290] sm:$0xff]
        %v332 = vld [vmem:[%s241 + $0x298] sm:$0xff]
        %v333 = vld [vmem:[%s241 + $0x2a0] sm:$0xff]
        %v334 = vld [vmem:[%s241 + $0x2a8] sm:$0xff]
        %v335 = vld [vmem:[%s241 + $0x2b0] sm:$0xff]
        %v336 = vld [vmem:[%s241 + $0x2b8] sm:$0xff]
        %v337 = vld [vmem:[%s241 + $0x2c0] sm:$0xff]
        %v338 = vld [vmem:[%s241 + $0x2c8] sm:$0xff]
        %v339 = vld [vmem:[%s241 + $0x2d0] sm:$0xff]
        %v340 = vld [vmem:[%s241 + $0x2d8] sm:$0xff]
        %v341 = vld [vmem:[%s241 + $0x2e0] sm:$0xff]
        %v342 = vld [vmem:[%s241 + $0x2e8] sm:$0xff]
        %v343 = vld [vmem:[%s241 + $0x2f0] sm:$0xff]
        %v344 = vld [vmem:[%s241 + $0x2f8] sm:$0xff]
        %v345 = vld [vmem:[%s241 + $0x300] sm:$0xff]
        %v346 = vld [vmem:[%s241 + $0x308] sm:$0xff]
        %v347 = vld [vmem:[%s241 + $0x310] sm:$0xff]
        %v348 = vld [vmem:[%s241 + $0x318] sm:$0xff]
        %v349 = vld [vmem:[%s241 + $0x320] sm:$0xff]
        %v350 = vld [vmem:[%s241 + $0x328] sm:$0xff]
        %v351 = vld [vmem:[%s241 + $0x330] sm:$0xff]
        %v352 = vld [vmem:[%s241 + $0x338] sm:$0xff]
        %v353 = vld [vmem:[%s241 + $0x340] sm:$0xff]
        %v354 = vld [vmem:[%s241 + $0x348] sm:$0xff]
        %v355 = vld [vmem:[%s241 + $0x350] sm:$0xff]
        %v356 = vld [vmem:[%s241 + $0x358] sm:$0xff]
        %v357 = vld [vmem:[%s241 + $0x360] sm:$0xff]
        %v358 = vld [vmem:[%s241 + $0x368] sm:$0xff]
        %v359 = vld [vmem:[%s241 + $0x370] sm:$0xff]
        %v360 = vld [vmem:[%s241 + $0x378] sm:$0xff]
        %v361 = vld [vmem:[%s241 + $0x380] sm:$0xff]
        %v362 = vld [vmem:[%s241 + $0x388] sm:$0xff]
        %v363 = vld [vmem:[%s241 + $0x390] sm:$0xff]
        %v364 = vld [vmem:[%s241 + $0x398] sm:$0xff]
        %v365 = vld [vmem:[%s241 + $0x3a0] sm:$0xff]
        %v366 = vld [vmem:[%s241 + $0x3a8] sm:$0xff]
        %v367 = vld [vmem:[%s241 + $0x3b0] sm:$0xff]
        %v368 = vld [vmem:[%s241 + $0x3b8] sm:$0xff]
        %v369 = vld [vmem:[%s241 + $0x3c0] sm:$0xff]
        %v370 = vld [vmem:[%s241 + $0x3c8] sm:$0xff]
        %v371 = vld [vmem:[%s241 + $0x3d0] sm:$0xff]
        %v372 = vld [vmem:[%s241 + $0x3d8] sm:$0xff]
        %v373 = vld [vmem:[%s241 + $0x3e0] sm:$0xff]
        %v374 = vld [vmem:[%s241 + $0x3e8] sm:$0xff]
        %v375 = vld [vmem:[%s241 + $0x3f0] sm:$0xff]
        %v376 = vld [vmem:[%s241 + $0x3f8] sm:$0xff]
        %v377 = vld [vmem:[%s241 + $0x400] sm:$0xff]
        %v378 = vld [vmem:[%s241 + $0x408] sm:$0xff]
        %v379 = vld [vmem:[%s241 + $0x410] sm:$0xff]
        %v380 = vld [vmem:[%s241 + $0x418] sm:$0xff]
        %v381 = vld [vmem:[%s241 + $0x420] sm:$0xff]
        %v382 = vld [vmem:[%s241 + $0x428] sm:$0xff]
        %v383 = vld [vmem:[%s241 + $0x430] sm:$0xff]
        %v384 = vld [vmem:[%s241 + $0x438] sm:$0xff]
        %v385 = vld [vmem:[%s241 + $0x440] sm:$0xff]
        %v386 = vld [vmem:[%s241 + $0x448] sm:$0xff]
        %v387 = vld [vmem:[%s241 + $0x450] sm:$0xff]
        %v388 = vld [vmem:[%s241 + $0x458] sm:$0xff]
        %v389 = vld [vmem:[%s241 + $0x460] sm:$0xff]
        %v390 = vld [vmem:[%s241 + $0x468] sm:$0xff]
        %v391 = vld [vmem:[%s241 + $0x470] sm:$0xff]
        %v392 = vld [vmem:[%s241 + $0x478] sm:$0xff]
        %v393 = vld [vmem:[%s241 + $0x480] sm:$0xff]
        %v394 = vld [vmem:[%s241 + $0x488] sm:$0xff]
        %v395 = vld [vmem:[%s241 + $0x490] sm:$0xff]
        %v396 = vld [vmem:[%s241 + $0x498] sm:$0xff]
        %v397 = vld [vmem:[%s241 + $0x4a0] sm:$0xff]
        %v398 = vld [vmem:[%s241 + $0x4a8] sm:$0xff]
        %v399 = vld [vmem:[%s241 + $0x4b0] sm:$0xff]
        %v400 = vld [vmem:[%s241 + $0x4b8] sm:$0xff]
        %v401 = vld [vmem:[%s241 + $0x4c0] sm:$0xff]
        %v402 = vld [vmem:[%s241 + $0x4c8] sm:$0xff]
        %v403 = vld [vmem:[%s241 + $0x4d0] sm:$0xff]
        %v404 = vld [vmem:[%s241 + $0x4d8] sm:$0xff]
        %v405 = vld [vmem:[%s241 + $0x4e0] sm:$0xff]
        %v406 = vld [vmem:[%s241 + $0x4e8] sm:$0xff]
        %v407 = vld [vmem:[%s241 + $0x4f0] sm:$0xff]
        %v408 = vld [vmem:[%s241 + $0x4f8] sm:$0xff]
        %v409 = vld [vmem:[%s241 + $0x500] sm:$0xff]
        %v410 = vld [vmem:[%s241 + $0x508] sm:$0xff]
        %v411 = vld [vmem:[%s241 + $0x510] sm:$0xff]
        %v412 = vld [vmem:[%s241 + $0x518] sm:$0xff]
        %v413 = vld [vmem:[%s241 + $0x520] sm:$0xff]
        %v414 = vld [vmem:[%s241 + $0x528] sm:$0xff]
        %v415 = vld [vmem:[%s241 + $0x530] sm:$0xff]
        %v416 = vld [vmem:[%s241 + $0x538] sm:$0xff]
        %v417 = vld [vmem:[%s241 + $0x540] sm:$0xff]
        %v418 = vld [vmem:[%s241 + $0x548] sm:$0xff]
        %v419 = vld [vmem:[%s241 + $0x550] sm:$0xff]
        %v420 = vld [vmem:[%s241 + $0x558] sm:$0xff]
        %v421 = vld [vmem:[%s241 + $0x560] sm:$0xff]
        %v422 = vld [vmem:[%s241 + $0x568] sm:$0xff]
        %v423 = vld [vmem:[%s241 + $0x570] sm:$0xff]
        %v424 = vld [vmem:[%s241 + $0x578] sm:$0xff]
        %v425 = vld [vmem:[%s241 + $0x580] sm:$0xff]
        %v426 = vld [vmem:[%s241 + $0x588] sm:$0xff]
        %v427 = vld [vmem:[%s241 + $0x590] sm:$0xff]
        %v428 = vld [vmem:[%s241 + $0x598] sm:$0xff]
        %v429 = vld [vmem:[%s241 + $0x5a0] sm:$0xff]
        %v430 = vld [vmem:[%s241 + $0x5a8] sm:$0xff]
        %v431 = vld [vmem:[%s241 + $0x5b0] sm:$0xff]
        %v432 = vld [vmem:[%s241 + $0x5b8] sm:$0xff]
        %v433 = vld [vmem:[%s241 + $0x5c0] sm:$0xff]
        %v434 = vld [vmem:[%s241 + $0x5c8] sm:$0xff]
        %v435 = vld [vmem:[%s241 + $0x5d0] sm:$0xff]
        %v436 = vld [vmem:[%s241 + $0x5d8] sm:$0xff]
        %v437 = vld [vmem:[%s241 + $0x5e0] sm:$0xff]
        %v438 = vld [vmem:[%s241 + $0x5e8] sm:$0xff]
        %v439 = vld [vmem:[%s241 + $0x5f0] sm:$0xff]
        %v440 = vld [vmem:[%s241 + $0x5f8] sm:$0xff]
        %v441 = vld [vmem:[%s241 + $0x600] sm:$0xff]
        %v442 = vld [vmem:[%s241 + $0x608] sm:$0xff]
        %v443 = vld [vmem:[%s241 + $0x610] sm:$0xff]
        %v444 = vld [vmem:[%s241 + $0x618] sm:$0xff]
        %v445 = vld [vmem:[%s241 + $0x620] sm:$0xff]
        %v446 = vld [vmem:[%s241 + $0x628] sm:$0xff]
        %v447 = vld [vmem:[%s241 + $0x630] sm:$0xff]
        %v448 = vld [vmem:[%s241 + $0x638] sm:$0xff]
        %v449 = vld [vmem:[%s241 + $0x640] sm:$0xff]
        %v450 = vld [vmem:[%s241 + $0x648] sm:$0xff]
        %v451 = vld [vmem:[%s241 + $0x650] sm:$0xff]
        %v452 = vld [vmem:[%s241 + $0x658] sm:$0xff]
        %v453 = vld [vmem:[%s241 + $0x660] sm:$0xff]
        %v454 = vld [vmem:[%s241 + $0x668] sm:$0xff]
        %v455 = vld [vmem:[%s241 + $0x670] sm:$0xff]
        %v456 = vld [vmem:[%s241 + $0x678] sm:$0xff]
        %v457 = vld [vmem:[%s241 + $0x680] sm:$0xff]
        %v458 = vld [vmem:[%s241 + $0x688] sm:$0xff]
        %v459 = vld [vmem:[%s241 + $0x690] sm:$0xff]
        %v460 = vld [vmem:[%s241 + $0x698] sm:$0xff]
        %v461 = vld [vmem:[%s241 + $0x6a0] sm:$0xff]
        %v462 = vld [vmem:[%s241 + $0x6a8] sm:$0xff]
        %v463 = vld [vmem:[%s241 + $0x6b0] sm:$0xff]
        %v464 = vld [vmem:[%s241 + $0x6b8] sm:$0xff]
        %v465 = vld [vmem:[%s241 + $0x6c0] sm:$0xff]
        %v466 = vld [vmem:[%s241 + $0x6c8] sm:$0xff]
        %v467 = vld [vmem:[%s241 + $0x6d0] sm:$0xff]
        %v468 = vld [vmem:[%s241 + $0x6d8] sm:$0xff]
        %v469 = vld [vmem:[%s241 + $0x6e0] sm:$0xff]
        %v470 = vld [vmem:[%s241 + $0x6e8] sm:$0xff]
        %v471 = vld [vmem:[%s241 + $0x6f0] sm:$0xff]
        %v472 = vld [vmem:[%s241 + $0x6f8] sm:$0xff]
        %v473 = vld [vmem:[%s241 + $0x700] sm:$0xff]
        %v474 = vld [vmem:[%s241 + $0x708] sm:$0xff]
        %v475 = vld [vmem:[%s241 + $0x710] sm:$0xff]
        %v476 = vld [vmem:[%s241 + $0x718] sm:$0xff]
        %v477 = vld [vmem:[%s241 + $0x720] sm:$0xff]
        %v478 = vld [vmem:[%s241 + $0x728] sm:$0xff]
        %v479 = vld [vmem:[%s241 + $0x730] sm:$0xff]
        %v480 = vld [vmem:[%s241 + $0x738] sm:$0xff]
        %v481 = vld [vmem:[%s241 + $0x740] sm:$0xff]
        %v482 = vld [vmem:[%s241 + $0x748] sm:$0xff]
        %v483 = vld [vmem:[%s241 + $0x750] sm:$0xff]
        %v484 = vld [vmem:[%s241 + $0x758] sm:$0xff]
        %v485 = vld [vmem:[%s241 + $0x760] sm:$0xff]
        %v486 = vld [vmem:[%s241 + $0x768] sm:$0xff]
        %v487 = vld [vmem:[%s241 + $0x770] sm:$0xff]
        %v488 = vld [vmem:[%s241 + $0x778] sm:$0xff]
        %v489 = vld [vmem:[%s241 + $0x780] sm:$0xff]
        %v490 = vld [vmem:[%s241 + $0x788] sm:$0xff]
        %v491 = vld [vmem:[%s241 + $0x790] sm:$0xff]
        %v492 = vld [vmem:[%s241 + $0x798] sm:$0xff]
        %v493 = vld [vmem:[%s241 + $0x7a0] sm:$0xff]
        %v494 = vld [vmem:[%s241 + $0x7a8] sm:$0xff]
        %v495 = vld [vmem:[%s241 + $0x7b0] sm:$0xff]
        %v496 = vld [vmem:[%s241 + $0x7b8] sm:$0xff]
        %v497 = vld [vmem:[%s241 + $0x7c0] sm:$0xff]
        %v498 = vld [vmem:[%s241 + $0x7c8] sm:$0xff]
        %v499 = vld [vmem:[%s241 + $0x7d0] sm:$0xff]
        %v500 = vld [vmem:[%s241 + $0x7d8] sm:$0xff]
        %v501 = vld [vmem:[%s241 + $0x7e0] sm:$0xff]
        %v502 = vld [vmem:[%s241 + $0x7e8] sm:$0xff]
        %v503 = vld [vmem:[%s241 + $0x7f0] sm:$0xff]
        %v504 = vld [vmem:[%s241 + $0x7f8] sm:$0xff]
        %v505 = vld [vmem:[%s247] sm:$0xff]
        %v506 = vld [vmem:[%s247 + $0x8] sm:$0xff]
        %v507 = vld [vmem:[%s247 + $0x10] sm:$0xff]
        %v508 = vld [vmem:[%s247 + $0x18] sm:$0xff]
        %v509 = vld [vmem:[%s247 + $0x20] sm:$0xff]
        %v510 = vld [vmem:[%s247 + $0x28] sm:$0xff]
        %v511 = vld [vmem:[%s247 + $0x30] sm:$0xff]
        %v512 = vld [vmem:[%s247 + $0x38] sm:$0xff]
        %v513 = vld [vmem:[%s247 + $0x40] sm:$0xff]
        %v514 = vld [vmem:[%s247 + $0x48] sm:$0xff]
        %v515 = vld [vmem:[%s247 + $0x50] sm:$0xff]
        %v516 = vld [vmem:[%s247 + $0x58] sm:$0xff]
        %v517 = vld [vmem:[%s247 + $0x60] sm:$0xff]
        %v518 = vld [vmem:[%s247 + $0x68] sm:$0xff]
        %v519 = vld [vmem:[%s247 + $0x70] sm:$0xff]
        %v520 = vld [vmem:[%s247 + $0x78] sm:$0xff]
        %v521 = vld [vmem:[%s2] sm:$0xf]
        %v522 = vld [vmem:[%s3] sm:$0xf]
        %v523 = vld [vmem:[%s4] sm:$0x3]
        %vm524 = vcmask 31744
        %v526 = vsel %vm524, %v249, 0
        %v529 = vsel %vm524, %v250, 0
        %v532 = vsel %vm524, %v251, 0
        %v535 = vsel %vm524, %v252, 0
        %v538 = vsel %vm524, %v253, 0
        %v541 = vsel %vm524, %v254, 0
        %v544 = vsel %vm524, %v255, 0
        %v547 = vsel %vm524, %v256, 0
        %v550 = vsel %vm524, %v257, 0
        %v553 = vsel %vm524, %v258, 0
        %v556 = vsel %vm524, %v259, 0
        %v559 = vsel %vm524, %v260, 0
        %v562 = vsel %vm524, %v261, 0
        %v565 = vsel %vm524, %v262, 0
        %v568 = vsel %vm524, %v263, 0
        %v571 = vsel %vm524, %v264, 0
        %v574 = vsel %vm524, %v265, 0
        %v577 = vsel %vm524, %v266, 0
        %v580 = vsel %vm524, %v267, 0
        %v583 = vsel %vm524, %v268, 0
        %v586 = vsel %vm524, %v269, 0
        %v589 = vsel %vm524, %v270, 0
        %v592 = vsel %vm524, %v271, 0
        %v595 = vsel %vm524, %v272, 0
        %v598 = vsel %vm524, %v273, 0
        %v601 = vsel %vm524, %v274, 0
        %v604 = vsel %vm524, %v275, 0
        %v607 = vsel %vm524, %v276, 0
        %v610 = vsel %vm524, %v277, 0
        %v613 = vsel %vm524, %v278, 0
        %v616 = vsel %vm524, %v279, 0
        %v619 = vsel %vm524, %v280, 0
        %v622 = vsel %vm524, %v281, 0
        %v625 = vsel %vm524, %v282, 0
        %v628 = vsel %vm524, %v283, 0
        %v631 = vsel %vm524, %v284, 0
        %v634 = vsel %vm524, %v285, 0
        %v637 = vsel %vm524, %v286, 0
        %v640 = vsel %vm524, %v287, 0
        %v643 = vsel %vm524, %v288, 0
        %v646 = vsel %vm524, %v289, 0
        %v649 = vsel %vm524, %v290, 0
        %v652 = vsel %vm524, %v291, 0
        %v655 = vsel %vm524, %v292, 0
        %v658 = vsel %vm524, %v293, 0
        %v661 = vsel %vm524, %v294, 0
        %v664 = vsel %vm524, %v295, 0
        %v667 = vsel %vm524, %v296, 0
        %v670 = vsel %vm524, %v297, 0
        %v673 = vsel %vm524, %v298, 0
        %v676 = vsel %vm524, %v299, 0
        %v679 = vsel %vm524, %v300, 0
        %v682 = vsel %vm524, %v301, 0
        %v685 = vsel %vm524, %v302, 0
        %v688 = vsel %vm524, %v303, 0
        %v691 = vsel %vm524, %v304, 0
        %v694 = vsel %vm524, %v305, 0
        %v697 = vsel %vm524, %v306, 0
        %v700 = vsel %vm524, %v307, 0
        %v703 = vsel %vm524, %v308, 0
        %v706 = vsel %vm524, %v309, 0
        %v709 = vsel %vm524, %v310, 0
        %v712 = vsel %vm524, %v311, 0
        %v715 = vsel %vm524, %v312, 0
        %v718 = vsel %vm524, %v313, 0
        %v721 = vsel %vm524, %v314, 0
        %v724 = vsel %vm524, %v315, 0
        %v727 = vsel %vm524, %v316, 0
        %v730 = vsel %vm524, %v317, 0
        %v733 = vsel %vm524, %v318, 0
        %v736 = vsel %vm524, %v319, 0
        %v739 = vsel %vm524, %v320, 0
        %v742 = vsel %vm524, %v321, 0
        %v745 = vsel %vm524, %v322, 0
        %v748 = vsel %vm524, %v323, 0
        %v751 = vsel %vm524, %v324, 0
        %v754 = vsel %vm524, %v325, 0
        %v757 = vsel %vm524, %v326, 0
        %v760 = vsel %vm524, %v327, 0
        %v763 = vsel %vm524, %v328, 0
        %v766 = vsel %vm524, %v329, 0
        %v769 = vsel %vm524, %v330, 0
        %v772 = vsel %vm524, %v331, 0
        %v775 = vsel %vm524, %v332, 0
        %v778 = vsel %vm524, %v333, 0
        %v781 = vsel %vm524, %v334, 0
        %v784 = vsel %vm524, %v335, 0
        %v787 = vsel %vm524, %v336, 0
        %v790 = vsel %vm524, %v337, 0
        %v793 = vsel %vm524, %v338, 0
        %v796 = vsel %vm524, %v339, 0
        %v799 = vsel %vm524, %v340, 0
        %v802 = vsel %vm524, %v341, 0
        %v805 = vsel %vm524, %v342, 0
        %v808 = vsel %vm524, %v343, 0
        %v811 = vsel %vm524, %v344, 0
        %v814 = vsel %vm524, %v345, 0
        %v817 = vsel %vm524, %v346, 0
        %v820 = vsel %vm524, %v347, 0
        %v823 = vsel %vm524, %v348, 0
        %v826 = vsel %vm524, %v349, 0
        %v829 = vsel %vm524, %v350, 0
        %v832 = vsel %vm524, %v351, 0
        %v835 = vsel %vm524, %v352, 0
        %v838 = vsel %vm524, %v353, 0
        %v841 = vsel %vm524, %v354, 0
        %v844 = vsel %vm524, %v355, 0
        %v847 = vsel %vm524, %v356, 0
        %v850 = vsel %vm524, %v357, 0
        %v853 = vsel %vm524, %v358, 0
        %v856 = vsel %vm524, %v359, 0
        %v859 = vsel %vm524, %v360, 0
        %v862 = vsel %vm524, %v361, 0
        %v865 = vsel %vm524, %v362, 0
        %v868 = vsel %vm524, %v363, 0
        %v871 = vsel %vm524, %v364, 0
        %v874 = vsel %vm524, %v365, 0
        %v877 = vsel %vm524, %v366, 0
        %v880 = vsel %vm524, %v367, 0
        %v883 = vsel %vm524, %v368, 0
        %v886 = vsel %vm524, %v369, 0
        %v889 = vsel %vm524, %v370, 0
        %v892 = vsel %vm524, %v371, 0
        %v895 = vsel %vm524, %v372, 0
        %v898 = vsel %vm524, %v373, 0
        %v901 = vsel %vm524, %v374, 0
        %v904 = vsel %vm524, %v375, 0
        %v907 = vsel %vm524, %v376, 0
        %v910 = vsel %vm524, %v377, 0
        %v913 = vsel %vm524, %v378, 0
        %v916 = vsel %vm524, %v379, 0
        %v919 = vsel %vm524, %v380, 0
        %v922 = vsel %vm524, %v381, 0
        %v925 = vsel %vm524, %v382, 0
        %v928 = vsel %vm524, %v383, 0
        %v931 = vsel %vm524, %v384, 0
        %v934 = vsel %vm524, %v385, 0
        %v937 = vsel %vm524, %v386, 0
        %v940 = vsel %vm524, %v387, 0
        %v943 = vsel %vm524, %v388, 0
        %v946 = vsel %vm524, %v389, 0
        %v949 = vsel %vm524, %v390, 0
        %v952 = vsel %vm524, %v391, 0
        %v955 = vsel %vm524, %v392, 0
        %v958 = vsel %vm524, %v393, 0
        %v961 = vsel %vm524, %v394, 0
        %v964 = vsel %vm524, %v395, 0
        %v967 = vsel %vm524, %v396, 0
        %v970 = vsel %vm524, %v397, 0
        %v973 = vsel %vm524, %v398, 0
        %v976 = vsel %vm524, %v399, 0
        %v979 = vsel %vm524, %v400, 0
        %v982 = vsel %vm524, %v401, 0
        %v985 = vsel %vm524, %v402, 0
        %v988 = vsel %vm524, %v403, 0
        %v991 = vsel %vm524, %v404, 0
        %v994 = vsel %vm524, %v405, 0
        %v997 = vsel %vm524, %v406, 0
        %v1000 = vsel %vm524, %v407, 0
        %v1003 = vsel %vm524, %v408, 0
        %v1006 = vsel %vm524, %v409, 0
        %v1009 = vsel %vm524, %v410, 0
        %v1012 = vsel %vm524, %v411, 0
        %v1015 = vsel %vm524, %v412, 0
        %v1018 = vsel %vm524, %v413, 0
        %v1021 = vsel %vm524, %v414, 0
        %v1024 = vsel %vm524, %v415, 0
        %v1027 = vsel %vm524, %v416, 0
        %v1030 = vsel %vm524, %v417, 0
        %v1033 = vsel %vm524, %v418, 0
        %v1036 = vsel %vm524, %v419, 0
        %v1039 = vsel %vm524, %v420, 0
        %v1042 = vsel %vm524, %v421, 0
        %v1045 = vsel %vm524, %v422, 0
        %v1048 = vsel %vm524, %v423, 0
        %v1051 = vsel %vm524, %v424, 0
        %v1054 = vsel %vm524, %v425, 0
        %v1057 = vsel %vm524, %v426, 0
        %v1060 = vsel %vm524, %v427, 0
        %v1063 = vsel %vm524, %v428, 0
        %v1066 = vsel %vm524, %v429, 0
        %v1069 = vsel %vm524, %v430, 0
        %v1072 = vsel %vm524, %v431, 0
        %v1075 = vsel %vm524, %v432, 0
        %v1078 = vsel %vm524, %v433, 0
        %v1081 = vsel %vm524, %v434, 0
        %v1084 = vsel %vm524, %v435, 0
        %v1087 = vsel %vm524, %v436, 0
        %v1090 = vsel %vm524, %v437, 0
        %v1093 = vsel %vm524, %v438, 0
        %v1096 = vsel %vm524, %v439, 0
        %v1099 = vsel %vm524, %v440, 0
        %v1102 = vsel %vm524, %v441, 0
        %v1105 = vsel %vm524, %v442, 0
        %v1108 = vsel %vm524, %v443, 0
        %v1111 = vsel %vm524, %v444, 0
        %v1114 = vsel %vm524, %v445, 0
        %v1117 = vsel %vm524, %v446, 0
        %v1120 = vsel %vm524, %v447, 0
        %v1123 = vsel %vm524, %v448, 0
        %v1126 = vsel %vm524, %v449, 0
        %v1129 = vsel %vm524, %v450, 0
        %v1132 = vsel %vm524, %v451, 0
        %v1135 = vsel %vm524, %v452, 0
        %v1138 = vsel %vm524, %v453, 0
        %v1141 = vsel %vm524, %v454, 0
        %v1144 = vsel %vm524, %v455, 0
        %v1147 = vsel %vm524, %v456, 0
        %v1150 = vsel %vm524, %v457, 0
        %v1153 = vsel %vm524, %v458, 0
        %v1156 = vsel %vm524, %v459, 0
        %v1159 = vsel %vm524, %v460, 0
        %v1162 = vsel %vm524, %v461, 0
        %v1165 = vsel %vm524, %v462, 0
        %v1168 = vsel %vm524, %v463, 0
        %v1171 = vsel %vm524, %v464, 0
        %v1174 = vsel %vm524, %v465, 0
        %v1177 = vsel %vm524, %v466, 0
        %v1180 = vsel %vm524, %v467, 0
        %v1183 = vsel %vm524, %v468, 0
        %v1186 = vsel %vm524, %v469, 0
        %v1189 = vsel %vm524, %v470, 0
        %v1192 = vsel %vm524, %v471, 0
        %v1195 = vsel %vm524, %v472, 0
        %v1198 = vsel %vm524, %v473, 0
        %v1201 = vsel %vm524, %v474, 0
        %v1204 = vsel %vm524, %v475, 0
        %v1207 = vsel %vm524, %v476, 0
        %v1210 = vsel %vm524, %v477, 0
        %v1213 = vsel %vm524, %v478, 0
        %v1216 = vsel %vm524, %v479, 0
        %v1219 = vsel %vm524, %v480, 0
        %v1222 = vsel %vm524, %v481, 0
        %v1225 = vsel %vm524, %v482, 0
        %v1228 = vsel %vm524, %v483, 0
        %v1231 = vsel %vm524, %v484, 0
        %v1234 = vsel %vm524, %v485, 0
        %v1237 = vsel %vm524, %v486, 0
        %v1240 = vsel %vm524, %v487, 0
        %v1243 = vsel %vm524, %v488, 0
        %v1246 = vsel %vm524, %v489, 0
        %v1249 = vsel %vm524, %v490, 0
        %v1252 = vsel %vm524, %v491, 0
        %v1255 = vsel %vm524, %v492, 0
        %v1258 = vsel %vm524, %v493, 0
        %v1261 = vsel %vm524, %v494, 0
        %v1264 = vsel %vm524, %v495, 0
        %v1267 = vsel %vm524, %v496, 0
        %v1270 = vsel %vm524, %v497, 0
        %v1273 = vsel %vm524, %v498, 0
        %v1276 = vsel %vm524, %v499, 0
        %v1279 = vsel %vm524, %v500, 0
        %v1282 = vsel %vm524, %v501, 0
        %v1285 = vsel %vm524, %v502, 0
        %v1288 = vsel %vm524, %v503, 0
        %v1291 = vsel %vm524, %v504, 0
        %vm1293 = vcmask 1043456
        %v1295 = vsel %vm1293, %v521, 0
        %1297 = vmatprep.subr.mxu0 0.0
        %1298 = vmatpush1.msra.mxu0 0.0
        %1299 = vmatprep.subr.mxu0 0.0
        %1300 = vmatpush1.msra.mxu0 0.0
        %1301 = vmatprep.subr.mxu0 0.0
        %1302 = vmatpush1.msra.mxu0 0.0
        %1303 = vmatprep.subr.mxu0 0.0
        %1304 = vmatpush1.msra.mxu0 0.0
        %1305 = vmatprep.subr.mxu0 0.0
        %1306 = vmatpush1.msra.mxu0 0.0
        %1307 = vmatprep.subr.mxu0 0.0
        %1308 = vmatpush1.msra.mxu0 0.0
        %1309 = vmatprep.subr.mxu0 0.0
        %1310 = vmatpush1.msra.mxu0 0.0
        %1311 = vmatprep.subr.mxu0 0.0
        %1312 = vmatpush1.msra.mxu0 0.0
        %1313 = vmatprep.subr.mxu0 0.0
        %1314 = vmatpush1.msra.mxu0 0.0
        %1315 = vmatprep.subr.mxu0 0.0
        %1316 = vmatpush1.msra.mxu0 0.0
        %1317 = vmatprep.subr.mxu0 0.0
        %1318 = vmatpush1.msra.mxu0 0.0
        %1319 = vmatprep.subr.mxu0 0.0
        %1320 = vmatpush1.msra.mxu0 0.0
        %1321 = vmatprep.subr.mxu0 0.0
        %1322 = vmatpush1.msra.mxu0 0.0
        %1323 = vmatprep.subr.mxu0 0.0
        %1324 = vmatpush1.msra.mxu0 0.0
        %1325 = vmatprep.subr.mxu0 0.0
        %1326 = vmatpush1.msra.mxu0 0.0
        %1327 = vmatprep.subr.mxu0 0.0
        %1328 = vmatpush1.msra.mxu0 %v1295
        %1329 = vmatprep.subr.mxu0 0.0
        %1330 = vmatpush2.msra.mxu0 0.0
        %1331 = vmatprep.subr.mxu0 0.0
        %1332 = vmatpush2.msra.mxu0 0.0
        %1333 = vmatprep.subr.mxu0 0.0
        %1334 = vmatpush2.msra.mxu0 0.0
        %1335 = vmatprep.subr.mxu0 0.0
        %1336 = vmatpush2.msra.mxu0 0.0
        %1337 = vmatprep.subr.mxu0 0.0
        %1338 = vmatpush2.msra.mxu0 0.0
        %1339 = vmatprep.subr.mxu0 0.0
        %1340 = vmatpush2.msra.mxu0 0.0
        %1341 = vmatprep.subr.mxu0 0.0
        %1342 = vmatpush2.msra.mxu0 0.0
        %1343 = vmatprep.subr.mxu0 0.0
        %1344 = vmatpush2.msra.mxu0 0.0
        %1345 = vmatprep.subr.mxu0 0.0
        %1346 = vmatpush2.msra.mxu0 0.0
        %1347 = vmatprep.subr.mxu0 0.0
        %1348 = vmatpush2.msra.mxu0 0.0
        %1349 = vmatprep.subr.mxu0 0.0
        %1350 = vmatpush2.msra.mxu0 0.0
        %1351 = vmatprep.subr.mxu0 0.0
        %1352 = vmatpush2.msra.mxu0 0.0
        %1353 = vmatprep.subr.mxu0 0.0
        %1354 = vmatpush2.msra.mxu0 0.0
        %1355 = vmatprep.subr.mxu0 0.0
        %1356 = vmatpush2.msra.mxu0 0.0
        %1357 = vmatprep.subr.mxu0 0.0
        %1358 = vmatpush2.msra.mxu0 0.0
        %1359 = vmatprep.subr.mxu0 0.0
        %1360 = vmatpush2.msra.mxu0 0.0
        %1361 = vmatprep.mubr.f32.mxu0 0.0
        %1362 = vmatmul.mubr.f32.gmra.mxu0 %v526
        %v1363 = vpop.f32.mrf.mxu0
        %v1364 = vadd.f32 0.0, %v1363
        %v1365 = vpop.f32.mrf.mxu0
        %1366 = vmatprep.mubr.f32.mxu0 0.0
        %1367 = vmatmul.mubr.f32.gmra.mxu0 %v529
        %v1368 = vpop.f32.mrf.mxu0
        %v1369 = vadd.f32 0.0, %v1368
        %v1370 = vpop.f32.mrf.mxu0
        %1371 = vmatprep.mubr.f32.mxu0 0.0
        %1372 = vmatmul.mubr.f32.gmra.mxu0 %v532
        %v1373 = vpop.f32.mrf.mxu0
        %v1374 = vadd.f32 0.0, %v1373
        %v1375 = vpop.f32.mrf.mxu0
        %1376 = vmatprep.mubr.f32.mxu0 0.0
        %1377 = vmatmul.mubr.f32.gmra.mxu0 %v535
        %v1378 = vpop.f32.mrf.mxu0
        %v1379 = vadd.f32 0.0, %v1378
        %v1380 = vpop.f32.mrf.mxu0
        %1381 = vmatprep.mubr.f32.mxu0 0.0
        %1382 = vmatmul.mubr.f32.gmra.mxu0 %v538
        %v1383 = vpop.f32.mrf.mxu0
        %v1384 = vadd.f32 0.0, %v1383
        %v1385 = vpop.f32.mrf.mxu0
        %1386 = vmatprep.mubr.f32.mxu0 0.0
        %1387 = vmatmul.mubr.f32.gmra.mxu0 %v541
        %v1388 = vpop.f32.mrf.mxu0
        %v1389 = vadd.f32 0.0, %v1388
        %v1390 = vpop.f32.mrf.mxu0
        %1391 = vmatprep.mubr.f32.mxu0 0.0
        %1392 = vmatmul.mubr.f32.gmra.mxu0 %v544
        %v1393 = vpop.f32.mrf.mxu0
        %v1394 = vadd.f32 0.0, %v1393
        %v1395 = vpop.f32.mrf.mxu0
        %1396 = vmatprep.mubr.f32.mxu0 0.0
        %1397 = vmatmul.mubr.f32.gmra.mxu0 %v547
        %v1398 = vpop.f32.mrf.mxu0
        %v1399 = vadd.f32 0.0, %v1398
        %v1400 = vpop.f32.mrf.mxu0
        %1401 = vmatprep.mubr.f32.mxu0 0.0
        %1402 = vmatmul.mubr.f32.gmra.mxu0 %v550
        %v1403 = vpop.f32.mrf.mxu0
        %v1404 = vadd.f32 0.0, %v1403
        %v1405 = vpop.f32.mrf.mxu0
        %1406 = vmatprep.mubr.f32.mxu0 0.0
        %1407 = vmatmul.mubr.f32.gmra.mxu0 %v553
        %v1408 = vpop.f32.mrf.mxu0
        %v1409 = vadd.f32 0.0, %v1408
        %v1410 = vpop.f32.mrf.mxu0
        %1411 = vmatprep.mubr.f32.mxu0 0.0
        %1412 = vmatmul.mubr.f32.gmra.mxu0 %v556
        %v1413 = vpop.f32.mrf.mxu0
        %v1414 = vadd.f32 0.0, %v1413
        %v1415 = vpop.f32.mrf.mxu0
        %1416 = vmatprep.mubr.f32.mxu0 0.0
        %1417 = vmatmul.mubr.f32.gmra.mxu0 %v559
        %v1418 = vpop.f32.mrf.mxu0
        %v1419 = vadd.f32 0.0, %v1418
        %v1420 = vpop.f32.mrf.mxu0
        %1421 = vmatprep.mubr.f32.mxu0 0.0
        %1422 = vmatmul.mubr.f32.gmra.mxu0 %v562
        %v1423 = vpop.f32.mrf.mxu0
        %v1424 = vadd.f32 0.0, %v1423
        %v1425 = vpop.f32.mrf.mxu0
        %1426 = vmatprep.mubr.f32.mxu0 0.0
        %1427 = vmatmul.mubr.f32.gmra.mxu0 %v565
        %v1428 = vpop.f32.mrf.mxu0
        %v1429 = vadd.f32 0.0, %v1428
        %v1430 = vpop.f32.mrf.mxu0
        %1431 = vmatprep.mubr.f32.mxu0 0.0
        %1432 = vmatmul.mubr.f32.gmra.mxu0 %v568
        %v1433 = vpop.f32.mrf.mxu0
        %v1434 = vadd.f32 0.0, %v1433
        %v1435 = vpop.f32.mrf.mxu0
        %1436 = vmatprep.mubr.f32.mxu0 0.0
        %1437 = vmatmul.mubr.f32.gmra.mxu0 %v571
        %v1438 = vpop.f32.mrf.mxu0
        %v1439 = vadd.f32 0.0, %v1438
        %v1440 = vpop.f32.mrf.mxu0
        %1441 = vmatprep.mubr.f32.mxu0 0.0
        %1442 = vmatmul.mubr.f32.gmra.mxu0 %v574
        %v1443 = vpop.f32.mrf.mxu0
        %v1444 = vadd.f32 0.0, %v1443
        %v1445 = vpop.f32.mrf.mxu0
        %1446 = vmatprep.mubr.f32.mxu0 0.0
        %1447 = vmatmul.mubr.f32.gmra.mxu0 %v577
        %v1448 = vpop.f32.mrf.mxu0
        %v1449 = vadd.f32 0.0, %v1448
        %v1450 = vpop.f32.mrf.mxu0
        %1451 = vmatprep.mubr.f32.mxu0 0.0
        %1452 = vmatmul.mubr.f32.gmra.mxu0 %v580
        %v1453 = vpop.f32.mrf.mxu0
        %v1454 = vadd.f32 0.0, %v1453
        %v1455 = vpop.f32.mrf.mxu0
        %1456 = vmatprep.mubr.f32.mxu0 0.0
        %1457 = vmatmul.mubr.f32.gmra.mxu0 %v583
        %v1458 = vpop.f32.mrf.mxu0
        %v1459 = vadd.f32 0.0, %v1458
        %v1460 = vpop.f32.mrf.mxu0
        %1461 = vmatprep.mubr.f32.mxu0 0.0
        %1462 = vmatmul.mubr.f32.gmra.mxu0 %v586
        %v1463 = vpop.f32.mrf.mxu0
        %v1464 = vadd.f32 0.0, %v1463
        %v1465 = vpop.f32.mrf.mxu0
        %1466 = vmatprep.mubr.f32.mxu0 0.0
        %1467 = vmatmul.mubr.f32.gmra.mxu0 %v589
        %v1468 = vpop.f32.mrf.mxu0
        %v1469 = vadd.f32 0.0, %v1468
        %v1470 = vpop.f32.mrf.mxu0
        %1471 = vmatprep.mubr.f32.mxu0 0.0
        %1472 = vmatmul.mubr.f32.gmra.mxu0 %v592
        %v1473 = vpop.f32.mrf.mxu0
        %v1474 = vadd.f32 0.0, %v1473
        %v1475 = vpop.f32.mrf.mxu0
        %1476 = vmatprep.mubr.f32.mxu0 0.0
        %1477 = vmatmul.mubr.f32.gmra.mxu0 %v595
        %v1478 = vpop.f32.mrf.mxu0
        %v1479 = vadd.f32 0.0, %v1478
        %v1480 = vpop.f32.mrf.mxu0
        %1481 = vmatprep.mubr.f32.mxu0 0.0
        %1482 = vmatmul.mubr.f32.gmra.mxu0 %v598
        %v1483 = vpop.f32.mrf.mxu0
        %v1484 = vadd.f32 0.0, %v1483
        %v1485 = vpop.f32.mrf.mxu0
        %1486 = vmatprep.mubr.f32.mxu0 0.0
        %1487 = vmatmul.mubr.f32.gmra.mxu0 %v601
        %v1488 = vpop.f32.mrf.mxu0
        %v1489 = vadd.f32 0.0, %v1488
        %v1490 = vpop.f32.mrf.mxu0
        %1491 = vmatprep.mubr.f32.mxu0 0.0
        %1492 = vmatmul.mubr.f32.gmra.mxu0 %v604
        %v1493 = vpop.f32.mrf.mxu0
        %v1494 = vadd.f32 0.0, %v1493
        %v1495 = vpop.f32.mrf.mxu0
        %1496 = vmatprep.mubr.f32.mxu0 0.0
        %1497 = vmatmul.mubr.f32.gmra.mxu0 %v607
        %v1498 = vpop.f32.mrf.mxu0
        %v1499 = vadd.f32 0.0, %v1498
        %v1500 = vpop.f32.mrf.mxu0
        %1501 = vmatprep.mubr.f32.mxu0 0.0
        %1502 = vmatmul.mubr.f32.gmra.mxu0 %v610
        %v1503 = vpop.f32.mrf.mxu0
        %v1504 = vadd.f32 0.0, %v1503
        %v1505 = vpop.f32.mrf.mxu0
        %1506 = vmatprep.mubr.f32.mxu0 0.0
        %1507 = vmatmul.mubr.f32.gmra.mxu0 %v613
        %v1508 = vpop.f32.mrf.mxu0
        %v1509 = vadd.f32 0.0, %v1508
        %v1510 = vpop.f32.mrf.mxu0
        %1511 = vmatprep.mubr.f32.mxu0 0.0
        %1512 = vmatmul.mubr.f32.gmra.mxu0 %v616
        %v1513 = vpop.f32.mrf.mxu0
        %v1514 = vadd.f32 0.0, %v1513
        %v1515 = vpop.f32.mrf.mxu0
        %1516 = vmatprep.mubr.f32.mxu0 0.0
        %1517 = vmatmul.mubr.f32.gmra.mxu0 %v619
        %v1518 = vpop.f32.mrf.mxu0
        %v1519 = vadd.f32 0.0, %v1518
        %v1520 = vpop.f32.mrf.mxu0
        %1521 = vmatprep.mubr.f32.mxu0 0.0
        %1522 = vmatmul.mubr.f32.gmra.mxu0 %v622
        %v1523 = vpop.f32.mrf.mxu0
        %v1524 = vadd.f32 0.0, %v1523
        %v1525 = vpop.f32.mrf.mxu0
        %1526 = vmatprep.mubr.f32.mxu0 0.0
        %1527 = vmatmul.mubr.f32.gmra.mxu0 %v625
        %v1528 = vpop.f32.mrf.mxu0
        %v1529 = vadd.f32 0.0, %v1528
        %v1530 = vpop.f32.mrf.mxu0
        %1531 = vmatprep.mubr.f32.mxu0 0.0
        %1532 = vmatmul.mubr.f32.gmra.mxu0 %v628
        %v1533 = vpop.f32.mrf.mxu0
        %v1534 = vadd.f32 0.0, %v1533
        %v1535 = vpop.f32.mrf.mxu0
        %1536 = vmatprep.mubr.f32.mxu0 0.0
        %1537 = vmatmul.mubr.f32.gmra.mxu0 %v631
        %v1538 = vpop.f32.mrf.mxu0
        %v1539 = vadd.f32 0.0, %v1538
        %v1540 = vpop.f32.mrf.mxu0
        %1541 = vmatprep.mubr.f32.mxu0 0.0
        %1542 = vmatmul.mubr.f32.gmra.mxu0 %v634
        %v1543 = vpop.f32.mrf.mxu0
        %v1544 = vadd.f32 0.0, %v1543
        %v1545 = vpop.f32.mrf.mxu0
        %1546 = vmatprep.mubr.f32.mxu0 0.0
        %1547 = vmatmul.mubr.f32.gmra.mxu0 %v637
        %v1548 = vpop.f32.mrf.mxu0
        %v1549 = vadd.f32 0.0, %v1548
        %v1550 = vpop.f32.mrf.mxu0
        %1551 = vmatprep.mubr.f32.mxu0 0.0
        %1552 = vmatmul.mubr.f32.gmra.mxu0 %v640
        %v1553 = vpop.f32.mrf.mxu0
        %v1554 = vadd.f32 0.0, %v1553
        %v1555 = vpop.f32.mrf.mxu0
        %1556 = vmatprep.mubr.f32.mxu0 0.0
        %1557 = vmatmul.mubr.f32.gmra.mxu0 %v643
        %v1558 = vpop.f32.mrf.mxu0
        %v1559 = vadd.f32 0.0, %v1558
        %v1560 = vpop.f32.mrf.mxu0
        %1561 = vmatprep.mubr.f32.mxu0 0.0
        %1562 = vmatmul.mubr.f32.gmra.mxu0 %v646
        %v1563 = vpop.f32.mrf.mxu0
        %v1564 = vadd.f32 0.0, %v1563
        %v1565 = vpop.f32.mrf.mxu0
        %1566 = vmatprep.mubr.f32.mxu0 0.0
        %1567 = vmatmul.mubr.f32.gmra.mxu0 %v649
        %v1568 = vpop.f32.mrf.mxu0
        %v1569 = vadd.f32 0.0, %v1568
        %v1570 = vpop.f32.mrf.mxu0
        %1571 = vmatprep.mubr.f32.mxu0 0.0
        %1572 = vmatmul.mubr.f32.gmra.mxu0 %v652
        %v1573 = vpop.f32.mrf.mxu0
        %v1574 = vadd.f32 0.0, %v1573
        %v1575 = vpop.f32.mrf.mxu0
        %1576 = vmatprep.mubr.f32.mxu0 0.0
        %1577 = vmatmul.mubr.f32.gmra.mxu0 %v655
        %v1578 = vpop.f32.mrf.mxu0
        %v1579 = vadd.f32 0.0, %v1578
        %v1580 = vpop.f32.mrf.mxu0
        %1581 = vmatprep.mubr.f32.mxu0 0.0
        %1582 = vmatmul.mubr.f32.gmra.mxu0 %v658
        %v1583 = vpop.f32.mrf.mxu0
        %v1584 = vadd.f32 0.0, %v1583
        %v1585 = vpop.f32.mrf.mxu0
        %1586 = vmatprep.mubr.f32.mxu0 0.0
        %1587 = vmatmul.mubr.f32.gmra.mxu0 %v661
        %v1588 = vpop.f32.mrf.mxu0
        %v1589 = vadd.f32 0.0, %v1588
        %v1590 = vpop.f32.mrf.mxu0
        %1591 = vmatprep.mubr.f32.mxu0 0.0
        %1592 = vmatmul.mubr.f32.gmra.mxu0 %v664
        %v1593 = vpop.f32.mrf.mxu0
        %v1594 = vadd.f32 0.0, %v1593
        %v1595 = vpop.f32.mrf.mxu0
        %1596 = vmatprep.mubr.f32.mxu0 0.0
        %1597 = vmatmul.mubr.f32.gmra.mxu0 %v667
        %v1598 = vpop.f32.mrf.mxu0
        %v1599 = vadd.f32 0.0, %v1598
        %v1600 = vpop.f32.mrf.mxu0
        %1601 = vmatprep.mubr.f32.mxu0 0.0
        %1602 = vmatmul.mubr.f32.gmra.mxu0 %v670
        %v1603 = vpop.f32.mrf.mxu0
        %v1604 = vadd.f32 0.0, %v1603
        %v1605 = vpop.f32.mrf.mxu0
        %1606 = vmatprep.mubr.f32.mxu0 0.0
        %1607 = vmatmul.mubr.f32.gmra.mxu0 %v673
        %v1608 = vpop.f32.mrf.mxu0
        %v1609 = vadd.f32 0.0, %v1608
        %v1610 = vpop.f32.mrf.mxu0
        %1611 = vmatprep.mubr.f32.mxu0 0.0
        %1612 = vmatmul.mubr.f32.gmra.mxu0 %v676
        %v1613 = vpop.f32.mrf.mxu0
        %v1614 = vadd.f32 0.0, %v1613
        %v1615 = vpop.f32.mrf.mxu0
        %1616 = vmatprep.mubr.f32.mxu0 0.0
        %1617 = vmatmul.mubr.f32.gmra.mxu0 %v679
        %v1618 = vpop.f32.mrf.mxu0
        %v1619 = vadd.f32 0.0, %v1618
        %v1620 = vpop.f32.mrf.mxu0
        %1621 = vmatprep.mubr.f32.mxu0 0.0
        %1622 = vmatmul.mubr.f32.gmra.mxu0 %v682
        %v1623 = vpop.f32.mrf.mxu0
        %v1624 = vadd.f32 0.0, %v1623
        %v1625 = vpop.f32.mrf.mxu0
        %1626 = vmatprep.mubr.f32.mxu0 0.0
        %1627 = vmatmul.mubr.f32.gmra.mxu0 %v685
        %v1628 = vpop.f32.mrf.mxu0
        %v1629 = vadd.f32 0.0, %v1628
        %v1630 = vpop.f32.mrf.mxu0
        %1631 = vmatprep.mubr.f32.mxu0 0.0
        %1632 = vmatmul.mubr.f32.gmra.mxu0 %v688
        %v1633 = vpop.f32.mrf.mxu0
        %v1634 = vadd.f32 0.0, %v1633
        %v1635 = vpop.f32.mrf.mxu0
        %1636 = vmatprep.mubr.f32.mxu0 0.0
        %1637 = vmatmul.mubr.f32.gmra.mxu0 %v691
        %v1638 = vpop.f32.mrf.mxu0
        %v1639 = vadd.f32 0.0, %v1638
        %v1640 = vpop.f32.mrf.mxu0
        %1641 = vmatprep.mubr.f32.mxu0 0.0
        %1642 = vmatmul.mubr.f32.gmra.mxu0 %v694
        %v1643 = vpop.f32.mrf.mxu0
        %v1644 = vadd.f32 0.0, %v1643
        %v1645 = vpop.f32.mrf.mxu0
        %1646 = vmatprep.mubr.f32.mxu0 0.0
        %1647 = vmatmul.mubr.f32.gmra.mxu0 %v697
        %v1648 = vpop.f32.mrf.mxu0
        %v1649 = vadd.f32 0.0, %v1648
        %v1650 = vpop.f32.mrf.mxu0
        %1651 = vmatprep.mubr.f32.mxu0 0.0
        %1652 = vmatmul.mubr.f32.gmra.mxu0 %v700
        %v1653 = vpop.f32.mrf.mxu0
        %v1654 = vadd.f32 0.0, %v1653
        %v1655 = vpop.f32.mrf.mxu0
        %1656 = vmatprep.mubr.f32.mxu0 0.0
        %1657 = vmatmul.mubr.f32.gmra.mxu0 %v703
        %v1658 = vpop.f32.mrf.mxu0
        %v1659 = vadd.f32 0.0, %v1658
        %v1660 = vpop.f32.mrf.mxu0
        %1661 = vmatprep.mubr.f32.mxu0 0.0
        %1662 = vmatmul.mubr.f32.gmra.mxu0 %v706
        %v1663 = vpop.f32.mrf.mxu0
        %v1664 = vadd.f32 0.0, %v1663
        %v1665 = vpop.f32.mrf.mxu0
        %1666 = vmatprep.mubr.f32.mxu0 0.0
        %1667 = vmatmul.mubr.f32.gmra.mxu0 %v709
        %v1668 = vpop.f32.mrf.mxu0
        %v1669 = vadd.f32 0.0, %v1668
        %v1670 = vpop.f32.mrf.mxu0
        %1671 = vmatprep.mubr.f32.mxu0 0.0
        %1672 = vmatmul.mubr.f32.gmra.mxu0 %v712
        %v1673 = vpop.f32.mrf.mxu0
        %v1674 = vadd.f32 0.0, %v1673
        %v1675 = vpop.f32.mrf.mxu0
        %1676 = vmatprep.mubr.f32.mxu0 0.0
        %1677 = vmatmul.mubr.f32.gmra.mxu0 %v715
        %v1678 = vpop.f32.mrf.mxu0
        %v1679 = vadd.f32 0.0, %v1678
        %v1680 = vpop.f32.mrf.mxu0
        %1681 = vmatprep.mubr.f32.mxu0 0.0
        %1682 = vmatmul.mubr.f32.gmra.mxu0 %v718
        %v1683 = vpop.f32.mrf.mxu0
        %v1684 = vadd.f32 0.0, %v1683
        %v1685 = vpop.f32.mrf.mxu0
        %1686 = vmatprep.mubr.f32.mxu0 0.0
        %1687 = vmatmul.mubr.f32.gmra.mxu0 %v721
        %v1688 = vpop.f32.mrf.mxu0
        %v1689 = vadd.f32 0.0, %v1688
        %v1690 = vpop.f32.mrf.mxu0
        %1691 = vmatprep.mubr.f32.mxu0 0.0
        %1692 = vmatmul.mubr.f32.gmra.mxu0 %v724
        %v1693 = vpop.f32.mrf.mxu0
        %v1694 = vadd.f32 0.0, %v1693
        %v1695 = vpop.f32.mrf.mxu0
        %1696 = vmatprep.mubr.f32.mxu0 0.0
        %1697 = vmatmul.mubr.f32.gmra.mxu0 %v727
        %v1698 = vpop.f32.mrf.mxu0
        %v1699 = vadd.f32 0.0, %v1698
        %v1700 = vpop.f32.mrf.mxu0
        %1701 = vmatprep.mubr.f32.mxu0 0.0
        %1702 = vmatmul.mubr.f32.gmra.mxu0 %v730
        %v1703 = vpop.f32.mrf.mxu0
        %v1704 = vadd.f32 0.0, %v1703
        %v1705 = vpop.f32.mrf.mxu0
        %1706 = vmatprep.mubr.f32.mxu0 0.0
        %1707 = vmatmul.mubr.f32.gmra.mxu0 %v733
        %v1708 = vpop.f32.mrf.mxu0
        %v1709 = vadd.f32 0.0, %v1708
        %v1710 = vpop.f32.mrf.mxu0
        %1711 = vmatprep.mubr.f32.mxu0 0.0
        %1712 = vmatmul.mubr.f32.gmra.mxu0 %v736
        %v1713 = vpop.f32.mrf.mxu0
        %v1714 = vadd.f32 0.0, %v1713
        %v1715 = vpop.f32.mrf.mxu0
        %1716 = vmatprep.mubr.f32.mxu0 0.0
        %1717 = vmatmul.mubr.f32.gmra.mxu0 %v739
        %v1718 = vpop.f32.mrf.mxu0
        %v1719 = vadd.f32 0.0, %v1718
        %v1720 = vpop.f32.mrf.mxu0
        %1721 = vmatprep.mubr.f32.mxu0 0.0
        %1722 = vmatmul.mubr.f32.gmra.mxu0 %v742
        %v1723 = vpop.f32.mrf.mxu0
        %v1724 = vadd.f32 0.0, %v1723
        %v1725 = vpop.f32.mrf.mxu0
        %1726 = vmatprep.mubr.f32.mxu0 0.0
        %1727 = vmatmul.mubr.f32.gmra.mxu0 %v745
        %v1728 = vpop.f32.mrf.mxu0
        %v1729 = vadd.f32 0.0, %v1728
        %v1730 = vpop.f32.mrf.mxu0
        %1731 = vmatprep.mubr.f32.mxu0 0.0
        %1732 = vmatmul.mubr.f32.gmra.mxu0 %v748
        %v1733 = vpop.f32.mrf.mxu0
        %v1734 = vadd.f32 0.0, %v1733
        %v1735 = vpop.f32.mrf.mxu0
        %1736 = vmatprep.mubr.f32.mxu0 0.0
        %1737 = vmatmul.mubr.f32.gmra.mxu0 %v751
        %v1738 = vpop.f32.mrf.mxu0
        %v1739 = vadd.f32 0.0, %v1738
        %v1740 = vpop.f32.mrf.mxu0
        %1741 = vmatprep.mubr.f32.mxu0 0.0
        %1742 = vmatmul.mubr.f32.gmra.mxu0 %v754
        %v1743 = vpop.f32.mrf.mxu0
        %v1744 = vadd.f32 0.0, %v1743
        %v1745 = vpop.f32.mrf.mxu0
        %1746 = vmatprep.mubr.f32.mxu0 0.0
        %1747 = vmatmul.mubr.f32.gmra.mxu0 %v757
        %v1748 = vpop.f32.mrf.mxu0
        %v1749 = vadd.f32 0.0, %v1748
        %v1750 = vpop.f32.mrf.mxu0
        %1751 = vmatprep.mubr.f32.mxu0 0.0
        %1752 = vmatmul.mubr.f32.gmra.mxu0 %v760
        %v1753 = vpop.f32.mrf.mxu0
        %v1754 = vadd.f32 0.0, %v1753
        %v1755 = vpop.f32.mrf.mxu0
        %1756 = vmatprep.mubr.f32.mxu0 0.0
        %1757 = vmatmul.mubr.f32.gmra.mxu0 %v763
        %v1758 = vpop.f32.mrf.mxu0
        %v1759 = vadd.f32 0.0, %v1758
        %v1760 = vpop.f32.mrf.mxu0
        %1761 = vmatprep.mubr.f32.mxu0 0.0
        %1762 = vmatmul.mubr.f32.gmra.mxu0 %v766
        %v1763 = vpop.f32.mrf.mxu0
        %v1764 = vadd.f32 0.0, %v1763
        %v1765 = vpop.f32.mrf.mxu0
        %1766 = vmatprep.mubr.f32.mxu0 0.0
        %1767 = vmatmul.mubr.f32.gmra.mxu0 %v769
        %v1768 = vpop.f32.mrf.mxu0
        %v1769 = vadd.f32 0.0, %v1768
        %v1770 = vpop.f32.mrf.mxu0
        %1771 = vmatprep.mubr.f32.mxu0 0.0
        %1772 = vmatmul.mubr.f32.gmra.mxu0 %v772
        %v1773 = vpop.f32.mrf.mxu0
        %v1774 = vadd.f32 0.0, %v1773
        %v1775 = vpop.f32.mrf.mxu0
        %1776 = vmatprep.mubr.f32.mxu0 0.0
        %1777 = vmatmul.mubr.f32.gmra.mxu0 %v775
        %v1778 = vpop.f32.mrf.mxu0
        %v1779 = vadd.f32 0.0, %v1778
        %v1780 = vpop.f32.mrf.mxu0
        %1781 = vmatprep.mubr.f32.mxu0 0.0
        %1782 = vmatmul.mubr.f32.gmra.mxu0 %v778
        %v1783 = vpop.f32.mrf.mxu0
        %v1784 = vadd.f32 0.0, %v1783
        %v1785 = vpop.f32.mrf.mxu0
        %1786 = vmatprep.mubr.f32.mxu0 0.0
        %1787 = vmatmul.mubr.f32.gmra.mxu0 %v781
        %v1788 = vpop.f32.mrf.mxu0
        %v1789 = vadd.f32 0.0, %v1788
        %v1790 = vpop.f32.mrf.mxu0
        %1791 = vmatprep.mubr.f32.mxu0 0.0
        %1792 = vmatmul.mubr.f32.gmra.mxu0 %v784
        %v1793 = vpop.f32.mrf.mxu0
        %v1794 = vadd.f32 0.0, %v1793
        %v1795 = vpop.f32.mrf.mxu0
        %1796 = vmatprep.mubr.f32.mxu0 0.0
        %1797 = vmatmul.mubr.f32.gmra.mxu0 %v787
        %v1798 = vpop.f32.mrf.mxu0
        %v1799 = vadd.f32 0.0, %v1798
        %v1800 = vpop.f32.mrf.mxu0
        %1801 = vmatprep.mubr.f32.mxu0 0.0
        %1802 = vmatmul.mubr.f32.gmra.mxu0 %v790
        %v1803 = vpop.f32.mrf.mxu0
        %v1804 = vadd.f32 0.0, %v1803
        %v1805 = vpop.f32.mrf.mxu0
        %1806 = vmatprep.mubr.f32.mxu0 0.0
        %1807 = vmatmul.mubr.f32.gmra.mxu0 %v793
        %v1808 = vpop.f32.mrf.mxu0
        %v1809 = vadd.f32 0.0, %v1808
        %v1810 = vpop.f32.mrf.mxu0
        %1811 = vmatprep.mubr.f32.mxu0 0.0
        %1812 = vmatmul.mubr.f32.gmra.mxu0 %v796
        %v1813 = vpop.f32.mrf.mxu0
        %v1814 = vadd.f32 0.0, %v1813
        %v1815 = vpop.f32.mrf.mxu0
        %1816 = vmatprep.mubr.f32.mxu0 0.0
        %1817 = vmatmul.mubr.f32.gmra.mxu0 %v799
        %v1818 = vpop.f32.mrf.mxu0
        %v1819 = vadd.f32 0.0, %v1818
        %v1820 = vpop.f32.mrf.mxu0
        %1821 = vmatprep.mubr.f32.mxu0 0.0
        %1822 = vmatmul.mubr.f32.gmra.mxu0 %v802
        %v1823 = vpop.f32.mrf.mxu0
        %v1824 = vadd.f32 0.0, %v1823
        %v1825 = vpop.f32.mrf.mxu0
        %1826 = vmatprep.mubr.f32.mxu0 0.0
        %1827 = vmatmul.mubr.f32.gmra.mxu0 %v805
        %v1828 = vpop.f32.mrf.mxu0
        %v1829 = vadd.f32 0.0, %v1828
        %v1830 = vpop.f32.mrf.mxu0
        %1831 = vmatprep.mubr.f32.mxu0 0.0
        %1832 = vmatmul.mubr.f32.gmra.mxu0 %v808
        %v1833 = vpop.f32.mrf.mxu0
        %v1834 = vadd.f32 0.0, %v1833
        %v1835 = vpop.f32.mrf.mxu0
        %1836 = vmatprep.mubr.f32.mxu0 0.0
        %1837 = vmatmul.mubr.f32.gmra.mxu0 %v811
        %v1838 = vpop.f32.mrf.mxu0
        %v1839 = vadd.f32 0.0, %v1838
        %v1840 = vpop.f32.mrf.mxu0
        %1841 = vmatprep.mubr.f32.mxu0 0.0
        %1842 = vmatmul.mubr.f32.gmra.mxu0 %v814
        %v1843 = vpop.f32.mrf.mxu0
        %v1844 = vadd.f32 0.0, %v1843
        %v1845 = vpop.f32.mrf.mxu0
        %1846 = vmatprep.mubr.f32.mxu0 0.0
        %1847 = vmatmul.mubr.f32.gmra.mxu0 %v817
        %v1848 = vpop.f32.mrf.mxu0
        %v1849 = vadd.f32 0.0, %v1848
        %v1850 = vpop.f32.mrf.mxu0
        %1851 = vmatprep.mubr.f32.mxu0 0.0
        %1852 = vmatmul.mubr.f32.gmra.mxu0 %v820
        %v1853 = vpop.f32.mrf.mxu0
        %v1854 = vadd.f32 0.0, %v1853
        %v1855 = vpop.f32.mrf.mxu0
        %1856 = vmatprep.mubr.f32.mxu0 0.0
        %1857 = vmatmul.mubr.f32.gmra.mxu0 %v823
        %v1858 = vpop.f32.mrf.mxu0
        %v1859 = vadd.f32 0.0, %v1858
        %v1860 = vpop.f32.mrf.mxu0
        %1861 = vmatprep.mubr.f32.mxu0 0.0
        %1862 = vmatmul.mubr.f32.gmra.mxu0 %v826
        %v1863 = vpop.f32.mrf.mxu0
        %v1864 = vadd.f32 0.0, %v1863
        %v1865 = vpop.f32.mrf.mxu0
        %1866 = vmatprep.mubr.f32.mxu0 0.0
        %1867 = vmatmul.mubr.f32.gmra.mxu0 %v829
        %v1868 = vpop.f32.mrf.mxu0
        %v1869 = vadd.f32 0.0, %v1868
        %v1870 = vpop.f32.mrf.mxu0
        %1871 = vmatprep.mubr.f32.mxu0 0.0
        %1872 = vmatmul.mubr.f32.gmra.mxu0 %v832
        %v1873 = vpop.f32.mrf.mxu0
        %v1874 = vadd.f32 0.0, %v1873
        %v1875 = vpop.f32.mrf.mxu0
        %1876 = vmatprep.mubr.f32.mxu0 0.0
        %1877 = vmatmul.mubr.f32.gmra.mxu0 %v835
        %v1878 = vpop.f32.mrf.mxu0
        %v1879 = vadd.f32 0.0, %v1878
        %v1880 = vpop.f32.mrf.mxu0
        %1881 = vmatprep.mubr.f32.mxu0 0.0
        %1882 = vmatmul.mubr.f32.gmra.mxu0 %v838
        %v1883 = vpop.f32.mrf.mxu0
        %v1884 = vadd.f32 0.0, %v1883
        %v1885 = vpop.f32.mrf.mxu0
        %1886 = vmatprep.mubr.f32.mxu0 0.0
        %1887 = vmatmul.mubr.f32.gmra.mxu0 %v841
        %v1888 = vpop.f32.mrf.mxu0
        %v1889 = vadd.f32 0.0, %v1888
        %v1890 = vpop.f32.mrf.mxu0
        %1891 = vmatprep.mubr.f32.mxu0 0.0
        %1892 = vmatmul.mubr.f32.gmra.mxu0 %v844
        %v1893 = vpop.f32.mrf.mxu0
        %v1894 = vadd.f32 0.0, %v1893
        %v1895 = vpop.f32.mrf.mxu0
        %1896 = vmatprep.mubr.f32.mxu0 0.0
        %1897 = vmatmul.mubr.f32.gmra.mxu0 %v847
        %v1898 = vpop.f32.mrf.mxu0
        %v1899 = vadd.f32 0.0, %v1898
        %v1900 = vpop.f32.mrf.mxu0
        %1901 = vmatprep.mubr.f32.mxu0 0.0
        %1902 = vmatmul.mubr.f32.gmra.mxu0 %v850
        %v1903 = vpop.f32.mrf.mxu0
        %v1904 = vadd.f32 0.0, %v1903
        %v1905 = vpop.f32.mrf.mxu0
        %1906 = vmatprep.mubr.f32.mxu0 0.0
        %1907 = vmatmul.mubr.f32.gmra.mxu0 %v853
        %v1908 = vpop.f32.mrf.mxu0
        %v1909 = vadd.f32 0.0, %v1908
        %v1910 = vpop.f32.mrf.mxu0
        %1911 = vmatprep.mubr.f32.mxu0 0.0
        %1912 = vmatmul.mubr.f32.gmra.mxu0 %v856
        %v1913 = vpop.f32.mrf.mxu0
        %v1914 = vadd.f32 0.0, %v1913
        %v1915 = vpop.f32.mrf.mxu0
        %1916 = vmatprep.mubr.f32.mxu0 0.0
        %1917 = vmatmul.mubr.f32.gmra.mxu0 %v859
        %v1918 = vpop.f32.mrf.mxu0
        %v1919 = vadd.f32 0.0, %v1918
        %v1920 = vpop.f32.mrf.mxu0
        %1921 = vmatprep.mubr.f32.mxu0 0.0
        %1922 = vmatmul.mubr.f32.gmra.mxu0 %v862
        %v1923 = vpop.f32.mrf.mxu0
        %v1924 = vadd.f32 0.0, %v1923
        %v1925 = vpop.f32.mrf.mxu0
        %1926 = vmatprep.mubr.f32.mxu0 0.0
        %1927 = vmatmul.mubr.f32.gmra.mxu0 %v865
        %v1928 = vpop.f32.mrf.mxu0
        %v1929 = vadd.f32 0.0, %v1928
        %v1930 = vpop.f32.mrf.mxu0
        %1931 = vmatprep.mubr.f32.mxu0 0.0
        %1932 = vmatmul.mubr.f32.gmra.mxu0 %v868
        %v1933 = vpop.f32.mrf.mxu0
        %v1934 = vadd.f32 0.0, %v1933
        %v1935 = vpop.f32.mrf.mxu0
        %1936 = vmatprep.mubr.f32.mxu0 0.0
        %1937 = vmatmul.mubr.f32.gmra.mxu0 %v871
        %v1938 = vpop.f32.mrf.mxu0
        %v1939 = vadd.f32 0.0, %v1938
        %v1940 = vpop.f32.mrf.mxu0
        %1941 = vmatprep.mubr.f32.mxu0 0.0
        %1942 = vmatmul.mubr.f32.gmra.mxu0 %v874
        %v1943 = vpop.f32.mrf.mxu0
        %v1944 = vadd.f32 0.0, %v1943
        %v1945 = vpop.f32.mrf.mxu0
        %1946 = vmatprep.mubr.f32.mxu0 0.0
        %1947 = vmatmul.mubr.f32.gmra.mxu0 %v877
        %v1948 = vpop.f32.mrf.mxu0
        %v1949 = vadd.f32 0.0, %v1948
        %v1950 = vpop.f32.mrf.mxu0
        %1951 = vmatprep.mubr.f32.mxu0 0.0
        %1952 = vmatmul.mubr.f32.gmra.mxu0 %v880
        %v1953 = vpop.f32.mrf.mxu0
        %v1954 = vadd.f32 0.0, %v1953
        %v1955 = vpop.f32.mrf.mxu0
        %1956 = vmatprep.mubr.f32.mxu0 0.0
        %1957 = vmatmul.mubr.f32.gmra.mxu0 %v883
        %v1958 = vpop.f32.mrf.mxu0
        %v1959 = vadd.f32 0.0, %v1958
        %v1960 = vpop.f32.mrf.mxu0
        %1961 = vmatprep.mubr.f32.mxu0 0.0
        %1962 = vmatmul.mubr.f32.gmra.mxu0 %v886
        %v1963 = vpop.f32.mrf.mxu0
        %v1964 = vadd.f32 0.0, %v1963
        %v1965 = vpop.f32.mrf.mxu0
        %1966 = vmatprep.mubr.f32.mxu0 0.0
        %1967 = vmatmul.mubr.f32.gmra.mxu0 %v889
        %v1968 = vpop.f32.mrf.mxu0
        %v1969 = vadd.f32 0.0, %v1968
        %v1970 = vpop.f32.mrf.mxu0
        %1971 = vmatprep.mubr.f32.mxu0 0.0
        %1972 = vmatmul.mubr.f32.gmra.mxu0 %v892
        %v1973 = vpop.f32.mrf.mxu0
        %v1974 = vadd.f32 0.0, %v1973
        %v1975 = vpop.f32.mrf.mxu0
        %1976 = vmatprep.mubr.f32.mxu0 0.0
        %1977 = vmatmul.mubr.f32.gmra.mxu0 %v895
        %v1978 = vpop.f32.mrf.mxu0
        %v1979 = vadd.f32 0.0, %v1978
        %v1980 = vpop.f32.mrf.mxu0
        %1981 = vmatprep.mubr.f32.mxu0 0.0
        %1982 = vmatmul.mubr.f32.gmra.mxu0 %v898
        %v1983 = vpop.f32.mrf.mxu0
        %v1984 = vadd.f32 0.0, %v1983
        %v1985 = vpop.f32.mrf.mxu0
        %1986 = vmatprep.mubr.f32.mxu0 0.0
        %1987 = vmatmul.mubr.f32.gmra.mxu0 %v901
        %v1988 = vpop.f32.mrf.mxu0
        %v1989 = vadd.f32 0.0, %v1988
        %v1990 = vpop.f32.mrf.mxu0
        %1991 = vmatprep.mubr.f32.mxu0 0.0
        %1992 = vmatmul.mubr.f32.gmra.mxu0 %v904
        %v1993 = vpop.f32.mrf.mxu0
        %v1994 = vadd.f32 0.0, %v1993
        %v1995 = vpop.f32.mrf.mxu0
        %1996 = vmatprep.mubr.f32.mxu0 0.0
        %1997 = vmatmul.mubr.f32.gmra.mxu0 %v907
        %v1998 = vpop.f32.mrf.mxu0
        %v1999 = vadd.f32 0.0, %v1998
        %v2000 = vpop.f32.mrf.mxu0
        %2001 = vmatprep.mubr.f32.mxu0 0.0
        %2002 = vmatmul.mubr.f32.gmra.mxu0 %v910
        %v2003 = vpop.f32.mrf.mxu0
        %v2004 = vadd.f32 0.0, %v2003
        %v2005 = vpop.f32.mrf.mxu0
        %2006 = vmatprep.mubr.f32.mxu0 0.0
        %2007 = vmatmul.mubr.f32.gmra.mxu0 %v913
        %v2008 = vpop.f32.mrf.mxu0
        %v2009 = vadd.f32 0.0, %v2008
        %v2010 = vpop.f32.mrf.mxu0
        %2011 = vmatprep.mubr.f32.mxu0 0.0
        %2012 = vmatmul.mubr.f32.gmra.mxu0 %v916
        %v2013 = vpop.f32.mrf.mxu0
        %v2014 = vadd.f32 0.0, %v2013
        %v2015 = vpop.f32.mrf.mxu0
        %2016 = vmatprep.mubr.f32.mxu0 0.0
        %2017 = vmatmul.mubr.f32.gmra.mxu0 %v919
        %v2018 = vpop.f32.mrf.mxu0
        %v2019 = vadd.f32 0.0, %v2018
        %v2020 = vpop.f32.mrf.mxu0
        %2021 = vmatprep.mubr.f32.mxu0 0.0
        %2022 = vmatmul.mubr.f32.gmra.mxu0 %v922
        %v2023 = vpop.f32.mrf.mxu0
        %v2024 = vadd.f32 0.0, %v2023
        %v2025 = vpop.f32.mrf.mxu0
        %2026 = vmatprep.mubr.f32.mxu0 0.0
        %2027 = vmatmul.mubr.f32.gmra.mxu0 %v925
        %v2028 = vpop.f32.mrf.mxu0
        %v2029 = vadd.f32 0.0, %v2028
        %v2030 = vpop.f32.mrf.mxu0
        %2031 = vmatprep.mubr.f32.mxu0 0.0
        %2032 = vmatmul.mubr.f32.gmra.mxu0 %v928
        %v2033 = vpop.f32.mrf.mxu0
        %v2034 = vadd.f32 0.0, %v2033
        %v2035 = vpop.f32.mrf.mxu0
        %2036 = vmatprep.mubr.f32.mxu0 0.0
        %2037 = vmatmul.mubr.f32.gmra.mxu0 %v931
        %v2038 = vpop.f32.mrf.mxu0
        %v2039 = vadd.f32 0.0, %v2038
        %v2040 = vpop.f32.mrf.mxu0
        %2041 = vmatprep.mubr.f32.mxu0 0.0
        %2042 = vmatmul.mubr.f32.gmra.mxu0 %v934
        %v2043 = vpop.f32.mrf.mxu0
        %v2044 = vadd.f32 0.0, %v2043
        %v2045 = vpop.f32.mrf.mxu0
        %2046 = vmatprep.mubr.f32.mxu0 0.0
        %2047 = vmatmul.mubr.f32.gmra.mxu0 %v937
        %v2048 = vpop.f32.mrf.mxu0
        %v2049 = vadd.f32 0.0, %v2048
        %v2050 = vpop.f32.mrf.mxu0
        %2051 = vmatprep.mubr.f32.mxu0 0.0
        %2052 = vmatmul.mubr.f32.gmra.mxu0 %v940
        %v2053 = vpop.f32.mrf.mxu0
        %v2054 = vadd.f32 0.0, %v2053
        %v2055 = vpop.f32.mrf.mxu0
        %2056 = vmatprep.mubr.f32.mxu0 0.0
        %2057 = vmatmul.mubr.f32.gmra.mxu0 %v943
        %v2058 = vpop.f32.mrf.mxu0
        %v2059 = vadd.f32 0.0, %v2058
        %v2060 = vpop.f32.mrf.mxu0
        %2061 = vmatprep.mubr.f32.mxu0 0.0
        %2062 = vmatmul.mubr.f32.gmra.mxu0 %v946
        %v2063 = vpop.f32.mrf.mxu0
        %v2064 = vadd.f32 0.0, %v2063
        %v2065 = vpop.f32.mrf.mxu0
        %2066 = vmatprep.mubr.f32.mxu0 0.0
        %2067 = vmatmul.mubr.f32.gmra.mxu0 %v949
        %v2068 = vpop.f32.mrf.mxu0
        %v2069 = vadd.f32 0.0, %v2068
        %v2070 = vpop.f32.mrf.mxu0
        %2071 = vmatprep.mubr.f32.mxu0 0.0
        %2072 = vmatmul.mubr.f32.gmra.mxu0 %v952
        %v2073 = vpop.f32.mrf.mxu0
        %v2074 = vadd.f32 0.0, %v2073
        %v2075 = vpop.f32.mrf.mxu0
        %2076 = vmatprep.mubr.f32.mxu0 0.0
        %2077 = vmatmul.mubr.f32.gmra.mxu0 %v955
        %v2078 = vpop.f32.mrf.mxu0
        %v2079 = vadd.f32 0.0, %v2078
        %v2080 = vpop.f32.mrf.mxu0
        %2081 = vmatprep.mubr.f32.mxu0 0.0
        %2082 = vmatmul.mubr.f32.gmra.mxu0 %v958
        %v2083 = vpop.f32.mrf.mxu0
        %v2084 = vadd.f32 0.0, %v2083
        %v2085 = vpop.f32.mrf.mxu0
        %2086 = vmatprep.mubr.f32.mxu0 0.0
        %2087 = vmatmul.mubr.f32.gmra.mxu0 %v961
        %v2088 = vpop.f32.mrf.mxu0
        %v2089 = vadd.f32 0.0, %v2088
        %v2090 = vpop.f32.mrf.mxu0
        %2091 = vmatprep.mubr.f32.mxu0 0.0
        %2092 = vmatmul.mubr.f32.gmra.mxu0 %v964
        %v2093 = vpop.f32.mrf.mxu0
        %v2094 = vadd.f32 0.0, %v2093
        %v2095 = vpop.f32.mrf.mxu0
        %2096 = vmatprep.mubr.f32.mxu0 0.0
        %2097 = vmatmul.mubr.f32.gmra.mxu0 %v967
        %v2098 = vpop.f32.mrf.mxu0
        %v2099 = vadd.f32 0.0, %v2098
        %v2100 = vpop.f32.mrf.mxu0
        %2101 = vmatprep.mubr.f32.mxu0 0.0
        %2102 = vmatmul.mubr.f32.gmra.mxu0 %v970
        %v2103 = vpop.f32.mrf.mxu0
        %v2104 = vadd.f32 0.0, %v2103
        %v2105 = vpop.f32.mrf.mxu0
        %2106 = vmatprep.mubr.f32.mxu0 0.0
        %2107 = vmatmul.mubr.f32.gmra.mxu0 %v973
        %v2108 = vpop.f32.mrf.mxu0
        %v2109 = vadd.f32 0.0, %v2108
        %v2110 = vpop.f32.mrf.mxu0
        %2111 = vmatprep.mubr.f32.mxu0 0.0
        %2112 = vmatmul.mubr.f32.gmra.mxu0 %v976
        %v2113 = vpop.f32.mrf.mxu0
        %v2114 = vadd.f32 0.0, %v2113
        %v2115 = vpop.f32.mrf.mxu0
        %2116 = vmatprep.mubr.f32.mxu0 0.0
        %2117 = vmatmul.mubr.f32.gmra.mxu0 %v979
        %v2118 = vpop.f32.mrf.mxu0
        %v2119 = vadd.f32 0.0, %v2118
        %v2120 = vpop.f32.mrf.mxu0
        %2121 = vmatprep.mubr.f32.mxu0 0.0
        %2122 = vmatmul.mubr.f32.gmra.mxu0 %v982
        %v2123 = vpop.f32.mrf.mxu0
        %v2124 = vadd.f32 0.0, %v2123
        %v2125 = vpop.f32.mrf.mxu0
        %2126 = vmatprep.mubr.f32.mxu0 0.0
        %2127 = vmatmul.mubr.f32.gmra.mxu0 %v985
        %v2128 = vpop.f32.mrf.mxu0
        %v2129 = vadd.f32 0.0, %v2128
        %v2130 = vpop.f32.mrf.mxu0
        %2131 = vmatprep.mubr.f32.mxu0 0.0
        %2132 = vmatmul.mubr.f32.gmra.mxu0 %v988
        %v2133 = vpop.f32.mrf.mxu0
        %v2134 = vadd.f32 0.0, %v2133
        %v2135 = vpop.f32.mrf.mxu0
        %2136 = vmatprep.mubr.f32.mxu0 0.0
        %2137 = vmatmul.mubr.f32.gmra.mxu0 %v991
        %v2138 = vpop.f32.mrf.mxu0
        %v2139 = vadd.f32 0.0, %v2138
        %v2140 = vpop.f32.mrf.mxu0
        %2141 = vmatprep.mubr.f32.mxu0 0.0
        %2142 = vmatmul.mubr.f32.gmra.mxu0 %v994
        %v2143 = vpop.f32.mrf.mxu0
        %v2144 = vadd.f32 0.0, %v2143
        %v2145 = vpop.f32.mrf.mxu0
        %2146 = vmatprep.mubr.f32.mxu0 0.0
        %2147 = vmatmul.mubr.f32.gmra.mxu0 %v997
        %v2148 = vpop.f32.mrf.mxu0
        %v2149 = vadd.f32 0.0, %v2148
        %v2150 = vpop.f32.mrf.mxu0
        %2151 = vmatprep.mubr.f32.mxu0 0.0
        %2152 = vmatmul.mubr.f32.gmra.mxu0 %v1000
        %v2153 = vpop.f32.mrf.mxu0
        %v2154 = vadd.f32 0.0, %v2153
        %v2155 = vpop.f32.mrf.mxu0
        %2156 = vmatprep.mubr.f32.mxu0 0.0
        %2157 = vmatmul.mubr.f32.gmra.mxu0 %v1003
        %v2158 = vpop.f32.mrf.mxu0
        %v2159 = vadd.f32 0.0, %v2158
        %v2160 = vpop.f32.mrf.mxu0
        %2161 = vmatprep.mubr.f32.mxu0 0.0
        %2162 = vmatmul.mubr.f32.gmra.mxu0 %v1006
        %v2163 = vpop.f32.mrf.mxu0
        %v2164 = vadd.f32 0.0, %v2163
        %v2165 = vpop.f32.mrf.mxu0
        %2166 = vmatprep.mubr.f32.mxu0 0.0
        %2167 = vmatmul.mubr.f32.gmra.mxu0 %v1009
        %v2168 = vpop.f32.mrf.mxu0
        %v2169 = vadd.f32 0.0, %v2168
        %v2170 = vpop.f32.mrf.mxu0
        %2171 = vmatprep.mubr.f32.mxu0 0.0
        %2172 = vmatmul.mubr.f32.gmra.mxu0 %v1012
        %v2173 = vpop.f32.mrf.mxu0
        %v2174 = vadd.f32 0.0, %v2173
        %v2175 = vpop.f32.mrf.mxu0
        %2176 = vmatprep.mubr.f32.mxu0 0.0
        %2177 = vmatmul.mubr.f32.gmra.mxu0 %v1015
        %v2178 = vpop.f32.mrf.mxu0
        %v2179 = vadd.f32 0.0, %v2178
        %v2180 = vpop.f32.mrf.mxu0
        %2181 = vmatprep.mubr.f32.mxu0 0.0
        %2182 = vmatmul.mubr.f32.gmra.mxu0 %v1018
        %v2183 = vpop.f32.mrf.mxu0
        %v2184 = vadd.f32 0.0, %v2183
        %v2185 = vpop.f32.mrf.mxu0
        %2186 = vmatprep.mubr.f32.mxu0 0.0
        %2187 = vmatmul.mubr.f32.gmra.mxu0 %v1021
        %v2188 = vpop.f32.mrf.mxu0
        %v2189 = vadd.f32 0.0, %v2188
        %v2190 = vpop.f32.mrf.mxu0
        %2191 = vmatprep.mubr.f32.mxu0 0.0
        %2192 = vmatmul.mubr.f32.gmra.mxu0 %v1024
        %v2193 = vpop.f32.mrf.mxu0
        %v2194 = vadd.f32 0.0, %v2193
        %v2195 = vpop.f32.mrf.mxu0
        %2196 = vmatprep.mubr.f32.mxu0 0.0
        %2197 = vmatmul.mubr.f32.gmra.mxu0 %v1027
        %v2198 = vpop.f32.mrf.mxu0
        %v2199 = vadd.f32 0.0, %v2198
        %v2200 = vpop.f32.mrf.mxu0
        %2201 = vmatprep.mubr.f32.mxu0 0.0
        %2202 = vmatmul.mubr.f32.gmra.mxu0 %v1030
        %v2203 = vpop.f32.mrf.mxu0
        %v2204 = vadd.f32 0.0, %v2203
        %v2205 = vpop.f32.mrf.mxu0
        %2206 = vmatprep.mubr.f32.mxu0 0.0
        %2207 = vmatmul.mubr.f32.gmra.mxu0 %v1033
        %v2208 = vpop.f32.mrf.mxu0
        %v2209 = vadd.f32 0.0, %v2208
        %v2210 = vpop.f32.mrf.mxu0
        %2211 = vmatprep.mubr.f32.mxu0 0.0
        %2212 = vmatmul.mubr.f32.gmra.mxu0 %v1036
        %v2213 = vpop.f32.mrf.mxu0
        %v2214 = vadd.f32 0.0, %v2213
        %v2215 = vpop.f32.mrf.mxu0
        %2216 = vmatprep.mubr.f32.mxu0 0.0
        %2217 = vmatmul.mubr.f32.gmra.mxu0 %v1039
        %v2218 = vpop.f32.mrf.mxu0
        %v2219 = vadd.f32 0.0, %v2218
        %v2220 = vpop.f32.mrf.mxu0
        %2221 = vmatprep.mubr.f32.mxu0 0.0
        %2222 = vmatmul.mubr.f32.gmra.mxu0 %v1042
        %v2223 = vpop.f32.mrf.mxu0
        %v2224 = vadd.f32 0.0, %v2223
        %v2225 = vpop.f32.mrf.mxu0
        %2226 = vmatprep.mubr.f32.mxu0 0.0
        %2227 = vmatmul.mubr.f32.gmra.mxu0 %v1045
        %v2228 = vpop.f32.mrf.mxu0
        %v2229 = vadd.f32 0.0, %v2228
        %v2230 = vpop.f32.mrf.mxu0
        %2231 = vmatprep.mubr.f32.mxu0 0.0
        %2232 = vmatmul.mubr.f32.gmra.mxu0 %v1048
        %v2233 = vpop.f32.mrf.mxu0
        %v2234 = vadd.f32 0.0, %v2233
        %v2235 = vpop.f32.mrf.mxu0
        %2236 = vmatprep.mubr.f32.mxu0 0.0
        %2237 = vmatmul.mubr.f32.gmra.mxu0 %v1051
        %v2238 = vpop.f32.mrf.mxu0
        %v2239 = vadd.f32 0.0, %v2238
        %v2240 = vpop.f32.mrf.mxu0
        %2241 = vmatprep.mubr.f32.mxu0 0.0
        %2242 = vmatmul.mubr.f32.gmra.mxu0 %v1054
        %v2243 = vpop.f32.mrf.mxu0
        %v2244 = vadd.f32 0.0, %v2243
        %v2245 = vpop.f32.mrf.mxu0
        %2246 = vmatprep.mubr.f32.mxu0 0.0
        %2247 = vmatmul.mubr.f32.gmra.mxu0 %v1057
        %v2248 = vpop.f32.mrf.mxu0
        %v2249 = vadd.f32 0.0, %v2248
        %v2250 = vpop.f32.mrf.mxu0
        %2251 = vmatprep.mubr.f32.mxu0 0.0
        %2252 = vmatmul.mubr.f32.gmra.mxu0 %v1060
        %v2253 = vpop.f32.mrf.mxu0
        %v2254 = vadd.f32 0.0, %v2253
        %v2255 = vpop.f32.mrf.mxu0
        %2256 = vmatprep.mubr.f32.mxu0 0.0
        %2257 = vmatmul.mubr.f32.gmra.mxu0 %v1063
        %v2258 = vpop.f32.mrf.mxu0
        %v2259 = vadd.f32 0.0, %v2258
        %v2260 = vpop.f32.mrf.mxu0
        %2261 = vmatprep.mubr.f32.mxu0 0.0
        %2262 = vmatmul.mubr.f32.gmra.mxu0 %v1066
        %v2263 = vpop.f32.mrf.mxu0
        %v2264 = vadd.f32 0.0, %v2263
        %v2265 = vpop.f32.mrf.mxu0
        %2266 = vmatprep.mubr.f32.mxu0 0.0
        %2267 = vmatmul.mubr.f32.gmra.mxu0 %v1069
        %v2268 = vpop.f32.mrf.mxu0
        %v2269 = vadd.f32 0.0, %v2268
        %v2270 = vpop.f32.mrf.mxu0
        %2271 = vmatprep.mubr.f32.mxu0 0.0
        %2272 = vmatmul.mubr.f32.gmra.mxu0 %v1072
        %v2273 = vpop.f32.mrf.mxu0
        %v2274 = vadd.f32 0.0, %v2273
        %v2275 = vpop.f32.mrf.mxu0
        %2276 = vmatprep.mubr.f32.mxu0 0.0
        %2277 = vmatmul.mubr.f32.gmra.mxu0 %v1075
        %v2278 = vpop.f32.mrf.mxu0
        %v2279 = vadd.f32 0.0, %v2278
        %v2280 = vpop.f32.mrf.mxu0
        %2281 = vmatprep.mubr.f32.mxu0 0.0
        %2282 = vmatmul.mubr.f32.gmra.mxu0 %v1078
        %v2283 = vpop.f32.mrf.mxu0
        %v2284 = vadd.f32 0.0, %v2283
        %v2285 = vpop.f32.mrf.mxu0
        %2286 = vmatprep.mubr.f32.mxu0 0.0
        %2287 = vmatmul.mubr.f32.gmra.mxu0 %v1081
        %v2288 = vpop.f32.mrf.mxu0
        %v2289 = vadd.f32 0.0, %v2288
        %v2290 = vpop.f32.mrf.mxu0
        %2291 = vmatprep.mubr.f32.mxu0 0.0
        %2292 = vmatmul.mubr.f32.gmra.mxu0 %v1084
        %v2293 = vpop.f32.mrf.mxu0
        %v2294 = vadd.f32 0.0, %v2293
        %v2295 = vpop.f32.mrf.mxu0
        %2296 = vmatprep.mubr.f32.mxu0 0.0
        %2297 = vmatmul.mubr.f32.gmra.mxu0 %v1087
        %v2298 = vpop.f32.mrf.mxu0
        %v2299 = vadd.f32 0.0, %v2298
        %v2300 = vpop.f32.mrf.mxu0
        %2301 = vmatprep.mubr.f32.mxu0 0.0
        %2302 = vmatmul.mubr.f32.gmra.mxu0 %v1090
        %v2303 = vpop.f32.mrf.mxu0
        %v2304 = vadd.f32 0.0, %v2303
        %v2305 = vpop.f32.mrf.mxu0
        %2306 = vmatprep.mubr.f32.mxu0 0.0
        %2307 = vmatmul.mubr.f32.gmra.mxu0 %v1093
        %v2308 = vpop.f32.mrf.mxu0
        %v2309 = vadd.f32 0.0, %v2308
        %v2310 = vpop.f32.mrf.mxu0
        %2311 = vmatprep.mubr.f32.mxu0 0.0
        %2312 = vmatmul.mubr.f32.gmra.mxu0 %v1096
        %v2313 = vpop.f32.mrf.mxu0
        %v2314 = vadd.f32 0.0, %v2313
        %v2315 = vpop.f32.mrf.mxu0
        %2316 = vmatprep.mubr.f32.mxu0 0.0
        %2317 = vmatmul.mubr.f32.gmra.mxu0 %v1099
        %v2318 = vpop.f32.mrf.mxu0
        %v2319 = vadd.f32 0.0, %v2318
        %v2320 = vpop.f32.mrf.mxu0
        %2321 = vmatprep.mubr.f32.mxu0 0.0
        %2322 = vmatmul.mubr.f32.gmra.mxu0 %v1102
        %v2323 = vpop.f32.mrf.mxu0
        %v2324 = vadd.f32 0.0, %v2323
        %v2325 = vpop.f32.mrf.mxu0
        %2326 = vmatprep.mubr.f32.mxu0 0.0
        %2327 = vmatmul.mubr.f32.gmra.mxu0 %v1105
        %v2328 = vpop.f32.mrf.mxu0
        %v2329 = vadd.f32 0.0, %v2328
        %v2330 = vpop.f32.mrf.mxu0
        %2331 = vmatprep.mubr.f32.mxu0 0.0
        %2332 = vmatmul.mubr.f32.gmra.mxu0 %v1108
        %v2333 = vpop.f32.mrf.mxu0
        %v2334 = vadd.f32 0.0, %v2333
        %v2335 = vpop.f32.mrf.mxu0
        %2336 = vmatprep.mubr.f32.mxu0 0.0
        %2337 = vmatmul.mubr.f32.gmra.mxu0 %v1111
        %v2338 = vpop.f32.mrf.mxu0
        %v2339 = vadd.f32 0.0, %v2338
        %v2340 = vpop.f32.mrf.mxu0
        %2341 = vmatprep.mubr.f32.mxu0 0.0
        %2342 = vmatmul.mubr.f32.gmra.mxu0 %v1114
        %v2343 = vpop.f32.mrf.mxu0
        %v2344 = vadd.f32 0.0, %v2343
        %v2345 = vpop.f32.mrf.mxu0
        %2346 = vmatprep.mubr.f32.mxu0 0.0
        %2347 = vmatmul.mubr.f32.gmra.mxu0 %v1117
        %v2348 = vpop.f32.mrf.mxu0
        %v2349 = vadd.f32 0.0, %v2348
        %v2350 = vpop.f32.mrf.mxu0
        %2351 = vmatprep.mubr.f32.mxu0 0.0
        %2352 = vmatmul.mubr.f32.gmra.mxu0 %v1120
        %v2353 = vpop.f32.mrf.mxu0
        %v2354 = vadd.f32 0.0, %v2353
        %v2355 = vpop.f32.mrf.mxu0
        %2356 = vmatprep.mubr.f32.mxu0 0.0
        %2357 = vmatmul.mubr.f32.gmra.mxu0 %v1123
        %v2358 = vpop.f32.mrf.mxu0
        %v2359 = vadd.f32 0.0, %v2358
        %v2360 = vpop.f32.mrf.mxu0
        %2361 = vmatprep.mubr.f32.mxu0 0.0
        %2362 = vmatmul.mubr.f32.gmra.mxu0 %v1126
        %v2363 = vpop.f32.mrf.mxu0
        %v2364 = vadd.f32 0.0, %v2363
        %v2365 = vpop.f32.mrf.mxu0
        %2366 = vmatprep.mubr.f32.mxu0 0.0
        %2367 = vmatmul.mubr.f32.gmra.mxu0 %v1129
        %v2368 = vpop.f32.mrf.mxu0
        %v2369 = vadd.f32 0.0, %v2368
        %v2370 = vpop.f32.mrf.mxu0
        %2371 = vmatprep.mubr.f32.mxu0 0.0
        %2372 = vmatmul.mubr.f32.gmra.mxu0 %v1132
        %v2373 = vpop.f32.mrf.mxu0
        %v2374 = vadd.f32 0.0, %v2373
        %v2375 = vpop.f32.mrf.mxu0
        %2376 = vmatprep.mubr.f32.mxu0 0.0
        %2377 = vmatmul.mubr.f32.gmra.mxu0 %v1135
        %v2378 = vpop.f32.mrf.mxu0
        %v2379 = vadd.f32 0.0, %v2378
        %v2380 = vpop.f32.mrf.mxu0
        %2381 = vmatprep.mubr.f32.mxu0 0.0
        %2382 = vmatmul.mubr.f32.gmra.mxu0 %v1138
        %v2383 = vpop.f32.mrf.mxu0
        %v2384 = vadd.f32 0.0, %v2383
        %v2385 = vpop.f32.mrf.mxu0
        %2386 = vmatprep.mubr.f32.mxu0 0.0
        %2387 = vmatmul.mubr.f32.gmra.mxu0 %v1141
        %v2388 = vpop.f32.mrf.mxu0
        %v2389 = vadd.f32 0.0, %v2388
        %v2390 = vpop.f32.mrf.mxu0
        %2391 = vmatprep.mubr.f32.mxu0 0.0
        %2392 = vmatmul.mubr.f32.gmra.mxu0 %v1144
        %v2393 = vpop.f32.mrf.mxu0
        %v2394 = vadd.f32 0.0, %v2393
        %v2395 = vpop.f32.mrf.mxu0
        %2396 = vmatprep.mubr.f32.mxu0 0.0
        %2397 = vmatmul.mubr.f32.gmra.mxu0 %v1147
        %v2398 = vpop.f32.mrf.mxu0
        %v2399 = vadd.f32 0.0, %v2398
        %v2400 = vpop.f32.mrf.mxu0
        %2401 = vmatprep.mubr.f32.mxu0 0.0
        %2402 = vmatmul.mubr.f32.gmra.mxu0 %v1150
        %v2403 = vpop.f32.mrf.mxu0
        %v2404 = vadd.f32 0.0, %v2403
        %v2405 = vpop.f32.mrf.mxu0
        %2406 = vmatprep.mubr.f32.mxu0 0.0
        %2407 = vmatmul.mubr.f32.gmra.mxu0 %v1153
        %v2408 = vpop.f32.mrf.mxu0
        %v2409 = vadd.f32 0.0, %v2408
        %v2410 = vpop.f32.mrf.mxu0
        %2411 = vmatprep.mubr.f32.mxu0 0.0
        %2412 = vmatmul.mubr.f32.gmra.mxu0 %v1156
        %v2413 = vpop.f32.mrf.mxu0
        %v2414 = vadd.f32 0.0, %v2413
        %v2415 = vpop.f32.mrf.mxu0
        %2416 = vmatprep.mubr.f32.mxu0 0.0
        %2417 = vmatmul.mubr.f32.gmra.mxu0 %v1159
        %v2418 = vpop.f32.mrf.mxu0
        %v2419 = vadd.f32 0.0, %v2418
        %v2420 = vpop.f32.mrf.mxu0
        %2421 = vmatprep.mubr.f32.mxu0 0.0
        %2422 = vmatmul.mubr.f32.gmra.mxu0 %v1162
        %v2423 = vpop.f32.mrf.mxu0
        %v2424 = vadd.f32 0.0, %v2423
        %v2425 = vpop.f32.mrf.mxu0
        %2426 = vmatprep.mubr.f32.mxu0 0.0
        %2427 = vmatmul.mubr.f32.gmra.mxu0 %v1165
        %v2428 = vpop.f32.mrf.mxu0
        %v2429 = vadd.f32 0.0, %v2428
        %v2430 = vpop.f32.mrf.mxu0
        %2431 = vmatprep.mubr.f32.mxu0 0.0
        %2432 = vmatmul.mubr.f32.gmra.mxu0 %v1168
        %v2433 = vpop.f32.mrf.mxu0
        %v2434 = vadd.f32 0.0, %v2433
        %v2435 = vpop.f32.mrf.mxu0
        %2436 = vmatprep.mubr.f32.mxu0 0.0
        %2437 = vmatmul.mubr.f32.gmra.mxu0 %v1171
        %v2438 = vpop.f32.mrf.mxu0
        %v2439 = vadd.f32 0.0, %v2438
        %v2440 = vpop.f32.mrf.mxu0
        %2441 = vmatprep.mubr.f32.mxu0 0.0
        %2442 = vmatmul.mubr.f32.gmra.mxu0 %v1174
        %v2443 = vpop.f32.mrf.mxu0
        %v2444 = vadd.f32 0.0, %v2443
        %v2445 = vpop.f32.mrf.mxu0
        %2446 = vmatprep.mubr.f32.mxu0 0.0
        %2447 = vmatmul.mubr.f32.gmra.mxu0 %v1177
        %v2448 = vpop.f32.mrf.mxu0
        %v2449 = vadd.f32 0.0, %v2448
        %v2450 = vpop.f32.mrf.mxu0
        %2451 = vmatprep.mubr.f32.mxu0 0.0
        %2452 = vmatmul.mubr.f32.gmra.mxu0 %v1180
        %v2453 = vpop.f32.mrf.mxu0
        %v2454 = vadd.f32 0.0, %v2453
        %v2455 = vpop.f32.mrf.mxu0
        %2456 = vmatprep.mubr.f32.mxu0 0.0
        %2457 = vmatmul.mubr.f32.gmra.mxu0 %v1183
        %v2458 = vpop.f32.mrf.mxu0
        %v2459 = vadd.f32 0.0, %v2458
        %v2460 = vpop.f32.mrf.mxu0
        %2461 = vmatprep.mubr.f32.mxu0 0.0
        %2462 = vmatmul.mubr.f32.gmra.mxu0 %v1186
        %v2463 = vpop.f32.mrf.mxu0
        %v2464 = vadd.f32 0.0, %v2463
        %v2465 = vpop.f32.mrf.mxu0
        %2466 = vmatprep.mubr.f32.mxu0 0.0
        %2467 = vmatmul.mubr.f32.gmra.mxu0 %v1189
        %v2468 = vpop.f32.mrf.mxu0
        %v2469 = vadd.f32 0.0, %v2468
        %v2470 = vpop.f32.mrf.mxu0
        %2471 = vmatprep.mubr.f32.mxu0 0.0
        %2472 = vmatmul.mubr.f32.gmra.mxu0 %v1192
        %v2473 = vpop.f32.mrf.mxu0
        %v2474 = vadd.f32 0.0, %v2473
        %v2475 = vpop.f32.mrf.mxu0
        %2476 = vmatprep.mubr.f32.mxu0 0.0
        %2477 = vmatmul.mubr.f32.gmra.mxu0 %v1195
        %v2478 = vpop.f32.mrf.mxu0
        %v2479 = vadd.f32 0.0, %v2478
        %v2480 = vpop.f32.mrf.mxu0
        %2481 = vmatprep.mubr.f32.mxu0 0.0
        %2482 = vmatmul.mubr.f32.gmra.mxu0 %v1198
        %v2483 = vpop.f32.mrf.mxu0
        %v2484 = vadd.f32 0.0, %v2483
        %v2485 = vpop.f32.mrf.mxu0
        %2486 = vmatprep.mubr.f32.mxu0 0.0
        %2487 = vmatmul.mubr.f32.gmra.mxu0 %v1201
        %v2488 = vpop.f32.mrf.mxu0
        %v2489 = vadd.f32 0.0, %v2488
        %v2490 = vpop.f32.mrf.mxu0
        %2491 = vmatprep.mubr.f32.mxu0 0.0
        %2492 = vmatmul.mubr.f32.gmra.mxu0 %v1204
        %v2493 = vpop.f32.mrf.mxu0
        %v2494 = vadd.f32 0.0, %v2493
        %v2495 = vpop.f32.mrf.mxu0
        %2496 = vmatprep.mubr.f32.mxu0 0.0
        %2497 = vmatmul.mubr.f32.gmra.mxu0 %v1207
        %v2498 = vpop.f32.mrf.mxu0
        %v2499 = vadd.f32 0.0, %v2498
        %v2500 = vpop.f32.mrf.mxu0
        %2501 = vmatprep.mubr.f32.mxu0 0.0
        %2502 = vmatmul.mubr.f32.gmra.mxu0 %v1210
        %v2503 = vpop.f32.mrf.mxu0
        %v2504 = vadd.f32 0.0, %v2503
        %v2505 = vpop.f32.mrf.mxu0
        %2506 = vmatprep.mubr.f32.mxu0 0.0
        %2507 = vmatmul.mubr.f32.gmra.mxu0 %v1213
        %v2508 = vpop.f32.mrf.mxu0
        %v2509 = vadd.f32 0.0, %v2508
        %v2510 = vpop.f32.mrf.mxu0
        %2511 = vmatprep.mubr.f32.mxu0 0.0
        %2512 = vmatmul.mubr.f32.gmra.mxu0 %v1216
        %v2513 = vpop.f32.mrf.mxu0
        %v2514 = vadd.f32 0.0, %v2513
        %v2515 = vpop.f32.mrf.mxu0
        %2516 = vmatprep.mubr.f32.mxu0 0.0
        %2517 = vmatmul.mubr.f32.gmra.mxu0 %v1219
        %v2518 = vpop.f32.mrf.mxu0
        %v2519 = vadd.f32 0.0, %v2518
        %v2520 = vpop.f32.mrf.mxu0
        %2521 = vmatprep.mubr.f32.mxu0 0.0
        %2522 = vmatmul.mubr.f32.gmra.mxu0 %v1222
        %v2523 = vpop.f32.mrf.mxu0
        %v2524 = vadd.f32 0.0, %v2523
        %v2525 = vpop.f32.mrf.mxu0
        %2526 = vmatprep.mubr.f32.mxu0 0.0
        %2527 = vmatmul.mubr.f32.gmra.mxu0 %v1225
        %v2528 = vpop.f32.mrf.mxu0
        %v2529 = vadd.f32 0.0, %v2528
        %v2530 = vpop.f32.mrf.mxu0
        %2531 = vmatprep.mubr.f32.mxu0 0.0
        %2532 = vmatmul.mubr.f32.gmra.mxu0 %v1228
        %v2533 = vpop.f32.mrf.mxu0
        %v2534 = vadd.f32 0.0, %v2533
        %v2535 = vpop.f32.mrf.mxu0
        %2536 = vmatprep.mubr.f32.mxu0 0.0
        %2537 = vmatmul.mubr.f32.gmra.mxu0 %v1231
        %v2538 = vpop.f32.mrf.mxu0
        %v2539 = vadd.f32 0.0, %v2538
        %v2540 = vpop.f32.mrf.mxu0
        %2541 = vmatprep.mubr.f32.mxu0 0.0
        %2542 = vmatmul.mubr.f32.gmra.mxu0 %v1234
        %v2543 = vpop.f32.mrf.mxu0
        %v2544 = vadd.f32 0.0, %v2543
        %v2545 = vpop.f32.mrf.mxu0
        %2546 = vmatprep.mubr.f32.mxu0 0.0
        %2547 = vmatmul.mubr.f32.gmra.mxu0 %v1237
        %v2548 = vpop.f32.mrf.mxu0
        %v2549 = vadd.f32 0.0, %v2548
        %v2550 = vpop.f32.mrf.mxu0
        %2551 = vmatprep.mubr.f32.mxu0 0.0
        %2552 = vmatmul.mubr.f32.gmra.mxu0 %v1240
        %v2553 = vpop.f32.mrf.mxu0
        %v2554 = vadd.f32 0.0, %v2553
        %v2555 = vpop.f32.mrf.mxu0
        %2556 = vmatprep.mubr.f32.mxu0 0.0
        %2557 = vmatmul.mubr.f32.gmra.mxu0 %v1243
        %v2558 = vpop.f32.mrf.mxu0
        %v2559 = vadd.f32 0.0, %v2558
        %v2560 = vpop.f32.mrf.mxu0
        %2561 = vmatprep.mubr.f32.mxu0 0.0
        %2562 = vmatmul.mubr.f32.gmra.mxu0 %v1246
        %v2563 = vpop.f32.mrf.mxu0
        %v2564 = vadd.f32 0.0, %v2563
        %v2565 = vpop.f32.mrf.mxu0
        %2566 = vmatprep.mubr.f32.mxu0 0.0
        %2567 = vmatmul.mubr.f32.gmra.mxu0 %v1249
        %v2568 = vpop.f32.mrf.mxu0
        %v2569 = vadd.f32 0.0, %v2568
        %v2570 = vpop.f32.mrf.mxu0
        %2571 = vmatprep.mubr.f32.mxu0 0.0
        %2572 = vmatmul.mubr.f32.gmra.mxu0 %v1252
        %v2573 = vpop.f32.mrf.mxu0
        %v2574 = vadd.f32 0.0, %v2573
        %v2575 = vpop.f32.mrf.mxu0
        %2576 = vmatprep.mubr.f32.mxu0 0.0
        %2577 = vmatmul.mubr.f32.gmra.mxu0 %v1255
        %v2578 = vpop.f32.mrf.mxu0
        %v2579 = vadd.f32 0.0, %v2578
        %v2580 = vpop.f32.mrf.mxu0
        %2581 = vmatprep.mubr.f32.mxu0 0.0
        %2582 = vmatmul.mubr.f32.gmra.mxu0 %v1258
        %v2583 = vpop.f32.mrf.mxu0
        %v2584 = vadd.f32 0.0, %v2583
        %v2585 = vpop.f32.mrf.mxu0
        %2586 = vmatprep.mubr.f32.mxu0 0.0
        %2587 = vmatmul.mubr.f32.gmra.mxu0 %v1261
        %v2588 = vpop.f32.mrf.mxu0
        %v2589 = vadd.f32 0.0, %v2588
        %v2590 = vpop.f32.mrf.mxu0
        %2591 = vmatprep.mubr.f32.mxu0 0.0
        %2592 = vmatmul.mubr.f32.gmra.mxu0 %v1264
        %v2593 = vpop.f32.mrf.mxu0
        %v2594 = vadd.f32 0.0, %v2593
        %v2595 = vpop.f32.mrf.mxu0
        %2596 = vmatprep.mubr.f32.mxu0 0.0
        %2597 = vmatmul.mubr.f32.gmra.mxu0 %v1267
        %v2598 = vpop.f32.mrf.mxu0
        %v2599 = vadd.f32 0.0, %v2598
        %v2600 = vpop.f32.mrf.mxu0
        %2601 = vmatprep.mubr.f32.mxu0 0.0
        %2602 = vmatmul.mubr.f32.gmra.mxu0 %v1270
        %v2603 = vpop.f32.mrf.mxu0
        %v2604 = vadd.f32 0.0, %v2603
        %v2605 = vpop.f32.mrf.mxu0
        %2606 = vmatprep.mubr.f32.mxu0 0.0
        %2607 = vmatmul.mubr.f32.gmra.mxu0 %v1273
        %v2608 = vpop.f32.mrf.mxu0
        %v2609 = vadd.f32 0.0, %v2608
        %v2610 = vpop.f32.mrf.mxu0
        %2611 = vmatprep.mubr.f32.mxu0 0.0
        %2612 = vmatmul.mubr.f32.gmra.mxu0 %v1276
        %v2613 = vpop.f32.mrf.mxu0
        %v2614 = vadd.f32 0.0, %v2613
        %v2615 = vpop.f32.mrf.mxu0
        %2616 = vmatprep.mubr.f32.mxu0 0.0
        %2617 = vmatmul.mubr.f32.gmra.mxu0 %v1279
        %v2618 = vpop.f32.mrf.mxu0
        %v2619 = vadd.f32 0.0, %v2618
        %v2620 = vpop.f32.mrf.mxu0
        %2621 = vmatprep.mubr.f32.mxu0 0.0
        %2622 = vmatmul.mubr.f32.gmra.mxu0 %v1282
        %v2623 = vpop.f32.mrf.mxu0
        %v2624 = vadd.f32 0.0, %v2623
        %v2625 = vpop.f32.mrf.mxu0
        %2626 = vmatprep.mubr.f32.mxu0 0.0
        %2627 = vmatmul.mubr.f32.gmra.mxu0 %v1285
        %v2628 = vpop.f32.mrf.mxu0
        %v2629 = vadd.f32 0.0, %v2628
        %v2630 = vpop.f32.mrf.mxu0
        %2631 = vmatprep.mubr.f32.mxu0 0.0
        %2632 = vmatmul.mubr.f32.gmra.mxu0 %v1288
        %v2633 = vpop.f32.mrf.mxu0
        %v2634 = vadd.f32 0.0, %v2633
        %v2635 = vpop.f32.mrf.mxu0
        %2636 = vmatprep.mubr.f32.mxu0 0.0
        %2637 = vmatmul.mubr.f32.gmra.mxu0 %v1291
        %v2638 = vpop.f32.mrf.mxu0
        %v2639 = vadd.f32 0.0, %v2638
        %v2640 = vpop.f32.mrf.mxu0
        %2641 = vdwg.mxu0
        %v2642 = vsel %vm524, %v249, 0.0
        %v2643 = vsel %vm524, %v250, 0.0
        %v2644 = vadd.f32 %v2642, %v2643
        %v2645 = vrot.slane %v2644, 4
        %v2646 = vadd.f32 %v2644, %v2645
        %v2647 = vrot.slane %v2646, 2
        %v2648 = vadd.f32 %v2646, %v2647
        %v2649 = vrot.slane %v2648, 1
        %v2650 = vadd.f32 %v2648, %v2649
        %v2651 = vsel %vm524, %v251, 0.0
        %v2652 = vsel %vm524, %v252, 0.0
        %v2653 = vadd.f32 %v2651, %v2652
        %v2654 = vrot.slane %v2653, 4
        %v2655 = vadd.f32 %v2653, %v2654
        %v2656 = vrot.slane %v2655, 2
        %v2657 = vadd.f32 %v2655, %v2656
        %v2658 = vrot.slane %v2657, 1
        %v2659 = vadd.f32 %v2657, %v2658
        %v2660 = vsel %vm524, %v253, 0.0
        %v2661 = vsel %vm524, %v254, 0.0
        %v2662 = vadd.f32 %v2660, %v2661
        %v2663 = vrot.slane %v2662, 4
        %v2664 = vadd.f32 %v2662, %v2663
        %v2665 = vrot.slane %v2664, 2
        %v2666 = vadd.f32 %v2664, %v2665
        %v2667 = vrot.slane %v2666, 1
        %v2668 = vadd.f32 %v2666, %v2667
        %v2669 = vsel %vm524, %v255, 0.0
        %v2670 = vsel %vm524, %v256, 0.0
        %v2671 = vadd.f32 %v2669, %v2670
        %v2672 = vrot.slane %v2671, 4
        %v2673 = vadd.f32 %v2671, %v2672
        %v2674 = vrot.slane %v2673, 2
        %v2675 = vadd.f32 %v2673, %v2674
        %v2676 = vrot.slane %v2675, 1
        %v2677 = vadd.f32 %v2675, %v2676
        %v2678 = vsel %vm524, %v257, 0.0
        %v2679 = vsel %vm524, %v258, 0.0
        %v2680 = vadd.f32 %v2678, %v2679
        %v2681 = vrot.slane %v2680, 4
        %v2682 = vadd.f32 %v2680, %v2681
        %v2683 = vrot.slane %v2682, 2
        %v2684 = vadd.f32 %v2682, %v2683
        %v2685 = vrot.slane %v2684, 1
        %v2686 = vadd.f32 %v2684, %v2685
        %v2687 = vsel %vm524, %v259, 0.0
        %v2688 = vsel %vm524, %v260, 0.0
        %v2689 = vadd.f32 %v2687, %v2688
        %v2690 = vrot.slane %v2689, 4
        %v2691 = vadd.f32 %v2689, %v2690
        %v2692 = vrot.slane %v2691, 2
        %v2693 = vadd.f32 %v2691, %v2692
        %v2694 = vrot.slane %v2693, 1
        %v2695 = vadd.f32 %v2693, %v2694
        %v2696 = vsel %vm524, %v261, 0.0
        %v2697 = vsel %vm524, %v262, 0.0
        %v2698 = vadd.f32 %v2696, %v2697
        %v2699 = vrot.slane %v2698, 4
        %v2700 = vadd.f32 %v2698, %v2699
        %v2701 = vrot.slane %v2700, 2
        %v2702 = vadd.f32 %v2700, %v2701
        %v2703 = vrot.slane %v2702, 1
        %v2704 = vadd.f32 %v2702, %v2703
        %v2705 = vsel %vm524, %v263, 0.0
        %v2706 = vsel %vm524, %v264, 0.0
        %v2707 = vadd.f32 %v2705, %v2706
        %v2708 = vrot.slane %v2707, 4
        %v2709 = vadd.f32 %v2707, %v2708
        %v2710 = vrot.slane %v2709, 2
        %v2711 = vadd.f32 %v2709, %v2710
        %v2712 = vrot.slane %v2711, 1
        %v2713 = vadd.f32 %v2711, %v2712
        %v2714 = vsel %vm524, %v265, 0.0
        %v2715 = vsel %vm524, %v266, 0.0
        %v2716 = vadd.f32 %v2714, %v2715
        %v2717 = vrot.slane %v2716, 4
        %v2718 = vadd.f32 %v2716, %v2717
        %v2719 = vrot.slane %v2718, 2
        %v2720 = vadd.f32 %v2718, %v2719
        %v2721 = vrot.slane %v2720, 1
        %v2722 = vadd.f32 %v2720, %v2721
        %v2723 = vsel %vm524, %v267, 0.0
        %v2724 = vsel %vm524, %v268, 0.0
        %v2725 = vadd.f32 %v2723, %v2724
        %v2726 = vrot.slane %v2725, 4
        %v2727 = vadd.f32 %v2725, %v2726
        %v2728 = vrot.slane %v2727, 2
        %v2729 = vadd.f32 %v2727, %v2728
        %v2730 = vrot.slane %v2729, 1
        %v2731 = vadd.f32 %v2729, %v2730
        %v2732 = vsel %vm524, %v269, 0.0
        %v2733 = vsel %vm524, %v270, 0.0
        %v2734 = vadd.f32 %v2732, %v2733
        %v2735 = vrot.slane %v2734, 4
        %v2736 = vadd.f32 %v2734, %v2735
        %v2737 = vrot.slane %v2736, 2
        %v2738 = vadd.f32 %v2736, %v2737
        %v2739 = vrot.slane %v2738, 1
        %v2740 = vadd.f32 %v2738, %v2739
        %v2741 = vsel %vm524, %v271, 0.0
        %v2742 = vsel %vm524, %v272, 0.0
        %v2743 = vadd.f32 %v2741, %v2742
        %v2744 = vrot.slane %v2743, 4
        %v2745 = vadd.f32 %v2743, %v2744
        %v2746 = vrot.slane %v2745, 2
        %v2747 = vadd.f32 %v2745, %v2746
        %v2748 = vrot.slane %v2747, 1
        %v2749 = vadd.f32 %v2747, %v2748
        %v2750 = vsel %vm524, %v273, 0.0
        %v2751 = vsel %vm524, %v274, 0.0
        %v2752 = vadd.f32 %v2750, %v2751
        %v2753 = vrot.slane %v2752, 4
        %v2754 = vadd.f32 %v2752, %v2753
        %v2755 = vrot.slane %v2754, 2
        %v2756 = vadd.f32 %v2754, %v2755
        %v2757 = vrot.slane %v2756, 1
        %v2758 = vadd.f32 %v2756, %v2757
        %v2759 = vsel %vm524, %v275, 0.0
        %v2760 = vsel %vm524, %v276, 0.0
        %v2761 = vadd.f32 %v2759, %v2760
        %v2762 = vrot.slane %v2761, 4
        %v2763 = vadd.f32 %v2761, %v2762
        %v2764 = vrot.slane %v2763, 2
        %v2765 = vadd.f32 %v2763, %v2764
        %v2766 = vrot.slane %v2765, 1
        %v2767 = vadd.f32 %v2765, %v2766
        %v2768 = vsel %vm524, %v277, 0.0
        %v2769 = vsel %vm524, %v278, 0.0
        %v2770 = vadd.f32 %v2768, %v2769
        %v2771 = vrot.slane %v2770, 4
        %v2772 = vadd.f32 %v2770, %v2771
        %v2773 = vrot.slane %v2772, 2
        %v2774 = vadd.f32 %v2772, %v2773
        %v2775 = vrot.slane %v2774, 1
        %v2776 = vadd.f32 %v2774, %v2775
        %v2777 = vsel %vm524, %v279, 0.0
        %v2778 = vsel %vm524, %v280, 0.0
        %v2779 = vadd.f32 %v2777, %v2778
        %v2780 = vrot.slane %v2779, 4
        %v2781 = vadd.f32 %v2779, %v2780
        %v2782 = vrot.slane %v2781, 2
        %v2783 = vadd.f32 %v2781, %v2782
        %v2784 = vrot.slane %v2783, 1
        %v2785 = vadd.f32 %v2783, %v2784
        %v2786 = vsel %vm524, %v281, 0.0
        %v2787 = vsel %vm524, %v282, 0.0
        %v2788 = vadd.f32 %v2786, %v2787
        %v2789 = vrot.slane %v2788, 4
        %v2790 = vadd.f32 %v2788, %v2789
        %v2791 = vrot.slane %v2790, 2
        %v2792 = vadd.f32 %v2790, %v2791
        %v2793 = vrot.slane %v2792, 1
        %v2794 = vadd.f32 %v2792, %v2793
        %v2795 = vsel %vm524, %v283, 0.0
        %v2796 = vsel %vm524, %v284, 0.0
        %v2797 = vadd.f32 %v2795, %v2796
        %v2798 = vrot.slane %v2797, 4
        %v2799 = vadd.f32 %v2797, %v2798
        %v2800 = vrot.slane %v2799, 2
        %v2801 = vadd.f32 %v2799, %v2800
        %v2802 = vrot.slane %v2801, 1
        %v2803 = vadd.f32 %v2801, %v2802
        %v2804 = vsel %vm524, %v285, 0.0
        %v2805 = vsel %vm524, %v286, 0.0
        %v2806 = vadd.f32 %v2804, %v2805
        %v2807 = vrot.slane %v2806, 4
        %v2808 = vadd.f32 %v2806, %v2807
        %v2809 = vrot.slane %v2808, 2
        %v2810 = vadd.f32 %v2808, %v2809
        %v2811 = vrot.slane %v2810, 1
        %v2812 = vadd.f32 %v2810, %v2811
        %v2813 = vsel %vm524, %v287, 0.0
        %v2814 = vsel %vm524, %v288, 0.0
        %v2815 = vadd.f32 %v2813, %v2814
        %v2816 = vrot.slane %v2815, 4
        %v2817 = vadd.f32 %v2815, %v2816
        %v2818 = vrot.slane %v2817, 2
        %v2819 = vadd.f32 %v2817, %v2818
        %v2820 = vrot.slane %v2819, 1
        %v2821 = vadd.f32 %v2819, %v2820
        %v2822 = vsel %vm524, %v289, 0.0
        %v2823 = vsel %vm524, %v290, 0.0
        %v2824 = vadd.f32 %v2822, %v2823
        %v2825 = vrot.slane %v2824, 4
        %v2826 = vadd.f32 %v2824, %v2825
        %v2827 = vrot.slane %v2826, 2
        %v2828 = vadd.f32 %v2826, %v2827
        %v2829 = vrot.slane %v2828, 1
        %v2830 = vadd.f32 %v2828, %v2829
        %v2831 = vsel %vm524, %v291, 0.0
        %v2832 = vsel %vm524, %v292, 0.0
        %v2833 = vadd.f32 %v2831, %v2832
        %v2834 = vrot.slane %v2833, 4
        %v2835 = vadd.f32 %v2833, %v2834
        %v2836 = vrot.slane %v2835, 2
        %v2837 = vadd.f32 %v2835, %v2836
        %v2838 = vrot.slane %v2837, 1
        %v2839 = vadd.f32 %v2837, %v2838
        %v2840 = vsel %vm524, %v293, 0.0
        %v2841 = vsel %vm524, %v294, 0.0
        %v2842 = vadd.f32 %v2840, %v2841
        %v2843 = vrot.slane %v2842, 4
        %v2844 = vadd.f32 %v2842, %v2843
        %v2845 = vrot.slane %v2844, 2
        %v2846 = vadd.f32 %v2844, %v2845
        %v2847 = vrot.slane %v2846, 1
        %v2848 = vadd.f32 %v2846, %v2847
        %v2849 = vsel %vm524, %v295, 0.0
        %v2850 = vsel %vm524, %v296, 0.0
        %v2851 = vadd.f32 %v2849, %v2850
        %v2852 = vrot.slane %v2851, 4
        %v2853 = vadd.f32 %v2851, %v2852
        %v2854 = vrot.slane %v2853, 2
        %v2855 = vadd.f32 %v2853, %v2854
        %v2856 = vrot.slane %v2855, 1
        %v2857 = vadd.f32 %v2855, %v2856
        %v2858 = vsel %vm524, %v297, 0.0
        %v2859 = vsel %vm524, %v298, 0.0
        %v2860 = vadd.f32 %v2858, %v2859
        %v2861 = vrot.slane %v2860, 4
        %v2862 = vadd.f32 %v2860, %v2861
        %v2863 = vrot.slane %v2862, 2
        %v2864 = vadd.f32 %v2862, %v2863
        %v2865 = vrot.slane %v2864, 1
        %v2866 = vadd.f32 %v2864, %v2865
        %v2867 = vsel %vm524, %v299, 0.0
        %v2868 = vsel %vm524, %v300, 0.0
        %v2869 = vadd.f32 %v2867, %v2868
        %v2870 = vrot.slane %v2869, 4
        %v2871 = vadd.f32 %v2869, %v2870
        %v2872 = vrot.slane %v2871, 2
        %v2873 = vadd.f32 %v2871, %v2872
        %v2874 = vrot.slane %v2873, 1
        %v2875 = vadd.f32 %v2873, %v2874
        %v2876 = vsel %vm524, %v301, 0.0
        %v2877 = vsel %vm524, %v302, 0.0
        %v2878 = vadd.f32 %v2876, %v2877
        %v2879 = vrot.slane %v2878, 4
        %v2880 = vadd.f32 %v2878, %v2879
        %v2881 = vrot.slane %v2880, 2
        %v2882 = vadd.f32 %v2880, %v2881
        %v2883 = vrot.slane %v2882, 1
        %v2884 = vadd.f32 %v2882, %v2883
        %v2885 = vsel %vm524, %v303, 0.0
        %v2886 = vsel %vm524, %v304, 0.0
        %v2887 = vadd.f32 %v2885, %v2886
        %v2888 = vrot.slane %v2887, 4
        %v2889 = vadd.f32 %v2887, %v2888
        %v2890 = vrot.slane %v2889, 2
        %v2891 = vadd.f32 %v2889, %v2890
        %v2892 = vrot.slane %v2891, 1
        %v2893 = vadd.f32 %v2891, %v2892
        %v2894 = vsel %vm524, %v305, 0.0
        %v2895 = vsel %vm524, %v306, 0.0
        %v2896 = vadd.f32 %v2894, %v2895
        %v2897 = vrot.slane %v2896, 4
        %v2898 = vadd.f32 %v2896, %v2897
        %v2899 = vrot.slane %v2898, 2
        %v2900 = vadd.f32 %v2898, %v2899
        %v2901 = vrot.slane %v2900, 1
        %v2902 = vadd.f32 %v2900, %v2901
        %v2903 = vsel %vm524, %v307, 0.0
        %v2904 = vsel %vm524, %v308, 0.0
        %v2905 = vadd.f32 %v2903, %v2904
        %v2906 = vrot.slane %v2905, 4
        %v2907 = vadd.f32 %v2905, %v2906
        %v2908 = vrot.slane %v2907, 2
        %v2909 = vadd.f32 %v2907, %v2908
        %v2910 = vrot.slane %v2909, 1
        %v2911 = vadd.f32 %v2909, %v2910
        %v2912 = vsel %vm524, %v309, 0.0
        %v2913 = vsel %vm524, %v310, 0.0
        %v2914 = vadd.f32 %v2912, %v2913
        %v2915 = vrot.slane %v2914, 4
        %v2916 = vadd.f32 %v2914, %v2915
        %v2917 = vrot.slane %v2916, 2
        %v2918 = vadd.f32 %v2916, %v2917
        %v2919 = vrot.slane %v2918, 1
        %v2920 = vadd.f32 %v2918, %v2919
        %v2921 = vsel %vm524, %v311, 0.0
        %v2922 = vsel %vm524, %v312, 0.0
        %v2923 = vadd.f32 %v2921, %v2922
        %v2924 = vrot.slane %v2923, 4
        %v2925 = vadd.f32 %v2923, %v2924
        %v2926 = vrot.slane %v2925, 2
        %v2927 = vadd.f32 %v2925, %v2926
        %v2928 = vrot.slane %v2927, 1
        %v2929 = vadd.f32 %v2927, %v2928
        %v2930 = vsel %vm524, %v313, 0.0
        %v2931 = vsel %vm524, %v314, 0.0
        %v2932 = vadd.f32 %v2930, %v2931
        %v2933 = vrot.slane %v2932, 4
        %v2934 = vadd.f32 %v2932, %v2933
        %v2935 = vrot.slane %v2934, 2
        %v2936 = vadd.f32 %v2934, %v2935
        %v2937 = vrot.slane %v2936, 1
        %v2938 = vadd.f32 %v2936, %v2937
        %v2939 = vsel %vm524, %v315, 0.0
        %v2940 = vsel %vm524, %v316, 0.0
        %v2941 = vadd.f32 %v2939, %v2940
        %v2942 = vrot.slane %v2941, 4
        %v2943 = vadd.f32 %v2941, %v2942
        %v2944 = vrot.slane %v2943, 2
        %v2945 = vadd.f32 %v2943, %v2944
        %v2946 = vrot.slane %v2945, 1
        %v2947 = vadd.f32 %v2945, %v2946
        %v2948 = vsel %vm524, %v317, 0.0
        %v2949 = vsel %vm524, %v318, 0.0
        %v2950 = vadd.f32 %v2948, %v2949
        %v2951 = vrot.slane %v2950, 4
        %v2952 = vadd.f32 %v2950, %v2951
        %v2953 = vrot.slane %v2952, 2
        %v2954 = vadd.f32 %v2952, %v2953
        %v2955 = vrot.slane %v2954, 1
        %v2956 = vadd.f32 %v2954, %v2955
        %v2957 = vsel %vm524, %v319, 0.0
        %v2958 = vsel %vm524, %v320, 0.0
        %v2959 = vadd.f32 %v2957, %v2958
        %v2960 = vrot.slane %v2959, 4
        %v2961 = vadd.f32 %v2959, %v2960
        %v2962 = vrot.slane %v2961, 2
        %v2963 = vadd.f32 %v2961, %v2962
        %v2964 = vrot.slane %v2963, 1
        %v2965 = vadd.f32 %v2963, %v2964
        %v2966 = vsel %vm524, %v321, 0.0
        %v2967 = vsel %vm524, %v322, 0.0
        %v2968 = vadd.f32 %v2966, %v2967
        %v2969 = vrot.slane %v2968, 4
        %v2970 = vadd.f32 %v2968, %v2969
        %v2971 = vrot.slane %v2970, 2
        %v2972 = vadd.f32 %v2970, %v2971
        %v2973 = vrot.slane %v2972, 1
        %v2974 = vadd.f32 %v2972, %v2973
        %v2975 = vsel %vm524, %v323, 0.0
        %v2976 = vsel %vm524, %v324, 0.0
        %v2977 = vadd.f32 %v2975, %v2976
        %v2978 = vrot.slane %v2977, 4
        %v2979 = vadd.f32 %v2977, %v2978
        %v2980 = vrot.slane %v2979, 2
        %v2981 = vadd.f32 %v2979, %v2980
        %v2982 = vrot.slane %v2981, 1
        %v2983 = vadd.f32 %v2981, %v2982
        %v2984 = vsel %vm524, %v325, 0.0
        %v2985 = vsel %vm524, %v326, 0.0
        %v2986 = vadd.f32 %v2984, %v2985
        %v2987 = vrot.slane %v2986, 4
        %v2988 = vadd.f32 %v2986, %v2987
        %v2989 = vrot.slane %v2988, 2
        %v2990 = vadd.f32 %v2988, %v2989
        %v2991 = vrot.slane %v2990, 1
        %v2992 = vadd.f32 %v2990, %v2991
        %v2993 = vsel %vm524, %v327, 0.0
        %v2994 = vsel %vm524, %v328, 0.0
        %v2995 = vadd.f32 %v2993, %v2994
        %v2996 = vrot.slane %v2995, 4
        %v2997 = vadd.f32 %v2995, %v2996
        %v2998 = vrot.slane %v2997, 2
        %v2999 = vadd.f32 %v2997, %v2998
        %v3000 = vrot.slane %v2999, 1
        %v3001 = vadd.f32 %v2999, %v3000
        %v3002 = vsel %vm524, %v329, 0.0
        %v3003 = vsel %vm524, %v330, 0.0
        %v3004 = vadd.f32 %v3002, %v3003
        %v3005 = vrot.slane %v3004, 4
        %v3006 = vadd.f32 %v3004, %v3005
        %v3007 = vrot.slane %v3006, 2
        %v3008 = vadd.f32 %v3006, %v3007
        %v3009 = vrot.slane %v3008, 1
        %v3010 = vadd.f32 %v3008, %v3009
        %v3011 = vsel %vm524, %v331, 0.0
        %v3012 = vsel %vm524, %v332, 0.0
        %v3013 = vadd.f32 %v3011, %v3012
        %v3014 = vrot.slane %v3013, 4
        %v3015 = vadd.f32 %v3013, %v3014
        %v3016 = vrot.slane %v3015, 2
        %v3017 = vadd.f32 %v3015, %v3016
        %v3018 = vrot.slane %v3017, 1
        %v3019 = vadd.f32 %v3017, %v3018
        %v3020 = vsel %vm524, %v333, 0.0
        %v3021 = vsel %vm524, %v334, 0.0
        %v3022 = vadd.f32 %v3020, %v3021
        %v3023 = vrot.slane %v3022, 4
        %v3024 = vadd.f32 %v3022, %v3023
        %v3025 = vrot.slane %v3024, 2
        %v3026 = vadd.f32 %v3024, %v3025
        %v3027 = vrot.slane %v3026, 1
        %v3028 = vadd.f32 %v3026, %v3027
        %v3029 = vsel %vm524, %v335, 0.0
        %v3030 = vsel %vm524, %v336, 0.0
        %v3031 = vadd.f32 %v3029, %v3030
        %v3032 = vrot.slane %v3031, 4
        %v3033 = vadd.f32 %v3031, %v3032
        %v3034 = vrot.slane %v3033, 2
        %v3035 = vadd.f32 %v3033, %v3034
        %v3036 = vrot.slane %v3035, 1
        %v3037 = vadd.f32 %v3035, %v3036
        %v3038 = vsel %vm524, %v337, 0.0
        %v3039 = vsel %vm524, %v338, 0.0
        %v3040 = vadd.f32 %v3038, %v3039
        %v3041 = vrot.slane %v3040, 4
        %v3042 = vadd.f32 %v3040, %v3041
        %v3043 = vrot.slane %v3042, 2
        %v3044 = vadd.f32 %v3042, %v3043
        %v3045 = vrot.slane %v3044, 1
        %v3046 = vadd.f32 %v3044, %v3045
        %v3047 = vsel %vm524, %v339, 0.0
        %v3048 = vsel %vm524, %v340, 0.0
        %v3049 = vadd.f32 %v3047, %v3048
        %v3050 = vrot.slane %v3049, 4
        %v3051 = vadd.f32 %v3049, %v3050
        %v3052 = vrot.slane %v3051, 2
        %v3053 = vadd.f32 %v3051, %v3052
        %v3054 = vrot.slane %v3053, 1
        %v3055 = vadd.f32 %v3053, %v3054
        %v3056 = vsel %vm524, %v341, 0.0
        %v3057 = vsel %vm524, %v342, 0.0
        %v3058 = vadd.f32 %v3056, %v3057
        %v3059 = vrot.slane %v3058, 4
        %v3060 = vadd.f32 %v3058, %v3059
        %v3061 = vrot.slane %v3060, 2
        %v3062 = vadd.f32 %v3060, %v3061
        %v3063 = vrot.slane %v3062, 1
        %v3064 = vadd.f32 %v3062, %v3063
        %v3065 = vsel %vm524, %v343, 0.0
        %v3066 = vsel %vm524, %v344, 0.0
        %v3067 = vadd.f32 %v3065, %v3066
        %v3068 = vrot.slane %v3067, 4
        %v3069 = vadd.f32 %v3067, %v3068
        %v3070 = vrot.slane %v3069, 2
        %v3071 = vadd.f32 %v3069, %v3070
        %v3072 = vrot.slane %v3071, 1
        %v3073 = vadd.f32 %v3071, %v3072
        %v3074 = vsel %vm524, %v345, 0.0
        %v3075 = vsel %vm524, %v346, 0.0
        %v3076 = vadd.f32 %v3074, %v3075
        %v3077 = vrot.slane %v3076, 4
        %v3078 = vadd.f32 %v3076, %v3077
        %v3079 = vrot.slane %v3078, 2
        %v3080 = vadd.f32 %v3078, %v3079
        %v3081 = vrot.slane %v3080, 1
        %v3082 = vadd.f32 %v3080, %v3081
        %v3083 = vsel %vm524, %v347, 0.0
        %v3084 = vsel %vm524, %v348, 0.0
        %v3085 = vadd.f32 %v3083, %v3084
        %v3086 = vrot.slane %v3085, 4
        %v3087 = vadd.f32 %v3085, %v3086
        %v3088 = vrot.slane %v3087, 2
        %v3089 = vadd.f32 %v3087, %v3088
        %v3090 = vrot.slane %v3089, 1
        %v3091 = vadd.f32 %v3089, %v3090
        %v3092 = vsel %vm524, %v349, 0.0
        %v3093 = vsel %vm524, %v350, 0.0
        %v3094 = vadd.f32 %v3092, %v3093
        %v3095 = vrot.slane %v3094, 4
        %v3096 = vadd.f32 %v3094, %v3095
        %v3097 = vrot.slane %v3096, 2
        %v3098 = vadd.f32 %v3096, %v3097
        %v3099 = vrot.slane %v3098, 1
        %v3100 = vadd.f32 %v3098, %v3099
        %v3101 = vsel %vm524, %v351, 0.0
        %v3102 = vsel %vm524, %v352, 0.0
        %v3103 = vadd.f32 %v3101, %v3102
        %v3104 = vrot.slane %v3103, 4
        %v3105 = vadd.f32 %v3103, %v3104
        %v3106 = vrot.slane %v3105, 2
        %v3107 = vadd.f32 %v3105, %v3106
        %v3108 = vrot.slane %v3107, 1
        %v3109 = vadd.f32 %v3107, %v3108
        %v3110 = vsel %vm524, %v353, 0.0
        %v3111 = vsel %vm524, %v354, 0.0
        %v3112 = vadd.f32 %v3110, %v3111
        %v3113 = vrot.slane %v3112, 4
        %v3114 = vadd.f32 %v3112, %v3113
        %v3115 = vrot.slane %v3114, 2
        %v3116 = vadd.f32 %v3114, %v3115
        %v3117 = vrot.slane %v3116, 1
        %v3118 = vadd.f32 %v3116, %v3117
        %v3119 = vsel %vm524, %v355, 0.0
        %v3120 = vsel %vm524, %v356, 0.0
        %v3121 = vadd.f32 %v3119, %v3120
        %v3122 = vrot.slane %v3121, 4
        %v3123 = vadd.f32 %v3121, %v3122
        %v3124 = vrot.slane %v3123, 2
        %v3125 = vadd.f32 %v3123, %v3124
        %v3126 = vrot.slane %v3125, 1
        %v3127 = vadd.f32 %v3125, %v3126
        %v3128 = vsel %vm524, %v357, 0.0
        %v3129 = vsel %vm524, %v358, 0.0
        %v3130 = vadd.f32 %v3128, %v3129
        %v3131 = vrot.slane %v3130, 4
        %v3132 = vadd.f32 %v3130, %v3131
        %v3133 = vrot.slane %v3132, 2
        %v3134 = vadd.f32 %v3132, %v3133
        %v3135 = vrot.slane %v3134, 1
        %v3136 = vadd.f32 %v3134, %v3135
        %v3137 = vsel %vm524, %v359, 0.0
        %v3138 = vsel %vm524, %v360, 0.0
        %v3139 = vadd.f32 %v3137, %v3138
        %v3140 = vrot.slane %v3139, 4
        %v3141 = vadd.f32 %v3139, %v3140
        %v3142 = vrot.slane %v3141, 2
        %v3143 = vadd.f32 %v3141, %v3142
        %v3144 = vrot.slane %v3143, 1
        %v3145 = vadd.f32 %v3143, %v3144
        %v3146 = vsel %vm524, %v361, 0.0
        %v3147 = vsel %vm524, %v362, 0.0
        %v3148 = vadd.f32 %v3146, %v3147
        %v3149 = vrot.slane %v3148, 4
        %v3150 = vadd.f32 %v3148, %v3149
        %v3151 = vrot.slane %v3150, 2
        %v3152 = vadd.f32 %v3150, %v3151
        %v3153 = vrot.slane %v3152, 1
        %v3154 = vadd.f32 %v3152, %v3153
        %v3155 = vsel %vm524, %v363, 0.0
        %v3156 = vsel %vm524, %v364, 0.0
        %v3157 = vadd.f32 %v3155, %v3156
        %v3158 = vrot.slane %v3157, 4
        %v3159 = vadd.f32 %v3157, %v3158
        %v3160 = vrot.slane %v3159, 2
        %v3161 = vadd.f32 %v3159, %v3160
        %v3162 = vrot.slane %v3161, 1
        %v3163 = vadd.f32 %v3161, %v3162
        %v3164 = vsel %vm524, %v365, 0.0
        %v3165 = vsel %vm524, %v366, 0.0
        %v3166 = vadd.f32 %v3164, %v3165
        %v3167 = vrot.slane %v3166, 4
        %v3168 = vadd.f32 %v3166, %v3167
        %v3169 = vrot.slane %v3168, 2
        %v3170 = vadd.f32 %v3168, %v3169
        %v3171 = vrot.slane %v3170, 1
        %v3172 = vadd.f32 %v3170, %v3171
        %v3173 = vsel %vm524, %v367, 0.0
        %v3174 = vsel %vm524, %v368, 0.0
        %v3175 = vadd.f32 %v3173, %v3174
        %v3176 = vrot.slane %v3175, 4
        %v3177 = vadd.f32 %v3175, %v3176
        %v3178 = vrot.slane %v3177, 2
        %v3179 = vadd.f32 %v3177, %v3178
        %v3180 = vrot.slane %v3179, 1
        %v3181 = vadd.f32 %v3179, %v3180
        %v3182 = vsel %vm524, %v369, 0.0
        %v3183 = vsel %vm524, %v370, 0.0
        %v3184 = vadd.f32 %v3182, %v3183
        %v3185 = vrot.slane %v3184, 4
        %v3186 = vadd.f32 %v3184, %v3185
        %v3187 = vrot.slane %v3186, 2
        %v3188 = vadd.f32 %v3186, %v3187
        %v3189 = vrot.slane %v3188, 1
        %v3190 = vadd.f32 %v3188, %v3189
        %v3191 = vsel %vm524, %v371, 0.0
        %v3192 = vsel %vm524, %v372, 0.0
        %v3193 = vadd.f32 %v3191, %v3192
        %v3194 = vrot.slane %v3193, 4
        %v3195 = vadd.f32 %v3193, %v3194
        %v3196 = vrot.slane %v3195, 2
        %v3197 = vadd.f32 %v3195, %v3196
        %v3198 = vrot.slane %v3197, 1
        %v3199 = vadd.f32 %v3197, %v3198
        %v3200 = vsel %vm524, %v373, 0.0
        %v3201 = vsel %vm524, %v374, 0.0
        %v3202 = vadd.f32 %v3200, %v3201
        %v3203 = vrot.slane %v3202, 4
        %v3204 = vadd.f32 %v3202, %v3203
        %v3205 = vrot.slane %v3204, 2
        %v3206 = vadd.f32 %v3204, %v3205
        %v3207 = vrot.slane %v3206, 1
        %v3208 = vadd.f32 %v3206, %v3207
        %v3209 = vsel %vm524, %v375, 0.0
        %v3210 = vsel %vm524, %v376, 0.0
        %v3211 = vadd.f32 %v3209, %v3210
        %v3212 = vrot.slane %v3211, 4
        %v3213 = vadd.f32 %v3211, %v3212
        %v3214 = vrot.slane %v3213, 2
        %v3215 = vadd.f32 %v3213, %v3214
        %v3216 = vrot.slane %v3215, 1
        %v3217 = vadd.f32 %v3215, %v3216
        %v3218 = vsel %vm524, %v377, 0.0
        %v3219 = vsel %vm524, %v378, 0.0
        %v3220 = vadd.f32 %v3218, %v3219
        %v3221 = vrot.slane %v3220, 4
        %v3222 = vadd.f32 %v3220, %v3221
        %v3223 = vrot.slane %v3222, 2
        %v3224 = vadd.f32 %v3222, %v3223
        %v3225 = vrot.slane %v3224, 1
        %v3226 = vadd.f32 %v3224, %v3225
        %v3227 = vsel %vm524, %v379, 0.0
        %v3228 = vsel %vm524, %v380, 0.0
        %v3229 = vadd.f32 %v3227, %v3228
        %v3230 = vrot.slane %v3229, 4
        %v3231 = vadd.f32 %v3229, %v3230
        %v3232 = vrot.slane %v3231, 2
        %v3233 = vadd.f32 %v3231, %v3232
        %v3234 = vrot.slane %v3233, 1
        %v3235 = vadd.f32 %v3233, %v3234
        %v3236 = vsel %vm524, %v381, 0.0
        %v3237 = vsel %vm524, %v382, 0.0
        %v3238 = vadd.f32 %v3236, %v3237
        %v3239 = vrot.slane %v3238, 4
        %v3240 = vadd.f32 %v3238, %v3239
        %v3241 = vrot.slane %v3240, 2
        %v3242 = vadd.f32 %v3240, %v3241
        %v3243 = vrot.slane %v3242, 1
        %v3244 = vadd.f32 %v3242, %v3243
        %v3245 = vsel %vm524, %v383, 0.0
        %v3246 = vsel %vm524, %v384, 0.0
        %v3247 = vadd.f32 %v3245, %v3246
        %v3248 = vrot.slane %v3247, 4
        %v3249 = vadd.f32 %v3247, %v3248
        %v3250 = vrot.slane %v3249, 2
        %v3251 = vadd.f32 %v3249, %v3250
        %v3252 = vrot.slane %v3251, 1
        %v3253 = vadd.f32 %v3251, %v3252
        %v3254 = vsel %vm524, %v385, 0.0
        %v3255 = vsel %vm524, %v386, 0.0
        %v3256 = vadd.f32 %v3254, %v3255
        %v3257 = vrot.slane %v3256, 4
        %v3258 = vadd.f32 %v3256, %v3257
        %v3259 = vrot.slane %v3258, 2
        %v3260 = vadd.f32 %v3258, %v3259
        %v3261 = vrot.slane %v3260, 1
        %v3262 = vadd.f32 %v3260, %v3261
        %v3263 = vsel %vm524, %v387, 0.0
        %v3264 = vsel %vm524, %v388, 0.0
        %v3265 = vadd.f32 %v3263, %v3264
        %v3266 = vrot.slane %v3265, 4
        %v3267 = vadd.f32 %v3265, %v3266
        %v3268 = vrot.slane %v3267, 2
        %v3269 = vadd.f32 %v3267, %v3268
        %v3270 = vrot.slane %v3269, 1
        %v3271 = vadd.f32 %v3269, %v3270
        %v3272 = vsel %vm524, %v389, 0.0
        %v3273 = vsel %vm524, %v390, 0.0
        %v3274 = vadd.f32 %v3272, %v3273
        %v3275 = vrot.slane %v3274, 4
        %v3276 = vadd.f32 %v3274, %v3275
        %v3277 = vrot.slane %v3276, 2
        %v3278 = vadd.f32 %v3276, %v3277
        %v3279 = vrot.slane %v3278, 1
        %v3280 = vadd.f32 %v3278, %v3279
        %v3281 = vsel %vm524, %v391, 0.0
        %v3282 = vsel %vm524, %v392, 0.0
        %v3283 = vadd.f32 %v3281, %v3282
        %v3284 = vrot.slane %v3283, 4
        %v3285 = vadd.f32 %v3283, %v3284
        %v3286 = vrot.slane %v3285, 2
        %v3287 = vadd.f32 %v3285, %v3286
        %v3288 = vrot.slane %v3287, 1
        %v3289 = vadd.f32 %v3287, %v3288
        %v3290 = vsel %vm524, %v393, 0.0
        %v3291 = vsel %vm524, %v394, 0.0
        %v3292 = vadd.f32 %v3290, %v3291
        %v3293 = vrot.slane %v3292, 4
        %v3294 = vadd.f32 %v3292, %v3293
        %v3295 = vrot.slane %v3294, 2
        %v3296 = vadd.f32 %v3294, %v3295
        %v3297 = vrot.slane %v3296, 1
        %v3298 = vadd.f32 %v3296, %v3297
        %v3299 = vsel %vm524, %v395, 0.0
        %v3300 = vsel %vm524, %v396, 0.0
        %v3301 = vadd.f32 %v3299, %v3300
        %v3302 = vrot.slane %v3301, 4
        %v3303 = vadd.f32 %v3301, %v3302
        %v3304 = vrot.slane %v3303, 2
        %v3305 = vadd.f32 %v3303, %v3304
        %v3306 = vrot.slane %v3305, 1
        %v3307 = vadd.f32 %v3305, %v3306
        %v3308 = vsel %vm524, %v397, 0.0
        %v3309 = vsel %vm524, %v398, 0.0
        %v3310 = vadd.f32 %v3308, %v3309
        %v3311 = vrot.slane %v3310, 4
        %v3312 = vadd.f32 %v3310, %v3311
        %v3313 = vrot.slane %v3312, 2
        %v3314 = vadd.f32 %v3312, %v3313
        %v3315 = vrot.slane %v3314, 1
        %v3316 = vadd.f32 %v3314, %v3315
        %v3317 = vsel %vm524, %v399, 0.0
        %v3318 = vsel %vm524, %v400, 0.0
        %v3319 = vadd.f32 %v3317, %v3318
        %v3320 = vrot.slane %v3319, 4
        %v3321 = vadd.f32 %v3319, %v3320
        %v3322 = vrot.slane %v3321, 2
        %v3323 = vadd.f32 %v3321, %v3322
        %v3324 = vrot.slane %v3323, 1
        %v3325 = vadd.f32 %v3323, %v3324
        %v3326 = vsel %vm524, %v401, 0.0
        %v3327 = vsel %vm524, %v402, 0.0
        %v3328 = vadd.f32 %v3326, %v3327
        %v3329 = vrot.slane %v3328, 4
        %v3330 = vadd.f32 %v3328, %v3329
        %v3331 = vrot.slane %v3330, 2
        %v3332 = vadd.f32 %v3330, %v3331
        %v3333 = vrot.slane %v3332, 1
        %v3334 = vadd.f32 %v3332, %v3333
        %v3335 = vsel %vm524, %v403, 0.0
        %v3336 = vsel %vm524, %v404, 0.0
        %v3337 = vadd.f32 %v3335, %v3336
        %v3338 = vrot.slane %v3337, 4
        %v3339 = vadd.f32 %v3337, %v3338
        %v3340 = vrot.slane %v3339, 2
        %v3341 = vadd.f32 %v3339, %v3340
        %v3342 = vrot.slane %v3341, 1
        %v3343 = vadd.f32 %v3341, %v3342
        %v3344 = vsel %vm524, %v405, 0.0
        %v3345 = vsel %vm524, %v406, 0.0
        %v3346 = vadd.f32 %v3344, %v3345
        %v3347 = vrot.slane %v3346, 4
        %v3348 = vadd.f32 %v3346, %v3347
        %v3349 = vrot.slane %v3348, 2
        %v3350 = vadd.f32 %v3348, %v3349
        %v3351 = vrot.slane %v3350, 1
        %v3352 = vadd.f32 %v3350, %v3351
        %v3353 = vsel %vm524, %v407, 0.0
        %v3354 = vsel %vm524, %v408, 0.0
        %v3355 = vadd.f32 %v3353, %v3354
        %v3356 = vrot.slane %v3355, 4
        %v3357 = vadd.f32 %v3355, %v3356
        %v3358 = vrot.slane %v3357, 2
        %v3359 = vadd.f32 %v3357, %v3358
        %v3360 = vrot.slane %v3359, 1
        %v3361 = vadd.f32 %v3359, %v3360
        %v3362 = vsel %vm524, %v409, 0.0
        %v3363 = vsel %vm524, %v410, 0.0
        %v3364 = vadd.f32 %v3362, %v3363
        %v3365 = vrot.slane %v3364, 4
        %v3366 = vadd.f32 %v3364, %v3365
        %v3367 = vrot.slane %v3366, 2
        %v3368 = vadd.f32 %v3366, %v3367
        %v3369 = vrot.slane %v3368, 1
        %v3370 = vadd.f32 %v3368, %v3369
        %v3371 = vsel %vm524, %v411, 0.0
        %v3372 = vsel %vm524, %v412, 0.0
        %v3373 = vadd.f32 %v3371, %v3372
        %v3374 = vrot.slane %v3373, 4
        %v3375 = vadd.f32 %v3373, %v3374
        %v3376 = vrot.slane %v3375, 2
        %v3377 = vadd.f32 %v3375, %v3376
        %v3378 = vrot.slane %v3377, 1
        %v3379 = vadd.f32 %v3377, %v3378
        %v3380 = vsel %vm524, %v413, 0.0
        %v3381 = vsel %vm524, %v414, 0.0
        %v3382 = vadd.f32 %v3380, %v3381
        %v3383 = vrot.slane %v3382, 4
        %v3384 = vadd.f32 %v3382, %v3383
        %v3385 = vrot.slane %v3384, 2
        %v3386 = vadd.f32 %v3384, %v3385
        %v3387 = vrot.slane %v3386, 1
        %v3388 = vadd.f32 %v3386, %v3387
        %v3389 = vsel %vm524, %v415, 0.0
        %v3390 = vsel %vm524, %v416, 0.0
        %v3391 = vadd.f32 %v3389, %v3390
        %v3392 = vrot.slane %v3391, 4
        %v3393 = vadd.f32 %v3391, %v3392
        %v3394 = vrot.slane %v3393, 2
        %v3395 = vadd.f32 %v3393, %v3394
        %v3396 = vrot.slane %v3395, 1
        %v3397 = vadd.f32 %v3395, %v3396
        %v3398 = vsel %vm524, %v417, 0.0
        %v3399 = vsel %vm524, %v418, 0.0
        %v3400 = vadd.f32 %v3398, %v3399
        %v3401 = vrot.slane %v3400, 4
        %v3402 = vadd.f32 %v3400, %v3401
        %v3403 = vrot.slane %v3402, 2
        %v3404 = vadd.f32 %v3402, %v3403
        %v3405 = vrot.slane %v3404, 1
        %v3406 = vadd.f32 %v3404, %v3405
        %v3407 = vsel %vm524, %v419, 0.0
        %v3408 = vsel %vm524, %v420, 0.0
        %v3409 = vadd.f32 %v3407, %v3408
        %v3410 = vrot.slane %v3409, 4
        %v3411 = vadd.f32 %v3409, %v3410
        %v3412 = vrot.slane %v3411, 2
        %v3413 = vadd.f32 %v3411, %v3412
        %v3414 = vrot.slane %v3413, 1
        %v3415 = vadd.f32 %v3413, %v3414
        %v3416 = vsel %vm524, %v421, 0.0
        %v3417 = vsel %vm524, %v422, 0.0
        %v3418 = vadd.f32 %v3416, %v3417
        %v3419 = vrot.slane %v3418, 4
        %v3420 = vadd.f32 %v3418, %v3419
        %v3421 = vrot.slane %v3420, 2
        %v3422 = vadd.f32 %v3420, %v3421
        %v3423 = vrot.slane %v3422, 1
        %v3424 = vadd.f32 %v3422, %v3423
        %v3425 = vsel %vm524, %v423, 0.0
        %v3426 = vsel %vm524, %v424, 0.0
        %v3427 = vadd.f32 %v3425, %v3426
        %v3428 = vrot.slane %v3427, 4
        %v3429 = vadd.f32 %v3427, %v3428
        %v3430 = vrot.slane %v3429, 2
        %v3431 = vadd.f32 %v3429, %v3430
        %v3432 = vrot.slane %v3431, 1
        %v3433 = vadd.f32 %v3431, %v3432
        %v3434 = vsel %vm524, %v425, 0.0
        %v3435 = vsel %vm524, %v426, 0.0
        %v3436 = vadd.f32 %v3434, %v3435
        %v3437 = vrot.slane %v3436, 4
        %v3438 = vadd.f32 %v3436, %v3437
        %v3439 = vrot.slane %v3438, 2
        %v3440 = vadd.f32 %v3438, %v3439
        %v3441 = vrot.slane %v3440, 1
        %v3442 = vadd.f32 %v3440, %v3441
        %v3443 = vsel %vm524, %v427, 0.0
        %v3444 = vsel %vm524, %v428, 0.0
        %v3445 = vadd.f32 %v3443, %v3444
        %v3446 = vrot.slane %v3445, 4
        %v3447 = vadd.f32 %v3445, %v3446
        %v3448 = vrot.slane %v3447, 2
        %v3449 = vadd.f32 %v3447, %v3448
        %v3450 = vrot.slane %v3449, 1
        %v3451 = vadd.f32 %v3449, %v3450
        %v3452 = vsel %vm524, %v429, 0.0
        %v3453 = vsel %vm524, %v430, 0.0
        %v3454 = vadd.f32 %v3452, %v3453
        %v3455 = vrot.slane %v3454, 4
        %v3456 = vadd.f32 %v3454, %v3455
        %v3457 = vrot.slane %v3456, 2
        %v3458 = vadd.f32 %v3456, %v3457
        %v3459 = vrot.slane %v3458, 1
        %v3460 = vadd.f32 %v3458, %v3459
        %v3461 = vsel %vm524, %v431, 0.0
        %v3462 = vsel %vm524, %v432, 0.0
        %v3463 = vadd.f32 %v3461, %v3462
        %v3464 = vrot.slane %v3463, 4
        %v3465 = vadd.f32 %v3463, %v3464
        %v3466 = vrot.slane %v3465, 2
        %v3467 = vadd.f32 %v3465, %v3466
        %v3468 = vrot.slane %v3467, 1
        %v3469 = vadd.f32 %v3467, %v3468
        %v3470 = vsel %vm524, %v433, 0.0
        %v3471 = vsel %vm524, %v434, 0.0
        %v3472 = vadd.f32 %v3470, %v3471
        %v3473 = vrot.slane %v3472, 4
        %v3474 = vadd.f32 %v3472, %v3473
        %v3475 = vrot.slane %v3474, 2
        %v3476 = vadd.f32 %v3474, %v3475
        %v3477 = vrot.slane %v3476, 1
        %v3478 = vadd.f32 %v3476, %v3477
        %v3479 = vsel %vm524, %v435, 0.0
        %v3480 = vsel %vm524, %v436, 0.0
        %v3481 = vadd.f32 %v3479, %v3480
        %v3482 = vrot.slane %v3481, 4
        %v3483 = vadd.f32 %v3481, %v3482
        %v3484 = vrot.slane %v3483, 2
        %v3485 = vadd.f32 %v3483, %v3484
        %v3486 = vrot.slane %v3485, 1
        %v3487 = vadd.f32 %v3485, %v3486
        %v3488 = vsel %vm524, %v437, 0.0
        %v3489 = vsel %vm524, %v438, 0.0
        %v3490 = vadd.f32 %v3488, %v3489
        %v3491 = vrot.slane %v3490, 4
        %v3492 = vadd.f32 %v3490, %v3491
        %v3493 = vrot.slane %v3492, 2
        %v3494 = vadd.f32 %v3492, %v3493
        %v3495 = vrot.slane %v3494, 1
        %v3496 = vadd.f32 %v3494, %v3495
        %v3497 = vsel %vm524, %v439, 0.0
        %v3498 = vsel %vm524, %v440, 0.0
        %v3499 = vadd.f32 %v3497, %v3498
        %v3500 = vrot.slane %v3499, 4
        %v3501 = vadd.f32 %v3499, %v3500
        %v3502 = vrot.slane %v3501, 2
        %v3503 = vadd.f32 %v3501, %v3502
        %v3504 = vrot.slane %v3503, 1
        %v3505 = vadd.f32 %v3503, %v3504
        %v3506 = vsel %vm524, %v441, 0.0
        %v3507 = vsel %vm524, %v442, 0.0
        %v3508 = vadd.f32 %v3506, %v3507
        %v3509 = vrot.slane %v3508, 4
        %v3510 = vadd.f32 %v3508, %v3509
        %v3511 = vrot.slane %v3510, 2
        %v3512 = vadd.f32 %v3510, %v3511
        %v3513 = vrot.slane %v3512, 1
        %v3514 = vadd.f32 %v3512, %v3513
        %v3515 = vsel %vm524, %v443, 0.0
        %v3516 = vsel %vm524, %v444, 0.0
        %v3517 = vadd.f32 %v3515, %v3516
        %v3518 = vrot.slane %v3517, 4
        %v3519 = vadd.f32 %v3517, %v3518
        %v3520 = vrot.slane %v3519, 2
        %v3521 = vadd.f32 %v3519, %v3520
        %v3522 = vrot.slane %v3521, 1
        %v3523 = vadd.f32 %v3521, %v3522
        %v3524 = vsel %vm524, %v445, 0.0
        %v3525 = vsel %vm524, %v446, 0.0
        %v3526 = vadd.f32 %v3524, %v3525
        %v3527 = vrot.slane %v3526, 4
        %v3528 = vadd.f32 %v3526, %v3527
        %v3529 = vrot.slane %v3528, 2
        %v3530 = vadd.f32 %v3528, %v3529
        %v3531 = vrot.slane %v3530, 1
        %v3532 = vadd.f32 %v3530, %v3531
        %v3533 = vsel %vm524, %v447, 0.0
        %v3534 = vsel %vm524, %v448, 0.0
        %v3535 = vadd.f32 %v3533, %v3534
        %v3536 = vrot.slane %v3535, 4
        %v3537 = vadd.f32 %v3535, %v3536
        %v3538 = vrot.slane %v3537, 2
        %v3539 = vadd.f32 %v3537, %v3538
        %v3540 = vrot.slane %v3539, 1
        %v3541 = vadd.f32 %v3539, %v3540
        %v3542 = vsel %vm524, %v449, 0.0
        %v3543 = vsel %vm524, %v450, 0.0
        %v3544 = vadd.f32 %v3542, %v3543
        %v3545 = vrot.slane %v3544, 4
        %v3546 = vadd.f32 %v3544, %v3545
        %v3547 = vrot.slane %v3546, 2
        %v3548 = vadd.f32 %v3546, %v3547
        %v3549 = vrot.slane %v3548, 1
        %v3550 = vadd.f32 %v3548, %v3549
        %v3551 = vsel %vm524, %v451, 0.0
        %v3552 = vsel %vm524, %v452, 0.0
        %v3553 = vadd.f32 %v3551, %v3552
        %v3554 = vrot.slane %v3553, 4
        %v3555 = vadd.f32 %v3553, %v3554
        %v3556 = vrot.slane %v3555, 2
        %v3557 = vadd.f32 %v3555, %v3556
        %v3558 = vrot.slane %v3557, 1
        %v3559 = vadd.f32 %v3557, %v3558
        %v3560 = vsel %vm524, %v453, 0.0
        %v3561 = vsel %vm524, %v454, 0.0
        %v3562 = vadd.f32 %v3560, %v3561
        %v3563 = vrot.slane %v3562, 4
        %v3564 = vadd.f32 %v3562, %v3563
        %v3565 = vrot.slane %v3564, 2
        %v3566 = vadd.f32 %v3564, %v3565
        %v3567 = vrot.slane %v3566, 1
        %v3568 = vadd.f32 %v3566, %v3567
        %v3569 = vsel %vm524, %v455, 0.0
        %v3570 = vsel %vm524, %v456, 0.0
        %v3571 = vadd.f32 %v3569, %v3570
        %v3572 = vrot.slane %v3571, 4
        %v3573 = vadd.f32 %v3571, %v3572
        %v3574 = vrot.slane %v3573, 2
        %v3575 = vadd.f32 %v3573, %v3574
        %v3576 = vrot.slane %v3575, 1
        %v3577 = vadd.f32 %v3575, %v3576
        %v3578 = vsel %vm524, %v457, 0.0
        %v3579 = vsel %vm524, %v458, 0.0
        %v3580 = vadd.f32 %v3578, %v3579
        %v3581 = vrot.slane %v3580, 4
        %v3582 = vadd.f32 %v3580, %v3581
        %v3583 = vrot.slane %v3582, 2
        %v3584 = vadd.f32 %v3582, %v3583
        %v3585 = vrot.slane %v3584, 1
        %v3586 = vadd.f32 %v3584, %v3585
        %v3587 = vsel %vm524, %v459, 0.0
        %v3588 = vsel %vm524, %v460, 0.0
        %v3589 = vadd.f32 %v3587, %v3588
        %v3590 = vrot.slane %v3589, 4
        %v3591 = vadd.f32 %v3589, %v3590
        %v3592 = vrot.slane %v3591, 2
        %v3593 = vadd.f32 %v3591, %v3592
        %v3594 = vrot.slane %v3593, 1
        %v3595 = vadd.f32 %v3593, %v3594
        %v3596 = vsel %vm524, %v461, 0.0
        %v3597 = vsel %vm524, %v462, 0.0
        %v3598 = vadd.f32 %v3596, %v3597
        %v3599 = vrot.slane %v3598, 4
        %v3600 = vadd.f32 %v3598, %v3599
        %v3601 = vrot.slane %v3600, 2
        %v3602 = vadd.f32 %v3600, %v3601
        %v3603 = vrot.slane %v3602, 1
        %v3604 = vadd.f32 %v3602, %v3603
        %v3605 = vsel %vm524, %v463, 0.0
        %v3606 = vsel %vm524, %v464, 0.0
        %v3607 = vadd.f32 %v3605, %v3606
        %v3608 = vrot.slane %v3607, 4
        %v3609 = vadd.f32 %v3607, %v3608
        %v3610 = vrot.slane %v3609, 2
        %v3611 = vadd.f32 %v3609, %v3610
        %v3612 = vrot.slane %v3611, 1
        %v3613 = vadd.f32 %v3611, %v3612
        %v3614 = vsel %vm524, %v465, 0.0
        %v3615 = vsel %vm524, %v466, 0.0
        %v3616 = vadd.f32 %v3614, %v3615
        %v3617 = vrot.slane %v3616, 4
        %v3618 = vadd.f32 %v3616, %v3617
        %v3619 = vrot.slane %v3618, 2
        %v3620 = vadd.f32 %v3618, %v3619
        %v3621 = vrot.slane %v3620, 1
        %v3622 = vadd.f32 %v3620, %v3621
        %v3623 = vsel %vm524, %v467, 0.0
        %v3624 = vsel %vm524, %v468, 0.0
        %v3625 = vadd.f32 %v3623, %v3624
        %v3626 = vrot.slane %v3625, 4
        %v3627 = vadd.f32 %v3625, %v3626
        %v3628 = vrot.slane %v3627, 2
        %v3629 = vadd.f32 %v3627, %v3628
        %v3630 = vrot.slane %v3629, 1
        %v3631 = vadd.f32 %v3629, %v3630
        %v3632 = vsel %vm524, %v469, 0.0
        %v3633 = vsel %vm524, %v470, 0.0
        %v3634 = vadd.f32 %v3632, %v3633
        %v3635 = vrot.slane %v3634, 4
        %v3636 = vadd.f32 %v3634, %v3635
        %v3637 = vrot.slane %v3636, 2
        %v3638 = vadd.f32 %v3636, %v3637
        %v3639 = vrot.slane %v3638, 1
        %v3640 = vadd.f32 %v3638, %v3639
        %v3641 = vsel %vm524, %v471, 0.0
        %v3642 = vsel %vm524, %v472, 0.0
        %v3643 = vadd.f32 %v3641, %v3642
        %v3644 = vrot.slane %v3643, 4
        %v3645 = vadd.f32 %v3643, %v3644
        %v3646 = vrot.slane %v3645, 2
        %v3647 = vadd.f32 %v3645, %v3646
        %v3648 = vrot.slane %v3647, 1
        %v3649 = vadd.f32 %v3647, %v3648
        %v3650 = vsel %vm524, %v473, 0.0
        %v3651 = vsel %vm524, %v474, 0.0
        %v3652 = vadd.f32 %v3650, %v3651
        %v3653 = vrot.slane %v3652, 4
        %v3654 = vadd.f32 %v3652, %v3653
        %v3655 = vrot.slane %v3654, 2
        %v3656 = vadd.f32 %v3654, %v3655
        %v3657 = vrot.slane %v3656, 1
        %v3658 = vadd.f32 %v3656, %v3657
        %v3659 = vsel %vm524, %v475, 0.0
        %v3660 = vsel %vm524, %v476, 0.0
        %v3661 = vadd.f32 %v3659, %v3660
        %v3662 = vrot.slane %v3661, 4
        %v3663 = vadd.f32 %v3661, %v3662
        %v3664 = vrot.slane %v3663, 2
        %v3665 = vadd.f32 %v3663, %v3664
        %v3666 = vrot.slane %v3665, 1
        %v3667 = vadd.f32 %v3665, %v3666
        %v3668 = vsel %vm524, %v477, 0.0
        %v3669 = vsel %vm524, %v478, 0.0
        %v3670 = vadd.f32 %v3668, %v3669
        %v3671 = vrot.slane %v3670, 4
        %v3672 = vadd.f32 %v3670, %v3671
        %v3673 = vrot.slane %v3672, 2
        %v3674 = vadd.f32 %v3672, %v3673
        %v3675 = vrot.slane %v3674, 1
        %v3676 = vadd.f32 %v3674, %v3675
        %v3677 = vsel %vm524, %v479, 0.0
        %v3678 = vsel %vm524, %v480, 0.0
        %v3679 = vadd.f32 %v3677, %v3678
        %v3680 = vrot.slane %v3679, 4
        %v3681 = vadd.f32 %v3679, %v3680
        %v3682 = vrot.slane %v3681, 2
        %v3683 = vadd.f32 %v3681, %v3682
        %v3684 = vrot.slane %v3683, 1
        %v3685 = vadd.f32 %v3683, %v3684
        %v3686 = vsel %vm524, %v481, 0.0
        %v3687 = vsel %vm524, %v482, 0.0
        %v3688 = vadd.f32 %v3686, %v3687
        %v3689 = vrot.slane %v3688, 4
        %v3690 = vadd.f32 %v3688, %v3689
        %v3691 = vrot.slane %v3690, 2
        %v3692 = vadd.f32 %v3690, %v3691
        %v3693 = vrot.slane %v3692, 1
        %v3694 = vadd.f32 %v3692, %v3693
        %v3695 = vsel %vm524, %v483, 0.0
        %v3696 = vsel %vm524, %v484, 0.0
        %v3697 = vadd.f32 %v3695, %v3696
        %v3698 = vrot.slane %v3697, 4
        %v3699 = vadd.f32 %v3697, %v3698
        %v3700 = vrot.slane %v3699, 2
        %v3701 = vadd.f32 %v3699, %v3700
        %v3702 = vrot.slane %v3701, 1
        %v3703 = vadd.f32 %v3701, %v3702
        %v3704 = vsel %vm524, %v485, 0.0
        %v3705 = vsel %vm524, %v486, 0.0
        %v3706 = vadd.f32 %v3704, %v3705
        %v3707 = vrot.slane %v3706, 4
        %v3708 = vadd.f32 %v3706, %v3707
        %v3709 = vrot.slane %v3708, 2
        %v3710 = vadd.f32 %v3708, %v3709
        %v3711 = vrot.slane %v3710, 1
        %v3712 = vadd.f32 %v3710, %v3711
        %v3713 = vsel %vm524, %v487, 0.0
        %v3714 = vsel %vm524, %v488, 0.0
        %v3715 = vadd.f32 %v3713, %v3714
        %v3716 = vrot.slane %v3715, 4
        %v3717 = vadd.f32 %v3715, %v3716
        %v3718 = vrot.slane %v3717, 2
        %v3719 = vadd.f32 %v3717, %v3718
        %v3720 = vrot.slane %v3719, 1
        %v3721 = vadd.f32 %v3719, %v3720
        %v3722 = vsel %vm524, %v489, 0.0
        %v3723 = vsel %vm524, %v490, 0.0
        %v3724 = vadd.f32 %v3722, %v3723
        %v3725 = vrot.slane %v3724, 4
        %v3726 = vadd.f32 %v3724, %v3725
        %v3727 = vrot.slane %v3726, 2
        %v3728 = vadd.f32 %v3726, %v3727
        %v3729 = vrot.slane %v3728, 1
        %v3730 = vadd.f32 %v3728, %v3729
        %v3731 = vsel %vm524, %v491, 0.0
        %v3732 = vsel %vm524, %v492, 0.0
        %v3733 = vadd.f32 %v3731, %v3732
        %v3734 = vrot.slane %v3733, 4
        %v3735 = vadd.f32 %v3733, %v3734
        %v3736 = vrot.slane %v3735, 2
        %v3737 = vadd.f32 %v3735, %v3736
        %v3738 = vrot.slane %v3737, 1
        %v3739 = vadd.f32 %v3737, %v3738
        %v3740 = vsel %vm524, %v493, 0.0
        %v3741 = vsel %vm524, %v494, 0.0
        %v3742 = vadd.f32 %v3740, %v3741
        %v3743 = vrot.slane %v3742, 4
        %v3744 = vadd.f32 %v3742, %v3743
        %v3745 = vrot.slane %v3744, 2
        %v3746 = vadd.f32 %v3744, %v3745
        %v3747 = vrot.slane %v3746, 1
        %v3748 = vadd.f32 %v3746, %v3747
        %v3749 = vsel %vm524, %v495, 0.0
        %v3750 = vsel %vm524, %v496, 0.0
        %v3751 = vadd.f32 %v3749, %v3750
        %v3752 = vrot.slane %v3751, 4
        %v3753 = vadd.f32 %v3751, %v3752
        %v3754 = vrot.slane %v3753, 2
        %v3755 = vadd.f32 %v3753, %v3754
        %v3756 = vrot.slane %v3755, 1
        %v3757 = vadd.f32 %v3755, %v3756
        %v3758 = vsel %vm524, %v497, 0.0
        %v3759 = vsel %vm524, %v498, 0.0
        %v3760 = vadd.f32 %v3758, %v3759
        %v3761 = vrot.slane %v3760, 4
        %v3762 = vadd.f32 %v3760, %v3761
        %v3763 = vrot.slane %v3762, 2
        %v3764 = vadd.f32 %v3762, %v3763
        %v3765 = vrot.slane %v3764, 1
        %v3766 = vadd.f32 %v3764, %v3765
        %v3767 = vsel %vm524, %v499, 0.0
        %v3768 = vsel %vm524, %v500, 0.0
        %v3769 = vadd.f32 %v3767, %v3768
        %v3770 = vrot.slane %v3769, 4
        %v3771 = vadd.f32 %v3769, %v3770
        %v3772 = vrot.slane %v3771, 2
        %v3773 = vadd.f32 %v3771, %v3772
        %v3774 = vrot.slane %v3773, 1
        %v3775 = vadd.f32 %v3773, %v3774
        %v3776 = vsel %vm524, %v501, 0.0
        %v3777 = vsel %vm524, %v502, 0.0
        %v3778 = vadd.f32 %v3776, %v3777
        %v3779 = vrot.slane %v3778, 4
        %v3780 = vadd.f32 %v3778, %v3779
        %v3781 = vrot.slane %v3780, 2
        %v3782 = vadd.f32 %v3780, %v3781
        %v3783 = vrot.slane %v3782, 1
        %v3784 = vadd.f32 %v3782, %v3783
        %v3785 = vsel %vm524, %v503, 0.0
        %v3786 = vsel %vm524, %v504, 0.0
        %v3787 = vadd.f32 %v3785, %v3786
        %v3788 = vrot.slane %v3787, 4
        %v3789 = vadd.f32 %v3787, %v3788
        %v3790 = vrot.slane %v3789, 2
        %v3791 = vadd.f32 %v3789, %v3790
        %v3792 = vrot.slane %v3791, 1
        %v3793 = vadd.f32 %v3791, %v3792
        %3795 = vset.pattern.permute.xlu0 1
        %3796 = vperm.xlu0 %3795, %v505
        %v3797 = vpop.permute.xlu0 %3796
        %3799 = vset.pattern.permute.xlu0 1
        %3800 = vperm.xlu0 %3799, %v506
        %v3801 = vpop.permute.xlu0 %3800
        %3803 = vset.pattern.permute.xlu0 1
        %3804 = vperm.xlu0 %3803, %v507
        %v3805 = vpop.permute.xlu0 %3804
        %3807 = vset.pattern.permute.xlu0 1
        %3808 = vperm.xlu0 %3807, %v508
        %v3809 = vpop.permute.xlu0 %3808
        %3811 = vset.pattern.permute.xlu0 1
        %3812 = vperm.xlu0 %3811, %v509
        %v3813 = vpop.permute.xlu0 %3812
        %3815 = vset.pattern.permute.xlu0 1
        %3816 = vperm.xlu0 %3815, %v510
        %v3817 = vpop.permute.xlu0 %3816
        %3819 = vset.pattern.permute.xlu0 1
        %3820 = vperm.xlu0 %3819, %v511
        %v3821 = vpop.permute.xlu0 %3820
        %3823 = vset.pattern.permute.xlu0 1
        %3824 = vperm.xlu0 %3823, %v512
        %v3825 = vpop.permute.xlu0 %3824
        %3827 = vset.pattern.permute.xlu0 1
        %3828 = vperm.xlu0 %3827, %v513
        %v3829 = vpop.permute.xlu0 %3828
        %3831 = vset.pattern.permute.xlu0 1
        %3832 = vperm.xlu0 %3831, %v514
        %v3833 = vpop.permute.xlu0 %3832
        %3835 = vset.pattern.permute.xlu0 1
        %3836 = vperm.xlu0 %3835, %v515
        %v3837 = vpop.permute.xlu0 %3836
        %3839 = vset.pattern.permute.xlu0 1
        %3840 = vperm.xlu0 %3839, %v516
        %v3841 = vpop.permute.xlu0 %3840
        %3843 = vset.pattern.permute.xlu0 1
        %3844 = vperm.xlu0 %3843, %v517
        %v3845 = vpop.permute.xlu0 %3844
        %3847 = vset.pattern.permute.xlu0 1
        %3848 = vperm.xlu0 %3847, %v518
        %v3849 = vpop.permute.xlu0 %3848
        %3851 = vset.pattern.permute.xlu0 1
        %3852 = vperm.xlu0 %3851, %v519
        %v3853 = vpop.permute.xlu0 %3852
        %3855 = vset.pattern.permute.xlu0 1
        %3856 = vperm.xlu0 %3855, %v520
        %v3857 = vpop.permute.xlu0 %3856
        %v3858 = vrot.slane %v3797, 1
        %v3859 = vrot.slane %v3797, 2
        %v3860 = vrot.slane %v3797, 3
        %v3861 = vrot.slane %v3797, 4
        %v3862 = vrot.slane %v3797, 5
        %v3863 = vrot.slane %v3797, 6
        %v3864 = vrot.slane %v3797, 7
        %v3865 = vrot.slane %v3801, 1
        %v3866 = vrot.slane %v3801, 2
        %v3867 = vrot.slane %v3801, 3
        %v3868 = vrot.slane %v3801, 4
        %v3869 = vrot.slane %v3801, 5
        %v3870 = vrot.slane %v3801, 6
        %v3871 = vrot.slane %v3801, 7
        %v3872 = vrot.slane %v3805, 1
        %v3873 = vrot.slane %v3805, 2
        %v3874 = vrot.slane %v3805, 3
        %v3875 = vrot.slane %v3805, 4
        %v3876 = vrot.slane %v3805, 5
        %v3877 = vrot.slane %v3805, 6
        %v3878 = vrot.slane %v3805, 7
        %v3879 = vrot.slane %v3809, 1
        %v3880 = vrot.slane %v3809, 2
        %v3881 = vrot.slane %v3809, 3
        %v3882 = vrot.slane %v3809, 4
        %v3883 = vrot.slane %v3809, 5
        %v3884 = vrot.slane %v3809, 6
        %v3885 = vrot.slane %v3809, 7
        %v3886 = vrot.slane %v3813, 1
        %v3887 = vrot.slane %v3813, 2
        %v3888 = vrot.slane %v3813, 3
        %v3889 = vrot.slane %v3813, 4
        %v3890 = vrot.slane %v3813, 5
        %v3891 = vrot.slane %v3813, 6
        %v3892 = vrot.slane %v3813, 7
        %v3893 = vrot.slane %v3817, 1
        %v3894 = vrot.slane %v3817, 2
        %v3895 = vrot.slane %v3817, 3
        %v3896 = vrot.slane %v3817, 4
        %v3897 = vrot.slane %v3817, 5
        %v3898 = vrot.slane %v3817, 6
        %v3899 = vrot.slane %v3817, 7
        %v3900 = vrot.slane %v3821, 1
        %v3901 = vrot.slane %v3821, 2
        %v3902 = vrot.slane %v3821, 3
        %v3903 = vrot.slane %v3821, 4
        %v3904 = vrot.slane %v3821, 5
        %v3905 = vrot.slane %v3821, 6
        %v3906 = vrot.slane %v3821, 7
        %v3907 = vrot.slane %v3825, 1
        %v3908 = vrot.slane %v3825, 2
        %v3909 = vrot.slane %v3825, 3
        %v3910 = vrot.slane %v3825, 4
        %v3911 = vrot.slane %v3825, 5
        %v3912 = vrot.slane %v3825, 6
        %v3913 = vrot.slane %v3825, 7
        %v3914 = vrot.slane %v3829, 1
        %v3915 = vrot.slane %v3829, 2
        %v3916 = vrot.slane %v3829, 3
        %v3917 = vrot.slane %v3829, 4
        %v3918 = vrot.slane %v3829, 5
        %v3919 = vrot.slane %v3829, 6
        %v3920 = vrot.slane %v3829, 7
        %v3921 = vrot.slane %v3833, 1
        %v3922 = vrot.slane %v3833, 2
        %v3923 = vrot.slane %v3833, 3
        %v3924 = vrot.slane %v3833, 4
        %v3925 = vrot.slane %v3833, 5
        %v3926 = vrot.slane %v3833, 6
        %v3927 = vrot.slane %v3833, 7
        %v3928 = vrot.slane %v3837, 1
        %v3929 = vrot.slane %v3837, 2
        %v3930 = vrot.slane %v3837, 3
        %v3931 = vrot.slane %v3837, 4
        %v3932 = vrot.slane %v3837, 5
        %v3933 = vrot.slane %v3837, 6
        %v3934 = vrot.slane %v3837, 7
        %v3935 = vrot.slane %v3841, 1
        %v3936 = vrot.slane %v3841, 2
        %v3937 = vrot.slane %v3841, 3
        %v3938 = vrot.slane %v3841, 4
        %v3939 = vrot.slane %v3841, 5
        %v3940 = vrot.slane %v3841, 6
        %v3941 = vrot.slane %v3841, 7
        %v3942 = vrot.slane %v3845, 1
        %v3943 = vrot.slane %v3845, 2
        %v3944 = vrot.slane %v3845, 3
        %v3945 = vrot.slane %v3845, 4
        %v3946 = vrot.slane %v3845, 5
        %v3947 = vrot.slane %v3845, 6
        %v3948 = vrot.slane %v3845, 7
        %v3949 = vrot.slane %v3849, 1
        %v3950 = vrot.slane %v3849, 2
        %v3951 = vrot.slane %v3849, 3
        %v3952 = vrot.slane %v3849, 4
        %v3953 = vrot.slane %v3849, 5
        %v3954 = vrot.slane %v3849, 6
        %v3955 = vrot.slane %v3849, 7
        %v3956 = vrot.slane %v3853, 1
        %v3957 = vrot.slane %v3853, 2
        %v3958 = vrot.slane %v3853, 3
        %v3959 = vrot.slane %v3853, 4
        %v3960 = vrot.slane %v3853, 5
        %v3961 = vrot.slane %v3853, 6
        %v3962 = vrot.slane %v3853, 7
        %v3963 = vrot.slane %v3857, 1
        %v3964 = vrot.slane %v3857, 2
        %v3965 = vrot.slane %v3857, 3
        %v3966 = vrot.slane %v3857, 4
        %v3967 = vrot.slane %v3857, 5
        %v3968 = vrot.slane %v3857, 6
        %v3969 = vrot.slane %v3857, 7
        %v4098 = vmul.f32 %v2650, %v3797
        %v4099 = vmul.f32 %v2659, %v3858
        %v4100 = vmul.f32 %v2668, %v3859
        %v4101 = vmul.f32 %v2677, %v3860
        %v4102 = vmul.f32 %v2686, %v3861
        %v4103 = vmul.f32 %v2695, %v3862
        %v4104 = vmul.f32 %v2704, %v3863
        %v4105 = vmul.f32 %v2713, %v3864
        %v4106 = vmul.f32 %v2722, %v3801
        %v4107 = vmul.f32 %v2731, %v3865
        %v4108 = vmul.f32 %v2740, %v3866
        %v4109 = vmul.f32 %v2749, %v3867
        %v4110 = vmul.f32 %v2758, %v3868
        %v4111 = vmul.f32 %v2767, %v3869
        %v4112 = vmul.f32 %v2776, %v3870
        %v4113 = vmul.f32 %v2785, %v3871
        %v4114 = vmul.f32 %v2794, %v3805
        %v4115 = vmul.f32 %v2803, %v3872
        %v4116 = vmul.f32 %v2812, %v3873
        %v4117 = vmul.f32 %v2821, %v3874
        %v4118 = vmul.f32 %v2830, %v3875
        %v4119 = vmul.f32 %v2839, %v3876
        %v4120 = vmul.f32 %v2848, %v3877
        %v4121 = vmul.f32 %v2857, %v3878
        %v4122 = vmul.f32 %v2866, %v3809
        %v4123 = vmul.f32 %v2875, %v3879
        %v4124 = vmul.f32 %v2884, %v3880
        %v4125 = vmul.f32 %v2893, %v3881
        %v4126 = vmul.f32 %v2902, %v3882
        %v4127 = vmul.f32 %v2911, %v3883
        %v4128 = vmul.f32 %v2920, %v3884
        %v4129 = vmul.f32 %v2929, %v3885
        %v4130 = vmul.f32 %v2938, %v3813
        %v4131 = vmul.f32 %v2947, %v3886
        %v4132 = vmul.f32 %v2956, %v3887
        %v4133 = vmul.f32 %v2965, %v3888
        %v4134 = vmul.f32 %v2974, %v3889
        %v4135 = vmul.f32 %v2983, %v3890
        %v4136 = vmul.f32 %v2992, %v3891
        %v4137 = vmul.f32 %v3001, %v3892
        %v4138 = vmul.f32 %v3010, %v3817
        %v4139 = vmul.f32 %v3019, %v3893
        %v4140 = vmul.f32 %v3028, %v3894
        %v4141 = vmul.f32 %v3037, %v3895
        %v4142 = vmul.f32 %v3046, %v3896
        %v4143 = vmul.f32 %v3055, %v3897
        %v4144 = vmul.f32 %v3064, %v3898
        %v4145 = vmul.f32 %v3073, %v3899
        %v4146 = vmul.f32 %v3082, %v3821
        %v4147 = vmul.f32 %v3091, %v3900
        %v4148 = vmul.f32 %v3100, %v3901
        %v4149 = vmul.f32 %v3109, %v3902
        %v4150 = vmul.f32 %v3118, %v3903
        %v4151 = vmul.f32 %v3127, %v3904
        %v4152 = vmul.f32 %v3136, %v3905
        %v4153 = vmul.f32 %v3145, %v3906
        %v4154 = vmul.f32 %v3154, %v3825
        %v4155 = vmul.f32 %v3163, %v3907
        %v4156 = vmul.f32 %v3172, %v3908
        %v4157 = vmul.f32 %v3181, %v3909
        %v4158 = vmul.f32 %v3190, %v3910
        %v4159 = vmul.f32 %v3199, %v3911
        %v4160 = vmul.f32 %v3208, %v3912
        %v4161 = vmul.f32 %v3217, %v3913
        %v4162 = vmul.f32 %v3226, %v3829
        %v4163 = vmul.f32 %v3235, %v3914
        %v4164 = vmul.f32 %v3244, %v3915
        %v4165 = vmul.f32 %v3253, %v3916
        %v4166 = vmul.f32 %v3262, %v3917
        %v4167 = vmul.f32 %v3271, %v3918
        %v4168 = vmul.f32 %v3280, %v3919
        %v4169 = vmul.f32 %v3289, %v3920
        %v4170 = vmul.f32 %v3298, %v3833
        %v4171 = vmul.f32 %v3307, %v3921
        %v4172 = vmul.f32 %v3316, %v3922
        %v4173 = vmul.f32 %v3325, %v3923
        %v4174 = vmul.f32 %v3334, %v3924
        %v4175 = vmul.f32 %v3343, %v3925
        %v4176 = vmul.f32 %v3352, %v3926
        %v4177 = vmul.f32 %v3361, %v3927
        %v4178 = vmul.f32 %v3370, %v3837
        %v4179 = vmul.f32 %v3379, %v3928
        %v4180 = vmul.f32 %v3388, %v3929
        %v4181 = vmul.f32 %v3397, %v3930
        %v4182 = vmul.f32 %v3406, %v3931
        %v4183 = vmul.f32 %v3415, %v3932
        %v4184 = vmul.f32 %v3424, %v3933
        %v4185 = vmul.f32 %v3433, %v3934
        %v4186 = vmul.f32 %v3442, %v3841
        %v4187 = vmul.f32 %v3451, %v3935
        %v4188 = vmul.f32 %v3460, %v3936
        %v4189 = vmul.f32 %v3469, %v3937
        %v4190 = vmul.f32 %v3478, %v3938
        %v4191 = vmul.f32 %v3487, %v3939
        %v4192 = vmul.f32 %v3496, %v3940
        %v4193 = vmul.f32 %v3505, %v3941
        %v4194 = vmul.f32 %v3514, %v3845
        %v4195 = vmul.f32 %v3523, %v3942
        %v4196 = vmul.f32 %v3532, %v3943
        %v4197 = vmul.f32 %v3541, %v3944
        %v4198 = vmul.f32 %v3550, %v3945
        %v4199 = vmul.f32 %v3559, %v3946
        %v4200 = vmul.f32 %v3568, %v3947
        %v4201 = vmul.f32 %v3577, %v3948
        %v4202 = vmul.f32 %v3586, %v3849
        %v4203 = vmul.f32 %v3595, %v3949
        %v4204 = vmul.f32 %v3604, %v3950
        %v4205 = vmul.f32 %v3613, %v3951
        %v4206 = vmul.f32 %v3622, %v3952
        %v4207 = vmul.f32 %v3631, %v3953
        %v4208 = vmul.f32 %v3640, %v3954
        %v4209 = vmul.f32 %v3649, %v3955
        %v4210 = vmul.f32 %v3658, %v3853
        %v4211 = vmul.f32 %v3667, %v3956
        %v4212 = vmul.f32 %v3676, %v3957
        %v4213 = vmul.f32 %v3685, %v3958
        %v4214 = vmul.f32 %v3694, %v3959
        %v4215 = vmul.f32 %v3703, %v3960
        %v4216 = vmul.f32 %v3712, %v3961
        %v4217 = vmul.f32 %v3721, %v3962
        %v4218 = vmul.f32 %v3730, %v3857
        %v4219 = vmul.f32 %v3739, %v3963
        %v4220 = vmul.f32 %v3748, %v3964
        %v4221 = vmul.f32 %v3757, %v3965
        %v4222 = vmul.f32 %v3766, %v3966
        %v4223 = vmul.f32 %v3775, %v3967
        %v4224 = vmul.f32 %v3784, %v3968
        %v4225 = vmul.f32 %v3793, %v3969
        %4226 = vset.pattern.permute.xlu0 2
        %4227 = vperm.xlu0 %4226, %v505
        %v4228 = vpop.permute.xlu0 %4227
        %4230 = vset.pattern.permute.xlu0 2
        %4231 = vperm.xlu0 %4230, %v506
        %v4232 = vpop.permute.xlu0 %4231
        %4234 = vset.pattern.permute.xlu0 2
        %4235 = vperm.xlu0 %4234, %v507
        %v4236 = vpop.permute.xlu0 %4235
        %4238 = vset.pattern.permute.xlu0 2
        %4239 = vperm.xlu0 %4238, %v508
        %v4240 = vpop.permute.xlu0 %4239
        %4242 = vset.pattern.permute.xlu0 2
        %4243 = vperm.xlu0 %4242, %v509
        %v4244 = vpop.permute.xlu0 %4243
        %4246 = vset.pattern.permute.xlu0 2
        %4247 = vperm.xlu0 %4246, %v510
        %v4248 = vpop.permute.xlu0 %4247
        %4250 = vset.pattern.permute.xlu0 2
        %4251 = vperm.xlu0 %4250, %v511
        %v4252 = vpop.permute.xlu0 %4251
        %4254 = vset.pattern.permute.xlu0 2
        %4255 = vperm.xlu0 %4254, %v512
        %v4256 = vpop.permute.xlu0 %4255
        %4258 = vset.pattern.permute.xlu0 2
        %4259 = vperm.xlu0 %4258, %v513
        %v4260 = vpop.permute.xlu0 %4259
        %4262 = vset.pattern.permute.xlu0 2
        %4263 = vperm.xlu0 %4262, %v514
        %v4264 = vpop.permute.xlu0 %4263
        %4266 = vset.pattern.permute.xlu0 2
        %4267 = vperm.xlu0 %4266, %v515
        %v4268 = vpop.permute.xlu0 %4267
        %4270 = vset.pattern.permute.xlu0 2
        %4271 = vperm.xlu0 %4270, %v516
        %v4272 = vpop.permute.xlu0 %4271
        %4274 = vset.pattern.permute.xlu0 2
        %4275 = vperm.xlu0 %4274, %v517
        %v4276 = vpop.permute.xlu0 %4275
        %4278 = vset.pattern.permute.xlu0 2
        %4279 = vperm.xlu0 %4278, %v518
        %v4280 = vpop.permute.xlu0 %4279
        %4282 = vset.pattern.permute.xlu0 2
        %4283 = vperm.xlu0 %4282, %v519
        %v4284 = vpop.permute.xlu0 %4283
        %4286 = vset.pattern.permute.xlu0 2
        %4287 = vperm.xlu0 %4286, %v520
        %v4288 = vpop.permute.xlu0 %4287
        %v4290 = vlaneseq
        %v4291 = vshrl.u32 %v4290, 7
        %v4292 = vsub.s32 0, %v4291
        %v4293 = vrot.slane %v523, %v4292
        %v4294 = vmul.f32 %v4228, %v4293
        %v4295 = vmul.f32 %v4232, %v4293
        %v4296 = vmul.f32 %v4236, %v4293
        %v4297 = vmul.f32 %v4240, %v4293
        %v4298 = vmul.f32 %v4244, %v4293
        %v4299 = vmul.f32 %v4248, %v4293
        %v4300 = vmul.f32 %v4252, %v4293
        %v4301 = vmul.f32 %v4256, %v4293
        %v4302 = vmul.f32 %v4260, %v4293
        %v4303 = vmul.f32 %v4264, %v4293
        %v4304 = vmul.f32 %v4268, %v4293
        %v4305 = vmul.f32 %v4272, %v4293
        %v4306 = vmul.f32 %v4276, %v4293
        %v4307 = vmul.f32 %v4280, %v4293
        %v4308 = vmul.f32 %v4284, %v4293
        %v4309 = vmul.f32 %v4288, %v4293
        %v4438 = vrot.slane %v4099, 7
        %vm4439 = vcmask 1041409
        %v4440 = vsel %vm4439, %v4438, %v4098
        %v4441 = vrot.slane %v4100, 6
        %vm4442 = vcmask 1042434
        %v4443 = vsel %vm4442, %v4441, %v4440
        %v4444 = vrot.slane %v4101, 5
        %vm4445 = vcmask 1043459
        %v4446 = vsel %vm4445, %v4444, %v4443
        %v4447 = vrot.slane %v4102, 4
        %vm4448 = vcmask 1044484
        %v4449 = vsel %vm4448, %v4447, %v4446
        %v4450 = vrot.slane %v4103, 3
        %vm4451 = vcmask 1045509
        %v4452 = vsel %vm4451, %v4450, %v4449
        %v4453 = vrot.slane %v4104, 2
        %vm4454 = vcmask 1046534
        %v4455 = vsel %vm4454, %v4453, %v4452
        %v4456 = vrot.slane %v4105, 1
        %vm4457 = vcmask 1047559
        %v4458 = vsel %vm4457, %v4456, %v4455
        %v4459 = vrot.slane %v4107, 7
        %v4460 = vsel %vm4439, %v4459, %v4106
        %v4461 = vrot.slane %v4108, 6
        %v4462 = vsel %vm4442, %v4461, %v4460
        %v4463 = vrot.slane %v4109, 5
        %v4464 = vsel %vm4445, %v4463, %v4462
        %v4465 = vrot.slane %v4110, 4
        %v4466 = vsel %vm4448, %v4465, %v4464
        %v4467 = vrot.slane %v4111, 3
        %v4468 = vsel %vm4451, %v4467, %v4466
        %v4469 = vrot.slane %v4112, 2
        %v4470 = vsel %vm4454, %v4469, %v4468
        %v4471 = vrot.slane %v4113, 1
        %v4472 = vsel %vm4457, %v4471, %v4470
        %v4473 = vrot.slane %v4115, 7
        %v4474 = vsel %vm4439, %v4473, %v4114
        %v4475 = vrot.slane %v4116, 6
        %v4476 = vsel %vm4442, %v4475, %v4474
        %v4477 = vrot.slane %v4117, 5
        %v4478 = vsel %vm4445, %v4477, %v4476
        %v4479 = vrot.slane %v4118, 4
        %v4480 = vsel %vm4448, %v4479, %v4478
        %v4481 = vrot.slane %v4119, 3
        %v4482 = vsel %vm4451, %v4481, %v4480
        %v4483 = vrot.slane %v4120, 2
        %v4484 = vsel %vm4454, %v4483, %v4482
        %v4485 = vrot.slane %v4121, 1
        %v4486 = vsel %vm4457, %v4485, %v4484
        %v4487 = vrot.slane %v4123, 7
        %v4488 = vsel %vm4439, %v4487, %v4122
        %v4489 = vrot.slane %v4124, 6
        %v4490 = vsel %vm4442, %v4489, %v4488
        %v4491 = vrot.slane %v4125, 5
        %v4492 = vsel %vm4445, %v4491, %v4490
        %v4493 = vrot.slane %v4126, 4
        %v4494 = vsel %vm4448, %v4493, %v4492
        %v4495 = vrot.slane %v4127, 3
        %v4496 = vsel %vm4451, %v4495, %v4494
        %v4497 = vrot.slane %v4128, 2
        %v4498 = vsel %vm4454, %v4497, %v4496
        %v4499 = vrot.slane %v4129, 1
        %v4500 = vsel %vm4457, %v4499, %v4498
        %v4501 = vrot.slane %v4131, 7
        %v4502 = vsel %vm4439, %v4501, %v4130
        %v4503 = vrot.slane %v4132, 6
        %v4504 = vsel %vm4442, %v4503, %v4502
        %v4505 = vrot.slane %v4133, 5
        %v4506 = vsel %vm4445, %v4505, %v4504
        %v4507 = vrot.slane %v4134, 4
        %v4508 = vsel %vm4448, %v4507, %v4506
        %v4509 = vrot.slane %v4135, 3
        %v4510 = vsel %vm4451, %v4509, %v4508
        %v4511 = vrot.slane %v4136, 2
        %v4512 = vsel %vm4454, %v4511, %v4510
        %v4513 = vrot.slane %v4137, 1
        %v4514 = vsel %vm4457, %v4513, %v4512
        %v4515 = vrot.slane %v4139, 7
        %v4516 = vsel %vm4439, %v4515, %v4138
        %v4517 = vrot.slane %v4140, 6
        %v4518 = vsel %vm4442, %v4517, %v4516
        %v4519 = vrot.slane %v4141, 5
        %v4520 = vsel %vm4445, %v4519, %v4518
        %v4521 = vrot.slane %v4142, 4
        %v4522 = vsel %vm4448, %v4521, %v4520
        %v4523 = vrot.slane %v4143, 3
        %v4524 = vsel %vm4451, %v4523, %v4522
        %v4525 = vrot.slane %v4144, 2
        %v4526 = vsel %vm4454, %v4525, %v4524
        %v4527 = vrot.slane %v4145, 1
        %v4528 = vsel %vm4457, %v4527, %v4526
        %v4529 = vrot.slane %v4147, 7
        %v4530 = vsel %vm4439, %v4529, %v4146
        %v4531 = vrot.slane %v4148, 6
        %v4532 = vsel %vm4442, %v4531, %v4530
        %v4533 = vrot.slane %v4149, 5
        %v4534 = vsel %vm4445, %v4533, %v4532
        %v4535 = vrot.slane %v4150, 4
        %v4536 = vsel %vm4448, %v4535, %v4534
        %v4537 = vrot.slane %v4151, 3
        %v4538 = vsel %vm4451, %v4537, %v4536
        %v4539 = vrot.slane %v4152, 2
        %v4540 = vsel %vm4454, %v4539, %v4538
        %v4541 = vrot.slane %v4153, 1
        %v4542 = vsel %vm4457, %v4541, %v4540
        %v4543 = vrot.slane %v4155, 7
        %v4544 = vsel %vm4439, %v4543, %v4154
        %v4545 = vrot.slane %v4156, 6
        %v4546 = vsel %vm4442, %v4545, %v4544
        %v4547 = vrot.slane %v4157, 5
        %v4548 = vsel %vm4445, %v4547, %v4546
        %v4549 = vrot.slane %v4158, 4
        %v4550 = vsel %vm4448, %v4549, %v4548
        %v4551 = vrot.slane %v4159, 3
        %v4552 = vsel %vm4451, %v4551, %v4550
        %v4553 = vrot.slane %v4160, 2
        %v4554 = vsel %vm4454, %v4553, %v4552
        %v4555 = vrot.slane %v4161, 1
        %v4556 = vsel %vm4457, %v4555, %v4554
        %v4557 = vrot.slane %v4163, 7
        %v4558 = vsel %vm4439, %v4557, %v4162
        %v4559 = vrot.slane %v4164, 6
        %v4560 = vsel %vm4442, %v4559, %v4558
        %v4561 = vrot.slane %v4165, 5
        %v4562 = vsel %vm4445, %v4561, %v4560
        %v4563 = vrot.slane %v4166, 4
        %v4564 = vsel %vm4448, %v4563, %v4562
        %v4565 = vrot.slane %v4167, 3
        %v4566 = vsel %vm4451, %v4565, %v4564
        %v4567 = vrot.slane %v4168, 2
        %v4568 = vsel %vm4454, %v4567, %v4566
        %v4569 = vrot.slane %v4169, 1
        %v4570 = vsel %vm4457, %v4569, %v4568
        %v4571 = vrot.slane %v4171, 7
        %v4572 = vsel %vm4439, %v4571, %v4170
        %v4573 = vrot.slane %v4172, 6
        %v4574 = vsel %vm4442, %v4573, %v4572
        %v4575 = vrot.slane %v4173, 5
        %v4576 = vsel %vm4445, %v4575, %v4574
        %v4577 = vrot.slane %v4174, 4
        %v4578 = vsel %vm4448, %v4577, %v4576
        %v4579 = vrot.slane %v4175, 3
        %v4580 = vsel %vm4451, %v4579, %v4578
        %v4581 = vrot.slane %v4176, 2
        %v4582 = vsel %vm4454, %v4581, %v4580
        %v4583 = vrot.slane %v4177, 1
        %v4584 = vsel %vm4457, %v4583, %v4582
        %v4585 = vrot.slane %v4179, 7
        %v4586 = vsel %vm4439, %v4585, %v4178
        %v4587 = vrot.slane %v4180, 6
        %v4588 = vsel %vm4442, %v4587, %v4586
        %v4589 = vrot.slane %v4181, 5
        %v4590 = vsel %vm4445, %v4589, %v4588
        %v4591 = vrot.slane %v4182, 4
        %v4592 = vsel %vm4448, %v4591, %v4590
        %v4593 = vrot.slane %v4183, 3
        %v4594 = vsel %vm4451, %v4593, %v4592
        %v4595 = vrot.slane %v4184, 2
        %v4596 = vsel %vm4454, %v4595, %v4594
        %v4597 = vrot.slane %v4185, 1
        %v4598 = vsel %vm4457, %v4597, %v4596
        %v4599 = vrot.slane %v4187, 7
        %v4600 = vsel %vm4439, %v4599, %v4186
        %v4601 = vrot.slane %v4188, 6
        %v4602 = vsel %vm4442, %v4601, %v4600
        %v4603 = vrot.slane %v4189, 5
        %v4604 = vsel %vm4445, %v4603, %v4602
        %v4605 = vrot.slane %v4190, 4
        %v4606 = vsel %vm4448, %v4605, %v4604
        %v4607 = vrot.slane %v4191, 3
        %v4608 = vsel %vm4451, %v4607, %v4606
        %v4609 = vrot.slane %v4192, 2
        %v4610 = vsel %vm4454, %v4609, %v4608
        %v4611 = vrot.slane %v4193, 1
        %v4612 = vsel %vm4457, %v4611, %v4610
        %v4613 = vrot.slane %v4195, 7
        %v4614 = vsel %vm4439, %v4613, %v4194
        %v4615 = vrot.slane %v4196, 6
        %v4616 = vsel %vm4442, %v4615, %v4614
        %v4617 = vrot.slane %v4197, 5
        %v4618 = vsel %vm4445, %v4617, %v4616
        %v4619 = vrot.slane %v4198, 4
        %v4620 = vsel %vm4448, %v4619, %v4618
        %v4621 = vrot.slane %v4199, 3
        %v4622 = vsel %vm4451, %v4621, %v4620
        %v4623 = vrot.slane %v4200, 2
        %v4624 = vsel %vm4454, %v4623, %v4622
        %v4625 = vrot.slane %v4201, 1
        %v4626 = vsel %vm4457, %v4625, %v4624
        %v4627 = vrot.slane %v4203, 7
        %v4628 = vsel %vm4439, %v4627, %v4202
        %v4629 = vrot.slane %v4204, 6
        %v4630 = vsel %vm4442, %v4629, %v4628
        %v4631 = vrot.slane %v4205, 5
        %v4632 = vsel %vm4445, %v4631, %v4630
        %v4633 = vrot.slane %v4206, 4
        %v4634 = vsel %vm4448, %v4633, %v4632
        %v4635 = vrot.slane %v4207, 3
        %v4636 = vsel %vm4451, %v4635, %v4634
        %v4637 = vrot.slane %v4208, 2
        %v4638 = vsel %vm4454, %v4637, %v4636
        %v4639 = vrot.slane %v4209, 1
        %v4640 = vsel %vm4457, %v4639, %v4638
        %v4641 = vrot.slane %v4211, 7
        %v4642 = vsel %vm4439, %v4641, %v4210
        %v4643 = vrot.slane %v4212, 6
        %v4644 = vsel %vm4442, %v4643, %v4642
        %v4645 = vrot.slane %v4213, 5
        %v4646 = vsel %vm4445, %v4645, %v4644
        %v4647 = vrot.slane %v4214, 4
        %v4648 = vsel %vm4448, %v4647, %v4646
        %v4649 = vrot.slane %v4215, 3
        %v4650 = vsel %vm4451, %v4649, %v4648
        %v4651 = vrot.slane %v4216, 2
        %v4652 = vsel %vm4454, %v4651, %v4650
        %v4653 = vrot.slane %v4217, 1
        %v4654 = vsel %vm4457, %v4653, %v4652
        %v4655 = vrot.slane %v4219, 7
        %v4656 = vsel %vm4439, %v4655, %v4218
        %v4657 = vrot.slane %v4220, 6
        %v4658 = vsel %vm4442, %v4657, %v4656
        %v4659 = vrot.slane %v4221, 5
        %v4660 = vsel %vm4445, %v4659, %v4658
        %v4661 = vrot.slane %v4222, 4
        %v4662 = vsel %vm4448, %v4661, %v4660
        %v4663 = vrot.slane %v4223, 3
        %v4664 = vsel %vm4451, %v4663, %v4662
        %v4665 = vrot.slane %v4224, 2
        %v4666 = vsel %vm4454, %v4665, %v4664
        %v4667 = vrot.slane %v4225, 1
        %v4668 = vsel %vm4457, %v4667, %v4666
        %v4669 = vsel %vm524, %v4458, 0
        %v4671 = vsel %vm524, %v4472, 0
        %v4673 = vsel %vm524, %v4486, 0
        %v4675 = vsel %vm524, %v4500, 0
        %v4677 = vsel %vm524, %v4514, 0
        %v4679 = vsel %vm524, %v4528, 0
        %v4681 = vsel %vm524, %v4542, 0
        %v4683 = vsel %vm524, %v4556, 0
        %v4685 = vsel %vm524, %v4570, 0
        %v4687 = vsel %vm524, %v4584, 0
        %v4689 = vsel %vm524, %v4598, 0
        %v4691 = vsel %vm524, %v4612, 0
        %v4693 = vsel %vm524, %v4626, 0
        %v4695 = vsel %vm524, %v4640, 0
        %v4697 = vsel %vm524, %v4654, 0
        %v4699 = vsel %vm524, %v4668, 0
        %v4702 = vsel %vm1293, %v522, 0
        %4704 = vmatprep.subr.mxu0 0.0
        %4705 = vmatpush1.msra.mxu0 0.0
        %4706 = vmatprep.subr.mxu0 0.0
        %4707 = vmatpush1.msra.mxu0 0.0
        %4708 = vmatprep.subr.mxu0 0.0
        %4709 = vmatpush1.msra.mxu0 0.0
        %4710 = vmatprep.subr.mxu0 0.0
        %4711 = vmatpush1.msra.mxu0 0.0
        %4712 = vmatprep.subr.mxu0 0.0
        %4713 = vmatpush1.msra.mxu0 0.0
        %4714 = vmatprep.subr.mxu0 0.0
        %4715 = vmatpush1.msra.mxu0 0.0
        %4716 = vmatprep.subr.mxu0 0.0
        %4717 = vmatpush1.msra.mxu0 0.0
        %4718 = vmatprep.subr.mxu0 0.0
        %4719 = vmatpush1.msra.mxu0 0.0
        %4720 = vmatprep.subr.mxu0 0.0
        %4721 = vmatpush1.msra.mxu0 0.0
        %4722 = vmatprep.subr.mxu0 0.0
        %4723 = vmatpush1.msra.mxu0 0.0
        %4724 = vmatprep.subr.mxu0 0.0
        %4725 = vmatpush1.msra.mxu0 0.0
        %4726 = vmatprep.subr.mxu0 0.0
        %4727 = vmatpush1.msra.mxu0 0.0
        %4728 = vmatprep.subr.mxu0 0.0
        %4729 = vmatpush1.msra.mxu0 0.0
        %4730 = vmatprep.subr.mxu0 0.0
        %4731 = vmatpush1.msra.mxu0 0.0
        %4732 = vmatprep.subr.mxu0 0.0
        %4733 = vmatpush1.msra.mxu0 0.0
        %4734 = vmatprep.subr.mxu0 0.0
        %4735 = vmatpush1.msra.mxu0 %v4702
        %4736 = vmatprep.subr.mxu0 0.0
        %4737 = vmatpush2.msra.mxu0 0.0
        %4738 = vmatprep.subr.mxu0 0.0
        %4739 = vmatpush2.msra.mxu0 0.0
        %4740 = vmatprep.subr.mxu0 0.0
        %4741 = vmatpush2.msra.mxu0 0.0
        %4742 = vmatprep.subr.mxu0 0.0
        %4743 = vmatpush2.msra.mxu0 0.0
        %4744 = vmatprep.subr.mxu0 0.0
        %4745 = vmatpush2.msra.mxu0 0.0
        %4746 = vmatprep.subr.mxu0 0.0
        %4747 = vmatpush2.msra.mxu0 0.0
        %4748 = vmatprep.subr.mxu0 0.0
        %4749 = vmatpush2.msra.mxu0 0.0
        %4750 = vmatprep.subr.mxu0 0.0
        %4751 = vmatpush2.msra.mxu0 0.0
        %4752 = vmatprep.subr.mxu0 0.0
        %4753 = vmatpush2.msra.mxu0 0.0
        %4754 = vmatprep.subr.mxu0 0.0
        %4755 = vmatpush2.msra.mxu0 0.0
        %4756 = vmatprep.subr.mxu0 0.0
        %4757 = vmatpush2.msra.mxu0 0.0
        %4758 = vmatprep.subr.mxu0 0.0
        %4759 = vmatpush2.msra.mxu0 0.0
        %4760 = vmatprep.subr.mxu0 0.0
        %4761 = vmatpush2.msra.mxu0 0.0
        %4762 = vmatprep.subr.mxu0 0.0
        %4763 = vmatpush2.msra.mxu0 0.0
        %4764 = vmatprep.subr.mxu0 0.0
        %4765 = vmatpush2.msra.mxu0 0.0
        %4766 = vmatprep.subr.mxu0 0.0
        %4767 = vmatpush2.msra.mxu0 0.0
        %4768 = vmatprep.mubr.f32.mxu0 0.0
        %4769 = vmatmul.mubr.f32.gmra.mxu0 %v4669
        %v4770 = vpop.f32.mrf.mxu0
        %v4771 = vadd.f32 %v4294, %v4770
        %v4772 = vpop.f32.mrf.mxu0
        %4773 = vmatprep.mubr.f32.mxu0 0.0
        %4774 = vmatmul.mubr.f32.gmra.mxu0 %v4671
        %v4775 = vpop.f32.mrf.mxu0
        %v4776 = vadd.f32 %v4295, %v4775
        %v4777 = vpop.f32.mrf.mxu0
        %4778 = vmatprep.mubr.f32.mxu0 0.0
        %4779 = vmatmul.mubr.f32.gmra.mxu0 %v4673
        %v4780 = vpop.f32.mrf.mxu0
        %v4781 = vadd.f32 %v4296, %v4780
        %v4782 = vpop.f32.mrf.mxu0
        %4783 = vmatprep.mubr.f32.mxu0 0.0
        %4784 = vmatmul.mubr.f32.gmra.mxu0 %v4675
        %v4785 = vpop.f32.mrf.mxu0
        %v4786 = vadd.f32 %v4297, %v4785
        %v4787 = vpop.f32.mrf.mxu0
        %4788 = vmatprep.mubr.f32.mxu0 0.0
        %4789 = vmatmul.mubr.f32.gmra.mxu0 %v4677
        %v4790 = vpop.f32.mrf.mxu0
        %v4791 = vadd.f32 %v4298, %v4790
        %v4792 = vpop.f32.mrf.mxu0
        %4793 = vmatprep.mubr.f32.mxu0 0.0
        %4794 = vmatmul.mubr.f32.gmra.mxu0 %v4679
        %v4795 = vpop.f32.mrf.mxu0
        %v4796 = vadd.f32 %v4299, %v4795
        %v4797 = vpop.f32.mrf.mxu0
        %4798 = vmatprep.mubr.f32.mxu0 0.0
        %4799 = vmatmul.mubr.f32.gmra.mxu0 %v4681
        %v4800 = vpop.f32.mrf.mxu0
        %v4801 = vadd.f32 %v4300, %v4800
        %v4802 = vpop.f32.mrf.mxu0
        %4803 = vmatprep.mubr.f32.mxu0 0.0
        %4804 = vmatmul.mubr.f32.gmra.mxu0 %v4683
        %v4805 = vpop.f32.mrf.mxu0
        %v4806 = vadd.f32 %v4301, %v4805
        %v4807 = vpop.f32.mrf.mxu0
        %4808 = vmatprep.mubr.f32.mxu0 0.0
        %4809 = vmatmul.mubr.f32.gmra.mxu0 %v4685
        %v4810 = vpop.f32.mrf.mxu0
        %v4811 = vadd.f32 %v4302, %v4810
        %v4812 = vpop.f32.mrf.mxu0
        %4813 = vmatprep.mubr.f32.mxu0 0.0
        %4814 = vmatmul.mubr.f32.gmra.mxu0 %v4687
        %v4815 = vpop.f32.mrf.mxu0
        %v4816 = vadd.f32 %v4303, %v4815
        %v4817 = vpop.f32.mrf.mxu0
        %4818 = vmatprep.mubr.f32.mxu0 0.0
        %4819 = vmatmul.mubr.f32.gmra.mxu0 %v4689
        %v4820 = vpop.f32.mrf.mxu0
        %v4821 = vadd.f32 %v4304, %v4820
        %v4822 = vpop.f32.mrf.mxu0
        %4823 = vmatprep.mubr.f32.mxu0 0.0
        %4824 = vmatmul.mubr.f32.gmra.mxu0 %v4691
        %v4825 = vpop.f32.mrf.mxu0
        %v4826 = vadd.f32 %v4305, %v4825
        %v4827 = vpop.f32.mrf.mxu0
        %4828 = vmatprep.mubr.f32.mxu0 0.0
        %4829 = vmatmul.mubr.f32.gmra.mxu0 %v4693
        %v4830 = vpop.f32.mrf.mxu0
        %v4831 = vadd.f32 %v4306, %v4830
        %v4832 = vpop.f32.mrf.mxu0
        %4833 = vmatprep.mubr.f32.mxu0 0.0
        %4834 = vmatmul.mubr.f32.gmra.mxu0 %v4695
        %v4835 = vpop.f32.mrf.mxu0
        %v4836 = vadd.f32 %v4307, %v4835
        %v4837 = vpop.f32.mrf.mxu0
        %4838 = vmatprep.mubr.f32.mxu0 0.0
        %4839 = vmatmul.mubr.f32.gmra.mxu0 %v4697
        %v4840 = vpop.f32.mrf.mxu0
        %v4841 = vadd.f32 %v4308, %v4840
        %v4842 = vpop.f32.mrf.mxu0
        %4843 = vmatprep.mubr.f32.mxu0 0.0
        %4844 = vmatmul.mubr.f32.gmra.mxu0 %v4699
        %v4845 = vpop.f32.mrf.mxu0
        %v4846 = vadd.f32 %v4309, %v4845
        %v4847 = vpop.f32.mrf.mxu0
        %4848 = vdwg.mxu0
        %4849 = vset.pattern.permute.xlu0 3
        %4850 = vperm.xlu0 %4849, %v505
        %v4851 = vpop.permute.xlu0 %4850
        %4853 = vset.pattern.permute.xlu0 3
        %4854 = vperm.xlu0 %4853, %v506
        %v4855 = vpop.permute.xlu0 %4854
        %4857 = vset.pattern.permute.xlu0 3
        %4858 = vperm.xlu0 %4857, %v507
        %v4859 = vpop.permute.xlu0 %4858
        %4861 = vset.pattern.permute.xlu0 3
        %4862 = vperm.xlu0 %4861, %v508
        %v4863 = vpop.permute.xlu0 %4862
        %4865 = vset.pattern.permute.xlu0 3
        %4866 = vperm.xlu0 %4865, %v509
        %v4867 = vpop.permute.xlu0 %4866
        %4869 = vset.pattern.permute.xlu0 3
        %4870 = vperm.xlu0 %4869, %v510
        %v4871 = vpop.permute.xlu0 %4870
        %4873 = vset.pattern.permute.xlu0 3
        %4874 = vperm.xlu0 %4873, %v511
        %v4875 = vpop.permute.xlu0 %4874
        %4877 = vset.pattern.permute.xlu0 3
        %4878 = vperm.xlu0 %4877, %v512
        %v4879 = vpop.permute.xlu0 %4878
        %4881 = vset.pattern.permute.xlu0 3
        %4882 = vperm.xlu0 %4881, %v513
        %v4883 = vpop.permute.xlu0 %4882
        %4885 = vset.pattern.permute.xlu0 3
        %4886 = vperm.xlu0 %4885, %v514
        %v4887 = vpop.permute.xlu0 %4886
        %4889 = vset.pattern.permute.xlu0 3
        %4890 = vperm.xlu0 %4889, %v515
        %v4891 = vpop.permute.xlu0 %4890
        %4893 = vset.pattern.permute.xlu0 3
        %4894 = vperm.xlu0 %4893, %v516
        %v4895 = vpop.permute.xlu0 %4894
        %4897 = vset.pattern.permute.xlu0 3
        %4898 = vperm.xlu0 %4897, %v517
        %v4899 = vpop.permute.xlu0 %4898
        %4901 = vset.pattern.permute.xlu0 3
        %4902 = vperm.xlu0 %4901, %v518
        %v4903 = vpop.permute.xlu0 %4902
        %4905 = vset.pattern.permute.xlu0 3
        %4906 = vperm.xlu0 %4905, %v519
        %v4907 = vpop.permute.xlu0 %4906
        %4909 = vset.pattern.permute.xlu0 3
        %4910 = vperm.xlu0 %4909, %v520
        %v4911 = vpop.permute.xlu0 %4910
        %v4913 = vlaneseq
        %v4914 = vshrl.u32 %v4913, 7
        %v4915 = vsub.s32 1, %v4914
        %v4916 = vrot.slane %v523, %v4915
        %v4917 = vmul.f32 %v4851, %v4916
        %v4918 = vmul.f32 %v4855, %v4916
        %v4919 = vmul.f32 %v4859, %v4916
        %v4920 = vmul.f32 %v4863, %v4916
        %v4921 = vmul.f32 %v4867, %v4916
        %v4922 = vmul.f32 %v4871, %v4916
        %v4923 = vmul.f32 %v4875, %v4916
        %v4924 = vmul.f32 %v4879, %v4916
        %v4925 = vmul.f32 %v4883, %v4916
        %v4926 = vmul.f32 %v4887, %v4916
        %v4927 = vmul.f32 %v4891, %v4916
        %v4928 = vmul.f32 %v4895, %v4916
        %v4929 = vmul.f32 %v4899, %v4916
        %v4930 = vmul.f32 %v4903, %v4916
        %v4931 = vmul.f32 %v4907, %v4916
        %v4932 = vmul.f32 %v4911, %v4916
        %v4933 = vadd.f32 %v4771, %v4917
        %v4934 = vadd.f32 %v4776, %v4918
        %v4935 = vadd.f32 %v4781, %v4919
        %v4936 = vadd.f32 %v4786, %v4920
        %v4937 = vadd.f32 %v4791, %v4921
        %v4938 = vadd.f32 %v4796, %v4922
        %v4939 = vadd.f32 %v4801, %v4923
        %v4940 = vadd.f32 %v4806, %v4924
        %v4941 = vadd.f32 %v4811, %v4925
        %v4942 = vadd.f32 %v4816, %v4926
        %v4943 = vadd.f32 %v4821, %v4927
        %v4944 = vadd.f32 %v4826, %v4928
        %v4945 = vadd.f32 %v4831, %v4929
        %v4946 = vadd.f32 %v4836, %v4930
        %v4947 = vadd.f32 %v4841, %v4931
        %v4948 = vadd.f32 %v4846, %v4932
        %v4949 = vlaneseq
        %v4950 = vand.u32 %v4949, 127
        %v4951 = vcvt.s32.f32 %v4950
        %4952 = vset.pattern.permute.xlu0 0
        %4953 = vperm.xlu0 %4952, %v505
        %v4954 = vpop.permute.xlu0 %4953
        %4956 = vset.pattern.permute.xlu0 0
        %4957 = vperm.xlu0 %4956, %v506
        %v4958 = vpop.permute.xlu0 %4957
        %4960 = vset.pattern.permute.xlu0 0
        %4961 = vperm.xlu0 %4960, %v507
        %v4962 = vpop.permute.xlu0 %4961
        %4964 = vset.pattern.permute.xlu0 0
        %4965 = vperm.xlu0 %4964, %v508
        %v4966 = vpop.permute.xlu0 %4965
        %4968 = vset.pattern.permute.xlu0 0
        %4969 = vperm.xlu0 %4968, %v509
        %v4970 = vpop.permute.xlu0 %4969
        %4972 = vset.pattern.permute.xlu0 0
        %4973 = vperm.xlu0 %4972, %v510
        %v4974 = vpop.permute.xlu0 %4973
        %4976 = vset.pattern.permute.xlu0 0
        %4977 = vperm.xlu0 %4976, %v511
        %v4978 = vpop.permute.xlu0 %4977
        %4980 = vset.pattern.permute.xlu0 0
        %4981 = vperm.xlu0 %4980, %v512
        %v4982 = vpop.permute.xlu0 %4981
        %4984 = vset.pattern.permute.xlu0 0
        %4985 = vperm.xlu0 %4984, %v513
        %v4986 = vpop.permute.xlu0 %4985
        %4988 = vset.pattern.permute.xlu0 0
        %4989 = vperm.xlu0 %4988, %v514
        %v4990 = vpop.permute.xlu0 %4989
        %4992 = vset.pattern.permute.xlu0 0
        %4993 = vperm.xlu0 %4992, %v515
        %v4994 = vpop.permute.xlu0 %4993
        %4996 = vset.pattern.permute.xlu0 0
        %4997 = vperm.xlu0 %4996, %v516
        %v4998 = vpop.permute.xlu0 %4997
        %5000 = vset.pattern.permute.xlu0 0
        %5001 = vperm.xlu0 %5000, %v517
        %v5002 = vpop.permute.xlu0 %5001
        %5004 = vset.pattern.permute.xlu0 0
        %5005 = vperm.xlu0 %5004, %v518
        %v5006 = vpop.permute.xlu0 %5005
        %5008 = vset.pattern.permute.xlu0 0
        %5009 = vperm.xlu0 %5008, %v519
        %v5010 = vpop.permute.xlu0 %5009
        %5012 = vset.pattern.permute.xlu0 0
        %5013 = vperm.xlu0 %5012, %v520
        %v5014 = vpop.permute.xlu0 %5013
        %vm5016 = vcmp.lt.f32.partialorder %v4951, %v4954
        %vm5017 = vcmp.lt.f32.partialorder %v4951, %v4958
        %vm5018 = vcmp.lt.f32.partialorder %v4951, %v4962
        %vm5019 = vcmp.lt.f32.partialorder %v4951, %v4966
        %vm5020 = vcmp.lt.f32.partialorder %v4951, %v4970
        %vm5021 = vcmp.lt.f32.partialorder %v4951, %v4974
        %vm5022 = vcmp.lt.f32.partialorder %v4951, %v4978
        %vm5023 = vcmp.lt.f32.partialorder %v4951, %v4982
        %vm5024 = vcmp.lt.f32.partialorder %v4951, %v4986
        %vm5025 = vcmp.lt.f32.partialorder %v4951, %v4990
        %vm5026 = vcmp.lt.f32.partialorder %v4951, %v4994
        %vm5027 = vcmp.lt.f32.partialorder %v4951, %v4998
        %vm5028 = vcmp.lt.f32.partialorder %v4951, %v5002
        %vm5029 = vcmp.lt.f32.partialorder %v4951, %v5006
        %vm5030 = vcmp.lt.f32.partialorder %v4951, %v5010
        %vm5031 = vcmp.lt.f32.partialorder %v4951, %v5014
        %v5032 = vsel %vm5016, 1, 0
        %v5033 = vsel %vm5017, 1, 0
        %v5034 = vsel %vm5018, 1, 0
        %v5035 = vsel %vm5019, 1, 0
        %v5036 = vsel %vm5020, 1, 0
        %v5037 = vsel %vm5021, 1, 0
        %v5038 = vsel %vm5022, 1, 0
        %v5039 = vsel %vm5023, 1, 0
        %v5040 = vsel %vm5024, 1, 0
        %v5041 = vsel %vm5025, 1, 0
        %v5042 = vsel %vm5026, 1, 0
        %v5043 = vsel %vm5027, 1, 0
        %v5044 = vsel %vm5028, 1, 0
        %v5045 = vsel %vm5029, 1, 0
        %v5046 = vsel %vm5030, 1, 0
        %v5047 = vsel %vm5031, 1, 0
        %v5048 = vcvt.s32.f32 %v5032
        %v5049 = vcvt.s32.f32 %v5033
        %v5050 = vcvt.s32.f32 %v5034
        %v5051 = vcvt.s32.f32 %v5035
        %v5052 = vcvt.s32.f32 %v5036
        %v5053 = vcvt.s32.f32 %v5037
        %v5054 = vcvt.s32.f32 %v5038
        %v5055 = vcvt.s32.f32 %v5039
        %v5056 = vcvt.s32.f32 %v5040
        %v5057 = vcvt.s32.f32 %v5041
        %v5058 = vcvt.s32.f32 %v5042
        %v5059 = vcvt.s32.f32 %v5043
        %v5060 = vcvt.s32.f32 %v5044
        %v5061 = vcvt.s32.f32 %v5045
        %v5062 = vcvt.s32.f32 %v5046
        %v5063 = vcvt.s32.f32 %v5047
        %v5080 = vcombine.high %v4933, %v4933
        %v5082 = vunpack.c.l.s4 1966171168
        %v5083 = vunpack.c.0.s8 %v5082
        %v5084 = vlaneseq
        %v5085 = vshrl.u32 %v5084, 7
        %v5086 = vsub.s32 %v5083, %v5085
        %v5087 = vrot.slane %v4933, %v5086
        %v5089 = vunpack.c.l.s4 1966171168
        %v5090 = vunpack.c.0.s8 %v5089
        %v5091 = vlaneseq
        %v5092 = vshrl.u32 %v5091, 7
        %v5093 = vsub.s32 %v5090, %v5092
        %v5094 = vrot.slane %v5080, %v5093
        %v5095 = vcombine.high %v5087, %v5087
        %v5096 = vcombine.high %v5094, %v5094
        %v5098 = vunpack.c.l.s4 1966171168
        %v5099 = vunpack.c.0.s8 %v5098
        %v5100 = vlaneseq
        %v5101 = vshrl.u32 %v5100, 7
        %v5102 = vsub.s32 %v5099, %v5101
        %v5103 = vrot.slane %v5087, %v5102
        %v5105 = vunpack.c.l.s4 1966171168
        %v5106 = vunpack.c.0.s8 %v5105
        %v5107 = vlaneseq
        %v5108 = vshrl.u32 %v5107, 7
        %v5109 = vsub.s32 %v5106, %v5108
        %v5110 = vrot.slane %v5094, %v5109
        %v5112 = vunpack.c.l.s4 1966171168
        %v5113 = vunpack.c.0.s8 %v5112
        %v5114 = vlaneseq
        %v5115 = vshrl.u32 %v5114, 7
        %v5116 = vsub.s32 %v5113, %v5115
        %v5117 = vrot.slane %v5095, %v5116
        %v5119 = vunpack.c.l.s4 1966171168
        %v5120 = vunpack.c.0.s8 %v5119
        %v5121 = vlaneseq
        %v5122 = vshrl.u32 %v5121, 7
        %v5123 = vsub.s32 %v5120, %v5122
        %v5124 = vrot.slane %v5096, %v5123
        %v5125 = vcombine.high %v5103, %v5103
        %v5126 = vcombine.high %v5110, %v5110
        %v5127 = vcombine.high %v5117, %v5117
        %v5128 = vcombine.high %v5124, %v5124
        %v5129 = vcombine.high %v4934, %v4934
        %v5131 = vunpack.c.l.s4 1966171168
        %v5132 = vunpack.c.0.s8 %v5131
        %v5133 = vlaneseq
        %v5134 = vshrl.u32 %v5133, 7
        %v5135 = vsub.s32 %v5132, %v5134
        %v5136 = vrot.slane %v4934, %v5135
        %v5138 = vunpack.c.l.s4 1966171168
        %v5139 = vunpack.c.0.s8 %v5138
        %v5140 = vlaneseq
        %v5141 = vshrl.u32 %v5140, 7
        %v5142 = vsub.s32 %v5139, %v5141
        %v5143 = vrot.slane %v5129, %v5142
        %v5144 = vcombine.high %v5136, %v5136
        %v5145 = vcombine.high %v5143, %v5143
        %v5147 = vunpack.c.l.s4 1966171168
        %v5148 = vunpack.c.0.s8 %v5147
        %v5149 = vlaneseq
        %v5150 = vshrl.u32 %v5149, 7
        %v5151 = vsub.s32 %v5148, %v5150
        %v5152 = vrot.slane %v5136, %v5151
        %v5154 = vunpack.c.l.s4 1966171168
        %v5155 = vunpack.c.0.s8 %v5154
        %v5156 = vlaneseq
        %v5157 = vshrl.u32 %v5156, 7
        %v5158 = vsub.s32 %v5155, %v5157
        %v5159 = vrot.slane %v5143, %v5158
        %v5161 = vunpack.c.l.s4 1966171168
        %v5162 = vunpack.c.0.s8 %v5161
        %v5163 = vlaneseq
        %v5164 = vshrl.u32 %v5163, 7
        %v5165 = vsub.s32 %v5162, %v5164
        %v5166 = vrot.slane %v5144, %v5165
        %v5168 = vunpack.c.l.s4 1966171168
        %v5169 = vunpack.c.0.s8 %v5168
        %v5170 = vlaneseq
        %v5171 = vshrl.u32 %v5170, 7
        %v5172 = vsub.s32 %v5169, %v5171
        %v5173 = vrot.slane %v5145, %v5172
        %v5174 = vcombine.high %v5152, %v5152
        %v5175 = vcombine.high %v5159, %v5159
        %v5176 = vcombine.high %v5166, %v5166
        %v5177 = vcombine.high %v5173, %v5173
        %v5178 = vcombine.high %v4935, %v4935
        %v5180 = vunpack.c.l.s4 1966171168
        %v5181 = vunpack.c.0.s8 %v5180
        %v5182 = vlaneseq
        %v5183 = vshrl.u32 %v5182, 7
        %v5184 = vsub.s32 %v5181, %v5183
        %v5185 = vrot.slane %v4935, %v5184
        %v5187 = vunpack.c.l.s4 1966171168
        %v5188 = vunpack.c.0.s8 %v5187
        %v5189 = vlaneseq
        %v5190 = vshrl.u32 %v5189, 7
        %v5191 = vsub.s32 %v5188, %v5190
        %v5192 = vrot.slane %v5178, %v5191
        %v5193 = vcombine.high %v5185, %v5185
        %v5194 = vcombine.high %v5192, %v5192
        %v5196 = vunpack.c.l.s4 1966171168
        %v5197 = vunpack.c.0.s8 %v5196
        %v5198 = vlaneseq
        %v5199 = vshrl.u32 %v5198, 7
        %v5200 = vsub.s32 %v5197, %v5199
        %v5201 = vrot.slane %v5185, %v5200
        %v5203 = vunpack.c.l.s4 1966171168
        %v5204 = vunpack.c.0.s8 %v5203
        %v5205 = vlaneseq
        %v5206 = vshrl.u32 %v5205, 7
        %v5207 = vsub.s32 %v5204, %v5206
        %v5208 = vrot.slane %v5192, %v5207
        %v5210 = vunpack.c.l.s4 1966171168
        %v5211 = vunpack.c.0.s8 %v5210
        %v5212 = vlaneseq
        %v5213 = vshrl.u32 %v5212, 7
        %v5214 = vsub.s32 %v5211, %v5213
        %v5215 = vrot.slane %v5193, %v5214
        %v5217 = vunpack.c.l.s4 1966171168
        %v5218 = vunpack.c.0.s8 %v5217
        %v5219 = vlaneseq
        %v5220 = vshrl.u32 %v5219, 7
        %v5221 = vsub.s32 %v5218, %v5220
        %v5222 = vrot.slane %v5194, %v5221
        %v5223 = vcombine.high %v5201, %v5201
        %v5224 = vcombine.high %v5208, %v5208
        %v5225 = vcombine.high %v5215, %v5215
        %v5226 = vcombine.high %v5222, %v5222
        %v5227 = vcombine.high %v4936, %v4936
        %v5229 = vunpack.c.l.s4 1966171168
        %v5230 = vunpack.c.0.s8 %v5229
        %v5231 = vlaneseq
        %v5232 = vshrl.u32 %v5231, 7
        %v5233 = vsub.s32 %v5230, %v5232
        %v5234 = vrot.slane %v4936, %v5233
        %v5236 = vunpack.c.l.s4 1966171168
        %v5237 = vunpack.c.0.s8 %v5236
        %v5238 = vlaneseq
        %v5239 = vshrl.u32 %v5238, 7
        %v5240 = vsub.s32 %v5237, %v5239
        %v5241 = vrot.slane %v5227, %v5240
        %v5242 = vcombine.high %v5234, %v5234
        %v5243 = vcombine.high %v5241, %v5241
        %v5245 = vunpack.c.l.s4 1966171168
        %v5246 = vunpack.c.0.s8 %v5245
        %v5247 = vlaneseq
        %v5248 = vshrl.u32 %v5247, 7
        %v5249 = vsub.s32 %v5246, %v5248
        %v5250 = vrot.slane %v5234, %v5249
        %v5252 = vunpack.c.l.s4 1966171168
        %v5253 = vunpack.c.0.s8 %v5252
        %v5254 = vlaneseq
        %v5255 = vshrl.u32 %v5254, 7
        %v5256 = vsub.s32 %v5253, %v5255
        %v5257 = vrot.slane %v5241, %v5256
        %v5259 = vunpack.c.l.s4 1966171168
        %v5260 = vunpack.c.0.s8 %v5259
        %v5261 = vlaneseq
        %v5262 = vshrl.u32 %v5261, 7
        %v5263 = vsub.s32 %v5260, %v5262
        %v5264 = vrot.slane %v5242, %v5263
        %v5266 = vunpack.c.l.s4 1966171168
        %v5267 = vunpack.c.0.s8 %v5266
        %v5268 = vlaneseq
        %v5269 = vshrl.u32 %v5268, 7
        %v5270 = vsub.s32 %v5267, %v5269
        %v5271 = vrot.slane %v5243, %v5270
        %v5272 = vcombine.high %v5250, %v5250
        %v5273 = vcombine.high %v5257, %v5257
        %v5274 = vcombine.high %v5264, %v5264
        %v5275 = vcombine.high %v5271, %v5271
        %v5276 = vcombine.high %v4937, %v4937
        %v5278 = vunpack.c.l.s4 1966171168
        %v5279 = vunpack.c.0.s8 %v5278
        %v5280 = vlaneseq
        %v5281 = vshrl.u32 %v5280, 7
        %v5282 = vsub.s32 %v5279, %v5281
        %v5283 = vrot.slane %v4937, %v5282
        %v5285 = vunpack.c.l.s4 1966171168
        %v5286 = vunpack.c.0.s8 %v5285
        %v5287 = vlaneseq
        %v5288 = vshrl.u32 %v5287, 7
        %v5289 = vsub.s32 %v5286, %v5288
        %v5290 = vrot.slane %v5276, %v5289
        %v5291 = vcombine.high %v5283, %v5283
        %v5292 = vcombine.high %v5290, %v5290
        %v5294 = vunpack.c.l.s4 1966171168
        %v5295 = vunpack.c.0.s8 %v5294
        %v5296 = vlaneseq
        %v5297 = vshrl.u32 %v5296, 7
        %v5298 = vsub.s32 %v5295, %v5297
        %v5299 = vrot.slane %v5283, %v5298
        %v5301 = vunpack.c.l.s4 1966171168
        %v5302 = vunpack.c.0.s8 %v5301
        %v5303 = vlaneseq
        %v5304 = vshrl.u32 %v5303, 7
        %v5305 = vsub.s32 %v5302, %v5304
        %v5306 = vrot.slane %v5290, %v5305
        %v5308 = vunpack.c.l.s4 1966171168
        %v5309 = vunpack.c.0.s8 %v5308
        %v5310 = vlaneseq
        %v5311 = vshrl.u32 %v5310, 7
        %v5312 = vsub.s32 %v5309, %v5311
        %v5313 = vrot.slane %v5291, %v5312
        %v5315 = vunpack.c.l.s4 1966171168
        %v5316 = vunpack.c.0.s8 %v5315
        %v5317 = vlaneseq
        %v5318 = vshrl.u32 %v5317, 7
        %v5319 = vsub.s32 %v5316, %v5318
        %v5320 = vrot.slane %v5292, %v5319
        %v5321 = vcombine.high %v5299, %v5299
        %v5322 = vcombine.high %v5306, %v5306
        %v5323 = vcombine.high %v5313, %v5313
        %v5324 = vcombine.high %v5320, %v5320
        %v5325 = vcombine.high %v4938, %v4938
        %v5327 = vunpack.c.l.s4 1966171168
        %v5328 = vunpack.c.0.s8 %v5327
        %v5329 = vlaneseq
        %v5330 = vshrl.u32 %v5329, 7
        %v5331 = vsub.s32 %v5328, %v5330
        %v5332 = vrot.slane %v4938, %v5331
        %v5334 = vunpack.c.l.s4 1966171168
        %v5335 = vunpack.c.0.s8 %v5334
        %v5336 = vlaneseq
        %v5337 = vshrl.u32 %v5336, 7
        %v5338 = vsub.s32 %v5335, %v5337
        %v5339 = vrot.slane %v5325, %v5338
        %v5340 = vcombine.high %v5332, %v5332
        %v5341 = vcombine.high %v5339, %v5339
        %v5343 = vunpack.c.l.s4 1966171168
        %v5344 = vunpack.c.0.s8 %v5343
        %v5345 = vlaneseq
        %v5346 = vshrl.u32 %v5345, 7
        %v5347 = vsub.s32 %v5344, %v5346
        %v5348 = vrot.slane %v5332, %v5347
        %v5350 = vunpack.c.l.s4 1966171168
        %v5351 = vunpack.c.0.s8 %v5350
        %v5352 = vlaneseq
        %v5353 = vshrl.u32 %v5352, 7
        %v5354 = vsub.s32 %v5351, %v5353
        %v5355 = vrot.slane %v5339, %v5354
        %v5357 = vunpack.c.l.s4 1966171168
        %v5358 = vunpack.c.0.s8 %v5357
        %v5359 = vlaneseq
        %v5360 = vshrl.u32 %v5359, 7
        %v5361 = vsub.s32 %v5358, %v5360
        %v5362 = vrot.slane %v5340, %v5361
        %v5364 = vunpack.c.l.s4 1966171168
        %v5365 = vunpack.c.0.s8 %v5364
        %v5366 = vlaneseq
        %v5367 = vshrl.u32 %v5366, 7
        %v5368 = vsub.s32 %v5365, %v5367
        %v5369 = vrot.slane %v5341, %v5368
        %v5370 = vcombine.high %v5348, %v5348
        %v5371 = vcombine.high %v5355, %v5355
        %v5372 = vcombine.high %v5362, %v5362
        %v5373 = vcombine.high %v5369, %v5369
        %v5374 = vcombine.high %v4939, %v4939
        %v5376 = vunpack.c.l.s4 1966171168
        %v5377 = vunpack.c.0.s8 %v5376
        %v5378 = vlaneseq
        %v5379 = vshrl.u32 %v5378, 7
        %v5380 = vsub.s32 %v5377, %v5379
        %v5381 = vrot.slane %v4939, %v5380
        %v5383 = vunpack.c.l.s4 1966171168
        %v5384 = vunpack.c.0.s8 %v5383
        %v5385 = vlaneseq
        %v5386 = vshrl.u32 %v5385, 7
        %v5387 = vsub.s32 %v5384, %v5386
        %v5388 = vrot.slane %v5374, %v5387
        %v5389 = vcombine.high %v5381, %v5381
        %v5390 = vcombine.high %v5388, %v5388
        %v5392 = vunpack.c.l.s4 1966171168
        %v5393 = vunpack.c.0.s8 %v5392
        %v5394 = vlaneseq
        %v5395 = vshrl.u32 %v5394, 7
        %v5396 = vsub.s32 %v5393, %v5395
        %v5397 = vrot.slane %v5381, %v5396
        %v5399 = vunpack.c.l.s4 1966171168
        %v5400 = vunpack.c.0.s8 %v5399
        %v5401 = vlaneseq
        %v5402 = vshrl.u32 %v5401, 7
        %v5403 = vsub.s32 %v5400, %v5402
        %v5404 = vrot.slane %v5388, %v5403
        %v5406 = vunpack.c.l.s4 1966171168
        %v5407 = vunpack.c.0.s8 %v5406
        %v5408 = vlaneseq
        %v5409 = vshrl.u32 %v5408, 7
        %v5410 = vsub.s32 %v5407, %v5409
        %v5411 = vrot.slane %v5389, %v5410
        %v5413 = vunpack.c.l.s4 1966171168
        %v5414 = vunpack.c.0.s8 %v5413
        %v5415 = vlaneseq
        %v5416 = vshrl.u32 %v5415, 7
        %v5417 = vsub.s32 %v5414, %v5416
        %v5418 = vrot.slane %v5390, %v5417
        %v5419 = vcombine.high %v5397, %v5397
        %v5420 = vcombine.high %v5404, %v5404
        %v5421 = vcombine.high %v5411, %v5411
        %v5422 = vcombine.high %v5418, %v5418
        %v5423 = vcombine.high %v4940, %v4940
        %v5425 = vunpack.c.l.s4 1966171168
        %v5426 = vunpack.c.0.s8 %v5425
        %v5427 = vlaneseq
        %v5428 = vshrl.u32 %v5427, 7
        %v5429 = vsub.s32 %v5426, %v5428
        %v5430 = vrot.slane %v4940, %v5429
        %v5432 = vunpack.c.l.s4 1966171168
        %v5433 = vunpack.c.0.s8 %v5432
        %v5434 = vlaneseq
        %v5435 = vshrl.u32 %v5434, 7
        %v5436 = vsub.s32 %v5433, %v5435
        %v5437 = vrot.slane %v5423, %v5436
        %v5438 = vcombine.high %v5430, %v5430
        %v5439 = vcombine.high %v5437, %v5437
        %v5441 = vunpack.c.l.s4 1966171168
        %v5442 = vunpack.c.0.s8 %v5441
        %v5443 = vlaneseq
        %v5444 = vshrl.u32 %v5443, 7
        %v5445 = vsub.s32 %v5442, %v5444
        %v5446 = vrot.slane %v5430, %v5445
        %v5448 = vunpack.c.l.s4 1966171168
        %v5449 = vunpack.c.0.s8 %v5448
        %v5450 = vlaneseq
        %v5451 = vshrl.u32 %v5450, 7
        %v5452 = vsub.s32 %v5449, %v5451
        %v5453 = vrot.slane %v5437, %v5452
        %v5455 = vunpack.c.l.s4 1966171168
        %v5456 = vunpack.c.0.s8 %v5455
        %v5457 = vlaneseq
        %v5458 = vshrl.u32 %v5457, 7
        %v5459 = vsub.s32 %v5456, %v5458
        %v5460 = vrot.slane %v5438, %v5459
        %v5462 = vunpack.c.l.s4 1966171168
        %v5463 = vunpack.c.0.s8 %v5462
        %v5464 = vlaneseq
        %v5465 = vshrl.u32 %v5464, 7
        %v5466 = vsub.s32 %v5463, %v5465
        %v5467 = vrot.slane %v5439, %v5466
        %v5468 = vcombine.high %v5446, %v5446
        %v5469 = vcombine.high %v5453, %v5453
        %v5470 = vcombine.high %v5460, %v5460
        %v5471 = vcombine.high %v5467, %v5467
        %v5472 = vcombine.high %v4941, %v4941
        %v5474 = vunpack.c.l.s4 1966171168
        %v5475 = vunpack.c.0.s8 %v5474
        %v5476 = vlaneseq
        %v5477 = vshrl.u32 %v5476, 7
        %v5478 = vsub.s32 %v5475, %v5477
        %v5479 = vrot.slane %v4941, %v5478
        %v5481 = vunpack.c.l.s4 1966171168
        %v5482 = vunpack.c.0.s8 %v5481
        %v5483 = vlaneseq
        %v5484 = vshrl.u32 %v5483, 7
        %v5485 = vsub.s32 %v5482, %v5484
        %v5486 = vrot.slane %v5472, %v5485
        %v5487 = vcombine.high %v5479, %v5479
        %v5488 = vcombine.high %v5486, %v5486
        %v5490 = vunpack.c.l.s4 1966171168
        %v5491 = vunpack.c.0.s8 %v5490
        %v5492 = vlaneseq
        %v5493 = vshrl.u32 %v5492, 7
        %v5494 = vsub.s32 %v5491, %v5493
        %v5495 = vrot.slane %v5479, %v5494
        %v5497 = vunpack.c.l.s4 1966171168
        %v5498 = vunpack.c.0.s8 %v5497
        %v5499 = vlaneseq
        %v5500 = vshrl.u32 %v5499, 7
        %v5501 = vsub.s32 %v5498, %v5500
        %v5502 = vrot.slane %v5486, %v5501
        %v5504 = vunpack.c.l.s4 1966171168
        %v5505 = vunpack.c.0.s8 %v5504
        %v5506 = vlaneseq
        %v5507 = vshrl.u32 %v5506, 7
        %v5508 = vsub.s32 %v5505, %v5507
        %v5509 = vrot.slane %v5487, %v5508
        %v5511 = vunpack.c.l.s4 1966171168
        %v5512 = vunpack.c.0.s8 %v5511
        %v5513 = vlaneseq
        %v5514 = vshrl.u32 %v5513, 7
        %v5515 = vsub.s32 %v5512, %v5514
        %v5516 = vrot.slane %v5488, %v5515
        %v5517 = vcombine.high %v5495, %v5495
        %v5518 = vcombine.high %v5502, %v5502
        %v5519 = vcombine.high %v5509, %v5509
        %v5520 = vcombine.high %v5516, %v5516
        %v5521 = vcombine.high %v4942, %v4942
        %v5523 = vunpack.c.l.s4 1966171168
        %v5524 = vunpack.c.0.s8 %v5523
        %v5525 = vlaneseq
        %v5526 = vshrl.u32 %v5525, 7
        %v5527 = vsub.s32 %v5524, %v5526
        %v5528 = vrot.slane %v4942, %v5527
        %v5530 = vunpack.c.l.s4 1966171168
        %v5531 = vunpack.c.0.s8 %v5530
        %v5532 = vlaneseq
        %v5533 = vshrl.u32 %v5532, 7
        %v5534 = vsub.s32 %v5531, %v5533
        %v5535 = vrot.slane %v5521, %v5534
        %v5536 = vcombine.high %v5528, %v5528
        %v5537 = vcombine.high %v5535, %v5535
        %v5539 = vunpack.c.l.s4 1966171168
        %v5540 = vunpack.c.0.s8 %v5539
        %v5541 = vlaneseq
        %v5542 = vshrl.u32 %v5541, 7
        %v5543 = vsub.s32 %v5540, %v5542
        %v5544 = vrot.slane %v5528, %v5543
        %v5546 = vunpack.c.l.s4 1966171168
        %v5547 = vunpack.c.0.s8 %v5546
        %v5548 = vlaneseq
        %v5549 = vshrl.u32 %v5548, 7
        %v5550 = vsub.s32 %v5547, %v5549
        %v5551 = vrot.slane %v5535, %v5550
        %v5553 = vunpack.c.l.s4 1966171168
        %v5554 = vunpack.c.0.s8 %v5553
        %v5555 = vlaneseq
        %v5556 = vshrl.u32 %v5555, 7
        %v5557 = vsub.s32 %v5554, %v5556
        %v5558 = vrot.slane %v5536, %v5557
        %v5560 = vunpack.c.l.s4 1966171168
        %v5561 = vunpack.c.0.s8 %v5560
        %v5562 = vlaneseq
        %v5563 = vshrl.u32 %v5562, 7
        %v5564 = vsub.s32 %v5561, %v5563
        %v5565 = vrot.slane %v5537, %v5564
        %v5566 = vcombine.high %v5544, %v5544
        %v5567 = vcombine.high %v5551, %v5551
        %v5568 = vcombine.high %v5558, %v5558
        %v5569 = vcombine.high %v5565, %v5565
        %v5570 = vcombine.high %v4943, %v4943
        %v5572 = vunpack.c.l.s4 1966171168
        %v5573 = vunpack.c.0.s8 %v5572
        %v5574 = vlaneseq
        %v5575 = vshrl.u32 %v5574, 7
        %v5576 = vsub.s32 %v5573, %v5575
        %v5577 = vrot.slane %v4943, %v5576
        %v5579 = vunpack.c.l.s4 1966171168
        %v5580 = vunpack.c.0.s8 %v5579
        %v5581 = vlaneseq
        %v5582 = vshrl.u32 %v5581, 7
        %v5583 = vsub.s32 %v5580, %v5582
        %v5584 = vrot.slane %v5570, %v5583
        %v5585 = vcombine.high %v5577, %v5577
        %v5586 = vcombine.high %v5584, %v5584
        %v5588 = vunpack.c.l.s4 1966171168
        %v5589 = vunpack.c.0.s8 %v5588
        %v5590 = vlaneseq
        %v5591 = vshrl.u32 %v5590, 7
        %v5592 = vsub.s32 %v5589, %v5591
        %v5593 = vrot.slane %v5577, %v5592
        %v5595 = vunpack.c.l.s4 1966171168
        %v5596 = vunpack.c.0.s8 %v5595
        %v5597 = vlaneseq
        %v5598 = vshrl.u32 %v5597, 7
        %v5599 = vsub.s32 %v5596, %v5598
        %v5600 = vrot.slane %v5584, %v5599
        %v5602 = vunpack.c.l.s4 1966171168
        %v5603 = vunpack.c.0.s8 %v5602
        %v5604 = vlaneseq
        %v5605 = vshrl.u32 %v5604, 7
        %v5606 = vsub.s32 %v5603, %v5605
        %v5607 = vrot.slane %v5585, %v5606
        %v5609 = vunpack.c.l.s4 1966171168
        %v5610 = vunpack.c.0.s8 %v5609
        %v5611 = vlaneseq
        %v5612 = vshrl.u32 %v5611, 7
        %v5613 = vsub.s32 %v5610, %v5612
        %v5614 = vrot.slane %v5586, %v5613
        %v5615 = vcombine.high %v5593, %v5593
        %v5616 = vcombine.high %v5600, %v5600
        %v5617 = vcombine.high %v5607, %v5607
        %v5618 = vcombine.high %v5614, %v5614
        %v5619 = vcombine.high %v4944, %v4944
        %v5621 = vunpack.c.l.s4 1966171168
        %v5622 = vunpack.c.0.s8 %v5621
        %v5623 = vlaneseq
        %v5624 = vshrl.u32 %v5623, 7
        %v5625 = vsub.s32 %v5622, %v5624
        %v5626 = vrot.slane %v4944, %v5625
        %v5628 = vunpack.c.l.s4 1966171168
        %v5629 = vunpack.c.0.s8 %v5628
        %v5630 = vlaneseq
        %v5631 = vshrl.u32 %v5630, 7
        %v5632 = vsub.s32 %v5629, %v5631
        %v5633 = vrot.slane %v5619, %v5632
        %v5634 = vcombine.high %v5626, %v5626
        %v5635 = vcombine.high %v5633, %v5633
        %v5637 = vunpack.c.l.s4 1966171168
        %v5638 = vunpack.c.0.s8 %v5637
        %v5639 = vlaneseq
        %v5640 = vshrl.u32 %v5639, 7
        %v5641 = vsub.s32 %v5638, %v5640
        %v5642 = vrot.slane %v5626, %v5641
        %v5644 = vunpack.c.l.s4 1966171168
        %v5645 = vunpack.c.0.s8 %v5644
        %v5646 = vlaneseq
        %v5647 = vshrl.u32 %v5646, 7
        %v5648 = vsub.s32 %v5645, %v5647
        %v5649 = vrot.slane %v5633, %v5648
        %v5651 = vunpack.c.l.s4 1966171168
        %v5652 = vunpack.c.0.s8 %v5651
        %v5653 = vlaneseq
        %v5654 = vshrl.u32 %v5653, 7
        %v5655 = vsub.s32 %v5652, %v5654
        %v5656 = vrot.slane %v5634, %v5655
        %v5658 = vunpack.c.l.s4 1966171168
        %v5659 = vunpack.c.0.s8 %v5658
        %v5660 = vlaneseq
        %v5661 = vshrl.u32 %v5660, 7
        %v5662 = vsub.s32 %v5659, %v5661
        %v5663 = vrot.slane %v5635, %v5662
        %v5664 = vcombine.high %v5642, %v5642
        %v5665 = vcombine.high %v5649, %v5649
        %v5666 = vcombine.high %v5656, %v5656
        %v5667 = vcombine.high %v5663, %v5663
        %v5668 = vcombine.high %v4945, %v4945
        %v5670 = vunpack.c.l.s4 1966171168
        %v5671 = vunpack.c.0.s8 %v5670
        %v5672 = vlaneseq
        %v5673 = vshrl.u32 %v5672, 7
        %v5674 = vsub.s32 %v5671, %v5673
        %v5675 = vrot.slane %v4945, %v5674
        %v5677 = vunpack.c.l.s4 1966171168
        %v5678 = vunpack.c.0.s8 %v5677
        %v5679 = vlaneseq
        %v5680 = vshrl.u32 %v5679, 7
        %v5681 = vsub.s32 %v5678, %v5680
        %v5682 = vrot.slane %v5668, %v5681
        %v5683 = vcombine.high %v5675, %v5675
        %v5684 = vcombine.high %v5682, %v5682
        %v5686 = vunpack.c.l.s4 1966171168
        %v5687 = vunpack.c.0.s8 %v5686
        %v5688 = vlaneseq
        %v5689 = vshrl.u32 %v5688, 7
        %v5690 = vsub.s32 %v5687, %v5689
        %v5691 = vrot.slane %v5675, %v5690
        %v5693 = vunpack.c.l.s4 1966171168
        %v5694 = vunpack.c.0.s8 %v5693
        %v5695 = vlaneseq
        %v5696 = vshrl.u32 %v5695, 7
        %v5697 = vsub.s32 %v5694, %v5696
        %v5698 = vrot.slane %v5682, %v5697
        %v5700 = vunpack.c.l.s4 1966171168
        %v5701 = vunpack.c.0.s8 %v5700
        %v5702 = vlaneseq
        %v5703 = vshrl.u32 %v5702, 7
        %v5704 = vsub.s32 %v5701, %v5703
        %v5705 = vrot.slane %v5683, %v5704
        %v5707 = vunpack.c.l.s4 1966171168
        %v5708 = vunpack.c.0.s8 %v5707
        %v5709 = vlaneseq
        %v5710 = vshrl.u32 %v5709, 7
        %v5711 = vsub.s32 %v5708, %v5710
        %v5712 = vrot.slane %v5684, %v5711
        %v5713 = vcombine.high %v5691, %v5691
        %v5714 = vcombine.high %v5698, %v5698
        %v5715 = vcombine.high %v5705, %v5705
        %v5716 = vcombine.high %v5712, %v5712
        %v5717 = vcombine.high %v4946, %v4946
        %v5719 = vunpack.c.l.s4 1966171168
        %v5720 = vunpack.c.0.s8 %v5719
        %v5721 = vlaneseq
        %v5722 = vshrl.u32 %v5721, 7
        %v5723 = vsub.s32 %v5720, %v5722
        %v5724 = vrot.slane %v4946, %v5723
        %v5726 = vunpack.c.l.s4 1966171168
        %v5727 = vunpack.c.0.s8 %v5726
        %v5728 = vlaneseq
        %v5729 = vshrl.u32 %v5728, 7
        %v5730 = vsub.s32 %v5727, %v5729
        %v5731 = vrot.slane %v5717, %v5730
        %v5732 = vcombine.high %v5724, %v5724
        %v5733 = vcombine.high %v5731, %v5731
        %v5735 = vunpack.c.l.s4 1966171168
        %v5736 = vunpack.c.0.s8 %v5735
        %v5737 = vlaneseq
        %v5738 = vshrl.u32 %v5737, 7
        %v5739 = vsub.s32 %v5736, %v5738
        %v5740 = vrot.slane %v5724, %v5739
        %v5742 = vunpack.c.l.s4 1966171168
        %v5743 = vunpack.c.0.s8 %v5742
        %v5744 = vlaneseq
        %v5745 = vshrl.u32 %v5744, 7
        %v5746 = vsub.s32 %v5743, %v5745
        %v5747 = vrot.slane %v5731, %v5746
        %v5749 = vunpack.c.l.s4 1966171168
        %v5750 = vunpack.c.0.s8 %v5749
        %v5751 = vlaneseq
        %v5752 = vshrl.u32 %v5751, 7
        %v5753 = vsub.s32 %v5750, %v5752
        %v5754 = vrot.slane %v5732, %v5753
        %v5756 = vunpack.c.l.s4 1966171168
        %v5757 = vunpack.c.0.s8 %v5756
        %v5758 = vlaneseq
        %v5759 = vshrl.u32 %v5758, 7
        %v5760 = vsub.s32 %v5757, %v5759
        %v5761 = vrot.slane %v5733, %v5760
        %v5762 = vcombine.high %v5740, %v5740
        %v5763 = vcombine.high %v5747, %v5747
        %v5764 = vcombine.high %v5754, %v5754
        %v5765 = vcombine.high %v5761, %v5761
        %v5766 = vcombine.high %v4947, %v4947
        %v5768 = vunpack.c.l.s4 1966171168
        %v5769 = vunpack.c.0.s8 %v5768
        %v5770 = vlaneseq
        %v5771 = vshrl.u32 %v5770, 7
        %v5772 = vsub.s32 %v5769, %v5771
        %v5773 = vrot.slane %v4947, %v5772
        %v5775 = vunpack.c.l.s4 1966171168
        %v5776 = vunpack.c.0.s8 %v5775
        %v5777 = vlaneseq
        %v5778 = vshrl.u32 %v5777, 7
        %v5779 = vsub.s32 %v5776, %v5778
        %v5780 = vrot.slane %v5766, %v5779
        %v5781 = vcombine.high %v5773, %v5773
        %v5782 = vcombine.high %v5780, %v5780
        %v5784 = vunpack.c.l.s4 1966171168
        %v5785 = vunpack.c.0.s8 %v5784
        %v5786 = vlaneseq
        %v5787 = vshrl.u32 %v5786, 7
        %v5788 = vsub.s32 %v5785, %v5787
        %v5789 = vrot.slane %v5773, %v5788
        %v5791 = vunpack.c.l.s4 1966171168
        %v5792 = vunpack.c.0.s8 %v5791
        %v5793 = vlaneseq
        %v5794 = vshrl.u32 %v5793, 7
        %v5795 = vsub.s32 %v5792, %v5794
        %v5796 = vrot.slane %v5780, %v5795
        %v5798 = vunpack.c.l.s4 1966171168
        %v5799 = vunpack.c.0.s8 %v5798
        %v5800 = vlaneseq
        %v5801 = vshrl.u32 %v5800, 7
        %v5802 = vsub.s32 %v5799, %v5801
        %v5803 = vrot.slane %v5781, %v5802
        %v5805 = vunpack.c.l.s4 1966171168
        %v5806 = vunpack.c.0.s8 %v5805
        %v5807 = vlaneseq
        %v5808 = vshrl.u32 %v5807, 7
        %v5809 = vsub.s32 %v5806, %v5808
        %v5810 = vrot.slane %v5782, %v5809
        %v5811 = vcombine.high %v5789, %v5789
        %v5812 = vcombine.high %v5796, %v5796
        %v5813 = vcombine.high %v5803, %v5803
        %v5814 = vcombine.high %v5810, %v5810
        %v5815 = vcombine.high %v4948, %v4948
        %v5817 = vunpack.c.l.s4 1966171168
        %v5818 = vunpack.c.0.s8 %v5817
        %v5819 = vlaneseq
        %v5820 = vshrl.u32 %v5819, 7
        %v5821 = vsub.s32 %v5818, %v5820
        %v5822 = vrot.slane %v4948, %v5821
        %v5824 = vunpack.c.l.s4 1966171168
        %v5825 = vunpack.c.0.s8 %v5824
        %v5826 = vlaneseq
        %v5827 = vshrl.u32 %v5826, 7
        %v5828 = vsub.s32 %v5825, %v5827
        %v5829 = vrot.slane %v5815, %v5828
        %v5830 = vcombine.high %v5822, %v5822
        %v5831 = vcombine.high %v5829, %v5829
        %v5833 = vunpack.c.l.s4 1966171168
        %v5834 = vunpack.c.0.s8 %v5833
        %v5835 = vlaneseq
        %v5836 = vshrl.u32 %v5835, 7
        %v5837 = vsub.s32 %v5834, %v5836
        %v5838 = vrot.slane %v5822, %v5837
        %v5840 = vunpack.c.l.s4 1966171168
        %v5841 = vunpack.c.0.s8 %v5840
        %v5842 = vlaneseq
        %v5843 = vshrl.u32 %v5842, 7
        %v5844 = vsub.s32 %v5841, %v5843
        %v5845 = vrot.slane %v5829, %v5844
        %v5847 = vunpack.c.l.s4 1966171168
        %v5848 = vunpack.c.0.s8 %v5847
        %v5849 = vlaneseq
        %v5850 = vshrl.u32 %v5849, 7
        %v5851 = vsub.s32 %v5848, %v5850
        %v5852 = vrot.slane %v5830, %v5851
        %v5854 = vunpack.c.l.s4 1966171168
        %v5855 = vunpack.c.0.s8 %v5854
        %v5856 = vlaneseq
        %v5857 = vshrl.u32 %v5856, 7
        %v5858 = vsub.s32 %v5855, %v5857
        %v5859 = vrot.slane %v5831, %v5858
        %v5860 = vcombine.high %v5838, %v5838
        %v5861 = vcombine.high %v5845, %v5845
        %v5862 = vcombine.high %v5852, %v5852
        %v5863 = vcombine.high %v5859, %v5859
        %v5864 = vlaneseq
        %v5865 = vshrl.u32 %v5864, 7
        %v5866 = vsub.s32 0, %v5865
        %v5867 = vrot.slane %v5103, %v5866
        %v5868 = vlaneseq
        %v5869 = vshrl.u32 %v5868, 7
        %v5870 = vsub.s32 0, %v5869
        %v5871 = vrot.slane %v5117, %v5870
        %v5872 = vlaneseq
        %v5873 = vshrl.u32 %v5872, 7
        %v5874 = vsub.s32 0, %v5873
        %v5875 = vrot.slane %v5125, %v5874
        %v5876 = vlaneseq
        %v5877 = vshrl.u32 %v5876, 7
        %v5878 = vsub.s32 0, %v5877
        %v5879 = vrot.slane %v5127, %v5878
        %v5880 = vlaneseq
        %v5881 = vshrl.u32 %v5880, 7
        %v5882 = vsub.s32 0, %v5881
        %v5883 = vrot.slane %v5110, %v5882
        %v5884 = vlaneseq
        %v5885 = vshrl.u32 %v5884, 7
        %v5886 = vsub.s32 0, %v5885
        %v5887 = vrot.slane %v5124, %v5886
        %v5888 = vlaneseq
        %v5889 = vshrl.u32 %v5888, 7
        %v5890 = vsub.s32 0, %v5889
        %v5891 = vrot.slane %v5126, %v5890
        %v5892 = vlaneseq
        %v5893 = vshrl.u32 %v5892, 7
        %v5894 = vsub.s32 0, %v5893
        %v5895 = vrot.slane %v5128, %v5894
        %v5896 = vlaneseq
        %v5897 = vshrl.u32 %v5896, 7
        %v5898 = vsub.s32 0, %v5897
        %v5899 = vrot.slane %v5152, %v5898
        %v5900 = vlaneseq
        %v5901 = vshrl.u32 %v5900, 7
        %v5902 = vsub.s32 0, %v5901
        %v5903 = vrot.slane %v5166, %v5902
        %v5904 = vlaneseq
        %v5905 = vshrl.u32 %v5904, 7
        %v5906 = vsub.s32 0, %v5905
        %v5907 = vrot.slane %v5174, %v5906
        %v5908 = vlaneseq
        %v5909 = vshrl.u32 %v5908, 7
        %v5910 = vsub.s32 0, %v5909
        %v5911 = vrot.slane %v5176, %v5910
        %v5912 = vlaneseq
        %v5913 = vshrl.u32 %v5912, 7
        %v5914 = vsub.s32 0, %v5913
        %v5915 = vrot.slane %v5159, %v5914
        %v5916 = vlaneseq
        %v5917 = vshrl.u32 %v5916, 7
        %v5918 = vsub.s32 0, %v5917
        %v5919 = vrot.slane %v5173, %v5918
        %v5920 = vlaneseq
        %v5921 = vshrl.u32 %v5920, 7
        %v5922 = vsub.s32 0, %v5921
        %v5923 = vrot.slane %v5175, %v5922
        %v5924 = vlaneseq
        %v5925 = vshrl.u32 %v5924, 7
        %v5926 = vsub.s32 0, %v5925
        %v5927 = vrot.slane %v5177, %v5926
        %v5928 = vlaneseq
        %v5929 = vshrl.u32 %v5928, 7
        %v5930 = vsub.s32 0, %v5929
        %v5931 = vrot.slane %v5201, %v5930
        %v5932 = vlaneseq
        %v5933 = vshrl.u32 %v5932, 7
        %v5934 = vsub.s32 0, %v5933
        %v5935 = vrot.slane %v5215, %v5934
        %v5936 = vlaneseq
        %v5937 = vshrl.u32 %v5936, 7
        %v5938 = vsub.s32 0, %v5937
        %v5939 = vrot.slane %v5223, %v5938
        %v5940 = vlaneseq
        %v5941 = vshrl.u32 %v5940, 7
        %v5942 = vsub.s32 0, %v5941
        %v5943 = vrot.slane %v5225, %v5942
        %v5944 = vlaneseq
        %v5945 = vshrl.u32 %v5944, 7
        %v5946 = vsub.s32 0, %v5945
        %v5947 = vrot.slane %v5208, %v5946
        %v5948 = vlaneseq
        %v5949 = vshrl.u32 %v5948, 7
        %v5950 = vsub.s32 0, %v5949
        %v5951 = vrot.slane %v5222, %v5950
        %v5952 = vlaneseq
        %v5953 = vshrl.u32 %v5952, 7
        %v5954 = vsub.s32 0, %v5953
        %v5955 = vrot.slane %v5224, %v5954
        %v5956 = vlaneseq
        %v5957 = vshrl.u32 %v5956, 7
        %v5958 = vsub.s32 0, %v5957
        %v5959 = vrot.slane %v5226, %v5958
        %v5960 = vlaneseq
        %v5961 = vshrl.u32 %v5960, 7
        %v5962 = vsub.s32 0, %v5961
        %v5963 = vrot.slane %v5250, %v5962
        %v5964 = vlaneseq
        %v5965 = vshrl.u32 %v5964, 7
        %v5966 = vsub.s32 0, %v5965
        %v5967 = vrot.slane %v5264, %v5966
        %v5968 = vlaneseq
        %v5969 = vshrl.u32 %v5968, 7
        %v5970 = vsub.s32 0, %v5969
        %v5971 = vrot.slane %v5272, %v5970
        %v5972 = vlaneseq
        %v5973 = vshrl.u32 %v5972, 7
        %v5974 = vsub.s32 0, %v5973
        %v5975 = vrot.slane %v5274, %v5974
        %v5976 = vlaneseq
        %v5977 = vshrl.u32 %v5976, 7
        %v5978 = vsub.s32 0, %v5977
        %v5979 = vrot.slane %v5257, %v5978
        %v5980 = vlaneseq
        %v5981 = vshrl.u32 %v5980, 7
        %v5982 = vsub.s32 0, %v5981
        %v5983 = vrot.slane %v5271, %v5982
        %v5984 = vlaneseq
        %v5985 = vshrl.u32 %v5984, 7
        %v5986 = vsub.s32 0, %v5985
        %v5987 = vrot.slane %v5273, %v5986
        %v5988 = vlaneseq
        %v5989 = vshrl.u32 %v5988, 7
        %v5990 = vsub.s32 0, %v5989
        %v5991 = vrot.slane %v5275, %v5990
        %v5992 = vlaneseq
        %v5993 = vshrl.u32 %v5992, 7
        %v5994 = vsub.s32 0, %v5993
        %v5995 = vrot.slane %v5299, %v5994
        %v5996 = vlaneseq
        %v5997 = vshrl.u32 %v5996, 7
        %v5998 = vsub.s32 0, %v5997
        %v5999 = vrot.slane %v5313, %v5998
        %v6000 = vlaneseq
        %v6001 = vshrl.u32 %v6000, 7
        %v6002 = vsub.s32 0, %v6001
        %v6003 = vrot.slane %v5321, %v6002
        %v6004 = vlaneseq
        %v6005 = vshrl.u32 %v6004, 7
        %v6006 = vsub.s32 0, %v6005
        %v6007 = vrot.slane %v5323, %v6006
        %v6008 = vlaneseq
        %v6009 = vshrl.u32 %v6008, 7
        %v6010 = vsub.s32 0, %v6009
        %v6011 = vrot.slane %v5306, %v6010
        %v6012 = vlaneseq
        %v6013 = vshrl.u32 %v6012, 7
        %v6014 = vsub.s32 0, %v6013
        %v6015 = vrot.slane %v5320, %v6014
        %v6016 = vlaneseq
        %v6017 = vshrl.u32 %v6016, 7
        %v6018 = vsub.s32 0, %v6017
        %v6019 = vrot.slane %v5322, %v6018
        %v6020 = vlaneseq
        %v6021 = vshrl.u32 %v6020, 7
        %v6022 = vsub.s32 0, %v6021
        %v6023 = vrot.slane %v5324, %v6022
        %v6024 = vlaneseq
        %v6025 = vshrl.u32 %v6024, 7
        %v6026 = vsub.s32 0, %v6025
        %v6027 = vrot.slane %v5348, %v6026
        %v6028 = vlaneseq
        %v6029 = vshrl.u32 %v6028, 7
        %v6030 = vsub.s32 0, %v6029
        %v6031 = vrot.slane %v5362, %v6030
        %v6032 = vlaneseq
        %v6033 = vshrl.u32 %v6032, 7
        %v6034 = vsub.s32 0, %v6033
        %v6035 = vrot.slane %v5370, %v6034
        %v6036 = vlaneseq
        %v6037 = vshrl.u32 %v6036, 7
        %v6038 = vsub.s32 0, %v6037
        %v6039 = vrot.slane %v5372, %v6038
        %v6040 = vlaneseq
        %v6041 = vshrl.u32 %v6040, 7
        %v6042 = vsub.s32 0, %v6041
        %v6043 = vrot.slane %v5355, %v6042
        %v6044 = vlaneseq
        %v6045 = vshrl.u32 %v6044, 7
        %v6046 = vsub.s32 0, %v6045
        %v6047 = vrot.slane %v5369, %v6046
        %v6048 = vlaneseq
        %v6049 = vshrl.u32 %v6048, 7
        %v6050 = vsub.s32 0, %v6049
        %v6051 = vrot.slane %v5371, %v6050
        %v6052 = vlaneseq
        %v6053 = vshrl.u32 %v6052, 7
        %v6054 = vsub.s32 0, %v6053
        %v6055 = vrot.slane %v5373, %v6054
        %v6056 = vlaneseq
        %v6057 = vshrl.u32 %v6056, 7
        %v6058 = vsub.s32 0, %v6057
        %v6059 = vrot.slane %v5397, %v6058
        %v6060 = vlaneseq
        %v6061 = vshrl.u32 %v6060, 7
        %v6062 = vsub.s32 0, %v6061
        %v6063 = vrot.slane %v5411, %v6062
        %v6064 = vlaneseq
        %v6065 = vshrl.u32 %v6064, 7
        %v6066 = vsub.s32 0, %v6065
        %v6067 = vrot.slane %v5419, %v6066
        %v6068 = vlaneseq
        %v6069 = vshrl.u32 %v6068, 7
        %v6070 = vsub.s32 0, %v6069
        %v6071 = vrot.slane %v5421, %v6070
        %v6072 = vlaneseq
        %v6073 = vshrl.u32 %v6072, 7
        %v6074 = vsub.s32 0, %v6073
        %v6075 = vrot.slane %v5404, %v6074
        %v6076 = vlaneseq
        %v6077 = vshrl.u32 %v6076, 7
        %v6078 = vsub.s32 0, %v6077
        %v6079 = vrot.slane %v5418, %v6078
        %v6080 = vlaneseq
        %v6081 = vshrl.u32 %v6080, 7
        %v6082 = vsub.s32 0, %v6081
        %v6083 = vrot.slane %v5420, %v6082
        %v6084 = vlaneseq
        %v6085 = vshrl.u32 %v6084, 7
        %v6086 = vsub.s32 0, %v6085
        %v6087 = vrot.slane %v5422, %v6086
        %v6088 = vlaneseq
        %v6089 = vshrl.u32 %v6088, 7
        %v6090 = vsub.s32 0, %v6089
        %v6091 = vrot.slane %v5446, %v6090
        %v6092 = vlaneseq
        %v6093 = vshrl.u32 %v6092, 7
        %v6094 = vsub.s32 0, %v6093
        %v6095 = vrot.slane %v5460, %v6094
        %v6096 = vlaneseq
        %v6097 = vshrl.u32 %v6096, 7
        %v6098 = vsub.s32 0, %v6097
        %v6099 = vrot.slane %v5468, %v6098
        %v6100 = vlaneseq
        %v6101 = vshrl.u32 %v6100, 7
        %v6102 = vsub.s32 0, %v6101
        %v6103 = vrot.slane %v5470, %v6102
        %v6104 = vlaneseq
        %v6105 = vshrl.u32 %v6104, 7
        %v6106 = vsub.s32 0, %v6105
        %v6107 = vrot.slane %v5453, %v6106
        %v6108 = vlaneseq
        %v6109 = vshrl.u32 %v6108, 7
        %v6110 = vsub.s32 0, %v6109
        %v6111 = vrot.slane %v5467, %v6110
        %v6112 = vlaneseq
        %v6113 = vshrl.u32 %v6112, 7
        %v6114 = vsub.s32 0, %v6113
        %v6115 = vrot.slane %v5469, %v6114
        %v6116 = vlaneseq
        %v6117 = vshrl.u32 %v6116, 7
        %v6118 = vsub.s32 0, %v6117
        %v6119 = vrot.slane %v5471, %v6118
        %v6120 = vlaneseq
        %v6121 = vshrl.u32 %v6120, 7
        %v6122 = vsub.s32 0, %v6121
        %v6123 = vrot.slane %v5495, %v6122
        %v6124 = vlaneseq
        %v6125 = vshrl.u32 %v6124, 7
        %v6126 = vsub.s32 0, %v6125
        %v6127 = vrot.slane %v5509, %v6126
        %v6128 = vlaneseq
        %v6129 = vshrl.u32 %v6128, 7
        %v6130 = vsub.s32 0, %v6129
        %v6131 = vrot.slane %v5517, %v6130
        %v6132 = vlaneseq
        %v6133 = vshrl.u32 %v6132, 7
        %v6134 = vsub.s32 0, %v6133
        %v6135 = vrot.slane %v5519, %v6134
        %v6136 = vlaneseq
        %v6137 = vshrl.u32 %v6136, 7
        %v6138 = vsub.s32 0, %v6137
        %v6139 = vrot.slane %v5502, %v6138
        %v6140 = vlaneseq
        %v6141 = vshrl.u32 %v6140, 7
        %v6142 = vsub.s32 0, %v6141
        %v6143 = vrot.slane %v5516, %v6142
        %v6144 = vlaneseq
        %v6145 = vshrl.u32 %v6144, 7
        %v6146 = vsub.s32 0, %v6145
        %v6147 = vrot.slane %v5518, %v6146
        %v6148 = vlaneseq
        %v6149 = vshrl.u32 %v6148, 7
        %v6150 = vsub.s32 0, %v6149
        %v6151 = vrot.slane %v5520, %v6150
        %v6152 = vlaneseq
        %v6153 = vshrl.u32 %v6152, 7
        %v6154 = vsub.s32 0, %v6153
        %v6155 = vrot.slane %v5544, %v6154
        %v6156 = vlaneseq
        %v6157 = vshrl.u32 %v6156, 7
        %v6158 = vsub.s32 0, %v6157
        %v6159 = vrot.slane %v5558, %v6158
        %v6160 = vlaneseq
        %v6161 = vshrl.u32 %v6160, 7
        %v6162 = vsub.s32 0, %v6161
        %v6163 = vrot.slane %v5566, %v6162
        %v6164 = vlaneseq
        %v6165 = vshrl.u32 %v6164, 7
        %v6166 = vsub.s32 0, %v6165
        %v6167 = vrot.slane %v5568, %v6166
        %v6168 = vlaneseq
        %v6169 = vshrl.u32 %v6168, 7
        %v6170 = vsub.s32 0, %v6169
        %v6171 = vrot.slane %v5551, %v6170
        %v6172 = vlaneseq
        %v6173 = vshrl.u32 %v6172, 7
        %v6174 = vsub.s32 0, %v6173
        %v6175 = vrot.slane %v5565, %v6174
        %v6176 = vlaneseq
        %v6177 = vshrl.u32 %v6176, 7
        %v6178 = vsub.s32 0, %v6177
        %v6179 = vrot.slane %v5567, %v6178
        %v6180 = vlaneseq
        %v6181 = vshrl.u32 %v6180, 7
        %v6182 = vsub.s32 0, %v6181
        %v6183 = vrot.slane %v5569, %v6182
        %v6184 = vlaneseq
        %v6185 = vshrl.u32 %v6184, 7
        %v6186 = vsub.s32 0, %v6185
        %v6187 = vrot.slane %v5593, %v6186
        %v6188 = vlaneseq
        %v6189 = vshrl.u32 %v6188, 7
        %v6190 = vsub.s32 0, %v6189
        %v6191 = vrot.slane %v5607, %v6190
        %v6192 = vlaneseq
        %v6193 = vshrl.u32 %v6192, 7
        %v6194 = vsub.s32 0, %v6193
        %v6195 = vrot.slane %v5615, %v6194
        %v6196 = vlaneseq
        %v6197 = vshrl.u32 %v6196, 7
        %v6198 = vsub.s32 0, %v6197
        %v6199 = vrot.slane %v5617, %v6198
        %v6200 = vlaneseq
        %v6201 = vshrl.u32 %v6200, 7
        %v6202 = vsub.s32 0, %v6201
        %v6203 = vrot.slane %v5600, %v6202
        %v6204 = vlaneseq
        %v6205 = vshrl.u32 %v6204, 7
        %v6206 = vsub.s32 0, %v6205
        %v6207 = vrot.slane %v5614, %v6206
        %v6208 = vlaneseq
        %v6209 = vshrl.u32 %v6208, 7
        %v6210 = vsub.s32 0, %v6209
        %v6211 = vrot.slane %v5616, %v6210
        %v6212 = vlaneseq
        %v6213 = vshrl.u32 %v6212, 7
        %v6214 = vsub.s32 0, %v6213
        %v6215 = vrot.slane %v5618, %v6214
        %v6216 = vlaneseq
        %v6217 = vshrl.u32 %v6216, 7
        %v6218 = vsub.s32 0, %v6217
        %v6219 = vrot.slane %v5642, %v6218
        %v6220 = vlaneseq
        %v6221 = vshrl.u32 %v6220, 7
        %v6222 = vsub.s32 0, %v6221
        %v6223 = vrot.slane %v5656, %v6222
        %v6224 = vlaneseq
        %v6225 = vshrl.u32 %v6224, 7
        %v6226 = vsub.s32 0, %v6225
        %v6227 = vrot.slane %v5664, %v6226
        %v6228 = vlaneseq
        %v6229 = vshrl.u32 %v6228, 7
        %v6230 = vsub.s32 0, %v6229
        %v6231 = vrot.slane %v5666, %v6230
        %v6232 = vlaneseq
        %v6233 = vshrl.u32 %v6232, 7
        %v6234 = vsub.s32 0, %v6233
        %v6235 = vrot.slane %v5649, %v6234
        %v6236 = vlaneseq
        %v6237 = vshrl.u32 %v6236, 7
        %v6238 = vsub.s32 0, %v6237
        %v6239 = vrot.slane %v5663, %v6238
        %v6240 = vlaneseq
        %v6241 = vshrl.u32 %v6240, 7
        %v6242 = vsub.s32 0, %v6241
        %v6243 = vrot.slane %v5665, %v6242
        %v6244 = vlaneseq
        %v6245 = vshrl.u32 %v6244, 7
        %v6246 = vsub.s32 0, %v6245
        %v6247 = vrot.slane %v5667, %v6246
        %v6248 = vlaneseq
        %v6249 = vshrl.u32 %v6248, 7
        %v6250 = vsub.s32 0, %v6249
        %v6251 = vrot.slane %v5691, %v6250
        %v6252 = vlaneseq
        %v6253 = vshrl.u32 %v6252, 7
        %v6254 = vsub.s32 0, %v6253
        %v6255 = vrot.slane %v5705, %v6254
        %v6256 = vlaneseq
        %v6257 = vshrl.u32 %v6256, 7
        %v6258 = vsub.s32 0, %v6257
        %v6259 = vrot.slane %v5713, %v6258
        %v6260 = vlaneseq
        %v6261 = vshrl.u32 %v6260, 7
        %v6262 = vsub.s32 0, %v6261
        %v6263 = vrot.slane %v5715, %v6262
        %v6264 = vlaneseq
        %v6265 = vshrl.u32 %v6264, 7
        %v6266 = vsub.s32 0, %v6265
        %v6267 = vrot.slane %v5698, %v6266
        %v6268 = vlaneseq
        %v6269 = vshrl.u32 %v6268, 7
        %v6270 = vsub.s32 0, %v6269
        %v6271 = vrot.slane %v5712, %v6270
        %v6272 = vlaneseq
        %v6273 = vshrl.u32 %v6272, 7
        %v6274 = vsub.s32 0, %v6273
        %v6275 = vrot.slane %v5714, %v6274
        %v6276 = vlaneseq
        %v6277 = vshrl.u32 %v6276, 7
        %v6278 = vsub.s32 0, %v6277
        %v6279 = vrot.slane %v5716, %v6278
        %v6280 = vlaneseq
        %v6281 = vshrl.u32 %v6280, 7
        %v6282 = vsub.s32 0, %v6281
        %v6283 = vrot.slane %v5740, %v6282
        %v6284 = vlaneseq
        %v6285 = vshrl.u32 %v6284, 7
        %v6286 = vsub.s32 0, %v6285
        %v6287 = vrot.slane %v5754, %v6286
        %v6288 = vlaneseq
        %v6289 = vshrl.u32 %v6288, 7
        %v6290 = vsub.s32 0, %v6289
        %v6291 = vrot.slane %v5762, %v6290
        %v6292 = vlaneseq
        %v6293 = vshrl.u32 %v6292, 7
        %v6294 = vsub.s32 0, %v6293
        %v6295 = vrot.slane %v5764, %v6294
        %v6296 = vlaneseq
        %v6297 = vshrl.u32 %v6296, 7
        %v6298 = vsub.s32 0, %v6297
        %v6299 = vrot.slane %v5747, %v6298
        %v6300 = vlaneseq
        %v6301 = vshrl.u32 %v6300, 7
        %v6302 = vsub.s32 0, %v6301
        %v6303 = vrot.slane %v5761, %v6302
        %v6304 = vlaneseq
        %v6305 = vshrl.u32 %v6304, 7
        %v6306 = vsub.s32 0, %v6305
        %v6307 = vrot.slane %v5763, %v6306
        %v6308 = vlaneseq
        %v6309 = vshrl.u32 %v6308, 7
        %v6310 = vsub.s32 0, %v6309
        %v6311 = vrot.slane %v5765, %v6310
        %v6312 = vlaneseq
        %v6313 = vshrl.u32 %v6312, 7
        %v6314 = vsub.s32 0, %v6313
        %v6315 = vrot.slane %v5789, %v6314
        %v6316 = vlaneseq
        %v6317 = vshrl.u32 %v6316, 7
        %v6318 = vsub.s32 0, %v6317
        %v6319 = vrot.slane %v5803, %v6318
        %v6320 = vlaneseq
        %v6321 = vshrl.u32 %v6320, 7
        %v6322 = vsub.s32 0, %v6321
        %v6323 = vrot.slane %v5811, %v6322
        %v6324 = vlaneseq
        %v6325 = vshrl.u32 %v6324, 7
        %v6326 = vsub.s32 0, %v6325
        %v6327 = vrot.slane %v5813, %v6326
        %v6328 = vlaneseq
        %v6329 = vshrl.u32 %v6328, 7
        %v6330 = vsub.s32 0, %v6329
        %v6331 = vrot.slane %v5796, %v6330
        %v6332 = vlaneseq
        %v6333 = vshrl.u32 %v6332, 7
        %v6334 = vsub.s32 0, %v6333
        %v6335 = vrot.slane %v5810, %v6334
        %v6336 = vlaneseq
        %v6337 = vshrl.u32 %v6336, 7
        %v6338 = vsub.s32 0, %v6337
        %v6339 = vrot.slane %v5812, %v6338
        %v6340 = vlaneseq
        %v6341 = vshrl.u32 %v6340, 7
        %v6342 = vsub.s32 0, %v6341
        %v6343 = vrot.slane %v5814, %v6342
        %v6344 = vlaneseq
        %v6345 = vshrl.u32 %v6344, 7
        %v6346 = vsub.s32 0, %v6345
        %v6347 = vrot.slane %v5838, %v6346
        %v6348 = vlaneseq
        %v6349 = vshrl.u32 %v6348, 7
        %v6350 = vsub.s32 0, %v6349
        %v6351 = vrot.slane %v5852, %v6350
        %v6352 = vlaneseq
        %v6353 = vshrl.u32 %v6352, 7
        %v6354 = vsub.s32 0, %v6353
        %v6355 = vrot.slane %v5860, %v6354
        %v6356 = vlaneseq
        %v6357 = vshrl.u32 %v6356, 7
        %v6358 = vsub.s32 0, %v6357
        %v6359 = vrot.slane %v5862, %v6358
        %v6360 = vlaneseq
        %v6361 = vshrl.u32 %v6360, 7
        %v6362 = vsub.s32 0, %v6361
        %v6363 = vrot.slane %v5845, %v6362
        %v6364 = vlaneseq
        %v6365 = vshrl.u32 %v6364, 7
        %v6366 = vsub.s32 0, %v6365
        %v6367 = vrot.slane %v5859, %v6366
        %v6368 = vlaneseq
        %v6369 = vshrl.u32 %v6368, 7
        %v6370 = vsub.s32 0, %v6369
        %v6371 = vrot.slane %v5861, %v6370
        %v6372 = vlaneseq
        %v6373 = vshrl.u32 %v6372, 7
        %v6374 = vsub.s32 0, %v6373
        %v6375 = vrot.slane %v5863, %v6374
        %v6504 = vsub.f32 %v1364, %v5867
        %v6505 = vsub.f32 %v1369, %v5867
        %v6506 = vsub.f32 %v1374, %v5871
        %v6507 = vsub.f32 %v1379, %v5871
        %v6508 = vsub.f32 %v1384, %v5875
        %v6509 = vsub.f32 %v1389, %v5875
        %v6510 = vsub.f32 %v1394, %v5879
        %v6511 = vsub.f32 %v1399, %v5879
        %v6512 = vsub.f32 %v1404, %v5883
        %v6513 = vsub.f32 %v1409, %v5883
        %v6514 = vsub.f32 %v1414, %v5887
        %v6515 = vsub.f32 %v1419, %v5887
        %v6516 = vsub.f32 %v1424, %v5891
        %v6517 = vsub.f32 %v1429, %v5891
        %v6518 = vsub.f32 %v1434, %v5895
        %v6519 = vsub.f32 %v1439, %v5895
        %v6520 = vsub.f32 %v1444, %v5899
        %v6521 = vsub.f32 %v1449, %v5899
        %v6522 = vsub.f32 %v1454, %v5903
        %v6523 = vsub.f32 %v1459, %v5903
        %v6524 = vsub.f32 %v1464, %v5907
        %v6525 = vsub.f32 %v1469, %v5907
        %v6526 = vsub.f32 %v1474, %v5911
        %v6527 = vsub.f32 %v1479, %v5911
        %v6528 = vsub.f32 %v1484, %v5915
        %v6529 = vsub.f32 %v1489, %v5915
        %v6530 = vsub.f32 %v1494, %v5919
        %v6531 = vsub.f32 %v1499, %v5919
        %v6532 = vsub.f32 %v1504, %v5923
        %v6533 = vsub.f32 %v1509, %v5923
        %v6534 = vsub.f32 %v1514, %v5927
        %v6535 = vsub.f32 %v1519, %v5927
        %v6536 = vsub.f32 %v1524, %v5931
        %v6537 = vsub.f32 %v1529, %v5931
        %v6538 = vsub.f32 %v1534, %v5935
        %v6539 = vsub.f32 %v1539, %v5935
        %v6540 = vsub.f32 %v1544, %v5939
        %v6541 = vsub.f32 %v1549, %v5939
        %v6542 = vsub.f32 %v1554, %v5943
        %v6543 = vsub.f32 %v1559, %v5943
        %v6544 = vsub.f32 %v1564, %v5947
        %v6545 = vsub.f32 %v1569, %v5947
        %v6546 = vsub.f32 %v1574, %v5951
        %v6547 = vsub.f32 %v1579, %v5951
        %v6548 = vsub.f32 %v1584, %v5955
        %v6549 = vsub.f32 %v1589, %v5955
        %v6550 = vsub.f32 %v1594, %v5959
        %v6551 = vsub.f32 %v1599, %v5959
        %v6552 = vsub.f32 %v1604, %v5963
        %v6553 = vsub.f32 %v1609, %v5963
        %v6554 = vsub.f32 %v1614, %v5967
        %v6555 = vsub.f32 %v1619, %v5967
        %v6556 = vsub.f32 %v1624, %v5971
        %v6557 = vsub.f32 %v1629, %v5971
        %v6558 = vsub.f32 %v1634, %v5975
        %v6559 = vsub.f32 %v1639, %v5975
        %v6560 = vsub.f32 %v1644, %v5979
        %v6561 = vsub.f32 %v1649, %v5979
        %v6562 = vsub.f32 %v1654, %v5983
        %v6563 = vsub.f32 %v1659, %v5983
        %v6564 = vsub.f32 %v1664, %v5987
        %v6565 = vsub.f32 %v1669, %v5987
        %v6566 = vsub.f32 %v1674, %v5991
        %v6567 = vsub.f32 %v1679, %v5991
        %v6568 = vsub.f32 %v1684, %v5995
        %v6569 = vsub.f32 %v1689, %v5995
        %v6570 = vsub.f32 %v1694, %v5999
        %v6571 = vsub.f32 %v1699, %v5999
        %v6572 = vsub.f32 %v1704, %v6003
        %v6573 = vsub.f32 %v1709, %v6003
        %v6574 = vsub.f32 %v1714, %v6007
        %v6575 = vsub.f32 %v1719, %v6007
        %v6576 = vsub.f32 %v1724, %v6011
        %v6577 = vsub.f32 %v1729, %v6011
        %v6578 = vsub.f32 %v1734, %v6015
        %v6579 = vsub.f32 %v1739, %v6015
        %v6580 = vsub.f32 %v1744, %v6019
        %v6581 = vsub.f32 %v1749, %v6019
        %v6582 = vsub.f32 %v1754, %v6023
        %v6583 = vsub.f32 %v1759, %v6023
        %v6584 = vsub.f32 %v1764, %v6027
        %v6585 = vsub.f32 %v1769, %v6027
        %v6586 = vsub.f32 %v1774, %v6031
        %v6587 = vsub.f32 %v1779, %v6031
        %v6588 = vsub.f32 %v1784, %v6035
        %v6589 = vsub.f32 %v1789, %v6035
        %v6590 = vsub.f32 %v1794, %v6039
        %v6591 = vsub.f32 %v1799, %v6039
        %v6592 = vsub.f32 %v1804, %v6043
        %v6593 = vsub.f32 %v1809, %v6043
        %v6594 = vsub.f32 %v1814, %v6047
        %v6595 = vsub.f32 %v1819, %v6047
        %v6596 = vsub.f32 %v1824, %v6051
        %v6597 = vsub.f32 %v1829, %v6051
        %v6598 = vsub.f32 %v1834, %v6055
        %v6599 = vsub.f32 %v1839, %v6055
        %v6600 = vsub.f32 %v1844, %v6059
        %v6601 = vsub.f32 %v1849, %v6059
        %v6602 = vsub.f32 %v1854, %v6063
        %v6603 = vsub.f32 %v1859, %v6063
        %v6604 = vsub.f32 %v1864, %v6067
        %v6605 = vsub.f32 %v1869, %v6067
        %v6606 = vsub.f32 %v1874, %v6071
        %v6607 = vsub.f32 %v1879, %v6071
        %v6608 = vsub.f32 %v1884, %v6075
        %v6609 = vsub.f32 %v1889, %v6075
        %v6610 = vsub.f32 %v1894, %v6079
        %v6611 = vsub.f32 %v1899, %v6079
        %v6612 = vsub.f32 %v1904, %v6083
        %v6613 = vsub.f32 %v1909, %v6083
        %v6614 = vsub.f32 %v1914, %v6087
        %v6615 = vsub.f32 %v1919, %v6087
        %v6616 = vsub.f32 %v1924, %v6091
        %v6617 = vsub.f32 %v1929, %v6091
        %v6618 = vsub.f32 %v1934, %v6095
        %v6619 = vsub.f32 %v1939, %v6095
        %v6620 = vsub.f32 %v1944, %v6099
        %v6621 = vsub.f32 %v1949, %v6099
        %v6622 = vsub.f32 %v1954, %v6103
        %v6623 = vsub.f32 %v1959, %v6103
        %v6624 = vsub.f32 %v1964, %v6107
        %v6625 = vsub.f32 %v1969, %v6107
        %v6626 = vsub.f32 %v1974, %v6111
        %v6627 = vsub.f32 %v1979, %v6111
        %v6628 = vsub.f32 %v1984, %v6115
        %v6629 = vsub.f32 %v1989, %v6115
        %v6630 = vsub.f32 %v1994, %v6119
        %v6631 = vsub.f32 %v1999, %v6119
        %v6632 = vsub.f32 %v2004, %v6123
        %v6633 = vsub.f32 %v2009, %v6123
        %v6634 = vsub.f32 %v2014, %v6127
        %v6635 = vsub.f32 %v2019, %v6127
        %v6636 = vsub.f32 %v2024, %v6131
        %v6637 = vsub.f32 %v2029, %v6131
        %v6638 = vsub.f32 %v2034, %v6135
        %v6639 = vsub.f32 %v2039, %v6135
        %v6640 = vsub.f32 %v2044, %v6139
        %v6641 = vsub.f32 %v2049, %v6139
        %v6642 = vsub.f32 %v2054, %v6143
        %v6643 = vsub.f32 %v2059, %v6143
        %v6644 = vsub.f32 %v2064, %v6147
        %v6645 = vsub.f32 %v2069, %v6147
        %v6646 = vsub.f32 %v2074, %v6151
        %v6647 = vsub.f32 %v2079, %v6151
        %v6648 = vsub.f32 %v2084, %v6155
        %v6649 = vsub.f32 %v2089, %v6155
        %v6650 = vsub.f32 %v2094, %v6159
        %v6651 = vsub.f32 %v2099, %v6159
        %v6652 = vsub.f32 %v2104, %v6163
        %v6653 = vsub.f32 %v2109, %v6163
        %v6654 = vsub.f32 %v2114, %v6167
        %v6655 = vsub.f32 %v2119, %v6167
        %v6656 = vsub.f32 %v2124, %v6171
        %v6657 = vsub.f32 %v2129, %v6171
        %v6658 = vsub.f32 %v2134, %v6175
        %v6659 = vsub.f32 %v2139, %v6175
        %v6660 = vsub.f32 %v2144, %v6179
        %v6661 = vsub.f32 %v2149, %v6179
        %v6662 = vsub.f32 %v2154, %v6183
        %v6663 = vsub.f32 %v2159, %v6183
        %v6664 = vsub.f32 %v2164, %v6187
        %v6665 = vsub.f32 %v2169, %v6187
        %v6666 = vsub.f32 %v2174, %v6191
        %v6667 = vsub.f32 %v2179, %v6191
        %v6668 = vsub.f32 %v2184, %v6195
        %v6669 = vsub.f32 %v2189, %v6195
        %v6670 = vsub.f32 %v2194, %v6199
        %v6671 = vsub.f32 %v2199, %v6199
        %v6672 = vsub.f32 %v2204, %v6203
        %v6673 = vsub.f32 %v2209, %v6203
        %v6674 = vsub.f32 %v2214, %v6207
        %v6675 = vsub.f32 %v2219, %v6207
        %v6676 = vsub.f32 %v2224, %v6211
        %v6677 = vsub.f32 %v2229, %v6211
        %v6678 = vsub.f32 %v2234, %v6215
        %v6679 = vsub.f32 %v2239, %v6215
        %v6680 = vsub.f32 %v2244, %v6219
        %v6681 = vsub.f32 %v2249, %v6219
        %v6682 = vsub.f32 %v2254, %v6223
        %v6683 = vsub.f32 %v2259, %v6223
        %v6684 = vsub.f32 %v2264, %v6227
        %v6685 = vsub.f32 %v2269, %v6227
        %v6686 = vsub.f32 %v2274, %v6231
        %v6687 = vsub.f32 %v2279, %v6231
        %v6688 = vsub.f32 %v2284, %v6235
        %v6689 = vsub.f32 %v2289, %v6235
        %v6690 = vsub.f32 %v2294, %v6239
        %v6691 = vsub.f32 %v2299, %v6239
        %v6692 = vsub.f32 %v2304, %v6243
        %v6693 = vsub.f32 %v2309, %v6243
        %v6694 = vsub.f32 %v2314, %v6247
        %v6695 = vsub.f32 %v2319, %v6247
        %v6696 = vsub.f32 %v2324, %v6251
        %v6697 = vsub.f32 %v2329, %v6251
        %v6698 = vsub.f32 %v2334, %v6255
        %v6699 = vsub.f32 %v2339, %v6255
        %v6700 = vsub.f32 %v2344, %v6259
        %v6701 = vsub.f32 %v2349, %v6259
        %v6702 = vsub.f32 %v2354, %v6263
        %v6703 = vsub.f32 %v2359, %v6263
        %v6704 = vsub.f32 %v2364, %v6267
        %v6705 = vsub.f32 %v2369, %v6267
        %v6706 = vsub.f32 %v2374, %v6271
        %v6707 = vsub.f32 %v2379, %v6271
        %v6708 = vsub.f32 %v2384, %v6275
        %v6709 = vsub.f32 %v2389, %v6275
        %v6710 = vsub.f32 %v2394, %v6279
        %v6711 = vsub.f32 %v2399, %v6279
        %v6712 = vsub.f32 %v2404, %v6283
        %v6713 = vsub.f32 %v2409, %v6283
        %v6714 = vsub.f32 %v2414, %v6287
        %v6715 = vsub.f32 %v2419, %v6287
        %v6716 = vsub.f32 %v2424, %v6291
        %v6717 = vsub.f32 %v2429, %v6291
        %v6718 = vsub.f32 %v2434, %v6295
        %v6719 = vsub.f32 %v2439, %v6295
        %v6720 = vsub.f32 %v2444, %v6299
        %v6721 = vsub.f32 %v2449, %v6299
        %v6722 = vsub.f32 %v2454, %v6303
        %v6723 = vsub.f32 %v2459, %v6303
        %v6724 = vsub.f32 %v2464, %v6307
        %v6725 = vsub.f32 %v2469, %v6307
        %v6726 = vsub.f32 %v2474, %v6311
        %v6727 = vsub.f32 %v2479, %v6311
        %v6728 = vsub.f32 %v2484, %v6315
        %v6729 = vsub.f32 %v2489, %v6315
        %v6730 = vsub.f32 %v2494, %v6319
        %v6731 = vsub.f32 %v2499, %v6319
        %v6732 = vsub.f32 %v2504, %v6323
        %v6733 = vsub.f32 %v2509, %v6323
        %v6734 = vsub.f32 %v2514, %v6327
        %v6735 = vsub.f32 %v2519, %v6327
        %v6736 = vsub.f32 %v2524, %v6331
        %v6737 = vsub.f32 %v2529, %v6331
        %v6738 = vsub.f32 %v2534, %v6335
        %v6739 = vsub.f32 %v2539, %v6335
        %v6740 = vsub.f32 %v2544, %v6339
        %v6741 = vsub.f32 %v2549, %v6339
        %v6742 = vsub.f32 %v2554, %v6343
        %v6743 = vsub.f32 %v2559, %v6343
        %v6744 = vsub.f32 %v2564, %v6347
        %v6745 = vsub.f32 %v2569, %v6347
        %v6746 = vsub.f32 %v2574, %v6351
        %v6747 = vsub.f32 %v2579, %v6351
        %v6748 = vsub.f32 %v2584, %v6355
        %v6749 = vsub.f32 %v2589, %v6355
        %v6750 = vsub.f32 %v2594, %v6359
        %v6751 = vsub.f32 %v2599, %v6359
        %v6752 = vsub.f32 %v2604, %v6363
        %v6753 = vsub.f32 %v2609, %v6363
        %v6754 = vsub.f32 %v2614, %v6367
        %v6755 = vsub.f32 %v2619, %v6367
        %v6756 = vsub.f32 %v2624, %v6371
        %v6757 = vsub.f32 %v2629, %v6371
        %v6758 = vsub.f32 %v2634, %v6375
        %v6759 = vsub.f32 %v2639, %v6375
        %v6760 = vlaneseq
        %v6761 = vshrl.u32 %v6760, 7
        %v6762 = vsub.s32 0, %v6761
        %v6763 = vrot.slane %v5048, %v6762
        %6765 = vbcast.lane.b32.xlu0 %v6763, 256
        %v6766 = vpop.permute.xlu0 %6765
        %s6768 = sor.u32 256, 8
        %6769 = vbcast.lane.b32.xlu0 %v6763, %s6768
        %v6770 = vpop.permute.xlu0 %6769
        %v6771 = vlaneseq
        %v6772 = vshrl.u32 %v6771, 7
        %v6773 = vsub.s32 1, %v6772
        %v6774 = vrot.slane %v5048, %v6773
        %6776 = vbcast.lane.b32.xlu0 %v6774, 256
        %v6777 = vpop.permute.xlu0 %6776
        %s6779 = sor.u32 256, 8
        %6780 = vbcast.lane.b32.xlu0 %v6774, %s6779
        %v6781 = vpop.permute.xlu0 %6780
        %v6782 = vlaneseq
        %v6783 = vshrl.u32 %v6782, 7
        %v6784 = vsub.s32 2, %v6783
        %v6785 = vrot.slane %v5048, %v6784
        %6787 = vbcast.lane.b32.xlu0 %v6785, 256
        %v6788 = vpop.permute.xlu0 %6787
        %s6790 = sor.u32 256, 8
        %6791 = vbcast.lane.b32.xlu0 %v6785, %s6790
        %v6792 = vpop.permute.xlu0 %6791
        %v6793 = vlaneseq
        %v6794 = vshrl.u32 %v6793, 7
        %v6795 = vsub.s32 3, %v6794
        %v6796 = vrot.slane %v5048, %v6795
        %6798 = vbcast.lane.b32.xlu0 %v6796, 256
        %v6799 = vpop.permute.xlu0 %6798
        %s6801 = sor.u32 256, 8
        %6802 = vbcast.lane.b32.xlu0 %v6796, %s6801
        %v6803 = vpop.permute.xlu0 %6802
        %v6804 = vlaneseq
        %v6805 = vshrl.u32 %v6804, 7
        %v6806 = vsub.s32 4, %v6805
        %v6807 = vrot.slane %v5048, %v6806
        %6809 = vbcast.lane.b32.xlu0 %v6807, 256
        %v6810 = vpop.permute.xlu0 %6809
        %s6812 = sor.u32 256, 8
        %6813 = vbcast.lane.b32.xlu0 %v6807, %s6812
        %v6814 = vpop.permute.xlu0 %6813
        %v6815 = vlaneseq
        %v6816 = vshrl.u32 %v6815, 7
        %v6817 = vsub.s32 5, %v6816
        %v6818 = vrot.slane %v5048, %v6817
        %6820 = vbcast.lane.b32.xlu0 %v6818, 256
        %v6821 = vpop.permute.xlu0 %6820
        %s6823 = sor.u32 256, 8
        %6824 = vbcast.lane.b32.xlu0 %v6818, %s6823
        %v6825 = vpop.permute.xlu0 %6824
        %v6826 = vlaneseq
        %v6827 = vshrl.u32 %v6826, 7
        %v6828 = vsub.s32 6, %v6827
        %v6829 = vrot.slane %v5048, %v6828
        %6831 = vbcast.lane.b32.xlu0 %v6829, 256
        %v6832 = vpop.permute.xlu0 %6831
        %s6834 = sor.u32 256, 8
        %6835 = vbcast.lane.b32.xlu0 %v6829, %s6834
        %v6836 = vpop.permute.xlu0 %6835
        %v6837 = vlaneseq
        %v6838 = vshrl.u32 %v6837, 7
        %v6839 = vsub.s32 7, %v6838
        %v6840 = vrot.slane %v5048, %v6839
        %6842 = vbcast.lane.b32.xlu0 %v6840, 256
        %v6843 = vpop.permute.xlu0 %6842
        %s6845 = sor.u32 256, 8
        %6846 = vbcast.lane.b32.xlu0 %v6840, %s6845
        %v6847 = vpop.permute.xlu0 %6846
        %v6848 = vlaneseq
        %v6849 = vshrl.u32 %v6848, 7
        %v6850 = vsub.s32 0, %v6849
        %v6851 = vrot.slane %v5049, %v6850
        %6853 = vbcast.lane.b32.xlu0 %v6851, 256
        %v6854 = vpop.permute.xlu0 %6853
        %s6856 = sor.u32 256, 8
        %6857 = vbcast.lane.b32.xlu0 %v6851, %s6856
        %v6858 = vpop.permute.xlu0 %6857
        %v6859 = vlaneseq
        %v6860 = vshrl.u32 %v6859, 7
        %v6861 = vsub.s32 1, %v6860
        %v6862 = vrot.slane %v5049, %v6861
        %6864 = vbcast.lane.b32.xlu0 %v6862, 256
        %v6865 = vpop.permute.xlu0 %6864
        %s6867 = sor.u32 256, 8
        %6868 = vbcast.lane.b32.xlu0 %v6862, %s6867
        %v6869 = vpop.permute.xlu0 %6868
        %v6870 = vlaneseq
        %v6871 = vshrl.u32 %v6870, 7
        %v6872 = vsub.s32 2, %v6871
        %v6873 = vrot.slane %v5049, %v6872
        %6875 = vbcast.lane.b32.xlu0 %v6873, 256
        %v6876 = vpop.permute.xlu0 %6875
        %s6878 = sor.u32 256, 8
        %6879 = vbcast.lane.b32.xlu0 %v6873, %s6878
        %v6880 = vpop.permute.xlu0 %6879
        %v6881 = vlaneseq
        %v6882 = vshrl.u32 %v6881, 7
        %v6883 = vsub.s32 3, %v6882
        %v6884 = vrot.slane %v5049, %v6883
        %6886 = vbcast.lane.b32.xlu0 %v6884, 256
        %v6887 = vpop.permute.xlu0 %6886
        %s6889 = sor.u32 256, 8
        %6890 = vbcast.lane.b32.xlu0 %v6884, %s6889
        %v6891 = vpop.permute.xlu0 %6890
        %v6892 = vlaneseq
        %v6893 = vshrl.u32 %v6892, 7
        %v6894 = vsub.s32 4, %v6893
        %v6895 = vrot.slane %v5049, %v6894
        %6897 = vbcast.lane.b32.xlu0 %v6895, 256
        %v6898 = vpop.permute.xlu0 %6897
        %s6900 = sor.u32 256, 8
        %6901 = vbcast.lane.b32.xlu0 %v6895, %s6900
        %v6902 = vpop.permute.xlu0 %6901
        %v6903 = vlaneseq
        %v6904 = vshrl.u32 %v6903, 7
        %v6905 = vsub.s32 5, %v6904
        %v6906 = vrot.slane %v5049, %v6905
        %6908 = vbcast.lane.b32.xlu0 %v6906, 256
        %v6909 = vpop.permute.xlu0 %6908
        %s6911 = sor.u32 256, 8
        %6912 = vbcast.lane.b32.xlu0 %v6906, %s6911
        %v6913 = vpop.permute.xlu0 %6912
        %v6914 = vlaneseq
        %v6915 = vshrl.u32 %v6914, 7
        %v6916 = vsub.s32 6, %v6915
        %v6917 = vrot.slane %v5049, %v6916
        %6919 = vbcast.lane.b32.xlu0 %v6917, 256
        %v6920 = vpop.permute.xlu0 %6919
        %s6922 = sor.u32 256, 8
        %6923 = vbcast.lane.b32.xlu0 %v6917, %s6922
        %v6924 = vpop.permute.xlu0 %6923
        %v6925 = vlaneseq
        %v6926 = vshrl.u32 %v6925, 7
        %v6927 = vsub.s32 7, %v6926
        %v6928 = vrot.slane %v5049, %v6927
        %6930 = vbcast.lane.b32.xlu0 %v6928, 256
        %v6931 = vpop.permute.xlu0 %6930
        %s6933 = sor.u32 256, 8
        %6934 = vbcast.lane.b32.xlu0 %v6928, %s6933
        %v6935 = vpop.permute.xlu0 %6934
        %v6936 = vlaneseq
        %v6937 = vshrl.u32 %v6936, 7
        %v6938 = vsub.s32 0, %v6937
        %v6939 = vrot.slane %v5050, %v6938
        %6941 = vbcast.lane.b32.xlu0 %v6939, 256
        %v6942 = vpop.permute.xlu0 %6941
        %s6944 = sor.u32 256, 8
        %6945 = vbcast.lane.b32.xlu0 %v6939, %s6944
        %v6946 = vpop.permute.xlu0 %6945
        %v6947 = vlaneseq
        %v6948 = vshrl.u32 %v6947, 7
        %v6949 = vsub.s32 1, %v6948
        %v6950 = vrot.slane %v5050, %v6949
        %6952 = vbcast.lane.b32.xlu0 %v6950, 256
        %v6953 = vpop.permute.xlu0 %6952
        %s6955 = sor.u32 256, 8
        %6956 = vbcast.lane.b32.xlu0 %v6950, %s6955
        %v6957 = vpop.permute.xlu0 %6956
        %v6958 = vlaneseq
        %v6959 = vshrl.u32 %v6958, 7
        %v6960 = vsub.s32 2, %v6959
        %v6961 = vrot.slane %v5050, %v6960
        %6963 = vbcast.lane.b32.xlu0 %v6961, 256
        %v6964 = vpop.permute.xlu0 %6963
        %s6966 = sor.u32 256, 8
        %6967 = vbcast.lane.b32.xlu0 %v6961, %s6966
        %v6968 = vpop.permute.xlu0 %6967
        %v6969 = vlaneseq
        %v6970 = vshrl.u32 %v6969, 7
        %v6971 = vsub.s32 3, %v6970
        %v6972 = vrot.slane %v5050, %v6971
        %6974 = vbcast.lane.b32.xlu0 %v6972, 256
        %v6975 = vpop.permute.xlu0 %6974
        %s6977 = sor.u32 256, 8
        %6978 = vbcast.lane.b32.xlu0 %v6972, %s6977
        %v6979 = vpop.permute.xlu0 %6978
        %v6980 = vlaneseq
        %v6981 = vshrl.u32 %v6980, 7
        %v6982 = vsub.s32 4, %v6981
        %v6983 = vrot.slane %v5050, %v6982
        %6985 = vbcast.lane.b32.xlu0 %v6983, 256
        %v6986 = vpop.permute.xlu0 %6985
        %s6988 = sor.u32 256, 8
        %6989 = vbcast.lane.b32.xlu0 %v6983, %s6988
        %v6990 = vpop.permute.xlu0 %6989
        %v6991 = vlaneseq
        %v6992 = vshrl.u32 %v6991, 7
        %v6993 = vsub.s32 5, %v6992
        %v6994 = vrot.slane %v5050, %v6993
        %6996 = vbcast.lane.b32.xlu0 %v6994, 256
        %v6997 = vpop.permute.xlu0 %6996
        %s6999 = sor.u32 256, 8
        %7000 = vbcast.lane.b32.xlu0 %v6994, %s6999
        %v7001 = vpop.permute.xlu0 %7000
        %v7002 = vlaneseq
        %v7003 = vshrl.u32 %v7002, 7
        %v7004 = vsub.s32 6, %v7003
        %v7005 = vrot.slane %v5050, %v7004
        %7007 = vbcast.lane.b32.xlu0 %v7005, 256
        %v7008 = vpop.permute.xlu0 %7007
        %s7010 = sor.u32 256, 8
        %7011 = vbcast.lane.b32.xlu0 %v7005, %s7010
        %v7012 = vpop.permute.xlu0 %7011
        %v7013 = vlaneseq
        %v7014 = vshrl.u32 %v7013, 7
        %v7015 = vsub.s32 7, %v7014
        %v7016 = vrot.slane %v5050, %v7015
        %7018 = vbcast.lane.b32.xlu0 %v7016, 256
        %v7019 = vpop.permute.xlu0 %7018
        %s7021 = sor.u32 256, 8
        %7022 = vbcast.lane.b32.xlu0 %v7016, %s7021
        %v7023 = vpop.permute.xlu0 %7022
        %v7024 = vlaneseq
        %v7025 = vshrl.u32 %v7024, 7
        %v7026 = vsub.s32 0, %v7025
        %v7027 = vrot.slane %v5051, %v7026
        %7029 = vbcast.lane.b32.xlu0 %v7027, 256
        %v7030 = vpop.permute.xlu0 %7029
        %s7032 = sor.u32 256, 8
        %7033 = vbcast.lane.b32.xlu0 %v7027, %s7032
        %v7034 = vpop.permute.xlu0 %7033
        %v7035 = vlaneseq
        %v7036 = vshrl.u32 %v7035, 7
        %v7037 = vsub.s32 1, %v7036
        %v7038 = vrot.slane %v5051, %v7037
        %7040 = vbcast.lane.b32.xlu0 %v7038, 256
        %v7041 = vpop.permute.xlu0 %7040
        %s7043 = sor.u32 256, 8
        %7044 = vbcast.lane.b32.xlu0 %v7038, %s7043
        %v7045 = vpop.permute.xlu0 %7044
        %v7046 = vlaneseq
        %v7047 = vshrl.u32 %v7046, 7
        %v7048 = vsub.s32 2, %v7047
        %v7049 = vrot.slane %v5051, %v7048
        %7051 = vbcast.lane.b32.xlu0 %v7049, 256
        %v7052 = vpop.permute.xlu0 %7051
        %s7054 = sor.u32 256, 8
        %7055 = vbcast.lane.b32.xlu0 %v7049, %s7054
        %v7056 = vpop.permute.xlu0 %7055
        %v7057 = vlaneseq
        %v7058 = vshrl.u32 %v7057, 7
        %v7059 = vsub.s32 3, %v7058
        %v7060 = vrot.slane %v5051, %v7059
        %7062 = vbcast.lane.b32.xlu0 %v7060, 256
        %v7063 = vpop.permute.xlu0 %7062
        %s7065 = sor.u32 256, 8
        %7066 = vbcast.lane.b32.xlu0 %v7060, %s7065
        %v7067 = vpop.permute.xlu0 %7066
        %v7068 = vlaneseq
        %v7069 = vshrl.u32 %v7068, 7
        %v7070 = vsub.s32 4, %v7069
        %v7071 = vrot.slane %v5051, %v7070
        %7073 = vbcast.lane.b32.xlu0 %v7071, 256
        %v7074 = vpop.permute.xlu0 %7073
        %s7076 = sor.u32 256, 8
        %7077 = vbcast.lane.b32.xlu0 %v7071, %s7076
        %v7078 = vpop.permute.xlu0 %7077
        %v7079 = vlaneseq
        %v7080 = vshrl.u32 %v7079, 7
        %v7081 = vsub.s32 5, %v7080
        %v7082 = vrot.slane %v5051, %v7081
        %7084 = vbcast.lane.b32.xlu0 %v7082, 256
        %v7085 = vpop.permute.xlu0 %7084
        %s7087 = sor.u32 256, 8
        %7088 = vbcast.lane.b32.xlu0 %v7082, %s7087
        %v7089 = vpop.permute.xlu0 %7088
        %v7090 = vlaneseq
        %v7091 = vshrl.u32 %v7090, 7
        %v7092 = vsub.s32 6, %v7091
        %v7093 = vrot.slane %v5051, %v7092
        %7095 = vbcast.lane.b32.xlu0 %v7093, 256
        %v7096 = vpop.permute.xlu0 %7095
        %s7098 = sor.u32 256, 8
        %7099 = vbcast.lane.b32.xlu0 %v7093, %s7098
        %v7100 = vpop.permute.xlu0 %7099
        %v7101 = vlaneseq
        %v7102 = vshrl.u32 %v7101, 7
        %v7103 = vsub.s32 7, %v7102
        %v7104 = vrot.slane %v5051, %v7103
        %7106 = vbcast.lane.b32.xlu0 %v7104, 256
        %v7107 = vpop.permute.xlu0 %7106
        %s7109 = sor.u32 256, 8
        %7110 = vbcast.lane.b32.xlu0 %v7104, %s7109
        %v7111 = vpop.permute.xlu0 %7110
        %v7112 = vlaneseq
        %v7113 = vshrl.u32 %v7112, 7
        %v7114 = vsub.s32 0, %v7113
        %v7115 = vrot.slane %v5052, %v7114
        %7117 = vbcast.lane.b32.xlu0 %v7115, 256
        %v7118 = vpop.permute.xlu0 %7117
        %s7120 = sor.u32 256, 8
        %7121 = vbcast.lane.b32.xlu0 %v7115, %s7120
        %v7122 = vpop.permute.xlu0 %7121
        %v7123 = vlaneseq
        %v7124 = vshrl.u32 %v7123, 7
        %v7125 = vsub.s32 1, %v7124
        %v7126 = vrot.slane %v5052, %v7125
        %7128 = vbcast.lane.b32.xlu0 %v7126, 256
        %v7129 = vpop.permute.xlu0 %7128
        %s7131 = sor.u32 256, 8
        %7132 = vbcast.lane.b32.xlu0 %v7126, %s7131
        %v7133 = vpop.permute.xlu0 %7132
        %v7134 = vlaneseq
        %v7135 = vshrl.u32 %v7134, 7
        %v7136 = vsub.s32 2, %v7135
        %v7137 = vrot.slane %v5052, %v7136
        %7139 = vbcast.lane.b32.xlu0 %v7137, 256
        %v7140 = vpop.permute.xlu0 %7139
        %s7142 = sor.u32 256, 8
        %7143 = vbcast.lane.b32.xlu0 %v7137, %s7142
        %v7144 = vpop.permute.xlu0 %7143
        %v7145 = vlaneseq
        %v7146 = vshrl.u32 %v7145, 7
        %v7147 = vsub.s32 3, %v7146
        %v7148 = vrot.slane %v5052, %v7147
        %7150 = vbcast.lane.b32.xlu0 %v7148, 256
        %v7151 = vpop.permute.xlu0 %7150
        %s7153 = sor.u32 256, 8
        %7154 = vbcast.lane.b32.xlu0 %v7148, %s7153
        %v7155 = vpop.permute.xlu0 %7154
        %v7156 = vlaneseq
        %v7157 = vshrl.u32 %v7156, 7
        %v7158 = vsub.s32 4, %v7157
        %v7159 = vrot.slane %v5052, %v7158
        %7161 = vbcast.lane.b32.xlu0 %v7159, 256
        %v7162 = vpop.permute.xlu0 %7161
        %s7164 = sor.u32 256, 8
        %7165 = vbcast.lane.b32.xlu0 %v7159, %s7164
        %v7166 = vpop.permute.xlu0 %7165
        %v7167 = vlaneseq
        %v7168 = vshrl.u32 %v7167, 7
        %v7169 = vsub.s32 5, %v7168
        %v7170 = vrot.slane %v5052, %v7169
        %7172 = vbcast.lane.b32.xlu0 %v7170, 256
        %v7173 = vpop.permute.xlu0 %7172
        %s7175 = sor.u32 256, 8
        %7176 = vbcast.lane.b32.xlu0 %v7170, %s7175
        %v7177 = vpop.permute.xlu0 %7176
        %v7178 = vlaneseq
        %v7179 = vshrl.u32 %v7178, 7
        %v7180 = vsub.s32 6, %v7179
        %v7181 = vrot.slane %v5052, %v7180
        %7183 = vbcast.lane.b32.xlu0 %v7181, 256
        %v7184 = vpop.permute.xlu0 %7183
        %s7186 = sor.u32 256, 8
        %7187 = vbcast.lane.b32.xlu0 %v7181, %s7186
        %v7188 = vpop.permute.xlu0 %7187
        %v7189 = vlaneseq
        %v7190 = vshrl.u32 %v7189, 7
        %v7191 = vsub.s32 7, %v7190
        %v7192 = vrot.slane %v5052, %v7191
        %7194 = vbcast.lane.b32.xlu0 %v7192, 256
        %v7195 = vpop.permute.xlu0 %7194
        %s7197 = sor.u32 256, 8
        %7198 = vbcast.lane.b32.xlu0 %v7192, %s7197
        %v7199 = vpop.permute.xlu0 %7198
        %v7200 = vlaneseq
        %v7201 = vshrl.u32 %v7200, 7
        %v7202 = vsub.s32 0, %v7201
        %v7203 = vrot.slane %v5053, %v7202
        %7205 = vbcast.lane.b32.xlu0 %v7203, 256
        %v7206 = vpop.permute.xlu0 %7205
        %s7208 = sor.u32 256, 8
        %7209 = vbcast.lane.b32.xlu0 %v7203, %s7208
        %v7210 = vpop.permute.xlu0 %7209
        %v7211 = vlaneseq
        %v7212 = vshrl.u32 %v7211, 7
        %v7213 = vsub.s32 1, %v7212
        %v7214 = vrot.slane %v5053, %v7213
        %7216 = vbcast.lane.b32.xlu0 %v7214, 256
        %v7217 = vpop.permute.xlu0 %7216
        %s7219 = sor.u32 256, 8
        %7220 = vbcast.lane.b32.xlu0 %v7214, %s7219
        %v7221 = vpop.permute.xlu0 %7220
        %v7222 = vlaneseq
        %v7223 = vshrl.u32 %v7222, 7
        %v7224 = vsub.s32 2, %v7223
        %v7225 = vrot.slane %v5053, %v7224
        %7227 = vbcast.lane.b32.xlu0 %v7225, 256
        %v7228 = vpop.permute.xlu0 %7227
        %s7230 = sor.u32 256, 8
        %7231 = vbcast.lane.b32.xlu0 %v7225, %s7230
        %v7232 = vpop.permute.xlu0 %7231
        %v7233 = vlaneseq
        %v7234 = vshrl.u32 %v7233, 7
        %v7235 = vsub.s32 3, %v7234
        %v7236 = vrot.slane %v5053, %v7235
        %7238 = vbcast.lane.b32.xlu0 %v7236, 256
        %v7239 = vpop.permute.xlu0 %7238
        %s7241 = sor.u32 256, 8
        %7242 = vbcast.lane.b32.xlu0 %v7236, %s7241
        %v7243 = vpop.permute.xlu0 %7242
        %v7244 = vlaneseq
        %v7245 = vshrl.u32 %v7244, 7
        %v7246 = vsub.s32 4, %v7245
        %v7247 = vrot.slane %v5053, %v7246
        %7249 = vbcast.lane.b32.xlu0 %v7247, 256
        %v7250 = vpop.permute.xlu0 %7249
        %s7252 = sor.u32 256, 8
        %7253 = vbcast.lane.b32.xlu0 %v7247, %s7252
        %v7254 = vpop.permute.xlu0 %7253
        %v7255 = vlaneseq
        %v7256 = vshrl.u32 %v7255, 7
        %v7257 = vsub.s32 5, %v7256
        %v7258 = vrot.slane %v5053, %v7257
        %7260 = vbcast.lane.b32.xlu0 %v7258, 256
        %v7261 = vpop.permute.xlu0 %7260
        %s7263 = sor.u32 256, 8
        %7264 = vbcast.lane.b32.xlu0 %v7258, %s7263
        %v7265 = vpop.permute.xlu0 %7264
        %v7266 = vlaneseq
        %v7267 = vshrl.u32 %v7266, 7
        %v7268 = vsub.s32 6, %v7267
        %v7269 = vrot.slane %v5053, %v7268
        %7271 = vbcast.lane.b32.xlu0 %v7269, 256
        %v7272 = vpop.permute.xlu0 %7271
        %s7274 = sor.u32 256, 8
        %7275 = vbcast.lane.b32.xlu0 %v7269, %s7274
        %v7276 = vpop.permute.xlu0 %7275
        %v7277 = vlaneseq
        %v7278 = vshrl.u32 %v7277, 7
        %v7279 = vsub.s32 7, %v7278
        %v7280 = vrot.slane %v5053, %v7279
        %7282 = vbcast.lane.b32.xlu0 %v7280, 256
        %v7283 = vpop.permute.xlu0 %7282
        %s7285 = sor.u32 256, 8
        %7286 = vbcast.lane.b32.xlu0 %v7280, %s7285
        %v7287 = vpop.permute.xlu0 %7286
        %v7288 = vlaneseq
        %v7289 = vshrl.u32 %v7288, 7
        %v7290 = vsub.s32 0, %v7289
        %v7291 = vrot.slane %v5054, %v7290
        %7293 = vbcast.lane.b32.xlu0 %v7291, 256
        %v7294 = vpop.permute.xlu0 %7293
        %s7296 = sor.u32 256, 8
        %7297 = vbcast.lane.b32.xlu0 %v7291, %s7296
        %v7298 = vpop.permute.xlu0 %7297
        %v7299 = vlaneseq
        %v7300 = vshrl.u32 %v7299, 7
        %v7301 = vsub.s32 1, %v7300
        %v7302 = vrot.slane %v5054, %v7301
        %7304 = vbcast.lane.b32.xlu0 %v7302, 256
        %v7305 = vpop.permute.xlu0 %7304
        %s7307 = sor.u32 256, 8
        %7308 = vbcast.lane.b32.xlu0 %v7302, %s7307
        %v7309 = vpop.permute.xlu0 %7308
        %v7310 = vlaneseq
        %v7311 = vshrl.u32 %v7310, 7
        %v7312 = vsub.s32 2, %v7311
        %v7313 = vrot.slane %v5054, %v7312
        %7315 = vbcast.lane.b32.xlu0 %v7313, 256
        %v7316 = vpop.permute.xlu0 %7315
        %s7318 = sor.u32 256, 8
        %7319 = vbcast.lane.b32.xlu0 %v7313, %s7318
        %v7320 = vpop.permute.xlu0 %7319
        %v7321 = vlaneseq
        %v7322 = vshrl.u32 %v7321, 7
        %v7323 = vsub.s32 3, %v7322
        %v7324 = vrot.slane %v5054, %v7323
        %7326 = vbcast.lane.b32.xlu0 %v7324, 256
        %v7327 = vpop.permute.xlu0 %7326
        %s7329 = sor.u32 256, 8
        %7330 = vbcast.lane.b32.xlu0 %v7324, %s7329
        %v7331 = vpop.permute.xlu0 %7330
        %v7332 = vlaneseq
        %v7333 = vshrl.u32 %v7332, 7
        %v7334 = vsub.s32 4, %v7333
        %v7335 = vrot.slane %v5054, %v7334
        %7337 = vbcast.lane.b32.xlu0 %v7335, 256
        %v7338 = vpop.permute.xlu0 %7337
        %s7340 = sor.u32 256, 8
        %7341 = vbcast.lane.b32.xlu0 %v7335, %s7340
        %v7342 = vpop.permute.xlu0 %7341
        %v7343 = vlaneseq
        %v7344 = vshrl.u32 %v7343, 7
        %v7345 = vsub.s32 5, %v7344
        %v7346 = vrot.slane %v5054, %v7345
        %7348 = vbcast.lane.b32.xlu0 %v7346, 256
        %v7349 = vpop.permute.xlu0 %7348
        %s7351 = sor.u32 256, 8
        %7352 = vbcast.lane.b32.xlu0 %v7346, %s7351
        %v7353 = vpop.permute.xlu0 %7352
        %v7354 = vlaneseq
        %v7355 = vshrl.u32 %v7354, 7
        %v7356 = vsub.s32 6, %v7355
        %v7357 = vrot.slane %v5054, %v7356
        %7359 = vbcast.lane.b32.xlu0 %v7357, 256
        %v7360 = vpop.permute.xlu0 %7359
        %s7362 = sor.u32 256, 8
        %7363 = vbcast.lane.b32.xlu0 %v7357, %s7362
        %v7364 = vpop.permute.xlu0 %7363
        %v7365 = vlaneseq
        %v7366 = vshrl.u32 %v7365, 7
        %v7367 = vsub.s32 7, %v7366
        %v7368 = vrot.slane %v5054, %v7367
        %7370 = vbcast.lane.b32.xlu0 %v7368, 256
        %v7371 = vpop.permute.xlu0 %7370
        %s7373 = sor.u32 256, 8
        %7374 = vbcast.lane.b32.xlu0 %v7368, %s7373
        %v7375 = vpop.permute.xlu0 %7374
        %v7376 = vlaneseq
        %v7377 = vshrl.u32 %v7376, 7
        %v7378 = vsub.s32 0, %v7377
        %v7379 = vrot.slane %v5055, %v7378
        %7381 = vbcast.lane.b32.xlu0 %v7379, 256
        %v7382 = vpop.permute.xlu0 %7381
        %s7384 = sor.u32 256, 8
        %7385 = vbcast.lane.b32.xlu0 %v7379, %s7384
        %v7386 = vpop.permute.xlu0 %7385
        %v7387 = vlaneseq
        %v7388 = vshrl.u32 %v7387, 7
        %v7389 = vsub.s32 1, %v7388
        %v7390 = vrot.slane %v5055, %v7389
        %7392 = vbcast.lane.b32.xlu0 %v7390, 256
        %v7393 = vpop.permute.xlu0 %7392
        %s7395 = sor.u32 256, 8
        %7396 = vbcast.lane.b32.xlu0 %v7390, %s7395
        %v7397 = vpop.permute.xlu0 %7396
        %v7398 = vlaneseq
        %v7399 = vshrl.u32 %v7398, 7
        %v7400 = vsub.s32 2, %v7399
        %v7401 = vrot.slane %v5055, %v7400
        %7403 = vbcast.lane.b32.xlu0 %v7401, 256
        %v7404 = vpop.permute.xlu0 %7403
        %s7406 = sor.u32 256, 8
        %7407 = vbcast.lane.b32.xlu0 %v7401, %s7406
        %v7408 = vpop.permute.xlu0 %7407
        %v7409 = vlaneseq
        %v7410 = vshrl.u32 %v7409, 7
        %v7411 = vsub.s32 3, %v7410
        %v7412 = vrot.slane %v5055, %v7411
        %7414 = vbcast.lane.b32.xlu0 %v7412, 256
        %v7415 = vpop.permute.xlu0 %7414
        %s7417 = sor.u32 256, 8
        %7418 = vbcast.lane.b32.xlu0 %v7412, %s7417
        %v7419 = vpop.permute.xlu0 %7418
        %v7420 = vlaneseq
        %v7421 = vshrl.u32 %v7420, 7
        %v7422 = vsub.s32 4, %v7421
        %v7423 = vrot.slane %v5055, %v7422
        %7425 = vbcast.lane.b32.xlu0 %v7423, 256
        %v7426 = vpop.permute.xlu0 %7425
        %s7428 = sor.u32 256, 8
        %7429 = vbcast.lane.b32.xlu0 %v7423, %s7428
        %v7430 = vpop.permute.xlu0 %7429
        %v7431 = vlaneseq
        %v7432 = vshrl.u32 %v7431, 7
        %v7433 = vsub.s32 5, %v7432
        %v7434 = vrot.slane %v5055, %v7433
        %7436 = vbcast.lane.b32.xlu0 %v7434, 256
        %v7437 = vpop.permute.xlu0 %7436
        %s7439 = sor.u32 256, 8
        %7440 = vbcast.lane.b32.xlu0 %v7434, %s7439
        %v7441 = vpop.permute.xlu0 %7440
        %v7442 = vlaneseq
        %v7443 = vshrl.u32 %v7442, 7
        %v7444 = vsub.s32 6, %v7443
        %v7445 = vrot.slane %v5055, %v7444
        %7447 = vbcast.lane.b32.xlu0 %v7445, 256
        %v7448 = vpop.permute.xlu0 %7447
        %s7450 = sor.u32 256, 8
        %7451 = vbcast.lane.b32.xlu0 %v7445, %s7450
        %v7452 = vpop.permute.xlu0 %7451
        %v7453 = vlaneseq
        %v7454 = vshrl.u32 %v7453, 7
        %v7455 = vsub.s32 7, %v7454
        %v7456 = vrot.slane %v5055, %v7455
        %7458 = vbcast.lane.b32.xlu0 %v7456, 256
        %v7459 = vpop.permute.xlu0 %7458
        %s7461 = sor.u32 256, 8
        %7462 = vbcast.lane.b32.xlu0 %v7456, %s7461
        %v7463 = vpop.permute.xlu0 %7462
        %v7464 = vlaneseq
        %v7465 = vshrl.u32 %v7464, 7
        %v7466 = vsub.s32 0, %v7465
        %v7467 = vrot.slane %v5056, %v7466
        %7469 = vbcast.lane.b32.xlu0 %v7467, 256
        %v7470 = vpop.permute.xlu0 %7469
        %s7472 = sor.u32 256, 8
        %7473 = vbcast.lane.b32.xlu0 %v7467, %s7472
        %v7474 = vpop.permute.xlu0 %7473
        %v7475 = vlaneseq
        %v7476 = vshrl.u32 %v7475, 7
        %v7477 = vsub.s32 1, %v7476
        %v7478 = vrot.slane %v5056, %v7477
        %7480 = vbcast.lane.b32.xlu0 %v7478, 256
        %v7481 = vpop.permute.xlu0 %7480
        %s7483 = sor.u32 256, 8
        %7484 = vbcast.lane.b32.xlu0 %v7478, %s7483
        %v7485 = vpop.permute.xlu0 %7484
        %v7486 = vlaneseq
        %v7487 = vshrl.u32 %v7486, 7
        %v7488 = vsub.s32 2, %v7487
        %v7489 = vrot.slane %v5056, %v7488
        %7491 = vbcast.lane.b32.xlu0 %v7489, 256
        %v7492 = vpop.permute.xlu0 %7491
        %s7494 = sor.u32 256, 8
        %7495 = vbcast.lane.b32.xlu0 %v7489, %s7494
        %v7496 = vpop.permute.xlu0 %7495
        %v7497 = vlaneseq
        %v7498 = vshrl.u32 %v7497, 7
        %v7499 = vsub.s32 3, %v7498
        %v7500 = vrot.slane %v5056, %v7499
        %7502 = vbcast.lane.b32.xlu0 %v7500, 256
        %v7503 = vpop.permute.xlu0 %7502
        %s7505 = sor.u32 256, 8
        %7506 = vbcast.lane.b32.xlu0 %v7500, %s7505
        %v7507 = vpop.permute.xlu0 %7506
        %v7508 = vlaneseq
        %v7509 = vshrl.u32 %v7508, 7
        %v7510 = vsub.s32 4, %v7509
        %v7511 = vrot.slane %v5056, %v7510
        %7513 = vbcast.lane.b32.xlu0 %v7511, 256
        %v7514 = vpop.permute.xlu0 %7513
        %s7516 = sor.u32 256, 8
        %7517 = vbcast.lane.b32.xlu0 %v7511, %s7516
        %v7518 = vpop.permute.xlu0 %7517
        %v7519 = vlaneseq
        %v7520 = vshrl.u32 %v7519, 7
        %v7521 = vsub.s32 5, %v7520
        %v7522 = vrot.slane %v5056, %v7521
        %7524 = vbcast.lane.b32.xlu0 %v7522, 256
        %v7525 = vpop.permute.xlu0 %7524
        %s7527 = sor.u32 256, 8
        %7528 = vbcast.lane.b32.xlu0 %v7522, %s7527
        %v7529 = vpop.permute.xlu0 %7528
        %v7530 = vlaneseq
        %v7531 = vshrl.u32 %v7530, 7
        %v7532 = vsub.s32 6, %v7531
        %v7533 = vrot.slane %v5056, %v7532
        %7535 = vbcast.lane.b32.xlu0 %v7533, 256
        %v7536 = vpop.permute.xlu0 %7535
        %s7538 = sor.u32 256, 8
        %7539 = vbcast.lane.b32.xlu0 %v7533, %s7538
        %v7540 = vpop.permute.xlu0 %7539
        %v7541 = vlaneseq
        %v7542 = vshrl.u32 %v7541, 7
        %v7543 = vsub.s32 7, %v7542
        %v7544 = vrot.slane %v5056, %v7543
        %7546 = vbcast.lane.b32.xlu0 %v7544, 256
        %v7547 = vpop.permute.xlu0 %7546
        %s7549 = sor.u32 256, 8
        %7550 = vbcast.lane.b32.xlu0 %v7544, %s7549
        %v7551 = vpop.permute.xlu0 %7550
        %v7552 = vlaneseq
        %v7553 = vshrl.u32 %v7552, 7
        %v7554 = vsub.s32 0, %v7553
        %v7555 = vrot.slane %v5057, %v7554
        %7557 = vbcast.lane.b32.xlu0 %v7555, 256
        %v7558 = vpop.permute.xlu0 %7557
        %s7560 = sor.u32 256, 8
        %7561 = vbcast.lane.b32.xlu0 %v7555, %s7560
        %v7562 = vpop.permute.xlu0 %7561
        %v7563 = vlaneseq
        %v7564 = vshrl.u32 %v7563, 7
        %v7565 = vsub.s32 1, %v7564
        %v7566 = vrot.slane %v5057, %v7565
        %7568 = vbcast.lane.b32.xlu0 %v7566, 256
        %v7569 = vpop.permute.xlu0 %7568
        %s7571 = sor.u32 256, 8
        %7572 = vbcast.lane.b32.xlu0 %v7566, %s7571
        %v7573 = vpop.permute.xlu0 %7572
        %v7574 = vlaneseq
        %v7575 = vshrl.u32 %v7574, 7
        %v7576 = vsub.s32 2, %v7575
        %v7577 = vrot.slane %v5057, %v7576
        %7579 = vbcast.lane.b32.xlu0 %v7577, 256
        %v7580 = vpop.permute.xlu0 %7579
        %s7582 = sor.u32 256, 8
        %7583 = vbcast.lane.b32.xlu0 %v7577, %s7582
        %v7584 = vpop.permute.xlu0 %7583
        %v7585 = vlaneseq
        %v7586 = vshrl.u32 %v7585, 7
        %v7587 = vsub.s32 3, %v7586
        %v7588 = vrot.slane %v5057, %v7587
        %7590 = vbcast.lane.b32.xlu0 %v7588, 256
        %v7591 = vpop.permute.xlu0 %7590
        %s7593 = sor.u32 256, 8
        %7594 = vbcast.lane.b32.xlu0 %v7588, %s7593
        %v7595 = vpop.permute.xlu0 %7594
        %v7596 = vlaneseq
        %v7597 = vshrl.u32 %v7596, 7
        %v7598 = vsub.s32 4, %v7597
        %v7599 = vrot.slane %v5057, %v7598
        %7601 = vbcast.lane.b32.xlu0 %v7599, 256
        %v7602 = vpop.permute.xlu0 %7601
        %s7604 = sor.u32 256, 8
        %7605 = vbcast.lane.b32.xlu0 %v7599, %s7604
        %v7606 = vpop.permute.xlu0 %7605
        %v7607 = vlaneseq
        %v7608 = vshrl.u32 %v7607, 7
        %v7609 = vsub.s32 5, %v7608
        %v7610 = vrot.slane %v5057, %v7609
        %7612 = vbcast.lane.b32.xlu0 %v7610, 256
        %v7613 = vpop.permute.xlu0 %7612
        %s7615 = sor.u32 256, 8
        %7616 = vbcast.lane.b32.xlu0 %v7610, %s7615
        %v7617 = vpop.permute.xlu0 %7616
        %v7618 = vlaneseq
        %v7619 = vshrl.u32 %v7618, 7
        %v7620 = vsub.s32 6, %v7619
        %v7621 = vrot.slane %v5057, %v7620
        %7623 = vbcast.lane.b32.xlu0 %v7621, 256
        %v7624 = vpop.permute.xlu0 %7623
        %s7626 = sor.u32 256, 8
        %7627 = vbcast.lane.b32.xlu0 %v7621, %s7626
        %v7628 = vpop.permute.xlu0 %7627
        %v7629 = vlaneseq
        %v7630 = vshrl.u32 %v7629, 7
        %v7631 = vsub.s32 7, %v7630
        %v7632 = vrot.slane %v5057, %v7631
        %7634 = vbcast.lane.b32.xlu0 %v7632, 256
        %v7635 = vpop.permute.xlu0 %7634
        %s7637 = sor.u32 256, 8
        %7638 = vbcast.lane.b32.xlu0 %v7632, %s7637
        %v7639 = vpop.permute.xlu0 %7638
        %v7640 = vlaneseq
        %v7641 = vshrl.u32 %v7640, 7
        %v7642 = vsub.s32 0, %v7641
        %v7643 = vrot.slane %v5058, %v7642
        %7645 = vbcast.lane.b32.xlu0 %v7643, 256
        %v7646 = vpop.permute.xlu0 %7645
        %s7648 = sor.u32 256, 8
        %7649 = vbcast.lane.b32.xlu0 %v7643, %s7648
        %v7650 = vpop.permute.xlu0 %7649
        %v7651 = vlaneseq
        %v7652 = vshrl.u32 %v7651, 7
        %v7653 = vsub.s32 1, %v7652
        %v7654 = vrot.slane %v5058, %v7653
        %7656 = vbcast.lane.b32.xlu0 %v7654, 256
        %v7657 = vpop.permute.xlu0 %7656
        %s7659 = sor.u32 256, 8
        %7660 = vbcast.lane.b32.xlu0 %v7654, %s7659
        %v7661 = vpop.permute.xlu0 %7660
        %v7662 = vlaneseq
        %v7663 = vshrl.u32 %v7662, 7
        %v7664 = vsub.s32 2, %v7663
        %v7665 = vrot.slane %v5058, %v7664
        %7667 = vbcast.lane.b32.xlu0 %v7665, 256
        %v7668 = vpop.permute.xlu0 %7667
        %s7670 = sor.u32 256, 8
        %7671 = vbcast.lane.b32.xlu0 %v7665, %s7670
        %v7672 = vpop.permute.xlu0 %7671
        %v7673 = vlaneseq
        %v7674 = vshrl.u32 %v7673, 7
        %v7675 = vsub.s32 3, %v7674
        %v7676 = vrot.slane %v5058, %v7675
        %7678 = vbcast.lane.b32.xlu0 %v7676, 256
        %v7679 = vpop.permute.xlu0 %7678
        %s7681 = sor.u32 256, 8
        %7682 = vbcast.lane.b32.xlu0 %v7676, %s7681
        %v7683 = vpop.permute.xlu0 %7682
        %v7684 = vlaneseq
        %v7685 = vshrl.u32 %v7684, 7
        %v7686 = vsub.s32 4, %v7685
        %v7687 = vrot.slane %v5058, %v7686
        %7689 = vbcast.lane.b32.xlu0 %v7687, 256
        %v7690 = vpop.permute.xlu0 %7689
        %s7692 = sor.u32 256, 8
        %7693 = vbcast.lane.b32.xlu0 %v7687, %s7692
        %v7694 = vpop.permute.xlu0 %7693
        %v7695 = vlaneseq
        %v7696 = vshrl.u32 %v7695, 7
        %v7697 = vsub.s32 5, %v7696
        %v7698 = vrot.slane %v5058, %v7697
        %7700 = vbcast.lane.b32.xlu0 %v7698, 256
        %v7701 = vpop.permute.xlu0 %7700
        %s7703 = sor.u32 256, 8
        %7704 = vbcast.lane.b32.xlu0 %v7698, %s7703
        %v7705 = vpop.permute.xlu0 %7704
        %v7706 = vlaneseq
        %v7707 = vshrl.u32 %v7706, 7
        %v7708 = vsub.s32 6, %v7707
        %v7709 = vrot.slane %v5058, %v7708
        %7711 = vbcast.lane.b32.xlu0 %v7709, 256
        %v7712 = vpop.permute.xlu0 %7711
        %s7714 = sor.u32 256, 8
        %7715 = vbcast.lane.b32.xlu0 %v7709, %s7714
        %v7716 = vpop.permute.xlu0 %7715
        %v7717 = vlaneseq
        %v7718 = vshrl.u32 %v7717, 7
        %v7719 = vsub.s32 7, %v7718
        %v7720 = vrot.slane %v5058, %v7719
        %7722 = vbcast.lane.b32.xlu0 %v7720, 256
        %v7723 = vpop.permute.xlu0 %7722
        %s7725 = sor.u32 256, 8
        %7726 = vbcast.lane.b32.xlu0 %v7720, %s7725
        %v7727 = vpop.permute.xlu0 %7726
        %v7728 = vlaneseq
        %v7729 = vshrl.u32 %v7728, 7
        %v7730 = vsub.s32 0, %v7729
        %v7731 = vrot.slane %v5059, %v7730
        %7733 = vbcast.lane.b32.xlu0 %v7731, 256
        %v7734 = vpop.permute.xlu0 %7733
        %s7736 = sor.u32 256, 8
        %7737 = vbcast.lane.b32.xlu0 %v7731, %s7736
        %v7738 = vpop.permute.xlu0 %7737
        %v7739 = vlaneseq
        %v7740 = vshrl.u32 %v7739, 7
        %v7741 = vsub.s32 1, %v7740
        %v7742 = vrot.slane %v5059, %v7741
        %7744 = vbcast.lane.b32.xlu0 %v7742, 256
        %v7745 = vpop.permute.xlu0 %7744
        %s7747 = sor.u32 256, 8
        %7748 = vbcast.lane.b32.xlu0 %v7742, %s7747
        %v7749 = vpop.permute.xlu0 %7748
        %v7750 = vlaneseq
        %v7751 = vshrl.u32 %v7750, 7
        %v7752 = vsub.s32 2, %v7751
        %v7753 = vrot.slane %v5059, %v7752
        %7755 = vbcast.lane.b32.xlu0 %v7753, 256
        %v7756 = vpop.permute.xlu0 %7755
        %s7758 = sor.u32 256, 8
        %7759 = vbcast.lane.b32.xlu0 %v7753, %s7758
        %v7760 = vpop.permute.xlu0 %7759
        %v7761 = vlaneseq
        %v7762 = vshrl.u32 %v7761, 7
        %v7763 = vsub.s32 3, %v7762
        %v7764 = vrot.slane %v5059, %v7763
        %7766 = vbcast.lane.b32.xlu0 %v7764, 256
        %v7767 = vpop.permute.xlu0 %7766
        %s7769 = sor.u32 256, 8
        %7770 = vbcast.lane.b32.xlu0 %v7764, %s7769
        %v7771 = vpop.permute.xlu0 %7770
        %v7772 = vlaneseq
        %v7773 = vshrl.u32 %v7772, 7
        %v7774 = vsub.s32 4, %v7773
        %v7775 = vrot.slane %v5059, %v7774
        %7777 = vbcast.lane.b32.xlu0 %v7775, 256
        %v7778 = vpop.permute.xlu0 %7777
        %s7780 = sor.u32 256, 8
        %7781 = vbcast.lane.b32.xlu0 %v7775, %s7780
        %v7782 = vpop.permute.xlu0 %7781
        %v7783 = vlaneseq
        %v7784 = vshrl.u32 %v7783, 7
        %v7785 = vsub.s32 5, %v7784
        %v7786 = vrot.slane %v5059, %v7785
        %7788 = vbcast.lane.b32.xlu0 %v7786, 256
        %v7789 = vpop.permute.xlu0 %7788
        %s7791 = sor.u32 256, 8
        %7792 = vbcast.lane.b32.xlu0 %v7786, %s7791
        %v7793 = vpop.permute.xlu0 %7792
        %v7794 = vlaneseq
        %v7795 = vshrl.u32 %v7794, 7
        %v7796 = vsub.s32 6, %v7795
        %v7797 = vrot.slane %v5059, %v7796
        %7799 = vbcast.lane.b32.xlu0 %v7797, 256
        %v7800 = vpop.permute.xlu0 %7799
        %s7802 = sor.u32 256, 8
        %7803 = vbcast.lane.b32.xlu0 %v7797, %s7802
        %v7804 = vpop.permute.xlu0 %7803
        %v7805 = vlaneseq
        %v7806 = vshrl.u32 %v7805, 7
        %v7807 = vsub.s32 7, %v7806
        %v7808 = vrot.slane %v5059, %v7807
        %7810 = vbcast.lane.b32.xlu0 %v7808, 256
        %v7811 = vpop.permute.xlu0 %7810
        %s7813 = sor.u32 256, 8
        %7814 = vbcast.lane.b32.xlu0 %v7808, %s7813
        %v7815 = vpop.permute.xlu0 %7814
        %v7816 = vlaneseq
        %v7817 = vshrl.u32 %v7816, 7
        %v7818 = vsub.s32 0, %v7817
        %v7819 = vrot.slane %v5060, %v7818
        %7821 = vbcast.lane.b32.xlu0 %v7819, 256
        %v7822 = vpop.permute.xlu0 %7821
        %s7824 = sor.u32 256, 8
        %7825 = vbcast.lane.b32.xlu0 %v7819, %s7824
        %v7826 = vpop.permute.xlu0 %7825
        %v7827 = vlaneseq
        %v7828 = vshrl.u32 %v7827, 7
        %v7829 = vsub.s32 1, %v7828
        %v7830 = vrot.slane %v5060, %v7829
        %7832 = vbcast.lane.b32.xlu0 %v7830, 256
        %v7833 = vpop.permute.xlu0 %7832
        %s7835 = sor.u32 256, 8
        %7836 = vbcast.lane.b32.xlu0 %v7830, %s7835
        %v7837 = vpop.permute.xlu0 %7836
        %v7838 = vlaneseq
        %v7839 = vshrl.u32 %v7838, 7
        %v7840 = vsub.s32 2, %v7839
        %v7841 = vrot.slane %v5060, %v7840
        %7843 = vbcast.lane.b32.xlu0 %v7841, 256
        %v7844 = vpop.permute.xlu0 %7843
        %s7846 = sor.u32 256, 8
        %7847 = vbcast.lane.b32.xlu0 %v7841, %s7846
        %v7848 = vpop.permute.xlu0 %7847
        %v7849 = vlaneseq
        %v7850 = vshrl.u32 %v7849, 7
        %v7851 = vsub.s32 3, %v7850
        %v7852 = vrot.slane %v5060, %v7851
        %7854 = vbcast.lane.b32.xlu0 %v7852, 256
        %v7855 = vpop.permute.xlu0 %7854
        %s7857 = sor.u32 256, 8
        %7858 = vbcast.lane.b32.xlu0 %v7852, %s7857
        %v7859 = vpop.permute.xlu0 %7858
        %v7860 = vlaneseq
        %v7861 = vshrl.u32 %v7860, 7
        %v7862 = vsub.s32 4, %v7861
        %v7863 = vrot.slane %v5060, %v7862
        %7865 = vbcast.lane.b32.xlu0 %v7863, 256
        %v7866 = vpop.permute.xlu0 %7865
        %s7868 = sor.u32 256, 8
        %7869 = vbcast.lane.b32.xlu0 %v7863, %s7868
        %v7870 = vpop.permute.xlu0 %7869
        %v7871 = vlaneseq
        %v7872 = vshrl.u32 %v7871, 7
        %v7873 = vsub.s32 5, %v7872
        %v7874 = vrot.slane %v5060, %v7873
        %7876 = vbcast.lane.b32.xlu0 %v7874, 256
        %v7877 = vpop.permute.xlu0 %7876
        %s7879 = sor.u32 256, 8
        %7880 = vbcast.lane.b32.xlu0 %v7874, %s7879
        %v7881 = vpop.permute.xlu0 %7880
        %v7882 = vlaneseq
        %v7883 = vshrl.u32 %v7882, 7
        %v7884 = vsub.s32 6, %v7883
        %v7885 = vrot.slane %v5060, %v7884
        %7887 = vbcast.lane.b32.xlu0 %v7885, 256
        %v7888 = vpop.permute.xlu0 %7887
        %s7890 = sor.u32 256, 8
        %7891 = vbcast.lane.b32.xlu0 %v7885, %s7890
        %v7892 = vpop.permute.xlu0 %7891
        %v7893 = vlaneseq
        %v7894 = vshrl.u32 %v7893, 7
        %v7895 = vsub.s32 7, %v7894
        %v7896 = vrot.slane %v5060, %v7895
        %7898 = vbcast.lane.b32.xlu0 %v7896, 256
        %v7899 = vpop.permute.xlu0 %7898
        %s7901 = sor.u32 256, 8
        %7902 = vbcast.lane.b32.xlu0 %v7896, %s7901
        %v7903 = vpop.permute.xlu0 %7902
        %v7904 = vlaneseq
        %v7905 = vshrl.u32 %v7904, 7
        %v7906 = vsub.s32 0, %v7905
        %v7907 = vrot.slane %v5061, %v7906
        %7909 = vbcast.lane.b32.xlu0 %v7907, 256
        %v7910 = vpop.permute.xlu0 %7909
        %s7912 = sor.u32 256, 8
        %7913 = vbcast.lane.b32.xlu0 %v7907, %s7912
        %v7914 = vpop.permute.xlu0 %7913
        %v7915 = vlaneseq
        %v7916 = vshrl.u32 %v7915, 7
        %v7917 = vsub.s32 1, %v7916
        %v7918 = vrot.slane %v5061, %v7917
        %7920 = vbcast.lane.b32.xlu0 %v7918, 256
        %v7921 = vpop.permute.xlu0 %7920
        %s7923 = sor.u32 256, 8
        %7924 = vbcast.lane.b32.xlu0 %v7918, %s7923
        %v7925 = vpop.permute.xlu0 %7924
        %v7926 = vlaneseq
        %v7927 = vshrl.u32 %v7926, 7
        %v7928 = vsub.s32 2, %v7927
        %v7929 = vrot.slane %v5061, %v7928
        %7931 = vbcast.lane.b32.xlu0 %v7929, 256
        %v7932 = vpop.permute.xlu0 %7931
        %s7934 = sor.u32 256, 8
        %7935 = vbcast.lane.b32.xlu0 %v7929, %s7934
        %v7936 = vpop.permute.xlu0 %7935
        %v7937 = vlaneseq
        %v7938 = vshrl.u32 %v7937, 7
        %v7939 = vsub.s32 3, %v7938
        %v7940 = vrot.slane %v5061, %v7939
        %7942 = vbcast.lane.b32.xlu0 %v7940, 256
        %v7943 = vpop.permute.xlu0 %7942
        %s7945 = sor.u32 256, 8
        %7946 = vbcast.lane.b32.xlu0 %v7940, %s7945
        %v7947 = vpop.permute.xlu0 %7946
        %v7948 = vlaneseq
        %v7949 = vshrl.u32 %v7948, 7
        %v7950 = vsub.s32 4, %v7949
        %v7951 = vrot.slane %v5061, %v7950
        %7953 = vbcast.lane.b32.xlu0 %v7951, 256
        %v7954 = vpop.permute.xlu0 %7953
        %s7956 = sor.u32 256, 8
        %7957 = vbcast.lane.b32.xlu0 %v7951, %s7956
        %v7958 = vpop.permute.xlu0 %7957
        %v7959 = vlaneseq
        %v7960 = vshrl.u32 %v7959, 7
        %v7961 = vsub.s32 5, %v7960
        %v7962 = vrot.slane %v5061, %v7961
        %7964 = vbcast.lane.b32.xlu0 %v7962, 256
        %v7965 = vpop.permute.xlu0 %7964
        %s7967 = sor.u32 256, 8
        %7968 = vbcast.lane.b32.xlu0 %v7962, %s7967
        %v7969 = vpop.permute.xlu0 %7968
        %v7970 = vlaneseq
        %v7971 = vshrl.u32 %v7970, 7
        %v7972 = vsub.s32 6, %v7971
        %v7973 = vrot.slane %v5061, %v7972
        %7975 = vbcast.lane.b32.xlu0 %v7973, 256
        %v7976 = vpop.permute.xlu0 %7975
        %s7978 = sor.u32 256, 8
        %7979 = vbcast.lane.b32.xlu0 %v7973, %s7978
        %v7980 = vpop.permute.xlu0 %7979
        %v7981 = vlaneseq
        %v7982 = vshrl.u32 %v7981, 7
        %v7983 = vsub.s32 7, %v7982
        %v7984 = vrot.slane %v5061, %v7983
        %7986 = vbcast.lane.b32.xlu0 %v7984, 256
        %v7987 = vpop.permute.xlu0 %7986
        %s7989 = sor.u32 256, 8
        %7990 = vbcast.lane.b32.xlu0 %v7984, %s7989
        %v7991 = vpop.permute.xlu0 %7990
        %v7992 = vlaneseq
        %v7993 = vshrl.u32 %v7992, 7
        %v7994 = vsub.s32 0, %v7993
        %v7995 = vrot.slane %v5062, %v7994
        %7997 = vbcast.lane.b32.xlu0 %v7995, 256
        %v7998 = vpop.permute.xlu0 %7997
        %s8000 = sor.u32 256, 8
        %8001 = vbcast.lane.b32.xlu0 %v7995, %s8000
        %v8002 = vpop.permute.xlu0 %8001
        %v8003 = vlaneseq
        %v8004 = vshrl.u32 %v8003, 7
        %v8005 = vsub.s32 1, %v8004
        %v8006 = vrot.slane %v5062, %v8005
        %8008 = vbcast.lane.b32.xlu0 %v8006, 256
        %v8009 = vpop.permute.xlu0 %8008
        %s8011 = sor.u32 256, 8
        %8012 = vbcast.lane.b32.xlu0 %v8006, %s8011
        %v8013 = vpop.permute.xlu0 %8012
        %v8014 = vlaneseq
        %v8015 = vshrl.u32 %v8014, 7
        %v8016 = vsub.s32 2, %v8015
        %v8017 = vrot.slane %v5062, %v8016
        %8019 = vbcast.lane.b32.xlu0 %v8017, 256
        %v8020 = vpop.permute.xlu0 %8019
        %s8022 = sor.u32 256, 8
        %8023 = vbcast.lane.b32.xlu0 %v8017, %s8022
        %v8024 = vpop.permute.xlu0 %8023
        %v8025 = vlaneseq
        %v8026 = vshrl.u32 %v8025, 7
        %v8027 = vsub.s32 3, %v8026
        %v8028 = vrot.slane %v5062, %v8027
        %8030 = vbcast.lane.b32.xlu0 %v8028, 256
        %v8031 = vpop.permute.xlu0 %8030
        %s8033 = sor.u32 256, 8
        %8034 = vbcast.lane.b32.xlu0 %v8028, %s8033
        %v8035 = vpop.permute.xlu0 %8034
        %v8036 = vlaneseq
        %v8037 = vshrl.u32 %v8036, 7
        %v8038 = vsub.s32 4, %v8037
        %v8039 = vrot.slane %v5062, %v8038
        %8041 = vbcast.lane.b32.xlu0 %v8039, 256
        %v8042 = vpop.permute.xlu0 %8041
        %s8044 = sor.u32 256, 8
        %8045 = vbcast.lane.b32.xlu0 %v8039, %s8044
        %v8046 = vpop.permute.xlu0 %8045
        %v8047 = vlaneseq
        %v8048 = vshrl.u32 %v8047, 7
        %v8049 = vsub.s32 5, %v8048
        %v8050 = vrot.slane %v5062, %v8049
        %8052 = vbcast.lane.b32.xlu0 %v8050, 256
        %v8053 = vpop.permute.xlu0 %8052
        %s8055 = sor.u32 256, 8
        %8056 = vbcast.lane.b32.xlu0 %v8050, %s8055
        %v8057 = vpop.permute.xlu0 %8056
        %v8058 = vlaneseq
        %v8059 = vshrl.u32 %v8058, 7
        %v8060 = vsub.s32 6, %v8059
        %v8061 = vrot.slane %v5062, %v8060
        %8063 = vbcast.lane.b32.xlu0 %v8061, 256
        %v8064 = vpop.permute.xlu0 %8063
        %s8066 = sor.u32 256, 8
        %8067 = vbcast.lane.b32.xlu0 %v8061, %s8066
        %v8068 = vpop.permute.xlu0 %8067
        %v8069 = vlaneseq
        %v8070 = vshrl.u32 %v8069, 7
        %v8071 = vsub.s32 7, %v8070
        %v8072 = vrot.slane %v5062, %v8071
        %8074 = vbcast.lane.b32.xlu0 %v8072, 256
        %v8075 = vpop.permute.xlu0 %8074
        %s8077 = sor.u32 256, 8
        %8078 = vbcast.lane.b32.xlu0 %v8072, %s8077
        %v8079 = vpop.permute.xlu0 %8078
        %v8080 = vlaneseq
        %v8081 = vshrl.u32 %v8080, 7
        %v8082 = vsub.s32 0, %v8081
        %v8083 = vrot.slane %v5063, %v8082
        %8085 = vbcast.lane.b32.xlu0 %v8083, 256
        %v8086 = vpop.permute.xlu0 %8085
        %s8088 = sor.u32 256, 8
        %8089 = vbcast.lane.b32.xlu0 %v8083, %s8088
        %v8090 = vpop.permute.xlu0 %8089
        %v8091 = vlaneseq
        %v8092 = vshrl.u32 %v8091, 7
        %v8093 = vsub.s32 1, %v8092
        %v8094 = vrot.slane %v5063, %v8093
        %8096 = vbcast.lane.b32.xlu0 %v8094, 256
        %v8097 = vpop.permute.xlu0 %8096
        %s8099 = sor.u32 256, 8
        %8100 = vbcast.lane.b32.xlu0 %v8094, %s8099
        %v8101 = vpop.permute.xlu0 %8100
        %v8102 = vlaneseq
        %v8103 = vshrl.u32 %v8102, 7
        %v8104 = vsub.s32 2, %v8103
        %v8105 = vrot.slane %v5063, %v8104
        %8107 = vbcast.lane.b32.xlu0 %v8105, 256
        %v8108 = vpop.permute.xlu0 %8107
        %s8110 = sor.u32 256, 8
        %8111 = vbcast.lane.b32.xlu0 %v8105, %s8110
        %v8112 = vpop.permute.xlu0 %8111
        %v8113 = vlaneseq
        %v8114 = vshrl.u32 %v8113, 7
        %v8115 = vsub.s32 3, %v8114
        %v8116 = vrot.slane %v5063, %v8115
        %8118 = vbcast.lane.b32.xlu0 %v8116, 256
        %v8119 = vpop.permute.xlu0 %8118
        %s8121 = sor.u32 256, 8
        %8122 = vbcast.lane.b32.xlu0 %v8116, %s8121
        %v8123 = vpop.permute.xlu0 %8122
        %v8124 = vlaneseq
        %v8125 = vshrl.u32 %v8124, 7
        %v8126 = vsub.s32 4, %v8125
        %v8127 = vrot.slane %v5063, %v8126
        %8129 = vbcast.lane.b32.xlu0 %v8127, 256
        %v8130 = vpop.permute.xlu0 %8129
        %s8132 = sor.u32 256, 8
        %8133 = vbcast.lane.b32.xlu0 %v8127, %s8132
        %v8134 = vpop.permute.xlu0 %8133
        %v8135 = vlaneseq
        %v8136 = vshrl.u32 %v8135, 7
        %v8137 = vsub.s32 5, %v8136
        %v8138 = vrot.slane %v5063, %v8137
        %8140 = vbcast.lane.b32.xlu0 %v8138, 256
        %v8141 = vpop.permute.xlu0 %8140
        %s8143 = sor.u32 256, 8
        %8144 = vbcast.lane.b32.xlu0 %v8138, %s8143
        %v8145 = vpop.permute.xlu0 %8144
        %v8146 = vlaneseq
        %v8147 = vshrl.u32 %v8146, 7
        %v8148 = vsub.s32 6, %v8147
        %v8149 = vrot.slane %v5063, %v8148
        %8151 = vbcast.lane.b32.xlu0 %v8149, 256
        %v8152 = vpop.permute.xlu0 %8151
        %s8154 = sor.u32 256, 8
        %8155 = vbcast.lane.b32.xlu0 %v8149, %s8154
        %v8156 = vpop.permute.xlu0 %8155
        %v8157 = vlaneseq
        %v8158 = vshrl.u32 %v8157, 7
        %v8159 = vsub.s32 7, %v8158
        %v8160 = vrot.slane %v5063, %v8159
        %8162 = vbcast.lane.b32.xlu0 %v8160, 256
        %v8163 = vpop.permute.xlu0 %8162
        %s8165 = sor.u32 256, 8
        %8166 = vbcast.lane.b32.xlu0 %v8160, %s8165
        %v8167 = vpop.permute.xlu0 %8166
        %v8168 = vmul.f32 %v6504, %v6766
        %v8169 = vmul.f32 %v6505, %v6770
        %v8170 = vmul.f32 %v6506, %v6777
        %v8171 = vmul.f32 %v6507, %v6781
        %v8172 = vmul.f32 %v6508, %v6788
        %v8173 = vmul.f32 %v6509, %v6792
        %v8174 = vmul.f32 %v6510, %v6799
        %v8175 = vmul.f32 %v6511, %v6803
        %v8176 = vmul.f32 %v6512, %v6810
        %v8177 = vmul.f32 %v6513, %v6814
        %v8178 = vmul.f32 %v6514, %v6821
        %v8179 = vmul.f32 %v6515, %v6825
        %v8180 = vmul.f32 %v6516, %v6832
        %v8181 = vmul.f32 %v6517, %v6836
        %v8182 = vmul.f32 %v6518, %v6843
        %v8183 = vmul.f32 %v6519, %v6847
        %v8184 = vmul.f32 %v6520, %v6854
        %v8185 = vmul.f32 %v6521, %v6858
        %v8186 = vmul.f32 %v6522, %v6865
        %v8187 = vmul.f32 %v6523, %v6869
        %v8188 = vmul.f32 %v6524, %v6876
        %v8189 = vmul.f32 %v6525, %v6880
        %v8190 = vmul.f32 %v6526, %v6887
        %v8191 = vmul.f32 %v6527, %v6891
        %v8192 = vmul.f32 %v6528, %v6898
        %v8193 = vmul.f32 %v6529, %v6902
        %v8194 = vmul.f32 %v6530, %v6909
        %v8195 = vmul.f32 %v6531, %v6913
        %v8196 = vmul.f32 %v6532, %v6920
        %v8197 = vmul.f32 %v6533, %v6924
        %v8198 = vmul.f32 %v6534, %v6931
        %v8199 = vmul.f32 %v6535, %v6935
        %v8200 = vmul.f32 %v6536, %v6942
        %v8201 = vmul.f32 %v6537, %v6946
        %v8202 = vmul.f32 %v6538, %v6953
        %v8203 = vmul.f32 %v6539, %v6957
        %v8204 = vmul.f32 %v6540, %v6964
        %v8205 = vmul.f32 %v6541, %v6968
        %v8206 = vmul.f32 %v6542, %v6975
        %v8207 = vmul.f32 %v6543, %v6979
        %v8208 = vmul.f32 %v6544, %v6986
        %v8209 = vmul.f32 %v6545, %v6990
        %v8210 = vmul.f32 %v6546, %v6997
        %v8211 = vmul.f32 %v6547, %v7001
        %v8212 = vmul.f32 %v6548, %v7008
        %v8213 = vmul.f32 %v6549, %v7012
        %v8214 = vmul.f32 %v6550, %v7019
        %v8215 = vmul.f32 %v6551, %v7023
        %v8216 = vmul.f32 %v6552, %v7030
        %v8217 = vmul.f32 %v6553, %v7034
        %v8218 = vmul.f32 %v6554, %v7041
        %v8219 = vmul.f32 %v6555, %v7045
        %v8220 = vmul.f32 %v6556, %v7052
        %v8221 = vmul.f32 %v6557, %v7056
        %v8222 = vmul.f32 %v6558, %v7063
        %v8223 = vmul.f32 %v6559, %v7067
        %v8224 = vmul.f32 %v6560, %v7074
        %v8225 = vmul.f32 %v6561, %v7078
        %v8226 = vmul.f32 %v6562, %v7085
        %v8227 = vmul.f32 %v6563, %v7089
        %v8228 = vmul.f32 %v6564, %v7096
        %v8229 = vmul.f32 %v6565, %v7100
        %v8230 = vmul.f32 %v6566, %v7107
        %v8231 = vmul.f32 %v6567, %v7111
        %v8232 = vmul.f32 %v6568, %v7118
        %v8233 = vmul.f32 %v6569, %v7122
        %v8234 = vmul.f32 %v6570, %v7129
        %v8235 = vmul.f32 %v6571, %v7133
        %v8236 = vmul.f32 %v6572, %v7140
        %v8237 = vmul.f32 %v6573, %v7144
        %v8238 = vmul.f32 %v6574, %v7151
        %v8239 = vmul.f32 %v6575, %v7155
        %v8240 = vmul.f32 %v6576, %v7162
        %v8241 = vmul.f32 %v6577, %v7166
        %v8242 = vmul.f32 %v6578, %v7173
        %v8243 = vmul.f32 %v6579, %v7177
        %v8244 = vmul.f32 %v6580, %v7184
        %v8245 = vmul.f32 %v6581, %v7188
        %v8246 = vmul.f32 %v6582, %v7195
        %v8247 = vmul.f32 %v6583, %v7199
        %v8248 = vmul.f32 %v6584, %v7206
        %v8249 = vmul.f32 %v6585, %v7210
        %v8250 = vmul.f32 %v6586, %v7217
        %v8251 = vmul.f32 %v6587, %v7221
        %v8252 = vmul.f32 %v6588, %v7228
        %v8253 = vmul.f32 %v6589, %v7232
        %v8254 = vmul.f32 %v6590, %v7239
        %v8255 = vmul.f32 %v6591, %v7243
        %v8256 = vmul.f32 %v6592, %v7250
        %v8257 = vmul.f32 %v6593, %v7254
        %v8258 = vmul.f32 %v6594, %v7261
        %v8259 = vmul.f32 %v6595, %v7265
        %v8260 = vmul.f32 %v6596, %v7272
        %v8261 = vmul.f32 %v6597, %v7276
        %v8262 = vmul.f32 %v6598, %v7283
        %v8263 = vmul.f32 %v6599, %v7287
        %v8264 = vmul.f32 %v6600, %v7294
        %v8265 = vmul.f32 %v6601, %v7298
        %v8266 = vmul.f32 %v6602, %v7305
        %v8267 = vmul.f32 %v6603, %v7309
        %v8268 = vmul.f32 %v6604, %v7316
        %v8269 = vmul.f32 %v6605, %v7320
        %v8270 = vmul.f32 %v6606, %v7327
        %v8271 = vmul.f32 %v6607, %v7331
        %v8272 = vmul.f32 %v6608, %v7338
        %v8273 = vmul.f32 %v6609, %v7342
        %v8274 = vmul.f32 %v6610, %v7349
        %v8275 = vmul.f32 %v6611, %v7353
        %v8276 = vmul.f32 %v6612, %v7360
        %v8277 = vmul.f32 %v6613, %v7364
        %v8278 = vmul.f32 %v6614, %v7371
        %v8279 = vmul.f32 %v6615, %v7375
        %v8280 = vmul.f32 %v6616, %v7382
        %v8281 = vmul.f32 %v6617, %v7386
        %v8282 = vmul.f32 %v6618, %v7393
        %v8283 = vmul.f32 %v6619, %v7397
        %v8284 = vmul.f32 %v6620, %v7404
        %v8285 = vmul.f32 %v6621, %v7408
        %v8286 = vmul.f32 %v6622, %v7415
        %v8287 = vmul.f32 %v6623, %v7419
        %v8288 = vmul.f32 %v6624, %v7426
        %v8289 = vmul.f32 %v6625, %v7430
        %v8290 = vmul.f32 %v6626, %v7437
        %v8291 = vmul.f32 %v6627, %v7441
        %v8292 = vmul.f32 %v6628, %v7448
        %v8293 = vmul.f32 %v6629, %v7452
        %v8294 = vmul.f32 %v6630, %v7459
        %v8295 = vmul.f32 %v6631, %v7463
        %v8296 = vmul.f32 %v6632, %v7470
        %v8297 = vmul.f32 %v6633, %v7474
        %v8298 = vmul.f32 %v6634, %v7481
        %v8299 = vmul.f32 %v6635, %v7485
        %v8300 = vmul.f32 %v6636, %v7492
        %v8301 = vmul.f32 %v6637, %v7496
        %v8302 = vmul.f32 %v6638, %v7503
        %v8303 = vmul.f32 %v6639, %v7507
        %v8304 = vmul.f32 %v6640, %v7514
        %v8305 = vmul.f32 %v6641, %v7518
        %v8306 = vmul.f32 %v6642, %v7525
        %v8307 = vmul.f32 %v6643, %v7529
        %v8308 = vmul.f32 %v6644, %v7536
        %v8309 = vmul.f32 %v6645, %v7540
        %v8310 = vmul.f32 %v6646, %v7547
        %v8311 = vmul.f32 %v6647, %v7551
        %v8312 = vmul.f32 %v6648, %v7558
        %v8313 = vmul.f32 %v6649, %v7562
        %v8314 = vmul.f32 %v6650, %v7569
        %v8315 = vmul.f32 %v6651, %v7573
        %v8316 = vmul.f32 %v6652, %v7580
        %v8317 = vmul.f32 %v6653, %v7584
        %v8318 = vmul.f32 %v6654, %v7591
        %v8319 = vmul.f32 %v6655, %v7595
        %v8320 = vmul.f32 %v6656, %v7602
        %v8321 = vmul.f32 %v6657, %v7606
        %v8322 = vmul.f32 %v6658, %v7613
        %v8323 = vmul.f32 %v6659, %v7617
        %v8324 = vmul.f32 %v6660, %v7624
        %v8325 = vmul.f32 %v6661, %v7628
        %v8326 = vmul.f32 %v6662, %v7635
        %v8327 = vmul.f32 %v6663, %v7639
        %v8328 = vmul.f32 %v6664, %v7646
        %v8329 = vmul.f32 %v6665, %v7650
        %v8330 = vmul.f32 %v6666, %v7657
        %v8331 = vmul.f32 %v6667, %v7661
        %v8332 = vmul.f32 %v6668, %v7668
        %v8333 = vmul.f32 %v6669, %v7672
        %v8334 = vmul.f32 %v6670, %v7679
        %v8335 = vmul.f32 %v6671, %v7683
        %v8336 = vmul.f32 %v6672, %v7690
        %v8337 = vmul.f32 %v6673, %v7694
        %v8338 = vmul.f32 %v6674, %v7701
        %v8339 = vmul.f32 %v6675, %v7705
        %v8340 = vmul.f32 %v6676, %v7712
        %v8341 = vmul.f32 %v6677, %v7716
        %v8342 = vmul.f32 %v6678, %v7723
        %v8343 = vmul.f32 %v6679, %v7727
        %v8344 = vmul.f32 %v6680, %v7734
        %v8345 = vmul.f32 %v6681, %v7738
        %v8346 = vmul.f32 %v6682, %v7745
        %v8347 = vmul.f32 %v6683, %v7749
        %v8348 = vmul.f32 %v6684, %v7756
        %v8349 = vmul.f32 %v6685, %v7760
        %v8350 = vmul.f32 %v6686, %v7767
        %v8351 = vmul.f32 %v6687, %v7771
        %v8352 = vmul.f32 %v6688, %v7778
        %v8353 = vmul.f32 %v6689, %v7782
        %v8354 = vmul.f32 %v6690, %v7789
        %v8355 = vmul.f32 %v6691, %v7793
        %v8356 = vmul.f32 %v6692, %v7800
        %v8357 = vmul.f32 %v6693, %v7804
        %v8358 = vmul.f32 %v6694, %v7811
        %v8359 = vmul.f32 %v6695, %v7815
        %v8360 = vmul.f32 %v6696, %v7822
        %v8361 = vmul.f32 %v6697, %v7826
        %v8362 = vmul.f32 %v6698, %v7833
        %v8363 = vmul.f32 %v6699, %v7837
        %v8364 = vmul.f32 %v6700, %v7844
        %v8365 = vmul.f32 %v6701, %v7848
        %v8366 = vmul.f32 %v6702, %v7855
        %v8367 = vmul.f32 %v6703, %v7859
        %v8368 = vmul.f32 %v6704, %v7866
        %v8369 = vmul.f32 %v6705, %v7870
        %v8370 = vmul.f32 %v6706, %v7877
        %v8371 = vmul.f32 %v6707, %v7881
        %v8372 = vmul.f32 %v6708, %v7888
        %v8373 = vmul.f32 %v6709, %v7892
        %v8374 = vmul.f32 %v6710, %v7899
        %v8375 = vmul.f32 %v6711, %v7903
        %v8376 = vmul.f32 %v6712, %v7910
        %v8377 = vmul.f32 %v6713, %v7914
        %v8378 = vmul.f32 %v6714, %v7921
        %v8379 = vmul.f32 %v6715, %v7925
        %v8380 = vmul.f32 %v6716, %v7932
        %v8381 = vmul.f32 %v6717, %v7936
        %v8382 = vmul.f32 %v6718, %v7943
        %v8383 = vmul.f32 %v6719, %v7947
        %v8384 = vmul.f32 %v6720, %v7954
        %v8385 = vmul.f32 %v6721, %v7958
        %v8386 = vmul.f32 %v6722, %v7965
        %v8387 = vmul.f32 %v6723, %v7969
        %v8388 = vmul.f32 %v6724, %v7976
        %v8389 = vmul.f32 %v6725, %v7980
        %v8390 = vmul.f32 %v6726, %v7987
        %v8391 = vmul.f32 %v6727, %v7991
        %v8392 = vmul.f32 %v6728, %v7998
        %v8393 = vmul.f32 %v6729, %v8002
        %v8394 = vmul.f32 %v6730, %v8009
        %v8395 = vmul.f32 %v6731, %v8013
        %v8396 = vmul.f32 %v6732, %v8020
        %v8397 = vmul.f32 %v6733, %v8024
        %v8398 = vmul.f32 %v6734, %v8031
        %v8399 = vmul.f32 %v6735, %v8035
        %v8400 = vmul.f32 %v6736, %v8042
        %v8401 = vmul.f32 %v6737, %v8046
        %v8402 = vmul.f32 %v6738, %v8053
        %v8403 = vmul.f32 %v6739, %v8057
        %v8404 = vmul.f32 %v6740, %v8064
        %v8405 = vmul.f32 %v6741, %v8068
        %v8406 = vmul.f32 %v6742, %v8075
        %v8407 = vmul.f32 %v6743, %v8079
        %v8408 = vmul.f32 %v6744, %v8086
        %v8409 = vmul.f32 %v6745, %v8090
        %v8410 = vmul.f32 %v6746, %v8097
        %v8411 = vmul.f32 %v6747, %v8101
        %v8412 = vmul.f32 %v6748, %v8108
        %v8413 = vmul.f32 %v6749, %v8112
        %v8414 = vmul.f32 %v6750, %v8119
        %v8415 = vmul.f32 %v6751, %v8123
        %v8416 = vmul.f32 %v6752, %v8130
        %v8417 = vmul.f32 %v6753, %v8134
        %v8418 = vmul.f32 %v6754, %v8141
        %v8419 = vmul.f32 %v6755, %v8145
        %v8420 = vmul.f32 %v6756, %v8152
        %v8421 = vmul.f32 %v6757, %v8156
        %v8422 = vmul.f32 %v6758, %v8163
        %v8423 = vmul.f32 %v6759, %v8167
        %vm8424 = vcmask 261120
        %v8425 = vsel %vm8424, %v8168, 0.0
        %v8426 = vsel %vm8424, %v8169, 0.0
        %v8427 = vadd.f32 %v8425, %v8426
        %v8428 = vsel %vm8424, %v8170, 0.0
        %v8429 = vadd.f32 %v8427, %v8428
        %v8430 = vsel %vm8424, %v8171, 0.0
        %v8431 = vadd.f32 %v8429, %v8430
        %v8432 = vsel %vm8424, %v8172, 0.0
        %v8433 = vadd.f32 %v8431, %v8432
        %v8434 = vsel %vm8424, %v8173, 0.0
        %v8435 = vadd.f32 %v8433, %v8434
        %v8436 = vsel %vm8424, %v8174, 0.0
        %v8437 = vadd.f32 %v8435, %v8436
        %v8438 = vsel %vm8424, %v8175, 0.0
        %v8439 = vadd.f32 %v8437, %v8438
        %v8440 = vsel %vm8424, %v8176, 0.0
        %v8441 = vadd.f32 %v8439, %v8440
        %v8442 = vsel %vm8424, %v8177, 0.0
        %v8443 = vadd.f32 %v8441, %v8442
        %v8444 = vsel %vm8424, %v8178, 0.0
        %v8445 = vadd.f32 %v8443, %v8444
        %v8446 = vsel %vm8424, %v8179, 0.0
        %v8447 = vadd.f32 %v8445, %v8446
        %v8448 = vsel %vm8424, %v8180, 0.0
        %v8449 = vadd.f32 %v8447, %v8448
        %v8450 = vsel %vm8424, %v8181, 0.0
        %v8451 = vadd.f32 %v8449, %v8450
        %v8452 = vsel %vm8424, %v8182, 0.0
        %v8453 = vadd.f32 %v8451, %v8452
        %v8454 = vsel %vm8424, %v8183, 0.0
        %v8455 = vadd.f32 %v8453, %v8454
        %v8456 = vsel %vm8424, %v8184, 0.0
        %v8457 = vadd.f32 %v8455, %v8456
        %v8458 = vsel %vm8424, %v8185, 0.0
        %v8459 = vadd.f32 %v8457, %v8458
        %v8460 = vsel %vm8424, %v8186, 0.0
        %v8461 = vadd.f32 %v8459, %v8460
        %v8462 = vsel %vm8424, %v8187, 0.0
        %v8463 = vadd.f32 %v8461, %v8462
        %v8464 = vsel %vm8424, %v8188, 0.0
        %v8465 = vadd.f32 %v8463, %v8464
        %v8466 = vsel %vm8424, %v8189, 0.0
        %v8467 = vadd.f32 %v8465, %v8466
        %v8468 = vsel %vm8424, %v8190, 0.0
        %v8469 = vadd.f32 %v8467, %v8468
        %v8470 = vsel %vm8424, %v8191, 0.0
        %v8471 = vadd.f32 %v8469, %v8470
        %v8472 = vsel %vm8424, %v8192, 0.0
        %v8473 = vadd.f32 %v8471, %v8472
        %v8474 = vsel %vm8424, %v8193, 0.0
        %v8475 = vadd.f32 %v8473, %v8474
        %v8476 = vsel %vm8424, %v8194, 0.0
        %v8477 = vadd.f32 %v8475, %v8476
        %v8478 = vsel %vm8424, %v8195, 0.0
        %v8479 = vadd.f32 %v8477, %v8478
        %v8480 = vsel %vm8424, %v8196, 0.0
        %v8481 = vadd.f32 %v8479, %v8480
        %v8482 = vsel %vm8424, %v8197, 0.0
        %v8483 = vadd.f32 %v8481, %v8482
        %v8484 = vsel %vm8424, %v8198, 0.0
        %v8485 = vadd.f32 %v8483, %v8484
        %v8486 = vsel %vm8424, %v8199, 0.0
        %v8487 = vadd.f32 %v8485, %v8486
        %v8488 = vsel %vm8424, %v8200, 0.0
        %v8489 = vadd.f32 %v8487, %v8488
        %v8490 = vsel %vm8424, %v8201, 0.0
        %v8491 = vadd.f32 %v8489, %v8490
        %v8492 = vsel %vm8424, %v8202, 0.0
        %v8493 = vadd.f32 %v8491, %v8492
        %v8494 = vsel %vm8424, %v8203, 0.0
        %v8495 = vadd.f32 %v8493, %v8494
        %v8496 = vsel %vm8424, %v8204, 0.0
        %v8497 = vadd.f32 %v8495, %v8496
        %v8498 = vsel %vm8424, %v8205, 0.0
        %v8499 = vadd.f32 %v8497, %v8498
        %v8500 = vsel %vm8424, %v8206, 0.0
        %v8501 = vadd.f32 %v8499, %v8500
        %v8502 = vsel %vm8424, %v8207, 0.0
        %v8503 = vadd.f32 %v8501, %v8502
        %v8504 = vsel %vm8424, %v8208, 0.0
        %v8505 = vadd.f32 %v8503, %v8504
        %v8506 = vsel %vm8424, %v8209, 0.0
        %v8507 = vadd.f32 %v8505, %v8506
        %v8508 = vsel %vm8424, %v8210, 0.0
        %v8509 = vadd.f32 %v8507, %v8508
        %v8510 = vsel %vm8424, %v8211, 0.0
        %v8511 = vadd.f32 %v8509, %v8510
        %v8512 = vsel %vm8424, %v8212, 0.0
        %v8513 = vadd.f32 %v8511, %v8512
        %v8514 = vsel %vm8424, %v8213, 0.0
        %v8515 = vadd.f32 %v8513, %v8514
        %v8516 = vsel %vm8424, %v8214, 0.0
        %v8517 = vadd.f32 %v8515, %v8516
        %v8518 = vsel %vm8424, %v8215, 0.0
        %v8519 = vadd.f32 %v8517, %v8518
        %v8520 = vsel %vm8424, %v8216, 0.0
        %v8521 = vadd.f32 %v8519, %v8520
        %v8522 = vsel %vm8424, %v8217, 0.0
        %v8523 = vadd.f32 %v8521, %v8522
        %v8524 = vsel %vm8424, %v8218, 0.0
        %v8525 = vadd.f32 %v8523, %v8524
        %v8526 = vsel %vm8424, %v8219, 0.0
        %v8527 = vadd.f32 %v8525, %v8526
        %v8528 = vsel %vm8424, %v8220, 0.0
        %v8529 = vadd.f32 %v8527, %v8528
        %v8530 = vsel %vm8424, %v8221, 0.0
        %v8531 = vadd.f32 %v8529, %v8530
        %v8532 = vsel %vm8424, %v8222, 0.0
        %v8533 = vadd.f32 %v8531, %v8532
        %v8534 = vsel %vm8424, %v8223, 0.0
        %v8535 = vadd.f32 %v8533, %v8534
        %v8536 = vsel %vm8424, %v8224, 0.0
        %v8537 = vadd.f32 %v8535, %v8536
        %v8538 = vsel %vm8424, %v8225, 0.0
        %v8539 = vadd.f32 %v8537, %v8538
        %v8540 = vsel %vm8424, %v8226, 0.0
        %v8541 = vadd.f32 %v8539, %v8540
        %v8542 = vsel %vm8424, %v8227, 0.0
        %v8543 = vadd.f32 %v8541, %v8542
        %v8544 = vsel %vm8424, %v8228, 0.0
        %v8545 = vadd.f32 %v8543, %v8544
        %v8546 = vsel %vm8424, %v8229, 0.0
        %v8547 = vadd.f32 %v8545, %v8546
        %v8548 = vsel %vm8424, %v8230, 0.0
        %v8549 = vadd.f32 %v8547, %v8548
        %v8550 = vsel %vm8424, %v8231, 0.0
        %v8551 = vadd.f32 %v8549, %v8550
        %v8552 = vsel %vm8424, %v8232, 0.0
        %v8553 = vadd.f32 %v8551, %v8552
        %v8554 = vsel %vm8424, %v8233, 0.0
        %v8555 = vadd.f32 %v8553, %v8554
        %v8556 = vsel %vm8424, %v8234, 0.0
        %v8557 = vadd.f32 %v8555, %v8556
        %v8558 = vsel %vm8424, %v8235, 0.0
        %v8559 = vadd.f32 %v8557, %v8558
        %v8560 = vsel %vm8424, %v8236, 0.0
        %v8561 = vadd.f32 %v8559, %v8560
        %v8562 = vsel %vm8424, %v8237, 0.0
        %v8563 = vadd.f32 %v8561, %v8562
        %v8564 = vsel %vm8424, %v8238, 0.0
        %v8565 = vadd.f32 %v8563, %v8564
        %v8566 = vsel %vm8424, %v8239, 0.0
        %v8567 = vadd.f32 %v8565, %v8566
        %v8568 = vsel %vm8424, %v8240, 0.0
        %v8569 = vadd.f32 %v8567, %v8568
        %v8570 = vsel %vm8424, %v8241, 0.0
        %v8571 = vadd.f32 %v8569, %v8570
        %v8572 = vsel %vm8424, %v8242, 0.0
        %v8573 = vadd.f32 %v8571, %v8572
        %v8574 = vsel %vm8424, %v8243, 0.0
        %v8575 = vadd.f32 %v8573, %v8574
        %v8576 = vsel %vm8424, %v8244, 0.0
        %v8577 = vadd.f32 %v8575, %v8576
        %v8578 = vsel %vm8424, %v8245, 0.0
        %v8579 = vadd.f32 %v8577, %v8578
        %v8580 = vsel %vm8424, %v8246, 0.0
        %v8581 = vadd.f32 %v8579, %v8580
        %v8582 = vsel %vm8424, %v8247, 0.0
        %v8583 = vadd.f32 %v8581, %v8582
        %v8584 = vsel %vm8424, %v8248, 0.0
        %v8585 = vadd.f32 %v8583, %v8584
        %v8586 = vsel %vm8424, %v8249, 0.0
        %v8587 = vadd.f32 %v8585, %v8586
        %v8588 = vsel %vm8424, %v8250, 0.0
        %v8589 = vadd.f32 %v8587, %v8588
        %v8590 = vsel %vm8424, %v8251, 0.0
        %v8591 = vadd.f32 %v8589, %v8590
        %v8592 = vsel %vm8424, %v8252, 0.0
        %v8593 = vadd.f32 %v8591, %v8592
        %v8594 = vsel %vm8424, %v8253, 0.0
        %v8595 = vadd.f32 %v8593, %v8594
        %v8596 = vsel %vm8424, %v8254, 0.0
        %v8597 = vadd.f32 %v8595, %v8596
        %v8598 = vsel %vm8424, %v8255, 0.0
        %v8599 = vadd.f32 %v8597, %v8598
        %v8600 = vsel %vm8424, %v8256, 0.0
        %v8601 = vadd.f32 %v8599, %v8600
        %v8602 = vsel %vm8424, %v8257, 0.0
        %v8603 = vadd.f32 %v8601, %v8602
        %v8604 = vsel %vm8424, %v8258, 0.0
        %v8605 = vadd.f32 %v8603, %v8604
        %v8606 = vsel %vm8424, %v8259, 0.0
        %v8607 = vadd.f32 %v8605, %v8606
        %v8608 = vsel %vm8424, %v8260, 0.0
        %v8609 = vadd.f32 %v8607, %v8608
        %v8610 = vsel %vm8424, %v8261, 0.0
        %v8611 = vadd.f32 %v8609, %v8610
        %v8612 = vsel %vm8424, %v8262, 0.0
        %v8613 = vadd.f32 %v8611, %v8612
        %v8614 = vsel %vm8424, %v8263, 0.0
        %v8615 = vadd.f32 %v8613, %v8614
        %v8616 = vsel %vm8424, %v8264, 0.0
        %v8617 = vadd.f32 %v8615, %v8616
        %v8618 = vsel %vm8424, %v8265, 0.0
        %v8619 = vadd.f32 %v8617, %v8618
        %v8620 = vsel %vm8424, %v8266, 0.0
        %v8621 = vadd.f32 %v8619, %v8620
        %v8622 = vsel %vm8424, %v8267, 0.0
        %v8623 = vadd.f32 %v8621, %v8622
        %v8624 = vsel %vm8424, %v8268, 0.0
        %v8625 = vadd.f32 %v8623, %v8624
        %v8626 = vsel %vm8424, %v8269, 0.0
        %v8627 = vadd.f32 %v8625, %v8626
        %v8628 = vsel %vm8424, %v8270, 0.0
        %v8629 = vadd.f32 %v8627, %v8628
        %v8630 = vsel %vm8424, %v8271, 0.0
        %v8631 = vadd.f32 %v8629, %v8630
        %v8632 = vsel %vm8424, %v8272, 0.0
        %v8633 = vadd.f32 %v8631, %v8632
        %v8634 = vsel %vm8424, %v8273, 0.0
        %v8635 = vadd.f32 %v8633, %v8634
        %v8636 = vsel %vm8424, %v8274, 0.0
        %v8637 = vadd.f32 %v8635, %v8636
        %v8638 = vsel %vm8424, %v8275, 0.0
        %v8639 = vadd.f32 %v8637, %v8638
        %v8640 = vsel %vm8424, %v8276, 0.0
        %v8641 = vadd.f32 %v8639, %v8640
        %v8642 = vsel %vm8424, %v8277, 0.0
        %v8643 = vadd.f32 %v8641, %v8642
        %v8644 = vsel %vm8424, %v8278, 0.0
        %v8645 = vadd.f32 %v8643, %v8644
        %v8646 = vsel %vm8424, %v8279, 0.0
        %v8647 = vadd.f32 %v8645, %v8646
        %v8648 = vsel %vm8424, %v8280, 0.0
        %v8649 = vadd.f32 %v8647, %v8648
        %v8650 = vsel %vm8424, %v8281, 0.0
        %v8651 = vadd.f32 %v8649, %v8650
        %v8652 = vsel %vm8424, %v8282, 0.0
        %v8653 = vadd.f32 %v8651, %v8652
        %v8654 = vsel %vm8424, %v8283, 0.0
        %v8655 = vadd.f32 %v8653, %v8654
        %v8656 = vsel %vm8424, %v8284, 0.0
        %v8657 = vadd.f32 %v8655, %v8656
        %v8658 = vsel %vm8424, %v8285, 0.0
        %v8659 = vadd.f32 %v8657, %v8658
        %v8660 = vsel %vm8424, %v8286, 0.0
        %v8661 = vadd.f32 %v8659, %v8660
        %v8662 = vsel %vm8424, %v8287, 0.0
        %v8663 = vadd.f32 %v8661, %v8662
        %v8664 = vsel %vm8424, %v8288, 0.0
        %v8665 = vadd.f32 %v8663, %v8664
        %v8666 = vsel %vm8424, %v8289, 0.0
        %v8667 = vadd.f32 %v8665, %v8666
        %v8668 = vsel %vm8424, %v8290, 0.0
        %v8669 = vadd.f32 %v8667, %v8668
        %v8670 = vsel %vm8424, %v8291, 0.0
        %v8671 = vadd.f32 %v8669, %v8670
        %v8672 = vsel %vm8424, %v8292, 0.0
        %v8673 = vadd.f32 %v8671, %v8672
        %v8674 = vsel %vm8424, %v8293, 0.0
        %v8675 = vadd.f32 %v8673, %v8674
        %v8676 = vsel %vm8424, %v8294, 0.0
        %v8677 = vadd.f32 %v8675, %v8676
        %v8678 = vsel %vm8424, %v8295, 0.0
        %v8679 = vadd.f32 %v8677, %v8678
        %v8680 = vsel %vm8424, %v8296, 0.0
        %v8681 = vadd.f32 %v8679, %v8680
        %v8682 = vsel %vm8424, %v8297, 0.0
        %v8683 = vadd.f32 %v8681, %v8682
        %v8684 = vsel %vm8424, %v8298, 0.0
        %v8685 = vadd.f32 %v8683, %v8684
        %v8686 = vsel %vm8424, %v8299, 0.0
        %v8687 = vadd.f32 %v8685, %v8686
        %v8688 = vsel %vm8424, %v8300, 0.0
        %v8689 = vadd.f32 %v8687, %v8688
        %v8690 = vsel %vm8424, %v8301, 0.0
        %v8691 = vadd.f32 %v8689, %v8690
        %v8692 = vsel %vm8424, %v8302, 0.0
        %v8693 = vadd.f32 %v8691, %v8692
        %v8694 = vsel %vm8424, %v8303, 0.0
        %v8695 = vadd.f32 %v8693, %v8694
        %v8696 = vsel %vm8424, %v8304, 0.0
        %v8697 = vadd.f32 %v8695, %v8696
        %v8698 = vsel %vm8424, %v8305, 0.0
        %v8699 = vadd.f32 %v8697, %v8698
        %v8700 = vsel %vm8424, %v8306, 0.0
        %v8701 = vadd.f32 %v8699, %v8700
        %v8702 = vsel %vm8424, %v8307, 0.0
        %v8703 = vadd.f32 %v8701, %v8702
        %v8704 = vsel %vm8424, %v8308, 0.0
        %v8705 = vadd.f32 %v8703, %v8704
        %v8706 = vsel %vm8424, %v8309, 0.0
        %v8707 = vadd.f32 %v8705, %v8706
        %v8708 = vsel %vm8424, %v8310, 0.0
        %v8709 = vadd.f32 %v8707, %v8708
        %v8710 = vsel %vm8424, %v8311, 0.0
        %v8711 = vadd.f32 %v8709, %v8710
        %v8712 = vsel %vm8424, %v8312, 0.0
        %v8713 = vadd.f32 %v8711, %v8712
        %v8714 = vsel %vm8424, %v8313, 0.0
        %v8715 = vadd.f32 %v8713, %v8714
        %v8716 = vsel %vm8424, %v8314, 0.0
        %v8717 = vadd.f32 %v8715, %v8716
        %v8718 = vsel %vm8424, %v8315, 0.0
        %v8719 = vadd.f32 %v8717, %v8718
        %v8720 = vsel %vm8424, %v8316, 0.0
        %v8721 = vadd.f32 %v8719, %v8720
        %v8722 = vsel %vm8424, %v8317, 0.0
        %v8723 = vadd.f32 %v8721, %v8722
        %v8724 = vsel %vm8424, %v8318, 0.0
        %v8725 = vadd.f32 %v8723, %v8724
        %v8726 = vsel %vm8424, %v8319, 0.0
        %v8727 = vadd.f32 %v8725, %v8726
        %v8728 = vsel %vm8424, %v8320, 0.0
        %v8729 = vadd.f32 %v8727, %v8728
        %v8730 = vsel %vm8424, %v8321, 0.0
        %v8731 = vadd.f32 %v8729, %v8730
        %v8732 = vsel %vm8424, %v8322, 0.0
        %v8733 = vadd.f32 %v8731, %v8732
        %v8734 = vsel %vm8424, %v8323, 0.0
        %v8735 = vadd.f32 %v8733, %v8734
        %v8736 = vsel %vm8424, %v8324, 0.0
        %v8737 = vadd.f32 %v8735, %v8736
        %v8738 = vsel %vm8424, %v8325, 0.0
        %v8739 = vadd.f32 %v8737, %v8738
        %v8740 = vsel %vm8424, %v8326, 0.0
        %v8741 = vadd.f32 %v8739, %v8740
        %v8742 = vsel %vm8424, %v8327, 0.0
        %v8743 = vadd.f32 %v8741, %v8742
        %v8744 = vsel %vm8424, %v8328, 0.0
        %v8745 = vadd.f32 %v8743, %v8744
        %v8746 = vsel %vm8424, %v8329, 0.0
        %v8747 = vadd.f32 %v8745, %v8746
        %v8748 = vsel %vm8424, %v8330, 0.0
        %v8749 = vadd.f32 %v8747, %v8748
        %v8750 = vsel %vm8424, %v8331, 0.0
        %v8751 = vadd.f32 %v8749, %v8750
        %v8752 = vsel %vm8424, %v8332, 0.0
        %v8753 = vadd.f32 %v8751, %v8752
        %v8754 = vsel %vm8424, %v8333, 0.0
        %v8755 = vadd.f32 %v8753, %v8754
        %v8756 = vsel %vm8424, %v8334, 0.0
        %v8757 = vadd.f32 %v8755, %v8756
        %v8758 = vsel %vm8424, %v8335, 0.0
        %v8759 = vadd.f32 %v8757, %v8758
        %v8760 = vsel %vm8424, %v8336, 0.0
        %v8761 = vadd.f32 %v8759, %v8760
        %v8762 = vsel %vm8424, %v8337, 0.0
        %v8763 = vadd.f32 %v8761, %v8762
        %v8764 = vsel %vm8424, %v8338, 0.0
        %v8765 = vadd.f32 %v8763, %v8764
        %v8766 = vsel %vm8424, %v8339, 0.0
        %v8767 = vadd.f32 %v8765, %v8766
        %v8768 = vsel %vm8424, %v8340, 0.0
        %v8769 = vadd.f32 %v8767, %v8768
        %v8770 = vsel %vm8424, %v8341, 0.0
        %v8771 = vadd.f32 %v8769, %v8770
        %v8772 = vsel %vm8424, %v8342, 0.0
        %v8773 = vadd.f32 %v8771, %v8772
        %v8774 = vsel %vm8424, %v8343, 0.0
        %v8775 = vadd.f32 %v8773, %v8774
        %v8776 = vsel %vm8424, %v8344, 0.0
        %v8777 = vadd.f32 %v8775, %v8776
        %v8778 = vsel %vm8424, %v8345, 0.0
        %v8779 = vadd.f32 %v8777, %v8778
        %v8780 = vsel %vm8424, %v8346, 0.0
        %v8781 = vadd.f32 %v8779, %v8780
        %v8782 = vsel %vm8424, %v8347, 0.0
        %v8783 = vadd.f32 %v8781, %v8782
        %v8784 = vsel %vm8424, %v8348, 0.0
        %v8785 = vadd.f32 %v8783, %v8784
        %v8786 = vsel %vm8424, %v8349, 0.0
        %v8787 = vadd.f32 %v8785, %v8786
        %v8788 = vsel %vm8424, %v8350, 0.0
        %v8789 = vadd.f32 %v8787, %v8788
        %v8790 = vsel %vm8424, %v8351, 0.0
        %v8791 = vadd.f32 %v8789, %v8790
        %v8792 = vsel %vm8424, %v8352, 0.0
        %v8793 = vadd.f32 %v8791, %v8792
        %v8794 = vsel %vm8424, %v8353, 0.0
        %v8795 = vadd.f32 %v8793, %v8794
        %v8796 = vsel %vm8424, %v8354, 0.0
        %v8797 = vadd.f32 %v8795, %v8796
        %v8798 = vsel %vm8424, %v8355, 0.0
        %v8799 = vadd.f32 %v8797, %v8798
        %v8800 = vsel %vm8424, %v8356, 0.0
        %v8801 = vadd.f32 %v8799, %v8800
        %v8802 = vsel %vm8424, %v8357, 0.0
        %v8803 = vadd.f32 %v8801, %v8802
        %v8804 = vsel %vm8424, %v8358, 0.0
        %v8805 = vadd.f32 %v8803, %v8804
        %v8806 = vsel %vm8424, %v8359, 0.0
        %v8807 = vadd.f32 %v8805, %v8806
        %v8808 = vsel %vm8424, %v8360, 0.0
        %v8809 = vadd.f32 %v8807, %v8808
        %v8810 = vsel %vm8424, %v8361, 0.0
        %v8811 = vadd.f32 %v8809, %v8810
        %v8812 = vsel %vm8424, %v8362, 0.0
        %v8813 = vadd.f32 %v8811, %v8812
        %v8814 = vsel %vm8424, %v8363, 0.0
        %v8815 = vadd.f32 %v8813, %v8814
        %v8816 = vsel %vm8424, %v8364, 0.0
        %v8817 = vadd.f32 %v8815, %v8816
        %v8818 = vsel %vm8424, %v8365, 0.0
        %v8819 = vadd.f32 %v8817, %v8818
        %v8820 = vsel %vm8424, %v8366, 0.0
        %v8821 = vadd.f32 %v8819, %v8820
        %v8822 = vsel %vm8424, %v8367, 0.0
        %v8823 = vadd.f32 %v8821, %v8822
        %v8824 = vsel %vm8424, %v8368, 0.0
        %v8825 = vadd.f32 %v8823, %v8824
        %v8826 = vsel %vm8424, %v8369, 0.0
        %v8827 = vadd.f32 %v8825, %v8826
        %v8828 = vsel %vm8424, %v8370, 0.0
        %v8829 = vadd.f32 %v8827, %v8828
        %v8830 = vsel %vm8424, %v8371, 0.0
        %v8831 = vadd.f32 %v8829, %v8830
        %v8832 = vsel %vm8424, %v8372, 0.0
        %v8833 = vadd.f32 %v8831, %v8832
        %v8834 = vsel %vm8424, %v8373, 0.0
        %v8835 = vadd.f32 %v8833, %v8834
        %v8836 = vsel %vm8424, %v8374, 0.0
        %v8837 = vadd.f32 %v8835, %v8836
        %v8838 = vsel %vm8424, %v8375, 0.0
        %v8839 = vadd.f32 %v8837, %v8838
        %v8840 = vsel %vm8424, %v8376, 0.0
        %v8841 = vadd.f32 %v8839, %v8840
        %v8842 = vsel %vm8424, %v8377, 0.0
        %v8843 = vadd.f32 %v8841, %v8842
        %v8844 = vsel %vm8424, %v8378, 0.0
        %v8845 = vadd.f32 %v8843, %v8844
        %v8846 = vsel %vm8424, %v8379, 0.0
        %v8847 = vadd.f32 %v8845, %v8846
        %v8848 = vsel %vm8424, %v8380, 0.0
        %v8849 = vadd.f32 %v8847, %v8848
        %v8850 = vsel %vm8424, %v8381, 0.0
        %v8851 = vadd.f32 %v8849, %v8850
        %v8852 = vsel %vm8424, %v8382, 0.0
        %v8853 = vadd.f32 %v8851, %v8852
        %v8854 = vsel %vm8424, %v8383, 0.0
        %v8855 = vadd.f32 %v8853, %v8854
        %v8856 = vsel %vm8424, %v8384, 0.0
        %v8857 = vadd.f32 %v8855, %v8856
        %v8858 = vsel %vm8424, %v8385, 0.0
        %v8859 = vadd.f32 %v8857, %v8858
        %v8860 = vsel %vm8424, %v8386, 0.0
        %v8861 = vadd.f32 %v8859, %v8860
        %v8862 = vsel %vm8424, %v8387, 0.0
        %v8863 = vadd.f32 %v8861, %v8862
        %v8864 = vsel %vm8424, %v8388, 0.0
        %v8865 = vadd.f32 %v8863, %v8864
        %v8866 = vsel %vm8424, %v8389, 0.0
        %v8867 = vadd.f32 %v8865, %v8866
        %v8868 = vsel %vm8424, %v8390, 0.0
        %v8869 = vadd.f32 %v8867, %v8868
        %v8870 = vsel %vm8424, %v8391, 0.0
        %v8871 = vadd.f32 %v8869, %v8870
        %v8872 = vsel %vm8424, %v8392, 0.0
        %v8873 = vadd.f32 %v8871, %v8872
        %v8874 = vsel %vm8424, %v8393, 0.0
        %v8875 = vadd.f32 %v8873, %v8874
        %v8876 = vsel %vm8424, %v8394, 0.0
        %v8877 = vadd.f32 %v8875, %v8876
        %v8878 = vsel %vm8424, %v8395, 0.0
        %v8879 = vadd.f32 %v8877, %v8878
        %v8880 = vsel %vm8424, %v8396, 0.0
        %v8881 = vadd.f32 %v8879, %v8880
        %v8882 = vsel %vm8424, %v8397, 0.0
        %v8883 = vadd.f32 %v8881, %v8882
        %v8884 = vsel %vm8424, %v8398, 0.0
        %v8885 = vadd.f32 %v8883, %v8884
        %v8886 = vsel %vm8424, %v8399, 0.0
        %v8887 = vadd.f32 %v8885, %v8886
        %v8888 = vsel %vm8424, %v8400, 0.0
        %v8889 = vadd.f32 %v8887, %v8888
        %v8890 = vsel %vm8424, %v8401, 0.0
        %v8891 = vadd.f32 %v8889, %v8890
        %v8892 = vsel %vm8424, %v8402, 0.0
        %v8893 = vadd.f32 %v8891, %v8892
        %v8894 = vsel %vm8424, %v8403, 0.0
        %v8895 = vadd.f32 %v8893, %v8894
        %v8896 = vsel %vm8424, %v8404, 0.0
        %v8897 = vadd.f32 %v8895, %v8896
        %v8898 = vsel %vm8424, %v8405, 0.0
        %v8899 = vadd.f32 %v8897, %v8898
        %v8900 = vsel %vm8424, %v8406, 0.0
        %v8901 = vadd.f32 %v8899, %v8900
        %v8902 = vsel %vm8424, %v8407, 0.0
        %v8903 = vadd.f32 %v8901, %v8902
        %v8904 = vsel %vm8424, %v8408, 0.0
        %v8905 = vadd.f32 %v8903, %v8904
        %v8906 = vsel %vm8424, %v8409, 0.0
        %v8907 = vadd.f32 %v8905, %v8906
        %v8908 = vsel %vm8424, %v8410, 0.0
        %v8909 = vadd.f32 %v8907, %v8908
        %v8910 = vsel %vm8424, %v8411, 0.0
        %v8911 = vadd.f32 %v8909, %v8910
        %v8912 = vsel %vm8424, %v8412, 0.0
        %v8913 = vadd.f32 %v8911, %v8912
        %v8914 = vsel %vm8424, %v8413, 0.0
        %v8915 = vadd.f32 %v8913, %v8914
        %v8916 = vsel %vm8424, %v8414, 0.0
        %v8917 = vadd.f32 %v8915, %v8916
        %v8918 = vsel %vm8424, %v8415, 0.0
        %v8919 = vadd.f32 %v8917, %v8918
        %v8920 = vsel %vm8424, %v8416, 0.0
        %v8921 = vadd.f32 %v8919, %v8920
        %v8922 = vsel %vm8424, %v8417, 0.0
        %v8923 = vadd.f32 %v8921, %v8922
        %v8924 = vsel %vm8424, %v8418, 0.0
        %v8925 = vadd.f32 %v8923, %v8924
        %v8926 = vsel %vm8424, %v8419, 0.0
        %v8927 = vadd.f32 %v8925, %v8926
        %v8928 = vsel %vm8424, %v8420, 0.0
        %v8929 = vadd.f32 %v8927, %v8928
        %v8930 = vsel %vm8424, %v8421, 0.0
        %v8931 = vadd.f32 %v8929, %v8930
        %v8932 = vsel %vm8424, %v8422, 0.0
        %v8933 = vadd.f32 %v8931, %v8932
        %v8934 = vsel %vm8424, %v8423, 0.0
        %v8935 = vadd.f32 %v8933, %v8934
        %v8936 = vrot.slane %v8935, 4
        %v8937 = vadd.f32 %v8935, %v8936
        %v8938 = vrot.slane %v8937, 2
        %v8939 = vadd.f32 %v8937, %v8938
        %v8940 = vrot.slane %v8939, 1
        %v8941 = vadd.f32 %v8939, %v8940
        %v8942 = vmul.f32 %v8168, %v8168
        %v8943 = vmul.f32 %v8169, %v8169
        %v8944 = vmul.f32 %v8170, %v8170
        %v8945 = vmul.f32 %v8171, %v8171
        %v8946 = vmul.f32 %v8172, %v8172
        %v8947 = vmul.f32 %v8173, %v8173
        %v8948 = vmul.f32 %v8174, %v8174
        %v8949 = vmul.f32 %v8175, %v8175
        %v8950 = vmul.f32 %v8176, %v8176
        %v8951 = vmul.f32 %v8177, %v8177
        %v8952 = vmul.f32 %v8178, %v8178
        %v8953 = vmul.f32 %v8179, %v8179
        %v8954 = vmul.f32 %v8180, %v8180
        %v8955 = vmul.f32 %v8181, %v8181
        %v8956 = vmul.f32 %v8182, %v8182
        %v8957 = vmul.f32 %v8183, %v8183
        %v8958 = vmul.f32 %v8184, %v8184
        %v8959 = vmul.f32 %v8185, %v8185
        %v8960 = vmul.f32 %v8186, %v8186
        %v8961 = vmul.f32 %v8187, %v8187
        %v8962 = vmul.f32 %v8188, %v8188
        %v8963 = vmul.f32 %v8189, %v8189
        %v8964 = vmul.f32 %v8190, %v8190
        %v8965 = vmul.f32 %v8191, %v8191
        %v8966 = vmul.f32 %v8192, %v8192
        %v8967 = vmul.f32 %v8193, %v8193
        %v8968 = vmul.f32 %v8194, %v8194
        %v8969 = vmul.f32 %v8195, %v8195
        %v8970 = vmul.f32 %v8196, %v8196
        %v8971 = vmul.f32 %v8197, %v8197
        %v8972 = vmul.f32 %v8198, %v8198
        %v8973 = vmul.f32 %v8199, %v8199
        %v8974 = vmul.f32 %v8200, %v8200
        %v8975 = vmul.f32 %v8201, %v8201
        %v8976 = vmul.f32 %v8202, %v8202
        %v8977 = vmul.f32 %v8203, %v8203
        %v8978 = vmul.f32 %v8204, %v8204
        %v8979 = vmul.f32 %v8205, %v8205
        %v8980 = vmul.f32 %v8206, %v8206
        %v8981 = vmul.f32 %v8207, %v8207
        %v8982 = vmul.f32 %v8208, %v8208
        %v8983 = vmul.f32 %v8209, %v8209
        %v8984 = vmul.f32 %v8210, %v8210
        %v8985 = vmul.f32 %v8211, %v8211
        %v8986 = vmul.f32 %v8212, %v8212
        %v8987 = vmul.f32 %v8213, %v8213
        %v8988 = vmul.f32 %v8214, %v8214
        %v8989 = vmul.f32 %v8215, %v8215
        %v8990 = vmul.f32 %v8216, %v8216
        %v8991 = vmul.f32 %v8217, %v8217
        %v8992 = vmul.f32 %v8218, %v8218
        %v8993 = vmul.f32 %v8219, %v8219
        %v8994 = vmul.f32 %v8220, %v8220
        %v8995 = vmul.f32 %v8221, %v8221
        %v8996 = vmul.f32 %v8222, %v8222
        %v8997 = vmul.f32 %v8223, %v8223
        %v8998 = vmul.f32 %v8224, %v8224
        %v8999 = vmul.f32 %v8225, %v8225
        %v9000 = vmul.f32 %v8226, %v8226
        %v9001 = vmul.f32 %v8227, %v8227
        %v9002 = vmul.f32 %v8228, %v8228
        %v9003 = vmul.f32 %v8229, %v8229
        %v9004 = vmul.f32 %v8230, %v8230
        %v9005 = vmul.f32 %v8231, %v8231
        %v9006 = vmul.f32 %v8232, %v8232
        %v9007 = vmul.f32 %v8233, %v8233
        %v9008 = vmul.f32 %v8234, %v8234
        %v9009 = vmul.f32 %v8235, %v8235
        %v9010 = vmul.f32 %v8236, %v8236
        %v9011 = vmul.f32 %v8237, %v8237
        %v9012 = vmul.f32 %v8238, %v8238
        %v9013 = vmul.f32 %v8239, %v8239
        %v9014 = vmul.f32 %v8240, %v8240
        %v9015 = vmul.f32 %v8241, %v8241
        %v9016 = vmul.f32 %v8242, %v8242
        %v9017 = vmul.f32 %v8243, %v8243
        %v9018 = vmul.f32 %v8244, %v8244
        %v9019 = vmul.f32 %v8245, %v8245
        %v9020 = vmul.f32 %v8246, %v8246
        %v9021 = vmul.f32 %v8247, %v8247
        %v9022 = vmul.f32 %v8248, %v8248
        %v9023 = vmul.f32 %v8249, %v8249
        %v9024 = vmul.f32 %v8250, %v8250
        %v9025 = vmul.f32 %v8251, %v8251
        %v9026 = vmul.f32 %v8252, %v8252
        %v9027 = vmul.f32 %v8253, %v8253
        %v9028 = vmul.f32 %v8254, %v8254
        %v9029 = vmul.f32 %v8255, %v8255
        %v9030 = vmul.f32 %v8256, %v8256
        %v9031 = vmul.f32 %v8257, %v8257
        %v9032 = vmul.f32 %v8258, %v8258
        %v9033 = vmul.f32 %v8259, %v8259
        %v9034 = vmul.f32 %v8260, %v8260
        %v9035 = vmul.f32 %v8261, %v8261
        %v9036 = vmul.f32 %v8262, %v8262
        %v9037 = vmul.f32 %v8263, %v8263
        %v9038 = vmul.f32 %v8264, %v8264
        %v9039 = vmul.f32 %v8265, %v8265
        %v9040 = vmul.f32 %v8266, %v8266
        %v9041 = vmul.f32 %v8267, %v8267
        %v9042 = vmul.f32 %v8268, %v8268
        %v9043 = vmul.f32 %v8269, %v8269
        %v9044 = vmul.f32 %v8270, %v8270
        %v9045 = vmul.f32 %v8271, %v8271
        %v9046 = vmul.f32 %v8272, %v8272
        %v9047 = vmul.f32 %v8273, %v8273
        %v9048 = vmul.f32 %v8274, %v8274
        %v9049 = vmul.f32 %v8275, %v8275
        %v9050 = vmul.f32 %v8276, %v8276
        %v9051 = vmul.f32 %v8277, %v8277
        %v9052 = vmul.f32 %v8278, %v8278
        %v9053 = vmul.f32 %v8279, %v8279
        %v9054 = vmul.f32 %v8280, %v8280
        %v9055 = vmul.f32 %v8281, %v8281
        %v9056 = vmul.f32 %v8282, %v8282
        %v9057 = vmul.f32 %v8283, %v8283
        %v9058 = vmul.f32 %v8284, %v8284
        %v9059 = vmul.f32 %v8285, %v8285
        %v9060 = vmul.f32 %v8286, %v8286
        %v9061 = vmul.f32 %v8287, %v8287
        %v9062 = vmul.f32 %v8288, %v8288
        %v9063 = vmul.f32 %v8289, %v8289
        %v9064 = vmul.f32 %v8290, %v8290
        %v9065 = vmul.f32 %v8291, %v8291
        %v9066 = vmul.f32 %v8292, %v8292
        %v9067 = vmul.f32 %v8293, %v8293
        %v9068 = vmul.f32 %v8294, %v8294
        %v9069 = vmul.f32 %v8295, %v8295
        %v9070 = vmul.f32 %v8296, %v8296
        %v9071 = vmul.f32 %v8297, %v8297
        %v9072 = vmul.f32 %v8298, %v8298
        %v9073 = vmul.f32 %v8299, %v8299
        %v9074 = vmul.f32 %v8300, %v8300
        %v9075 = vmul.f32 %v8301, %v8301
        %v9076 = vmul.f32 %v8302, %v8302
        %v9077 = vmul.f32 %v8303, %v8303
        %v9078 = vmul.f32 %v8304, %v8304
        %v9079 = vmul.f32 %v8305, %v8305
        %v9080 = vmul.f32 %v8306, %v8306
        %v9081 = vmul.f32 %v8307, %v8307
        %v9082 = vmul.f32 %v8308, %v8308
        %v9083 = vmul.f32 %v8309, %v8309
        %v9084 = vmul.f32 %v8310, %v8310
        %v9085 = vmul.f32 %v8311, %v8311
        %v9086 = vmul.f32 %v8312, %v8312
        %v9087 = vmul.f32 %v8313, %v8313
        %v9088 = vmul.f32 %v8314, %v8314
        %v9089 = vmul.f32 %v8315, %v8315
        %v9090 = vmul.f32 %v8316, %v8316
        %v9091 = vmul.f32 %v8317, %v8317
        %v9092 = vmul.f32 %v8318, %v8318
        %v9093 = vmul.f32 %v8319, %v8319
        %v9094 = vmul.f32 %v8320, %v8320
        %v9095 = vmul.f32 %v8321, %v8321
        %v9096 = vmul.f32 %v8322, %v8322
        %v9097 = vmul.f32 %v8323, %v8323
        %v9098 = vmul.f32 %v8324, %v8324
        %v9099 = vmul.f32 %v8325, %v8325
        %v9100 = vmul.f32 %v8326, %v8326
        %v9101 = vmul.f32 %v8327, %v8327
        %v9102 = vmul.f32 %v8328, %v8328
        %v9103 = vmul.f32 %v8329, %v8329
        %v9104 = vmul.f32 %v8330, %v8330
        %v9105 = vmul.f32 %v8331, %v8331
        %v9106 = vmul.f32 %v8332, %v8332
        %v9107 = vmul.f32 %v8333, %v8333
        %v9108 = vmul.f32 %v8334, %v8334
        %v9109 = vmul.f32 %v8335, %v8335
        %v9110 = vmul.f32 %v8336, %v8336
        %v9111 = vmul.f32 %v8337, %v8337
        %v9112 = vmul.f32 %v8338, %v8338
        %v9113 = vmul.f32 %v8339, %v8339
        %v9114 = vmul.f32 %v8340, %v8340
        %v9115 = vmul.f32 %v8341, %v8341
        %v9116 = vmul.f32 %v8342, %v8342
        %v9117 = vmul.f32 %v8343, %v8343
        %v9118 = vmul.f32 %v8344, %v8344
        %v9119 = vmul.f32 %v8345, %v8345
        %v9120 = vmul.f32 %v8346, %v8346
        %v9121 = vmul.f32 %v8347, %v8347
        %v9122 = vmul.f32 %v8348, %v8348
        %v9123 = vmul.f32 %v8349, %v8349
        %v9124 = vmul.f32 %v8350, %v8350
        %v9125 = vmul.f32 %v8351, %v8351
        %v9126 = vmul.f32 %v8352, %v8352
        %v9127 = vmul.f32 %v8353, %v8353
        %v9128 = vmul.f32 %v8354, %v8354
        %v9129 = vmul.f32 %v8355, %v8355
        %v9130 = vmul.f32 %v8356, %v8356
        %v9131 = vmul.f32 %v8357, %v8357
        %v9132 = vmul.f32 %v8358, %v8358
        %v9133 = vmul.f32 %v8359, %v8359
        %v9134 = vmul.f32 %v8360, %v8360
        %v9135 = vmul.f32 %v8361, %v8361
        %v9136 = vmul.f32 %v8362, %v8362
        %v9137 = vmul.f32 %v8363, %v8363
        %v9138 = vmul.f32 %v8364, %v8364
        %v9139 = vmul.f32 %v8365, %v8365
        %v9140 = vmul.f32 %v8366, %v8366
        %v9141 = vmul.f32 %v8367, %v8367
        %v9142 = vmul.f32 %v8368, %v8368
        %v9143 = vmul.f32 %v8369, %v8369
        %v9144 = vmul.f32 %v8370, %v8370
        %v9145 = vmul.f32 %v8371, %v8371
        %v9146 = vmul.f32 %v8372, %v8372
        %v9147 = vmul.f32 %v8373, %v8373
        %v9148 = vmul.f32 %v8374, %v8374
        %v9149 = vmul.f32 %v8375, %v8375
        %v9150 = vmul.f32 %v8376, %v8376
        %v9151 = vmul.f32 %v8377, %v8377
        %v9152 = vmul.f32 %v8378, %v8378
        %v9153 = vmul.f32 %v8379, %v8379
        %v9154 = vmul.f32 %v8380, %v8380
        %v9155 = vmul.f32 %v8381, %v8381
        %v9156 = vmul.f32 %v8382, %v8382
        %v9157 = vmul.f32 %v8383, %v8383
        %v9158 = vmul.f32 %v8384, %v8384
        %v9159 = vmul.f32 %v8385, %v8385
        %v9160 = vmul.f32 %v8386, %v8386
        %v9161 = vmul.f32 %v8387, %v8387
        %v9162 = vmul.f32 %v8388, %v8388
        %v9163 = vmul.f32 %v8389, %v8389
        %v9164 = vmul.f32 %v8390, %v8390
        %v9165 = vmul.f32 %v8391, %v8391
        %v9166 = vmul.f32 %v8392, %v8392
        %v9167 = vmul.f32 %v8393, %v8393
        %v9168 = vmul.f32 %v8394, %v8394
        %v9169 = vmul.f32 %v8395, %v8395
        %v9170 = vmul.f32 %v8396, %v8396
        %v9171 = vmul.f32 %v8397, %v8397
        %v9172 = vmul.f32 %v8398, %v8398
        %v9173 = vmul.f32 %v8399, %v8399
        %v9174 = vmul.f32 %v8400, %v8400
        %v9175 = vmul.f32 %v8401, %v8401
        %v9176 = vmul.f32 %v8402, %v8402
        %v9177 = vmul.f32 %v8403, %v8403
        %v9178 = vmul.f32 %v8404, %v8404
        %v9179 = vmul.f32 %v8405, %v8405
        %v9180 = vmul.f32 %v8406, %v8406
        %v9181 = vmul.f32 %v8407, %v8407
        %v9182 = vmul.f32 %v8408, %v8408
        %v9183 = vmul.f32 %v8409, %v8409
        %v9184 = vmul.f32 %v8410, %v8410
        %v9185 = vmul.f32 %v8411, %v8411
        %v9186 = vmul.f32 %v8412, %v8412
        %v9187 = vmul.f32 %v8413, %v8413
        %v9188 = vmul.f32 %v8414, %v8414
        %v9189 = vmul.f32 %v8415, %v8415
        %v9190 = vmul.f32 %v8416, %v8416
        %v9191 = vmul.f32 %v8417, %v8417
        %v9192 = vmul.f32 %v8418, %v8418
        %v9193 = vmul.f32 %v8419, %v8419
        %v9194 = vmul.f32 %v8420, %v8420
        %v9195 = vmul.f32 %v8421, %v8421
        %v9196 = vmul.f32 %v8422, %v8422
        %v9197 = vmul.f32 %v8423, %v8423
        %v9198 = vsel %vm8424, %v8942, 0.0
        %v9199 = vsel %vm8424, %v8943, 0.0
        %v9200 = vadd.f32 %v9198, %v9199
        %v9201 = vsel %vm8424, %v8944, 0.0
        %v9202 = vadd.f32 %v9200, %v9201
        %v9203 = vsel %vm8424, %v8945, 0.0
        %v9204 = vadd.f32 %v9202, %v9203
        %v9205 = vsel %vm8424, %v8946, 0.0
        %v9206 = vadd.f32 %v9204, %v9205
        %v9207 = vsel %vm8424, %v8947, 0.0
        %v9208 = vadd.f32 %v9206, %v9207
        %v9209 = vsel %vm8424, %v8948, 0.0
        %v9210 = vadd.f32 %v9208, %v9209
        %v9211 = vsel %vm8424, %v8949, 0.0
        %v9212 = vadd.f32 %v9210, %v9211
        %v9213 = vsel %vm8424, %v8950, 0.0
        %v9214 = vadd.f32 %v9212, %v9213
        %v9215 = vsel %vm8424, %v8951, 0.0
        %v9216 = vadd.f32 %v9214, %v9215
        %v9217 = vsel %vm8424, %v8952, 0.0
        %v9218 = vadd.f32 %v9216, %v9217
        %v9219 = vsel %vm8424, %v8953, 0.0
        %v9220 = vadd.f32 %v9218, %v9219
        %v9221 = vsel %vm8424, %v8954, 0.0
        %v9222 = vadd.f32 %v9220, %v9221
        %v9223 = vsel %vm8424, %v8955, 0.0
        %v9224 = vadd.f32 %v9222, %v9223
        %v9225 = vsel %vm8424, %v8956, 0.0
        %v9226 = vadd.f32 %v9224, %v9225
        %v9227 = vsel %vm8424, %v8957, 0.0
        %v9228 = vadd.f32 %v9226, %v9227
        %v9229 = vsel %vm8424, %v8958, 0.0
        %v9230 = vadd.f32 %v9228, %v9229
        %v9231 = vsel %vm8424, %v8959, 0.0
        %v9232 = vadd.f32 %v9230, %v9231
        %v9233 = vsel %vm8424, %v8960, 0.0
        %v9234 = vadd.f32 %v9232, %v9233
        %v9235 = vsel %vm8424, %v8961, 0.0
        %v9236 = vadd.f32 %v9234, %v9235
        %v9237 = vsel %vm8424, %v8962, 0.0
        %v9238 = vadd.f32 %v9236, %v9237
        %v9239 = vsel %vm8424, %v8963, 0.0
        %v9240 = vadd.f32 %v9238, %v9239
        %v9241 = vsel %vm8424, %v8964, 0.0
        %v9242 = vadd.f32 %v9240, %v9241
        %v9243 = vsel %vm8424, %v8965, 0.0
        %v9244 = vadd.f32 %v9242, %v9243
        %v9245 = vsel %vm8424, %v8966, 0.0
        %v9246 = vadd.f32 %v9244, %v9245
        %v9247 = vsel %vm8424, %v8967, 0.0
        %v9248 = vadd.f32 %v9246, %v9247
        %v9249 = vsel %vm8424, %v8968, 0.0
        %v9250 = vadd.f32 %v9248, %v9249
        %v9251 = vsel %vm8424, %v8969, 0.0
        %v9252 = vadd.f32 %v9250, %v9251
        %v9253 = vsel %vm8424, %v8970, 0.0
        %v9254 = vadd.f32 %v9252, %v9253
        %v9255 = vsel %vm8424, %v8971, 0.0
        %v9256 = vadd.f32 %v9254, %v9255
        %v9257 = vsel %vm8424, %v8972, 0.0
        %v9258 = vadd.f32 %v9256, %v9257
        %v9259 = vsel %vm8424, %v8973, 0.0
        %v9260 = vadd.f32 %v9258, %v9259
        %v9261 = vsel %vm8424, %v8974, 0.0
        %v9262 = vadd.f32 %v9260, %v9261
        %v9263 = vsel %vm8424, %v8975, 0.0
        %v9264 = vadd.f32 %v9262, %v9263
        %v9265 = vsel %vm8424, %v8976, 0.0
        %v9266 = vadd.f32 %v9264, %v9265
        %v9267 = vsel %vm8424, %v8977, 0.0
        %v9268 = vadd.f32 %v9266, %v9267
        %v9269 = vsel %vm8424, %v8978, 0.0
        %v9270 = vadd.f32 %v9268, %v9269
        %v9271 = vsel %vm8424, %v8979, 0.0
        %v9272 = vadd.f32 %v9270, %v9271
        %v9273 = vsel %vm8424, %v8980, 0.0
        %v9274 = vadd.f32 %v9272, %v9273
        %v9275 = vsel %vm8424, %v8981, 0.0
        %v9276 = vadd.f32 %v9274, %v9275
        %v9277 = vsel %vm8424, %v8982, 0.0
        %v9278 = vadd.f32 %v9276, %v9277
        %v9279 = vsel %vm8424, %v8983, 0.0
        %v9280 = vadd.f32 %v9278, %v9279
        %v9281 = vsel %vm8424, %v8984, 0.0
        %v9282 = vadd.f32 %v9280, %v9281
        %v9283 = vsel %vm8424, %v8985, 0.0
        %v9284 = vadd.f32 %v9282, %v9283
        %v9285 = vsel %vm8424, %v8986, 0.0
        %v9286 = vadd.f32 %v9284, %v9285
        %v9287 = vsel %vm8424, %v8987, 0.0
        %v9288 = vadd.f32 %v9286, %v9287
        %v9289 = vsel %vm8424, %v8988, 0.0
        %v9290 = vadd.f32 %v9288, %v9289
        %v9291 = vsel %vm8424, %v8989, 0.0
        %v9292 = vadd.f32 %v9290, %v9291
        %v9293 = vsel %vm8424, %v8990, 0.0
        %v9294 = vadd.f32 %v9292, %v9293
        %v9295 = vsel %vm8424, %v8991, 0.0
        %v9296 = vadd.f32 %v9294, %v9295
        %v9297 = vsel %vm8424, %v8992, 0.0
        %v9298 = vadd.f32 %v9296, %v9297
        %v9299 = vsel %vm8424, %v8993, 0.0
        %v9300 = vadd.f32 %v9298, %v9299
        %v9301 = vsel %vm8424, %v8994, 0.0
        %v9302 = vadd.f32 %v9300, %v9301
        %v9303 = vsel %vm8424, %v8995, 0.0
        %v9304 = vadd.f32 %v9302, %v9303
        %v9305 = vsel %vm8424, %v8996, 0.0
        %v9306 = vadd.f32 %v9304, %v9305
        %v9307 = vsel %vm8424, %v8997, 0.0
        %v9308 = vadd.f32 %v9306, %v9307
        %v9309 = vsel %vm8424, %v8998, 0.0
        %v9310 = vadd.f32 %v9308, %v9309
        %v9311 = vsel %vm8424, %v8999, 0.0
        %v9312 = vadd.f32 %v9310, %v9311
        %v9313 = vsel %vm8424, %v9000, 0.0
        %v9314 = vadd.f32 %v9312, %v9313
        %v9315 = vsel %vm8424, %v9001, 0.0
        %v9316 = vadd.f32 %v9314, %v9315
        %v9317 = vsel %vm8424, %v9002, 0.0
        %v9318 = vadd.f32 %v9316, %v9317
        %v9319 = vsel %vm8424, %v9003, 0.0
        %v9320 = vadd.f32 %v9318, %v9319
        %v9321 = vsel %vm8424, %v9004, 0.0
        %v9322 = vadd.f32 %v9320, %v9321
        %v9323 = vsel %vm8424, %v9005, 0.0
        %v9324 = vadd.f32 %v9322, %v9323
        %v9325 = vsel %vm8424, %v9006, 0.0
        %v9326 = vadd.f32 %v9324, %v9325
        %v9327 = vsel %vm8424, %v9007, 0.0
        %v9328 = vadd.f32 %v9326, %v9327
        %v9329 = vsel %vm8424, %v9008, 0.0
        %v9330 = vadd.f32 %v9328, %v9329
        %v9331 = vsel %vm8424, %v9009, 0.0
        %v9332 = vadd.f32 %v9330, %v9331
        %v9333 = vsel %vm8424, %v9010, 0.0
        %v9334 = vadd.f32 %v9332, %v9333
        %v9335 = vsel %vm8424, %v9011, 0.0
        %v9336 = vadd.f32 %v9334, %v9335
        %v9337 = vsel %vm8424, %v9012, 0.0
        %v9338 = vadd.f32 %v9336, %v9337
        %v9339 = vsel %vm8424, %v9013, 0.0
        %v9340 = vadd.f32 %v9338, %v9339
        %v9341 = vsel %vm8424, %v9014, 0.0
        %v9342 = vadd.f32 %v9340, %v9341
        %v9343 = vsel %vm8424, %v9015, 0.0
        %v9344 = vadd.f32 %v9342, %v9343
        %v9345 = vsel %vm8424, %v9016, 0.0
        %v9346 = vadd.f32 %v9344, %v9345
        %v9347 = vsel %vm8424, %v9017, 0.0
        %v9348 = vadd.f32 %v9346, %v9347
        %v9349 = vsel %vm8424, %v9018, 0.0
        %v9350 = vadd.f32 %v9348, %v9349
        %v9351 = vsel %vm8424, %v9019, 0.0
        %v9352 = vadd.f32 %v9350, %v9351
        %v9353 = vsel %vm8424, %v9020, 0.0
        %v9354 = vadd.f32 %v9352, %v9353
        %v9355 = vsel %vm8424, %v9021, 0.0
        %v9356 = vadd.f32 %v9354, %v9355
        %v9357 = vsel %vm8424, %v9022, 0.0
        %v9358 = vadd.f32 %v9356, %v9357
        %v9359 = vsel %vm8424, %v9023, 0.0
        %v9360 = vadd.f32 %v9358, %v9359
        %v9361 = vsel %vm8424, %v9024, 0.0
        %v9362 = vadd.f32 %v9360, %v9361
        %v9363 = vsel %vm8424, %v9025, 0.0
        %v9364 = vadd.f32 %v9362, %v9363
        %v9365 = vsel %vm8424, %v9026, 0.0
        %v9366 = vadd.f32 %v9364, %v9365
        %v9367 = vsel %vm8424, %v9027, 0.0
        %v9368 = vadd.f32 %v9366, %v9367
        %v9369 = vsel %vm8424, %v9028, 0.0
        %v9370 = vadd.f32 %v9368, %v9369
        %v9371 = vsel %vm8424, %v9029, 0.0
        %v9372 = vadd.f32 %v9370, %v9371
        %v9373 = vsel %vm8424, %v9030, 0.0
        %v9374 = vadd.f32 %v9372, %v9373
        %v9375 = vsel %vm8424, %v9031, 0.0
        %v9376 = vadd.f32 %v9374, %v9375
        %v9377 = vsel %vm8424, %v9032, 0.0
        %v9378 = vadd.f32 %v9376, %v9377
        %v9379 = vsel %vm8424, %v9033, 0.0
        %v9380 = vadd.f32 %v9378, %v9379
        %v9381 = vsel %vm8424, %v9034, 0.0
        %v9382 = vadd.f32 %v9380, %v9381
        %v9383 = vsel %vm8424, %v9035, 0.0
        %v9384 = vadd.f32 %v9382, %v9383
        %v9385 = vsel %vm8424, %v9036, 0.0
        %v9386 = vadd.f32 %v9384, %v9385
        %v9387 = vsel %vm8424, %v9037, 0.0
        %v9388 = vadd.f32 %v9386, %v9387
        %v9389 = vsel %vm8424, %v9038, 0.0
        %v9390 = vadd.f32 %v9388, %v9389
        %v9391 = vsel %vm8424, %v9039, 0.0
        %v9392 = vadd.f32 %v9390, %v9391
        %v9393 = vsel %vm8424, %v9040, 0.0
        %v9394 = vadd.f32 %v9392, %v9393
        %v9395 = vsel %vm8424, %v9041, 0.0
        %v9396 = vadd.f32 %v9394, %v9395
        %v9397 = vsel %vm8424, %v9042, 0.0
        %v9398 = vadd.f32 %v9396, %v9397
        %v9399 = vsel %vm8424, %v9043, 0.0
        %v9400 = vadd.f32 %v9398, %v9399
        %v9401 = vsel %vm8424, %v9044, 0.0
        %v9402 = vadd.f32 %v9400, %v9401
        %v9403 = vsel %vm8424, %v9045, 0.0
        %v9404 = vadd.f32 %v9402, %v9403
        %v9405 = vsel %vm8424, %v9046, 0.0
        %v9406 = vadd.f32 %v9404, %v9405
        %v9407 = vsel %vm8424, %v9047, 0.0
        %v9408 = vadd.f32 %v9406, %v9407
        %v9409 = vsel %vm8424, %v9048, 0.0
        %v9410 = vadd.f32 %v9408, %v9409
        %v9411 = vsel %vm8424, %v9049, 0.0
        %v9412 = vadd.f32 %v9410, %v9411
        %v9413 = vsel %vm8424, %v9050, 0.0
        %v9414 = vadd.f32 %v9412, %v9413
        %v9415 = vsel %vm8424, %v9051, 0.0
        %v9416 = vadd.f32 %v9414, %v9415
        %v9417 = vsel %vm8424, %v9052, 0.0
        %v9418 = vadd.f32 %v9416, %v9417
        %v9419 = vsel %vm8424, %v9053, 0.0
        %v9420 = vadd.f32 %v9418, %v9419
        %v9421 = vsel %vm8424, %v9054, 0.0
        %v9422 = vadd.f32 %v9420, %v9421
        %v9423 = vsel %vm8424, %v9055, 0.0
        %v9424 = vadd.f32 %v9422, %v9423
        %v9425 = vsel %vm8424, %v9056, 0.0
        %v9426 = vadd.f32 %v9424, %v9425
        %v9427 = vsel %vm8424, %v9057, 0.0
        %v9428 = vadd.f32 %v9426, %v9427
        %v9429 = vsel %vm8424, %v9058, 0.0
        %v9430 = vadd.f32 %v9428, %v9429
        %v9431 = vsel %vm8424, %v9059, 0.0
        %v9432 = vadd.f32 %v9430, %v9431
        %v9433 = vsel %vm8424, %v9060, 0.0
        %v9434 = vadd.f32 %v9432, %v9433
        %v9435 = vsel %vm8424, %v9061, 0.0
        %v9436 = vadd.f32 %v9434, %v9435
        %v9437 = vsel %vm8424, %v9062, 0.0
        %v9438 = vadd.f32 %v9436, %v9437
        %v9439 = vsel %vm8424, %v9063, 0.0
        %v9440 = vadd.f32 %v9438, %v9439
        %v9441 = vsel %vm8424, %v9064, 0.0
        %v9442 = vadd.f32 %v9440, %v9441
        %v9443 = vsel %vm8424, %v9065, 0.0
        %v9444 = vadd.f32 %v9442, %v9443
        %v9445 = vsel %vm8424, %v9066, 0.0
        %v9446 = vadd.f32 %v9444, %v9445
        %v9447 = vsel %vm8424, %v9067, 0.0
        %v9448 = vadd.f32 %v9446, %v9447
        %v9449 = vsel %vm8424, %v9068, 0.0
        %v9450 = vadd.f32 %v9448, %v9449
        %v9451 = vsel %vm8424, %v9069, 0.0
        %v9452 = vadd.f32 %v9450, %v9451
        %v9453 = vsel %vm8424, %v9070, 0.0
        %v9454 = vadd.f32 %v9452, %v9453
        %v9455 = vsel %vm8424, %v9071, 0.0
        %v9456 = vadd.f32 %v9454, %v9455
        %v9457 = vsel %vm8424, %v9072, 0.0
        %v9458 = vadd.f32 %v9456, %v9457
        %v9459 = vsel %vm8424, %v9073, 0.0
        %v9460 = vadd.f32 %v9458, %v9459
        %v9461 = vsel %vm8424, %v9074, 0.0
        %v9462 = vadd.f32 %v9460, %v9461
        %v9463 = vsel %vm8424, %v9075, 0.0
        %v9464 = vadd.f32 %v9462, %v9463
        %v9465 = vsel %vm8424, %v9076, 0.0
        %v9466 = vadd.f32 %v9464, %v9465
        %v9467 = vsel %vm8424, %v9077, 0.0
        %v9468 = vadd.f32 %v9466, %v9467
        %v9469 = vsel %vm8424, %v9078, 0.0
        %v9470 = vadd.f32 %v9468, %v9469
        %v9471 = vsel %vm8424, %v9079, 0.0
        %v9472 = vadd.f32 %v9470, %v9471
        %v9473 = vsel %vm8424, %v9080, 0.0
        %v9474 = vadd.f32 %v9472, %v9473
        %v9475 = vsel %vm8424, %v9081, 0.0
        %v9476 = vadd.f32 %v9474, %v9475
        %v9477 = vsel %vm8424, %v9082, 0.0
        %v9478 = vadd.f32 %v9476, %v9477
        %v9479 = vsel %vm8424, %v9083, 0.0
        %v9480 = vadd.f32 %v9478, %v9479
        %v9481 = vsel %vm8424, %v9084, 0.0
        %v9482 = vadd.f32 %v9480, %v9481
        %v9483 = vsel %vm8424, %v9085, 0.0
        %v9484 = vadd.f32 %v9482, %v9483
        %v9485 = vsel %vm8424, %v9086, 0.0
        %v9486 = vadd.f32 %v9484, %v9485
        %v9487 = vsel %vm8424, %v9087, 0.0
        %v9488 = vadd.f32 %v9486, %v9487
        %v9489 = vsel %vm8424, %v9088, 0.0
        %v9490 = vadd.f32 %v9488, %v9489
        %v9491 = vsel %vm8424, %v9089, 0.0
        %v9492 = vadd.f32 %v9490, %v9491
        %v9493 = vsel %vm8424, %v9090, 0.0
        %v9494 = vadd.f32 %v9492, %v9493
        %v9495 = vsel %vm8424, %v9091, 0.0
        %v9496 = vadd.f32 %v9494, %v9495
        %v9497 = vsel %vm8424, %v9092, 0.0
        %v9498 = vadd.f32 %v9496, %v9497
        %v9499 = vsel %vm8424, %v9093, 0.0
        %v9500 = vadd.f32 %v9498, %v9499
        %v9501 = vsel %vm8424, %v9094, 0.0
        %v9502 = vadd.f32 %v9500, %v9501
        %v9503 = vsel %vm8424, %v9095, 0.0
        %v9504 = vadd.f32 %v9502, %v9503
        %v9505 = vsel %vm8424, %v9096, 0.0
        %v9506 = vadd.f32 %v9504, %v9505
        %v9507 = vsel %vm8424, %v9097, 0.0
        %v9508 = vadd.f32 %v9506, %v9507
        %v9509 = vsel %vm8424, %v9098, 0.0
        %v9510 = vadd.f32 %v9508, %v9509
        %v9511 = vsel %vm8424, %v9099, 0.0
        %v9512 = vadd.f32 %v9510, %v9511
        %v9513 = vsel %vm8424, %v9100, 0.0
        %v9514 = vadd.f32 %v9512, %v9513
        %v9515 = vsel %vm8424, %v9101, 0.0
        %v9516 = vadd.f32 %v9514, %v9515
        %v9517 = vsel %vm8424, %v9102, 0.0
        %v9518 = vadd.f32 %v9516, %v9517
        %v9519 = vsel %vm8424, %v9103, 0.0
        %v9520 = vadd.f32 %v9518, %v9519
        %v9521 = vsel %vm8424, %v9104, 0.0
        %v9522 = vadd.f32 %v9520, %v9521
        %v9523 = vsel %vm8424, %v9105, 0.0
        %v9524 = vadd.f32 %v9522, %v9523
        %v9525 = vsel %vm8424, %v9106, 0.0
        %v9526 = vadd.f32 %v9524, %v9525
        %v9527 = vsel %vm8424, %v9107, 0.0
        %v9528 = vadd.f32 %v9526, %v9527
        %v9529 = vsel %vm8424, %v9108, 0.0
        %v9530 = vadd.f32 %v9528, %v9529
        %v9531 = vsel %vm8424, %v9109, 0.0
        %v9532 = vadd.f32 %v9530, %v9531
        %v9533 = vsel %vm8424, %v9110, 0.0
        %v9534 = vadd.f32 %v9532, %v9533
        %v9535 = vsel %vm8424, %v9111, 0.0
        %v9536 = vadd.f32 %v9534, %v9535
        %v9537 = vsel %vm8424, %v9112, 0.0
        %v9538 = vadd.f32 %v9536, %v9537
        %v9539 = vsel %vm8424, %v9113, 0.0
        %v9540 = vadd.f32 %v9538, %v9539
        %v9541 = vsel %vm8424, %v9114, 0.0
        %v9542 = vadd.f32 %v9540, %v9541
        %v9543 = vsel %vm8424, %v9115, 0.0
        %v9544 = vadd.f32 %v9542, %v9543
        %v9545 = vsel %vm8424, %v9116, 0.0
        %v9546 = vadd.f32 %v9544, %v9545
        %v9547 = vsel %vm8424, %v9117, 0.0
        %v9548 = vadd.f32 %v9546, %v9547
        %v9549 = vsel %vm8424, %v9118, 0.0
        %v9550 = vadd.f32 %v9548, %v9549
        %v9551 = vsel %vm8424, %v9119, 0.0
        %v9552 = vadd.f32 %v9550, %v9551
        %v9553 = vsel %vm8424, %v9120, 0.0
        %v9554 = vadd.f32 %v9552, %v9553
        %v9555 = vsel %vm8424, %v9121, 0.0
        %v9556 = vadd.f32 %v9554, %v9555
        %v9557 = vsel %vm8424, %v9122, 0.0
        %v9558 = vadd.f32 %v9556, %v9557
        %v9559 = vsel %vm8424, %v9123, 0.0
        %v9560 = vadd.f32 %v9558, %v9559
        %v9561 = vsel %vm8424, %v9124, 0.0
        %v9562 = vadd.f32 %v9560, %v9561
        %v9563 = vsel %vm8424, %v9125, 0.0
        %v9564 = vadd.f32 %v9562, %v9563
        %v9565 = vsel %vm8424, %v9126, 0.0
        %v9566 = vadd.f32 %v9564, %v9565
        %v9567 = vsel %vm8424, %v9127, 0.0
        %v9568 = vadd.f32 %v9566, %v9567
        %v9569 = vsel %vm8424, %v9128, 0.0
        %v9570 = vadd.f32 %v9568, %v9569
        %v9571 = vsel %vm8424, %v9129, 0.0
        %v9572 = vadd.f32 %v9570, %v9571
        %v9573 = vsel %vm8424, %v9130, 0.0
        %v9574 = vadd.f32 %v9572, %v9573
        %v9575 = vsel %vm8424, %v9131, 0.0
        %v9576 = vadd.f32 %v9574, %v9575
        %v9577 = vsel %vm8424, %v9132, 0.0
        %v9578 = vadd.f32 %v9576, %v9577
        %v9579 = vsel %vm8424, %v9133, 0.0
        %v9580 = vadd.f32 %v9578, %v9579
        %v9581 = vsel %vm8424, %v9134, 0.0
        %v9582 = vadd.f32 %v9580, %v9581
        %v9583 = vsel %vm8424, %v9135, 0.0
        %v9584 = vadd.f32 %v9582, %v9583
        %v9585 = vsel %vm8424, %v9136, 0.0
        %v9586 = vadd.f32 %v9584, %v9585
        %v9587 = vsel %vm8424, %v9137, 0.0
        %v9588 = vadd.f32 %v9586, %v9587
        %v9589 = vsel %vm8424, %v9138, 0.0
        %v9590 = vadd.f32 %v9588, %v9589
        %v9591 = vsel %vm8424, %v9139, 0.0
        %v9592 = vadd.f32 %v9590, %v9591
        %v9593 = vsel %vm8424, %v9140, 0.0
        %v9594 = vadd.f32 %v9592, %v9593
        %v9595 = vsel %vm8424, %v9141, 0.0
        %v9596 = vadd.f32 %v9594, %v9595
        %v9597 = vsel %vm8424, %v9142, 0.0
        %v9598 = vadd.f32 %v9596, %v9597
        %v9599 = vsel %vm8424, %v9143, 0.0
        %v9600 = vadd.f32 %v9598, %v9599
        %v9601 = vsel %vm8424, %v9144, 0.0
        %v9602 = vadd.f32 %v9600, %v9601
        %v9603 = vsel %vm8424, %v9145, 0.0
        %v9604 = vadd.f32 %v9602, %v9603
        %v9605 = vsel %vm8424, %v9146, 0.0
        %v9606 = vadd.f32 %v9604, %v9605
        %v9607 = vsel %vm8424, %v9147, 0.0
        %v9608 = vadd.f32 %v9606, %v9607
        %v9609 = vsel %vm8424, %v9148, 0.0
        %v9610 = vadd.f32 %v9608, %v9609
        %v9611 = vsel %vm8424, %v9149, 0.0
        %v9612 = vadd.f32 %v9610, %v9611
        %v9613 = vsel %vm8424, %v9150, 0.0
        %v9614 = vadd.f32 %v9612, %v9613
        %v9615 = vsel %vm8424, %v9151, 0.0
        %v9616 = vadd.f32 %v9614, %v9615
        %v9617 = vsel %vm8424, %v9152, 0.0
        %v9618 = vadd.f32 %v9616, %v9617
        %v9619 = vsel %vm8424, %v9153, 0.0
        %v9620 = vadd.f32 %v9618, %v9619
        %v9621 = vsel %vm8424, %v9154, 0.0
        %v9622 = vadd.f32 %v9620, %v9621
        %v9623 = vsel %vm8424, %v9155, 0.0
        %v9624 = vadd.f32 %v9622, %v9623
        %v9625 = vsel %vm8424, %v9156, 0.0
        %v9626 = vadd.f32 %v9624, %v9625
        %v9627 = vsel %vm8424, %v9157, 0.0
        %v9628 = vadd.f32 %v9626, %v9627
        %v9629 = vsel %vm8424, %v9158, 0.0
        %v9630 = vadd.f32 %v9628, %v9629
        %v9631 = vsel %vm8424, %v9159, 0.0
        %v9632 = vadd.f32 %v9630, %v9631
        %v9633 = vsel %vm8424, %v9160, 0.0
        %v9634 = vadd.f32 %v9632, %v9633
        %v9635 = vsel %vm8424, %v9161, 0.0
        %v9636 = vadd.f32 %v9634, %v9635
        %v9637 = vsel %vm8424, %v9162, 0.0
        %v9638 = vadd.f32 %v9636, %v9637
        %v9639 = vsel %vm8424, %v9163, 0.0
        %v9640 = vadd.f32 %v9638, %v9639
        %v9641 = vsel %vm8424, %v9164, 0.0
        %v9642 = vadd.f32 %v9640, %v9641
        %v9643 = vsel %vm8424, %v9165, 0.0
        %v9644 = vadd.f32 %v9642, %v9643
        %v9645 = vsel %vm8424, %v9166, 0.0
        %v9646 = vadd.f32 %v9644, %v9645
        %v9647 = vsel %vm8424, %v9167, 0.0
        %v9648 = vadd.f32 %v9646, %v9647
        %v9649 = vsel %vm8424, %v9168, 0.0
        %v9650 = vadd.f32 %v9648, %v9649
        %v9651 = vsel %vm8424, %v9169, 0.0
        %v9652 = vadd.f32 %v9650, %v9651
        %v9653 = vsel %vm8424, %v9170, 0.0
        %v9654 = vadd.f32 %v9652, %v9653
        %v9655 = vsel %vm8424, %v9171, 0.0
        %v9656 = vadd.f32 %v9654, %v9655
        %v9657 = vsel %vm8424, %v9172, 0.0
        %v9658 = vadd.f32 %v9656, %v9657
        %v9659 = vsel %vm8424, %v9173, 0.0
        %v9660 = vadd.f32 %v9658, %v9659
        %v9661 = vsel %vm8424, %v9174, 0.0
        %v9662 = vadd.f32 %v9660, %v9661
        %v9663 = vsel %vm8424, %v9175, 0.0
        %v9664 = vadd.f32 %v9662, %v9663
        %v9665 = vsel %vm8424, %v9176, 0.0
        %v9666 = vadd.f32 %v9664, %v9665
        %v9667 = vsel %vm8424, %v9177, 0.0
        %v9668 = vadd.f32 %v9666, %v9667
        %v9669 = vsel %vm8424, %v9178, 0.0
        %v9670 = vadd.f32 %v9668, %v9669
        %v9671 = vsel %vm8424, %v9179, 0.0
        %v9672 = vadd.f32 %v9670, %v9671
        %v9673 = vsel %vm8424, %v9180, 0.0
        %v9674 = vadd.f32 %v9672, %v9673
        %v9675 = vsel %vm8424, %v9181, 0.0
        %v9676 = vadd.f32 %v9674, %v9675
        %v9677 = vsel %vm8424, %v9182, 0.0
        %v9678 = vadd.f32 %v9676, %v9677
        %v9679 = vsel %vm8424, %v9183, 0.0
        %v9680 = vadd.f32 %v9678, %v9679
        %v9681 = vsel %vm8424, %v9184, 0.0
        %v9682 = vadd.f32 %v9680, %v9681
        %v9683 = vsel %vm8424, %v9185, 0.0
        %v9684 = vadd.f32 %v9682, %v9683
        %v9685 = vsel %vm8424, %v9186, 0.0
        %v9686 = vadd.f32 %v9684, %v9685
        %v9687 = vsel %vm8424, %v9187, 0.0
        %v9688 = vadd.f32 %v9686, %v9687
        %v9689 = vsel %vm8424, %v9188, 0.0
        %v9690 = vadd.f32 %v9688, %v9689
        %v9691 = vsel %vm8424, %v9189, 0.0
        %v9692 = vadd.f32 %v9690, %v9691
        %v9693 = vsel %vm8424, %v9190, 0.0
        %v9694 = vadd.f32 %v9692, %v9693
        %v9695 = vsel %vm8424, %v9191, 0.0
        %v9696 = vadd.f32 %v9694, %v9695
        %v9697 = vsel %vm8424, %v9192, 0.0
        %v9698 = vadd.f32 %v9696, %v9697
        %v9699 = vsel %vm8424, %v9193, 0.0
        %v9700 = vadd.f32 %v9698, %v9699
        %v9701 = vsel %vm8424, %v9194, 0.0
        %v9702 = vadd.f32 %v9700, %v9701
        %v9703 = vsel %vm8424, %v9195, 0.0
        %v9704 = vadd.f32 %v9702, %v9703
        %v9705 = vsel %vm8424, %v9196, 0.0
        %v9706 = vadd.f32 %v9704, %v9705
        %v9707 = vsel %vm8424, %v9197, 0.0
        %v9708 = vadd.f32 %v9706, %v9707
        %v9709 = vrot.slane %v9708, 4
        %v9710 = vadd.f32 %v9708, %v9709
        %v9711 = vrot.slane %v9710, 2
        %v9712 = vadd.f32 %v9710, %v9711
        %v9713 = vrot.slane %v9712, 1
        %v9714 = vadd.f32 %v9712, %v9713
        %9716 = vrot.lane.b32.xlu0 %v9714, 32
        %v9717 = vpop.permute.xlu0 %9716
        %v9719 = vsel %vm8424, %v8941, %v9717
        %vm9720 = vcmask 516096
        %9721 = vst.msk [vmem:[%s235] sm:$0x1] %vm9720, %v9719
        %s9722 = sand.u32 %s142, 1
        %s9723 = scalar_lea.sflag [#allocation3], %s9722
        %s9724 = sand.u32 %s142, 1
        %s9725 = scalar_lea.vmem [#allocation2], %s9724
        // Predicated region
        $region41: #{tpu_custom_call.1} parent=39 // pred_check
          %p9726 = pneg %p152
        $region42: #{tpu_custom_call.1} parent=39 // pred_check_branch
          %9728 = sbr.rel (%p9726) target = $region44
        $region43: #{tpu_custom_call.1} parent=39 // pred_region
          %s9730 = ssub.s32 16, 16
          %9731 = vsyncadd %s9723, %s9730
          %s9732 = smul.addr %s19, 16
          %s9733 = scalar_lea.hbm %s5, %s9732
          %s9735 = sshll.u32 %s9725, 4
          %s9736 = int_to_ptr.vmem [resolvable:$true] %s9735
          %9738 = dma.vmem_to_hbm [thread:$0]  %s9736, 16, %s9733, %s9723
        $region44: #{tpu_custom_call.1} parent=39 // pred_fallthru
          _
      $region40: #{tpu_custom_call.1} parent=5 // pred_fallthru
        _
      %p9739 = scmp.le.s32.totalorder 2, %s14
      // Predicated region
      $region45: #{tpu_custom_call.1} parent=5 // pred_check
        %p9740 = pneg %p9739
      $region46: #{tpu_custom_call.1} parent=5 // pred_check_branch
        %9742 = sbr.rel (%p9740) target = $region48
      $region47: #{tpu_custom_call.1} parent=5 // pred_region
        %s9743 = ssub.s32 %s14, 2
        // Predicated region
        $region49: #{tpu_custom_call.1} parent=47 // pred_check
          %p9744 = pneg %p158
        $region50: #{tpu_custom_call.1} parent=47 // pred_check_branch
          %9746 = sbr.rel (%p9744) target = $region52
        $region51: #{tpu_custom_call.1} parent=47 // pred_region
          %s9747 = sand.u32 %s143, 1
          %s9748 = scalar_lea.sflag [#allocation3], %s9747
          %s9749 = sand.u32 %s143, 1
          %s9750 = scalar_lea.vmem [#allocation2], %s9749
          %9751 = dma.done %s9748, 16
        $region52: #{tpu_custom_call.1} parent=47 // pred_fallthru
          _
      $region48: #{tpu_custom_call.1} parent=5 // pred_fallthru
        _
    $region6: #{tpu_custom_call.1} parent=1 // loop_footer
      %s18 = sadd.s32 1, %s14
    $region7: #{tpu_custom_call.1} parent=1 // loop_footer_branch
      %13 = sbr.rel target = $region3
    $region8: #{tpu_custom_call.1} parent=1 // loop_exit
      _
    %9752 = vsyncpa [#allocation3], 1
    %s9753 = scalar_lea.sflag [#allocation3], 1
    %9754 = vsyncpa %s9753, 1

</llo_original>
